<compile_context>
chip_gen: v5e
topology: v5e:2x2
jax: 0.10.0
libtpu: 0.0.40
codegen_flags: <defaults>
</compile_context>

<pallas_src>
import math

import jax
import jax.numpy as jnp
from jax import lax
from jax.experimental import pallas as pl
from jax.experimental.pallas import tpu as pltpu

# ---------------- synthetic model config (small) ----------------
DIM        = 32                 # transformer model dim
N_HEADS    = 4
HEAD_DIM   = DIM // N_HEADS
DIM_FF     = 64
N_ENC      = 2                  # data-encoder layers
N_FUS      = 2                  # fusion layers
N_DEC      = 2                  # data-decoder layers
X_NUM      = 16                 # spatial points (1D PDE)
DATA_DIM   = 2                  # max_output_dimension
PATCH_SIZE = 4
PATCH_NUM  = X_NUM // PATCH_SIZE
PATCH_IN   = PATCH_SIZE * DATA_DIM
OUT_PAD    = 128                # lane-dense decoder output width
LN_EPS     = 1e-5
ATTN_SCALE = 1.0 / math.sqrt(HEAD_DIM)


# ======================= in-kernel helpers =======================

def _ln(x, g, b):
    """LayerNorm over the last dim. x: (rows, D); g/b: (1, D)."""
    mu = jnp.mean(x, axis=-1, keepdims=True)
    xc = x - mu
    var = jnp.mean(xc * xc, axis=-1, keepdims=True)
    return xc * lax.rsqrt(var + LN_EPS) * g + b


def _mha(xq, xkv, wqkv, bqkv, wo, bo, bias, self_attn):
    """Multi-head attention with a fused QKV projection.

    xq: (Lq, D), xkv: (Lk, D); wqkv: (D, 3D); bqkv: (1, 3D);
    wo: (D, D); bo: (1, D); bias: (1, Lk) additive key-padding mask or None.
    """
    if self_attn:
        qkv = jnp.dot(xq, wqkv, preferred_element_type=jnp.float32) + bqkv
        q = qkv[:, :DIM]
        k = qkv[:, DIM:2 * DIM]
        v = qkv[:, 2 * DIM:]
    else:
        q = jnp.dot(xq, wqkv[:, :DIM], preferred_element_type=jnp.float32) + bqkv[:, :DIM]
        kv = jnp.dot(xkv, wqkv[:, DIM:], preferred_element_type=jnp.float32) + bqkv[:, DIM:]
        k = kv[:, :DIM]
        v = kv[:, DIM:]

    heads = []
    for h in range(N_HEADS):
        sl = slice(h * HEAD_DIM, (h + 1) * HEAD_DIM)
        s = lax.dot_general(q[:, sl], k[:, sl], (((1,), (1,)), ((), ())),
                            preferred_element_type=jnp.float32) * ATTN_SCALE
        if bias is not None:
            s = s + bias
        m = jnp.max(s, axis=-1, keepdims=True)
        p = jnp.exp(s - m)
        p = p * pl.reciprocal(jnp.sum(p, axis=-1, keepdims=True), approx=False)
        heads.append(jnp.dot(p, v[:, sl], preferred_element_type=jnp.float32))
    o = jnp.concatenate(heads, axis=1)                       # (Lq, D)
    return jnp.dot(o, wo, preferred_element_type=jnp.float32) + bo


def _encoder_layer(x, wqkv, wo, ff1w, ff2w, vec, bias):
    """Pre-LN encoder block. vec: (8, 128) packed
    [bqkv | bo | ff1b | ff2b | ln1g | ln1b | ln2g | ln2b]."""
    h = _ln(x, vec[4:5, :DIM], vec[5:6, :DIM])
    x = x + _mha(h, h, wqkv, vec[0:1, :3 * DIM], wo, vec[1:2, :DIM], bias, True)
    h = _ln(x, vec[6:7, :DIM], vec[7:8, :DIM])
    ff = jax.nn.gelu(jnp.dot(h, ff1w, preferred_element_type=jnp.float32)
                     + vec[2:3, :DIM_FF])
    return x + jnp.dot(ff, ff2w, preferred_element_type=jnp.float32) + vec[3:4, :DIM]


# ======================= fused forward kernel =======================

def _prose_kernel(patches_ref, add_in_ref, sym_ref, bias_ref, add_q_ref,
                  pre_w_ref, post_w_ref, gvec_ref,
                  e_wqkv, e_wo, e_ff1w, e_ff2w, e_vec,
                  f_wqkv, f_wo, f_ff1w, f_ff2w, f_vec,
                  d_sa_wqkv, d_sa_wo, d_ca_wqkv, d_ca_wo, d_ff1w, d_ff2w, d_vec,
                  emb_out, enc_out, fus_out, dec_out):
    gv = gvec_ref[...]                         # (8, 128) global vector slab
    bias = bias_ref[0]                         # (1, Lf) additive key-padding mask

    # ---- embedder encode (patch linear; time/pos adds precomputed in wrapper) ----
    x = (jnp.dot(patches_ref[0], pre_w_ref[...], preferred_element_type=jnp.float32)
         + add_in_ref[0])
    emb_out[0] = x

    # ---- data encoder ----
    for l in range(e_wqkv.shape[0]):
        x = _encoder_layer(x, e_wqkv[l], e_wo[l], e_ff1w[l], e_ff2w[l], e_vec[l], None)
    x = _ln(x, gv[0:1, :DIM], gv[1:2, :DIM])
    enc_out[0] = x

    # ---- fusion (concat data + symbol tokens inside the kernel) ----
    f = jnp.concatenate([x, sym_ref[0]], axis=0)
    for l in range(f_wqkv.shape[0]):
        f = _encoder_layer(f, f_wqkv[l], f_wo[l], f_ff1w[l], f_ff2w[l], f_vec[l], bias)
    f = _ln(f, gv[2:3, :DIM], gv[3:4, :DIM])
    fus_out[0] = f

    # ---- operator decoder (self-attn, cross-attn, FFN) + output projection ----
    q = add_q_ref[0]
    for l in range(d_sa_wqkv.shape[0]):
        dv = d_vec[l]                          # (16, 128) packed vectors for layer l
        h = _ln(q, dv[6:7, :DIM], dv[7:8, :DIM])
        q = q + _mha(h, h, d_sa_wqkv[l], dv[0:1, :3 * DIM],
                     d_sa_wo[l], dv[1:2, :DIM], None, True)
        h = _ln(q, dv[8:9, :DIM], dv[9:10, :DIM])
        q = q + _mha(h, f, d_ca_wqkv[l], dv[2:3, :3 * DIM],
                     d_ca_wo[l], dv[3:4, :DIM], bias, False)
        h = _ln(q, dv[10:11, :DIM], dv[11:12, :DIM])
        ff = jax.nn.gelu(jnp.dot(h, d_ff1w[l], preferred_element_type=jnp.float32)
                         + dv[4:5, :DIM_FF])
        q = q + jnp.dot(ff, d_ff2w[l], preferred_element_type=jnp.float32) + dv[5:6, :DIM]
    q = _ln(q, gv[4:5, :DIM], gv[5:6, :DIM])
    # lane-dense (128-wide) output store; padded columns of post_w are zero
    dec_out[0] = (jnp.dot(q, post_w_ref[...], preferred_element_type=jnp.float32)
                  + gv[6:7, :])


# ======================= pallas_call wrapper =======================

def _const_spec(a):
    nd = a.ndim
    return pl.BlockSpec(tuple(a.shape), lambda i, _n=nd: (0,) * _n)


def _batched_spec(a):
    nd = a.ndim
    return pl.BlockSpec((1,) + tuple(a.shape[1:]),
                        lambda i, _n=nd: (i,) + (0,) * (_n - 1))


def run_prose_kernel(patches, add_in, symbol, bias, add_q, pp):
    B, data_len, _ = patches.shape
    S = symbol.shape[1]
    Lf = data_len + S
    Lq = add_q.shape[1]

    batched = [patches, add_in, symbol, bias, add_q]
    consts = [pp["pre_w"], pp["post_w"], pp["gvec"],
              pp["enc"]["wqkv"], pp["enc"]["wo"], pp["enc"]["ff1w"],
              pp["enc"]["ff2w"], pp["enc"]["vec"],
              pp["fus"]["wqkv"], pp["fus"]["wo"], pp["fus"]["ff1w"],
              pp["fus"]["ff2w"], pp["fus"]["vec"],
              pp["dec"]["sa_wqkv"], pp["dec"]["sa_wo"],
              pp["dec"]["ca_wqkv"], pp["dec"]["ca_wo"],
              pp["dec"]["ff1w"], pp["dec"]["ff2w"], pp["dec"]["vec"]]

    in_specs = [_batched_spec(a) for a in batched] + [_const_spec(a) for a in consts]

    out_shape = (
        jax.ShapeDtypeStruct((B, data_len, DIM), jnp.float32),   # data_embeded
        jax.ShapeDtypeStruct((B, data_len, DIM), jnp.float32),   # data_encoded
        jax.ShapeDtypeStruct((B, Lf, DIM), jnp.float32),         # fused
        jax.ShapeDtypeStruct((B, Lq, OUT_PAD), jnp.float32),     # decoder out (padded)
    )
    out_specs = (
        pl.BlockSpec((1, data_len, DIM), lambda i: (i, 0, 0)),
        pl.BlockSpec((1, data_len, DIM), lambda i: (i, 0, 0)),
        pl.BlockSpec((1, Lf, DIM), lambda i: (i, 0, 0)),
        pl.BlockSpec((1, Lq, OUT_PAD), lambda i: (i, 0, 0)),
    )

    return pl.pallas_call(
        _prose_kernel,
        grid=(B,),
        out_shape=out_shape,
        in_specs=in_specs,
        out_specs=out_specs,
        compiler_params=pltpu.CompilerParams(dimension_semantics=("parallel",)),
    )(*batched, *consts)


# ======================= JAX glue (layout plumbing only) =======================

def _time_features(t, dim):
    # t: (bs, L, 1) -> (bs, L, dim) sinusoidal features
    half = dim // 2
    freqs = jnp.exp(-math.log(10000.0) * jnp.arange(half, dtype=jnp.float32) / half)
    ang = t.astype(jnp.float32) * freqs
    return jnp.concatenate([jnp.sin(ang), jnp.cos(ang)], axis=-1)


def prose_fwd(pp, data_input, input_times, output_times,
              symbol_encoded, symbol_padding_mask=None):
    bs, input_len, x_num, data_dim = data_input.shape
    data_len = input_len * PATCH_NUM
    out_len = output_times.shape[1]
    Lq = out_len * PATCH_NUM
    S = symbol_encoded.shape[1]

    # patchify the 1D field: (bs, input_len, x_num, dd) -> (bs, data_len, P*dd)
    patches = data_input.reshape(bs, data_len, PATCH_SIZE * data_dim).astype(jnp.float32)

    # input time embedding (proj + repeat over patches) + patch positions + pre bias
    t_emb = _time_features(input_times, DIM) @ pp["time_w"] + pp["time_b"]
    add_in = (jnp.repeat(t_emb, PATCH_NUM, axis=1)
              + jnp.tile(pp["patch_pos"], (input_len, 1))[None]
              + pp["pre_b"]).astype(jnp.float32)

    # decoder query embedding (output-time proj + repeat) + query patch positions
    q_emb = _time_features(output_times, DIM) @ pp["qtime_w"] + pp["qtime_b"]
    add_q = (jnp.repeat(q_emb, PATCH_NUM, axis=1)
             + jnp.tile(pp["query_patch_pos"], (out_len, 1))[None]).astype(jnp.float32)

    # fused-sequence key padding mask -> additive bias
    if symbol_padding_mask is None:
        sym_mask = jnp.zeros((bs, S), dtype=bool)
    else:
        sym_mask = symbol_padding_mask.astype(bool)
    fused_mask = jnp.concatenate([jnp.zeros((bs, data_len), dtype=bool), sym_mask], axis=1)
    bias = jnp.where(fused_mask, -1e9, 0.0).astype(jnp.float32)[:, None, :]   # (bs, 1, Lf)

    emb, enc, fused, dec_pad = run_prose_kernel(
        patches, add_in, symbol_encoded.astype(jnp.float32), bias, add_q, pp)

    output = {}
    output["data_embeded"] = emb
    output["data_encoded"] = enc
    output["symbol_encoded"] = symbol_encoded
    output["fused"] = fused
    data_output = dec_pad[:, :, :PATCH_SIZE * DATA_DIM]
    data_output = data_output.reshape(bs, out_len, PATCH_NUM, PATCH_SIZE, DATA_DIM)
    output["data_output"] = data_output.reshape(bs, out_len, X_NUM, DATA_DIM)
    return output


# ======================= parameter init & packing =======================

def _nrm(key, shape, scale=0.02):
    return jax.random.normal(key, shape, jnp.float32) * scale


def _init_embedder(key):
    k = jax.random.split(key, 7)
    return dict(
        pre_w=_nrm(k[0], (PATCH_IN, DIM)), pre_b=_nrm(k[1], (DIM,)),
        time_w=_nrm(k[2], (DIM, DIM)), time_b=_nrm(k[3], (DIM,)),
        post_w=_nrm(k[4], (DIM, PATCH_IN)), post_b=_nrm(k[5], (PATCH_IN,)),
        patch_pos=_nrm(k[6], (PATCH_NUM, DIM)))


def _init_encoder_stack(key, n):
    k = jax.random.split(key, 8)
    return dict(
        wqkv=_nrm(k[0], (n, DIM, 3 * DIM)), bqkv=_nrm(k[1], (n, 3 * DIM)),
        wo=_nrm(k[2], (n, DIM, DIM)), bo=_nrm(k[3], (n, DIM)),
        ff1w=_nrm(k[4], (n, DIM, DIM_FF)), ff1b=_nrm(k[5], (n, DIM_FF)),
        ff2w=_nrm(k[6], (n, DIM_FF, DIM)), ff2b=_nrm(k[7], (n, DIM)),
        ln1g=jnp.ones((n, DIM)), ln1b=jnp.zeros((n, DIM)),
        ln2g=jnp.ones((n, DIM)), ln2b=jnp.zeros((n, DIM)),
        lnfg=jnp.ones((DIM,)), lnfb=jnp.zeros((DIM,)))


def _init_decoder_stack(key, n):
    k = jax.random.split(key, 15)
    return dict(
        sa_wqkv=_nrm(k[0], (n, DIM, 3 * DIM)), sa_bqkv=_nrm(k[1], (n, 3 * DIM)),
        sa_wo=_nrm(k[2], (n, DIM, DIM)), sa_bo=_nrm(k[3], (n, DIM)),
        ca_wqkv=_nrm(k[4], (n, DIM, 3 * DIM)), ca_bqkv=_nrm(k[5], (n, 3 * DIM)),
        ca_wo=_nrm(k[6], (n, DIM, DIM)), ca_bo=_nrm(k[7], (n, DIM)),
        ff1w=_nrm(k[8], (n, DIM, DIM_FF)), ff1b=_nrm(k[9], (n, DIM_FF)),
        ff2w=_nrm(k[10], (n, DIM_FF, DIM)), ff2b=_nrm(k[11], (n, DIM)),
        ln1g=jnp.ones((n, DIM)), ln1b=jnp.zeros((n, DIM)),
        ln2g=jnp.ones((n, DIM)), ln2b=jnp.zeros((n, DIM)),
        ln3g=jnp.ones((n, DIM)), ln3b=jnp.zeros((n, DIM)),
        lnfg=jnp.ones((DIM,)), lnfb=jnp.zeros((DIM,)),
        qtime_w=_nrm(k[12], (DIM, DIM)), qtime_b=_nrm(k[13], (DIM,)),
        query_patch_pos=_nrm(k[14], (PATCH_NUM, DIM)))


def init_params(key):
    k1, k2, k3, k4 = jax.random.split(key, 4)
    return dict(embedder=_init_embedder(k1),
                data_encoder=_init_encoder_stack(k2, N_ENC),
                fusion=_init_encoder_stack(k3, N_FUS),
                data_decoder=_init_decoder_stack(k4, N_DEC))


def _pack_enc_vec(s):
    n = s["wqkv"].shape[0]
    v = jnp.zeros((n, 8, 128), jnp.float32)
    v = v.at[:, 0, :3 * DIM].set(s["bqkv"])
    v = v.at[:, 1, :DIM].set(s["bo"])
    v = v.at[:, 2, :DIM_FF].set(s["ff1b"])
    v = v.at[:, 3, :DIM].set(s["ff2b"])
    v = v.at[:, 4, :DIM].set(s["ln1g"])
    v = v.at[:, 5, :DIM].set(s["ln1b"])
    v = v.at[:, 6, :DIM].set(s["ln2g"])
    v = v.at[:, 7, :DIM].set(s["ln2b"])
    return v


def _pack_dec_vec(s):
    n = s["sa_wqkv"].shape[0]
    v = jnp.zeros((n, 16, 128), jnp.float32)
    v = v.at[:, 0, :3 * DIM].set(s["sa_bqkv"])
    v = v.at[:, 1, :DIM].set(s["sa_bo"])
    v = v.at[:, 2, :3 * DIM].set(s["ca_bqkv"])
    v = v.at[:, 3, :DIM].set(s["ca_bo"])
    v = v.at[:, 4, :DIM_FF].set(s["ff1b"])
    v = v.at[:, 5, :DIM].set(s["ff2b"])
    v = v.at[:, 6, :DIM].set(s["ln1g"])
    v = v.at[:, 7, :DIM].set(s["ln1b"])
    v = v.at[:, 8, :DIM].set(s["ln2g"])
    v = v.at[:, 9, :DIM].set(s["ln2b"])
    v = v.at[:, 10, :DIM].set(s["ln3g"])
    v = v.at[:, 11, :DIM].set(s["ln3b"])
    return v


def pack_params(p):
    """Pack per-module weights into a few (8,128)-friendly slabs (done once)."""
    emb, enc, fus, dec = p["embedder"], p["data_encoder"], p["fusion"], p["data_decoder"]
    gvec = jnp.zeros((8, 128), jnp.float32)
    gvec = gvec.at[0, :DIM].set(enc["lnfg"]).at[1, :DIM].set(enc["lnfb"])
    gvec = gvec.at[2, :DIM].set(fus["lnfg"]).at[3, :DIM].set(fus["lnfb"])
    gvec = gvec.at[4, :DIM].set(dec["lnfg"]).at[5, :DIM].set(dec["lnfb"])
    gvec = gvec.at[6, :PATCH_IN].set(emb["post_b"])
    post_w = jnp.zeros((DIM, OUT_PAD), jnp.float32).at[:, :PATCH_IN].set(emb["post_w"])
    return dict(
        # wrapper-side small weights (time / position embeddings)
        time_w=emb["time_w"], time_b=emb["time_b"], pre_b=emb["pre_b"],
        patch_pos=emb["patch_pos"],
        qtime_w=dec["qtime_w"], qtime_b=dec["qtime_b"],
        query_patch_pos=dec["query_patch_pos"],
        # kernel constants
        pre_w=emb["pre_w"], post_w=post_w, gvec=gvec,
        enc=dict(wqkv=enc["wqkv"], wo=enc["wo"], ff1w=enc["ff1w"],
                 ff2w=enc["ff2w"], vec=_pack_enc_vec(enc)),
        fus=dict(wqkv=fus["wqkv"], wo=fus["wo"], ff1w=fus["ff1w"],
                 ff2w=fus["ff2w"], vec=_pack_enc_vec(fus)),
        dec=dict(sa_wqkv=dec["sa_wqkv"], sa_wo=dec["sa_wo"],
                 ca_wqkv=dec["ca_wqkv"], ca_wo=dec["ca_wo"],
                 ff1w=dec["ff1w"], ff2w=dec["ff2w"], vec=_pack_dec_vec(dec)))


# ======================= main =======================

if __name__ == "__main__":
    key = jax.random.PRNGKey(0)
    kp, kd, kt1, kt2, ks = jax.random.split(key, 5)
    params = init_params(kp)
    packed = pack_params(params)

    bs, input_len, output_len, symbol_len = 2, 4, 4, 8
    data_input = jax.random.normal(kd, (bs, input_len, X_NUM, DATA_DIM), jnp.float32)
    input_times = jax.random.uniform(kt1, (bs, input_len, 1), jnp.float32)
    output_times = jax.random.uniform(kt2, (bs, output_len, 1), jnp.float32)
    symbol_encoded = jax.random.normal(ks, (bs, symbol_len, DIM), jnp.float32)
    # True = padded; batch 0 has no padding, batch 1 has 2 padded symbol tokens
    symbol_padding_mask = (jnp.arange(symbol_len)[None, :]
                           >= jnp.array([[symbol_len], [symbol_len - 2]]))

    fwd = jax.jit(prose_fwd)
    out = fwd(packed, data_input, input_times, output_times,
              symbol_encoded, symbol_padding_mask)
    out = jax.block_until_ready(out)

    data_len = input_len * PATCH_NUM
    assert out["data_output"].shape == (bs, output_len, X_NUM, DATA_DIM)
    assert out["data_embeded"].shape == (bs, data_len, DIM)
    assert out["data_encoded"].shape == (bs, data_len, DIM)
    assert out["fused"].shape == (bs, data_len + symbol_len, DIM)
    assert bool(jnp.all(jnp.isfinite(out["data_output"])))
    assert bool(jnp.all(jnp.isfinite(out["fused"])))
    print("KERNEL_OK")
</pallas_src>

<mosaic_0001>
module attributes {stable_mosaic.version = 11 : i64} {
  func.func @_prose_kernel(%arg0: i32, %arg1: memref<1x16x8xf32, #tpu.memory_space<vmem>>, %arg2: memref<1x16x32xf32, #tpu.memory_space<vmem>>, %arg3: memref<1x8x32xf32, #tpu.memory_space<vmem>>, %arg4: memref<1x1x24xf32, #tpu.memory_space<vmem>>, %arg5: memref<1x16x32xf32, #tpu.memory_space<vmem>>, %arg6: memref<8x32xf32, #tpu.memory_space<vmem>>, %arg7: memref<32x128xf32, #tpu.memory_space<vmem>>, %arg8: memref<8x128xf32, #tpu.memory_space<vmem>>, %arg9: memref<2x32x96xf32, #tpu.memory_space<vmem>>, %arg10: memref<2x32x32xf32, #tpu.memory_space<vmem>>, %arg11: memref<2x32x64xf32, #tpu.memory_space<vmem>>, %arg12: memref<2x64x32xf32, #tpu.memory_space<vmem>>, %arg13: memref<2x8x128xf32, #tpu.memory_space<vmem>>, %arg14: memref<2x32x96xf32, #tpu.memory_space<vmem>>, %arg15: memref<2x32x32xf32, #tpu.memory_space<vmem>>, %arg16: memref<2x32x64xf32, #tpu.memory_space<vmem>>, %arg17: memref<2x64x32xf32, #tpu.memory_space<vmem>>, %arg18: memref<2x8x128xf32, #tpu.memory_space<vmem>>, %arg19: memref<2x32x96xf32, #tpu.memory_space<vmem>>, %arg20: memref<2x32x32xf32, #tpu.memory_space<vmem>>, %arg21: memref<2x32x96xf32, #tpu.memory_space<vmem>>, %arg22: memref<2x32x32xf32, #tpu.memory_space<vmem>>, %arg23: memref<2x32x64xf32, #tpu.memory_space<vmem>>, %arg24: memref<2x64x32xf32, #tpu.memory_space<vmem>>, %arg25: memref<2x16x128xf32, #tpu.memory_space<vmem>>, %arg26: memref<1x16x32xf32, #tpu.memory_space<vmem>>, %arg27: memref<1x16x32xf32, #tpu.memory_space<vmem>>, %arg28: memref<1x24x32xf32, #tpu.memory_space<vmem>>, %arg29: memref<1x16x128xf32, #tpu.memory_space<vmem>>) attributes {dimension_semantics = [#tpu.dimension_semantics<parallel>], iteration_bounds = array<i64: 2>, scalar_prefetch = 0 : i64, scratch_operands = 0 : i64, tpu.core_type = #tpu.core_type<tc>, window_params = [{transform_indices = @transform_0, window_bounds = array<i64: 1, 16, 8>}, {transform_indices = @transform_1, window_bounds = array<i64: 1, 16, 32>}, {transform_indices = @transform_2, window_bounds = array<i64: 1, 8, 32>}, {transform_indices = @transform_3, window_bounds = array<i64: 1, 1, 24>}, {transform_indices = @transform_4, window_bounds = array<i64: 1, 16, 32>}, {pipeline_mode = #tpu.pipeline_mode<synchronous>, transform_indices = @transform_5, window_bounds = array<i64: 8, 32>}, {pipeline_mode = #tpu.pipeline_mode<synchronous>, transform_indices = @transform_6, window_bounds = array<i64: 32, 128>}, {pipeline_mode = #tpu.pipeline_mode<synchronous>, transform_indices = @transform_7, window_bounds = array<i64: 8, 128>}, {pipeline_mode = #tpu.pipeline_mode<synchronous>, transform_indices = @transform_8, window_bounds = array<i64: 2, 32, 96>}, {pipeline_mode = #tpu.pipeline_mode<synchronous>, transform_indices = @transform_9, window_bounds = array<i64: 2, 32, 32>}, {pipeline_mode = #tpu.pipeline_mode<synchronous>, transform_indices = @transform_10, window_bounds = array<i64: 2, 32, 64>}, {pipeline_mode = #tpu.pipeline_mode<synchronous>, transform_indices = @transform_11, window_bounds = array<i64: 2, 64, 32>}, {pipeline_mode = #tpu.pipeline_mode<synchronous>, transform_indices = @transform_12, window_bounds = array<i64: 2, 8, 128>}, {pipeline_mode = #tpu.pipeline_mode<synchronous>, transform_indices = @transform_13, window_bounds = array<i64: 2, 32, 96>}, {pipeline_mode = #tpu.pipeline_mode<synchronous>, transform_indices = @transform_14, window_bounds = array<i64: 2, 32, 32>}, {pipeline_mode = #tpu.pipeline_mode<synchronous>, transform_indices = @transform_15, window_bounds = array<i64: 2, 32, 64>}, {pipeline_mode = #tpu.pipeline_mode<synchronous>, transform_indices = @transform_16, window_bounds = array<i64: 2, 64, 32>}, {pipeline_mode = #tpu.pipeline_mode<synchronous>, transform_indices = @transform_17, window_bounds = array<i64: 2, 8, 128>}, {pipeline_mode = #tpu.pipeline_mode<synchronous>, transform_indices = @transform_18, window_bounds = array<i64: 2, 32, 96>}, {pipeline_mode = #tpu.pipeline_mode<synchronous>, transform_indices = @transform_19, window_bounds = array<i64: 2, 32, 32>}, {pipeline_mode = #tpu.pipeline_mode<synchronous>, transform_indices = @transform_20, window_bounds = array<i64: 2, 32, 96>}, {pipeline_mode = #tpu.pipeline_mode<synchronous>, transform_indices = @transform_21, window_bounds = array<i64: 2, 32, 32>}, {pipeline_mode = #tpu.pipeline_mode<synchronous>, transform_indices = @transform_22, window_bounds = array<i64: 2, 32, 64>}, {pipeline_mode = #tpu.pipeline_mode<synchronous>, transform_indices = @transform_23, window_bounds = array<i64: 2, 64, 32>}, {pipeline_mode = #tpu.pipeline_mode<synchronous>, transform_indices = @transform_24, window_bounds = array<i64: 2, 16, 128>}, {transform_indices = @transform_25, window_bounds = array<i64: 1, 16, 32>}, {transform_indices = @transform_26, window_bounds = array<i64: 1, 16, 32>}, {transform_indices = @transform_27, window_bounds = array<i64: 1, 24, 32>}, {transform_indices = @transform_28, window_bounds = array<i64: 1, 16, 128>}]} {
    %c0 = arith.constant 0 : index
    %c0_0 = arith.constant 0 : index
    %0 = vector.load %arg8[%c0, %c0_0] : memref<8x128xf32, #tpu.memory_space<vmem>>, vector<8x128xf32>
    %c0_1 = arith.constant 0 : index
    %c0_2 = arith.constant 0 : index
    %c0_3 = arith.constant 0 : index
    %1 = vector.load %arg4[%c0_1, %c0_2, %c0_3] : memref<1x1x24xf32, #tpu.memory_space<vmem>>, vector<1x1x24xf32>
    %2 = vector.shape_cast %1 : vector<1x1x24xf32> to vector<1x24xf32>
    %c0_4 = arith.constant 0 : index
    %c0_5 = arith.constant 0 : index
    %c0_6 = arith.constant 0 : index
    %3 = vector.load %arg1[%c0_4, %c0_5, %c0_6] : memref<1x16x8xf32, #tpu.memory_space<vmem>>, vector<1x16x8xf32>
    %4 = vector.shape_cast %3 : vector<1x16x8xf32> to vector<16x8xf32>
    %c0_7 = arith.constant 0 : index
    %c0_8 = arith.constant 0 : index
    %5 = vector.load %arg6[%c0_7, %c0_8] : memref<8x32xf32, #tpu.memory_space<vmem>>, vector<8x32xf32>
    %cst = arith.constant dense<0.000000e+00> : vector<16x32xf32>
    %6 = tpu.matmul %4, %5, %cst {dimension_numbers = #tpu.dot_dimension_numbers<[1], [0], [0], [1], [0, 0, 1, 1], [], []>} : vector<16x8xf32>, vector<8x32xf32>, vector<16x32xf32> -> vector<16x32xf32>
    %c0_9 = arith.constant 0 : index
    %c0_10 = arith.constant 0 : index
    %c0_11 = arith.constant 0 : index
    %7 = vector.load %arg2[%c0_9, %c0_10, %c0_11] : memref<1x16x32xf32, #tpu.memory_space<vmem>>, vector<1x16x32xf32>
    %8 = vector.shape_cast %7 : vector<1x16x32xf32> to vector<16x32xf32>
    %9 = arith.addf %6, %8 : vector<16x32xf32>
    %c0_12 = arith.constant 0 : index
    %c0_13 = arith.constant 0 : index
    %c0_14 = arith.constant 0 : index
    %10 = vector.load %arg26[%c0_12, %c0_13, %c0_14] : memref<1x16x32xf32, #tpu.memory_space<vmem>>, vector<1x16x32xf32>
    %11 = vector.shape_cast %10 : vector<1x16x32xf32> to vector<16x32xf32>
    %12 = vector.shape_cast %9 : vector<16x32xf32> to vector<1x16x32xf32>
    tpu.vector_store %arg26[%c0_12, %c0_13, %c0_14], %12 {strides = array<i32>} : memref<1x16x32xf32, #tpu.memory_space<vmem>>, vector<1x16x32xf32>,
    %c0_15 = arith.constant 0 : index
    %c0_16 = arith.constant 0 : index
    %c0_17 = arith.constant 0 : index
    %13 = vector.load %arg9[%c0_15, %c0_16, %c0_17] : memref<2x32x96xf32, #tpu.memory_space<vmem>>, vector<1x32x96xf32>
    %14 = vector.shape_cast %13 : vector<1x32x96xf32> to vector<32x96xf32>
    %c0_18 = arith.constant 0 : index
    %c0_19 = arith.constant 0 : index
    %c0_20 = arith.constant 0 : index
    %15 = vector.load %arg10[%c0_18, %c0_19, %c0_20] : memref<2x32x32xf32, #tpu.memory_space<vmem>>, vector<1x32x32xf32>
    %16 = vector.shape_cast %15 : vector<1x32x32xf32> to vector<32x32xf32>
    %c0_21 = arith.constant 0 : index
    %c0_22 = arith.constant 0 : index
    %c0_23 = arith.constant 0 : index
    %17 = vector.load %arg11[%c0_21, %c0_22, %c0_23] : memref<2x32x64xf32, #tpu.memory_space<vmem>>, vector<1x32x64xf32>
    %18 = vector.shape_cast %17 : vector<1x32x64xf32> to vector<32x64xf32>
    %c0_24 = arith.constant 0 : index
    %c0_25 = arith.constant 0 : index
    %c0_26 = arith.constant 0 : index
    %19 = vector.load %arg12[%c0_24, %c0_25, %c0_26] : memref<2x64x32xf32, #tpu.memory_space<vmem>>, vector<1x64x32xf32>
    %20 = vector.shape_cast %19 : vector<1x64x32xf32> to vector<64x32xf32>
    %c0_27 = arith.constant 0 : index
    %c0_28 = arith.constant 0 : index
    %c0_29 = arith.constant 0 : index
    %21 = vector.load %arg13[%c0_27, %c0_28, %c0_29] : memref<2x8x128xf32, #tpu.memory_space<vmem>>, vector<1x8x128xf32>
    %22 = vector.shape_cast %21 : vector<1x8x128xf32> to vector<8x128xf32>
    %23 = vector.extract_strided_slice %22 {offsets = [4, 0], sizes = [1, 32], strides = [1, 1]} : vector<8x128xf32> to vector<1x32xf32>
    %24 = vector.extract_strided_slice %22 {offsets = [5, 0], sizes = [1, 32], strides = [1, 1]} : vector<8x128xf32> to vector<1x32xf32>
    %cst_30 = arith.constant dense<0.000000e+00> : vector<16xf32>
    %25 = vector.multi_reduction <add>, %9, %cst_30 [1] : vector<16x32xf32> to vector<16xf32>
    %26 = vector.shape_cast %25 : vector<16xf32> to vector<16x1xf32>
    %cst_31 = arith.constant 3.200000e+01 : f32
    %27 = vector.broadcast %cst_31 : f32 to vector<16x1xf32>
    %28 = arith.divf %26, %27 : vector<16x1xf32>
    %29 = vector.broadcast %28 : vector<16x1xf32> to vector<16x32xf32>
    %30 = arith.subf %9, %29 : vector<16x32xf32>
    %31 = arith.mulf %30, %30 : vector<16x32xf32>
    %cst_32 = arith.constant dense<0.000000e+00> : vector<16xf32>
    %32 = vector.multi_reduction <add>, %31, %cst_32 [1] : vector<16x32xf32> to vector<16xf32>
    %33 = vector.shape_cast %32 : vector<16xf32> to vector<16x1xf32>
    %cst_33 = arith.constant 3.200000e+01 : f32
    %34 = vector.broadcast %cst_33 : f32 to vector<16x1xf32>
    %35 = arith.divf %33, %34 : vector<16x1xf32>
    %cst_34 = arith.constant 9.99999974E-6 : f32
    %36 = vector.broadcast %cst_34 : f32 to vector<16x1xf32>
    %37 = arith.addf %35, %36 : vector<16x1xf32>
    %38 = math.rsqrt %37 : vector<16x1xf32>
    %39 = vector.broadcast %38 : vector<16x1xf32> to vector<16x32xf32>
    %40 = arith.mulf %30, %39 : vector<16x32xf32>
    %41 = vector.broadcast %23 : vector<1x32xf32> to vector<16x32xf32>
    %42 = arith.mulf %40, %41 : vector<16x32xf32>
    %43 = vector.broadcast %24 : vector<1x32xf32> to vector<16x32xf32>
    %44 = arith.addf %42, %43 : vector<16x32xf32>
    %45 = vector.extract_strided_slice %22 {offsets = [0, 0], sizes = [1, 96], strides = [1, 1]} : vector<8x128xf32> to vector<1x96xf32>
    %46 = vector.extract_strided_slice %22 {offsets = [1, 0], sizes = [1, 32], strides = [1, 1]} : vector<8x128xf32> to vector<1x32xf32>
    %cst_35 = arith.constant dense<0.000000e+00> : vector<16x96xf32>
    %47 = tpu.matmul %44, %14, %cst_35 {dimension_numbers = #tpu.dot_dimension_numbers<[1], [0], [0], [1], [0, 0, 1, 1], [], []>} : vector<16x32xf32>, vector<32x96xf32>, vector<16x96xf32> -> vector<16x96xf32>
    %48 = vector.broadcast %45 : vector<1x96xf32> to vector<16x96xf32>
    %49 = arith.addf %47, %48 : vector<16x96xf32>
    %50 = vector.extract_strided_slice %49 {offsets = [0, 0], sizes = [16, 32], strides = [1, 1]} : vector<16x96xf32> to vector<16x32xf32>
    %51 = vector.extract_strided_slice %49 {offsets = [0, 32], sizes = [16, 32], strides = [1, 1]} : vector<16x96xf32> to vector<16x32xf32>
    %52 = vector.extract_strided_slice %49 {offsets = [0, 64], sizes = [16, 32], strides = [1, 1]} : vector<16x96xf32> to vector<16x32xf32>
    %53 = vector.extract_strided_slice %50 {offsets = [0, 0], sizes = [16, 8], strides = [1, 1]} : vector<16x32xf32> to vector<16x8xf32>
    %54 = vector.extract_strided_slice %51 {offsets = [0, 0], sizes = [16, 8], strides = [1, 1]} : vector<16x32xf32> to vector<16x8xf32>
    %cst_36 = arith.constant dense<0.000000e+00> : vector<16x16xf32>
    %55 = tpu.matmul %53, %54, %cst_36 {dimension_numbers = #tpu.dot_dimension_numbers<[1], [1], [0], [0], [0, 0, 1, 0], [], []>} : vector<16x8xf32>, vector<16x8xf32>, vector<16x16xf32> -> vector<16x16xf32>
    %cst_37 = arith.constant 0.353553385 : f32
    %56 = vector.broadcast %cst_37 : f32 to vector<16x16xf32>
    %57 = arith.mulf %55, %56 : vector<16x16xf32>
    %cst_38 = arith.constant dense<0xFF800000> : vector<16xf32>
    %58 = vector.multi_reduction <maximumf>, %57, %cst_38 [1] : vector<16x16xf32> to vector<16xf32>
    %59 = vector.shape_cast %58 : vector<16xf32> to vector<16x1xf32>
    %60 = vector.broadcast %59 : vector<16x1xf32> to vector<16x16xf32>
    %61 = arith.subf %57, %60 : vector<16x16xf32>
    %62 = math.exp %61 : vector<16x16xf32>
    %cst_39 = arith.constant dense<0.000000e+00> : vector<16xf32>
    %63 = vector.multi_reduction <add>, %62, %cst_39 [1] : vector<16x16xf32> to vector<16xf32>
    %64 = vector.shape_cast %63 : vector<16xf32> to vector<16x1xf32>
    %65 = tpu.reciprocal %64 : vector<16x1xf32> -> vector<16x1xf32>
    %66 = vector.broadcast %65 : vector<16x1xf32> to vector<16x16xf32>
    %67 = arith.mulf %62, %66 : vector<16x16xf32>
    %68 = vector.extract_strided_slice %52 {offsets = [0, 0], sizes = [16, 8], strides = [1, 1]} : vector<16x32xf32> to vector<16x8xf32>
    %cst_40 = arith.constant dense<0.000000e+00> : vector<16x8xf32>
    %69 = tpu.matmul %67, %68, %cst_40 {dimension_numbers = #tpu.dot_dimension_numbers<[1], [0], [0], [1], [0, 0, 1, 1], [], []>} : vector<16x16xf32>, vector<16x8xf32>, vector<16x8xf32> -> vector<16x8xf32>
    %70 = vector.extract_strided_slice %50 {offsets = [0, 8], sizes = [16, 8], strides = [1, 1]} : vector<16x32xf32> to vector<16x8xf32>
    %71 = vector.extract_strided_slice %51 {offsets = [0, 8], sizes = [16, 8], strides = [1, 1]} : vector<16x32xf32> to vector<16x8xf32>
    %cst_41 = arith.constant dense<0.000000e+00> : vector<16x16xf32>
    %72 = tpu.matmul %70, %71, %cst_41 {dimension_numbers = #tpu.dot_dimension_numbers<[1], [1], [0], [0], [0, 0, 1, 0], [], []>} : vector<16x8xf32>, vector<16x8xf32>, vector<16x16xf32> -> vector<16x16xf32>
    %cst_42 = arith.constant 0.353553385 : f32
    %73 = vector.broadcast %cst_42 : f32 to vector<16x16xf32>
    %74 = arith.mulf %72, %73 : vector<16x16xf32>
    %cst_43 = arith.constant dense<0xFF800000> : vector<16xf32>
    %75 = vector.multi_reduction <maximumf>, %74, %cst_43 [1] : vector<16x16xf32> to vector<16xf32>
    %76 = vector.shape_cast %75 : vector<16xf32> to vector<16x1xf32>
    %77 = vector.broadcast %76 : vector<16x1xf32> to vector<16x16xf32>
    %78 = arith.subf %74, %77 : vector<16x16xf32>
    %79 = math.exp %78 : vector<16x16xf32>
    %cst_44 = arith.constant dense<0.000000e+00> : vector<16xf32>
    %80 = vector.multi_reduction <add>, %79, %cst_44 [1] : vector<16x16xf32> to vector<16xf32>
    %81 = vector.shape_cast %80 : vector<16xf32> to vector<16x1xf32>
    %82 = tpu.reciprocal %81 : vector<16x1xf32> -> vector<16x1xf32>
    %83 = vector.broadcast %82 : vector<16x1xf32> to vector<16x16xf32>
    %84 = arith.mulf %79, %83 : vector<16x16xf32>
    %85 = vector.extract_strided_slice %52 {offsets = [0, 8], sizes = [16, 8], strides = [1, 1]} : vector<16x32xf32> to vector<16x8xf32>
    %cst_45 = arith.constant dense<0.000000e+00> : vector<16x8xf32>
    %86 = tpu.matmul %84, %85, %cst_45 {dimension_numbers = #tpu.dot_dimension_numbers<[1], [0], [0], [1], [0, 0, 1, 1], [], []>} : vector<16x16xf32>, vector<16x8xf32>, vector<16x8xf32> -> vector<16x8xf32>
    %87 = vector.extract_strided_slice %50 {offsets = [0, 16], sizes = [16, 8], strides = [1, 1]} : vector<16x32xf32> to vector<16x8xf32>
    %88 = vector.extract_strided_slice %51 {offsets = [0, 16], sizes = [16, 8], strides = [1, 1]} : vector<16x32xf32> to vector<16x8xf32>
    %cst_46 = arith.constant dense<0.000000e+00> : vector<16x16xf32>
    %89 = tpu.matmul %87, %88, %cst_46 {dimension_numbers = #tpu.dot_dimension_numbers<[1], [1], [0], [0], [0, 0, 1, 0], [], []>} : vector<16x8xf32>, vector<16x8xf32>, vector<16x16xf32> -> vector<16x16xf32>
    %cst_47 = arith.constant 0.353553385 : f32
    %90 = vector.broadcast %cst_47 : f32 to vector<16x16xf32>
    %91 = arith.mulf %89, %90 : vector<16x16xf32>
    %cst_48 = arith.constant dense<0xFF800000> : vector<16xf32>
    %92 = vector.multi_reduction <maximumf>, %91, %cst_48 [1] : vector<16x16xf32> to vector<16xf32>
    %93 = vector.shape_cast %92 : vector<16xf32> to vector<16x1xf32>
    %94 = vector.broadcast %93 : vector<16x1xf32> to vector<16x16xf32>
    %95 = arith.subf %91, %94 : vector<16x16xf32>
    %96 = math.exp %95 : vector<16x16xf32>
    %cst_49 = arith.constant dense<0.000000e+00> : vector<16xf32>
    %97 = vector.multi_reduction <add>, %96, %cst_49 [1] : vector<16x16xf32> to vector<16xf32>
    %98 = vector.shape_cast %97 : vector<16xf32> to vector<16x1xf32>
    %99 = tpu.reciprocal %98 : vector<16x1xf32> -> vector<16x1xf32>
    %100 = vector.broadcast %99 : vector<16x1xf32> to vector<16x16xf32>
    %101 = arith.mulf %96, %100 : vector<16x16xf32>
    %102 = vector.extract_strided_slice %52 {offsets = [0, 16], sizes = [16, 8], strides = [1, 1]} : vector<16x32xf32> to vector<16x8xf32>
    %cst_50 = arith.constant dense<0.000000e+00> : vector<16x8xf32>
    %103 = tpu.matmul %101, %102, %cst_50 {dimension_numbers = #tpu.dot_dimension_numbers<[1], [0], [0], [1], [0, 0, 1, 1], [], []>} : vector<16x16xf32>, vector<16x8xf32>, vector<16x8xf32> -> vector<16x8xf32>
    %104 = vector.extract_strided_slice %50 {offsets = [0, 24], sizes = [16, 8], strides = [1, 1]} : vector<16x32xf32> to vector<16x8xf32>
    %105 = vector.extract_strided_slice %51 {offsets = [0, 24], sizes = [16, 8], strides = [1, 1]} : vector<16x32xf32> to vector<16x8xf32>
    %cst_51 = arith.constant dense<0.000000e+00> : vector<16x16xf32>
    %106 = tpu.matmul %104, %105, %cst_51 {dimension_numbers = #tpu.dot_dimension_numbers<[1], [1], [0], [0], [0, 0, 1, 0], [], []>} : vector<16x8xf32>, vector<16x8xf32>, vector<16x16xf32> -> vector<16x16xf32>
    %cst_52 = arith.constant 0.353553385 : f32
    %107 = vector.broadcast %cst_52 : f32 to vector<16x16xf32>
    %108 = arith.mulf %106, %107 : vector<16x16xf32>
    %cst_53 = arith.constant dense<0xFF800000> : vector<16xf32>
    %109 = vector.multi_reduction <maximumf>, %108, %cst_53 [1] : vector<16x16xf32> to vector<16xf32>
    %110 = vector.shape_cast %109 : vector<16xf32> to vector<16x1xf32>
    %111 = vector.broadcast %110 : vector<16x1xf32> to vector<16x16xf32>
    %112 = arith.subf %108, %111 : vector<16x16xf32>
    %113 = math.exp %112 : vector<16x16xf32>
    %cst_54 = arith.constant dense<0.000000e+00> : vector<16xf32>
    %114 = vector.multi_reduction <add>, %113, %cst_54 [1] : vector<16x16xf32> to vector<16xf32>
    %115 = vector.shape_cast %114 : vector<16xf32> to vector<16x1xf32>
    %116 = tpu.reciprocal %115 : vector<16x1xf32> -> vector<16x1xf32>
    %117 = vector.broadcast %116 : vector<16x1xf32> to vector<16x16xf32>
    %118 = arith.mulf %113, %117 : vector<16x16xf32>
    %119 = vector.extract_strided_slice %52 {offsets = [0, 24], sizes = [16, 8], strides = [1, 1]} : vector<16x32xf32> to vector<16x8xf32>
    %cst_55 = arith.constant dense<0.000000e+00> : vector<16x8xf32>
    %120 = tpu.matmul %118, %119, %cst_55 {dimension_numbers = #tpu.dot_dimension_numbers<[1], [0], [0], [1], [0, 0, 1, 1], [], []>} : vector<16x16xf32>, vector<16x8xf32>, vector<16x8xf32> -> vector<16x8xf32>
    %121 = tpu.concatenate %69, %86, %103, %120 in 1 : vector<16x8xf32>, vector<16x8xf32>, vector<16x8xf32>, vector<16x8xf32> -> vector<16x32xf32>
    %cst_56 = arith.constant dense<0.000000e+00> : vector<16x32xf32>
    %122 = tpu.matmul %121, %16, %cst_56 {dimension_numbers = #tpu.dot_dimension_numbers<[1], [0], [0], [1], [0, 0, 1, 1], [], []>} : vector<16x32xf32>, vector<32x32xf32>, vector<16x32xf32> -> vector<16x32xf32>
    %123 = vector.broadcast %46 : vector<1x32xf32> to vector<16x32xf32>
    %124 = arith.addf %122, %123 : vector<16x32xf32>
    %125 = arith.addf %9, %124 : vector<16x32xf32>
    %126 = vector.extract_strided_slice %22 {offsets = [6, 0], sizes = [1, 32], strides = [1, 1]} : vector<8x128xf32> to vector<1x32xf32>
    %127 = vector.extract_strided_slice %22 {offsets = [7, 0], sizes = [1, 32], strides = [1, 1]} : vector<8x128xf32> to vector<1x32xf32>
    %cst_57 = arith.constant dense<0.000000e+00> : vector<16xf32>
    %128 = vector.multi_reduction <add>, %125, %cst_57 [1] : vector<16x32xf32> to vector<16xf32>
    %129 = vector.shape_cast %128 : vector<16xf32> to vector<16x1xf32>
    %cst_58 = arith.constant 3.200000e+01 : f32
    %130 = vector.broadcast %cst_58 : f32 to vector<16x1xf32>
    %131 = arith.divf %129, %130 : vector<16x1xf32>
    %132 = vector.broadcast %131 : vector<16x1xf32> to vector<16x32xf32>
    %133 = arith.subf %125, %132 : vector<16x32xf32>
    %134 = arith.mulf %133, %133 : vector<16x32xf32>
    %cst_59 = arith.constant dense<0.000000e+00> : vector<16xf32>
    %135 = vector.multi_reduction <add>, %134, %cst_59 [1] : vector<16x32xf32> to vector<16xf32>
    %136 = vector.shape_cast %135 : vector<16xf32> to vector<16x1xf32>
    %cst_60 = arith.constant 3.200000e+01 : f32
    %137 = vector.broadcast %cst_60 : f32 to vector<16x1xf32>
    %138 = arith.divf %136, %137 : vector<16x1xf32>
    %cst_61 = arith.constant 9.99999974E-6 : f32
    %139 = vector.broadcast %cst_61 : f32 to vector<16x1xf32>
    %140 = arith.addf %138, %139 : vector<16x1xf32>
    %141 = math.rsqrt %140 : vector<16x1xf32>
    %142 = vector.broadcast %141 : vector<16x1xf32> to vector<16x32xf32>
    %143 = arith.mulf %133, %142 : vector<16x32xf32>
    %144 = vector.broadcast %126 : vector<1x32xf32> to vector<16x32xf32>
    %145 = arith.mulf %143, %144 : vector<16x32xf32>
    %146 = vector.broadcast %127 : vector<1x32xf32> to vector<16x32xf32>
    %147 = arith.addf %145, %146 : vector<16x32xf32>
    %cst_62 = arith.constant dense<0.000000e+00> : vector<16x64xf32>
    %148 = tpu.matmul %147, %18, %cst_62 {dimension_numbers = #tpu.dot_dimension_numbers<[1], [0], [0], [1], [0, 0, 1, 1], [], []>} : vector<16x32xf32>, vector<32x64xf32>, vector<16x64xf32> -> vector<16x64xf32>
    %149 = vector.extract_strided_slice %22 {offsets = [2, 0], sizes = [1, 64], strides = [1, 1]} : vector<8x128xf32> to vector<1x64xf32>
    %150 = vector.broadcast %149 : vector<1x64xf32> to vector<16x64xf32>
    %151 = arith.addf %148, %150 : vector<16x64xf32>
    %152 = arith.mulf %151, %151 : vector<16x64xf32>
    %153 = arith.mulf %151, %152 : vector<16x64xf32>
    %cst_63 = arith.constant 4.471500e-02 : f32
    %154 = vector.broadcast %cst_63 : f32 to vector<16x64xf32>
    %155 = arith.mulf %154, %153 : vector<16x64xf32>
    %156 = arith.addf %151, %155 : vector<16x64xf32>
    %cst_64 = arith.constant 0.797884583 : f32
    %157 = vector.broadcast %cst_64 : f32 to vector<16x64xf32>
    %158 = arith.mulf %157, %156 : vector<16x64xf32>
    %159 = math.tanh %158 : vector<16x64xf32>
    %cst_65 = arith.constant 1.000000e+00 : f32
    %160 = vector.broadcast %cst_65 : f32 to vector<16x64xf32>
    %161 = arith.addf %160, %159 : vector<16x64xf32>
    %cst_66 = arith.constant 5.000000e-01 : f32
    %162 = vector.broadcast %cst_66 : f32 to vector<16x64xf32>
    %163 = arith.mulf %162, %161 : vector<16x64xf32>
    %164 = arith.mulf %151, %163 : vector<16x64xf32>
    %cst_67 = arith.constant dense<0.000000e+00> : vector<16x32xf32>
    %165 = tpu.matmul %164, %20, %cst_67 {dimension_numbers = #tpu.dot_dimension_numbers<[1], [0], [0], [1], [0, 0, 1, 1], [], []>} : vector<16x64xf32>, vector<64x32xf32>, vector<16x32xf32> -> vector<16x32xf32>
    %166 = arith.addf %125, %165 : vector<16x32xf32>
    %167 = vector.extract_strided_slice %22 {offsets = [3, 0], sizes = [1, 32], strides = [1, 1]} : vector<8x128xf32> to vector<1x32xf32>
    %168 = vector.broadcast %167 : vector<1x32xf32> to vector<16x32xf32>
    %169 = arith.addf %166, %168 : vector<16x32xf32>
    %c1 = arith.constant 1 : index
    %c0_68 = arith.constant 0 : index
    %c0_69 = arith.constant 0 : index
    %170 = vector.load %arg9[%c1, %c0_68, %c0_69] : memref<2x32x96xf32, #tpu.memory_space<vmem>>, vector<1x32x96xf32>
    %171 = vector.shape_cast %170 : vector<1x32x96xf32> to vector<32x96xf32>
    %c1_70 = arith.constant 1 : index
    %c0_71 = arith.constant 0 : index
    %c0_72 = arith.constant 0 : index
    %172 = vector.load %arg10[%c1_70, %c0_71, %c0_72] : memref<2x32x32xf32, #tpu.memory_space<vmem>>, vector<1x32x32xf32>
    %173 = vector.shape_cast %172 : vector<1x32x32xf32> to vector<32x32xf32>
    %c1_73 = arith.constant 1 : index
    %c0_74 = arith.constant 0 : index
    %c0_75 = arith.constant 0 : index
    %174 = vector.load %arg11[%c1_73, %c0_74, %c0_75] : memref<2x32x64xf32, #tpu.memory_space<vmem>>, vector<1x32x64xf32>
    %175 = vector.shape_cast %174 : vector<1x32x64xf32> to vector<32x64xf32>
    %c1_76 = arith.constant 1 : index
    %c0_77 = arith.constant 0 : index
    %c0_78 = arith.constant 0 : index
    %176 = vector.load %arg12[%c1_76, %c0_77, %c0_78] : memref<2x64x32xf32, #tpu.memory_space<vmem>>, vector<1x64x32xf32>
    %177 = vector.shape_cast %176 : vector<1x64x32xf32> to vector<64x32xf32>
    %c1_79 = arith.constant 1 : index
    %c0_80 = arith.constant 0 : index
    %c0_81 = arith.constant 0 : index
    %178 = vector.load %arg13[%c1_79, %c0_80, %c0_81] : memref<2x8x128xf32, #tpu.memory_space<vmem>>, vector<1x8x128xf32>
    %179 = vector.shape_cast %178 : vector<1x8x128xf32> to vector<8x128xf32>
    %180 = vector.extract_strided_slice %179 {offsets = [4, 0], sizes = [1, 32], strides = [1, 1]} : vector<8x128xf32> to vector<1x32xf32>
    %181 = vector.extract_strided_slice %179 {offsets = [5, 0], sizes = [1, 32], strides = [1, 1]} : vector<8x128xf32> to vector<1x32xf32>
    %cst_82 = arith.constant dense<0.000000e+00> : vector<16xf32>
    %182 = vector.multi_reduction <add>, %169, %cst_82 [1] : vector<16x32xf32> to vector<16xf32>
    %183 = vector.shape_cast %182 : vector<16xf32> to vector<16x1xf32>
    %cst_83 = arith.constant 3.200000e+01 : f32
    %184 = vector.broadcast %cst_83 : f32 to vector<16x1xf32>
    %185 = arith.divf %183, %184 : vector<16x1xf32>
    %186 = vector.broadcast %185 : vector<16x1xf32> to vector<16x32xf32>
    %187 = arith.subf %169, %186 : vector<16x32xf32>
    %188 = arith.mulf %187, %187 : vector<16x32xf32>
    %cst_84 = arith.constant dense<0.000000e+00> : vector<16xf32>
    %189 = vector.multi_reduction <add>, %188, %cst_84 [1] : vector<16x32xf32> to vector<16xf32>
    %190 = vector.shape_cast %189 : vector<16xf32> to vector<16x1xf32>
    %cst_85 = arith.constant 3.200000e+01 : f32
    %191 = vector.broadcast %cst_85 : f32 to vector<16x1xf32>
    %192 = arith.divf %190, %191 : vector<16x1xf32>
    %cst_86 = arith.constant 9.99999974E-6 : f32
    %193 = vector.broadcast %cst_86 : f32 to vector<16x1xf32>
    %194 = arith.addf %192, %193 : vector<16x1xf32>
    %195 = math.rsqrt %194 : vector<16x1xf32>
    %196 = vector.broadcast %195 : vector<16x1xf32> to vector<16x32xf32>
    %197 = arith.mulf %187, %196 : vector<16x32xf32>
    %198 = vector.broadcast %180 : vector<1x32xf32> to vector<16x32xf32>
    %199 = arith.mulf %197, %198 : vector<16x32xf32>
    %200 = vector.broadcast %181 : vector<1x32xf32> to vector<16x32xf32>
    %201 = arith.addf %199, %200 : vector<16x32xf32>
    %202 = vector.extract_strided_slice %179 {offsets = [0, 0], sizes = [1, 96], strides = [1, 1]} : vector<8x128xf32> to vector<1x96xf32>
    %203 = vector.extract_strided_slice %179 {offsets = [1, 0], sizes = [1, 32], strides = [1, 1]} : vector<8x128xf32> to vector<1x32xf32>
    %cst_87 = arith.constant dense<0.000000e+00> : vector<16x96xf32>
    %204 = tpu.matmul %201, %171, %cst_87 {dimension_numbers = #tpu.dot_dimension_numbers<[1], [0], [0], [1], [0, 0, 1, 1], [], []>} : vector<16x32xf32>, vector<32x96xf32>, vector<16x96xf32> -> vector<16x96xf32>
    %205 = vector.broadcast %202 : vector<1x96xf32> to vector<16x96xf32>
    %206 = arith.addf %204, %205 : vector<16x96xf32>
    %207 = vector.extract_strided_slice %206 {offsets = [0, 0], sizes = [16, 32], strides = [1, 1]} : vector<16x96xf32> to vector<16x32xf32>
    %208 = vector.extract_strided_slice %206 {offsets = [0, 32], sizes = [16, 32], strides = [1, 1]} : vector<16x96xf32> to vector<16x32xf32>
    %209 = vector.extract_strided_slice %206 {offsets = [0, 64], sizes = [16, 32], strides = [1, 1]} : vector<16x96xf32> to vector<16x32xf32>
    %210 = vector.extract_strided_slice %207 {offsets = [0, 0], sizes = [16, 8], strides = [1, 1]} : vector<16x32xf32> to vector<16x8xf32>
    %211 = vector.extract_strided_slice %208 {offsets = [0, 0], sizes = [16, 8], strides = [1, 1]} : vector<16x32xf32> to vector<16x8xf32>
    %cst_88 = arith.constant dense<0.000000e+00> : vector<16x16xf32>
    %212 = tpu.matmul %210, %211, %cst_88 {dimension_numbers = #tpu.dot_dimension_numbers<[1], [1], [0], [0], [0, 0, 1, 0], [], []>} : vector<16x8xf32>, vector<16x8xf32>, vector<16x16xf32> -> vector<16x16xf32>
    %cst_89 = arith.constant 0.353553385 : f32
    %213 = vector.broadcast %cst_89 : f32 to vector<16x16xf32>
    %214 = arith.mulf %212, %213 : vector<16x16xf32>
    %cst_90 = arith.constant dense<0xFF800000> : vector<16xf32>
    %215 = vector.multi_reduction <maximumf>, %214, %cst_90 [1] : vector<16x16xf32> to vector<16xf32>
    %216 = vector.shape_cast %215 : vector<16xf32> to vector<16x1xf32>
    %217 = vector.broadcast %216 : vector<16x1xf32> to vector<16x16xf32>
    %218 = arith.subf %214, %217 : vector<16x16xf32>
    %219 = math.exp %218 : vector<16x16xf32>
    %cst_91 = arith.constant dense<0.000000e+00> : vector<16xf32>
    %220 = vector.multi_reduction <add>, %219, %cst_91 [1] : vector<16x16xf32> to vector<16xf32>
    %221 = vector.shape_cast %220 : vector<16xf32> to vector<16x1xf32>
    %222 = tpu.reciprocal %221 : vector<16x1xf32> -> vector<16x1xf32>
    %223 = vector.broadcast %222 : vector<16x1xf32> to vector<16x16xf32>
    %224 = arith.mulf %219, %223 : vector<16x16xf32>
    %225 = vector.extract_strided_slice %209 {offsets = [0, 0], sizes = [16, 8], strides = [1, 1]} : vector<16x32xf32> to vector<16x8xf32>
    %cst_92 = arith.constant dense<0.000000e+00> : vector<16x8xf32>
    %226 = tpu.matmul %224, %225, %cst_92 {dimension_numbers = #tpu.dot_dimension_numbers<[1], [0], [0], [1], [0, 0, 1, 1], [], []>} : vector<16x16xf32>, vector<16x8xf32>, vector<16x8xf32> -> vector<16x8xf32>
    %227 = vector.extract_strided_slice %207 {offsets = [0, 8], sizes = [16, 8], strides = [1, 1]} : vector<16x32xf32> to vector<16x8xf32>
    %228 = vector.extract_strided_slice %208 {offsets = [0, 8], sizes = [16, 8], strides = [1, 1]} : vector<16x32xf32> to vector<16x8xf32>
    %cst_93 = arith.constant dense<0.000000e+00> : vector<16x16xf32>
    %229 = tpu.matmul %227, %228, %cst_93 {dimension_numbers = #tpu.dot_dimension_numbers<[1], [1], [0], [0], [0, 0, 1, 0], [], []>} : vector<16x8xf32>, vector<16x8xf32>, vector<16x16xf32> -> vector<16x16xf32>
    %cst_94 = arith.constant 0.353553385 : f32
    %230 = vector.broadcast %cst_94 : f32 to vector<16x16xf32>
    %231 = arith.mulf %229, %230 : vector<16x16xf32>
    %cst_95 = arith.constant dense<0xFF800000> : vector<16xf32>
    %232 = vector.multi_reduction <maximumf>, %231, %cst_95 [1] : vector<16x16xf32> to vector<16xf32>
    %233 = vector.shape_cast %232 : vector<16xf32> to vector<16x1xf32>
    %234 = vector.broadcast %233 : vector<16x1xf32> to vector<16x16xf32>
    %235 = arith.subf %231, %234 : vector<16x16xf32>
    %236 = math.exp %235 : vector<16x16xf32>
    %cst_96 = arith.constant dense<0.000000e+00> : vector<16xf32>
    %237 = vector.multi_reduction <add>, %236, %cst_96 [1] : vector<16x16xf32> to vector<16xf32>
    %238 = vector.shape_cast %237 : vector<16xf32> to vector<16x1xf32>
    %239 = tpu.reciprocal %238 : vector<16x1xf32> -> vector<16x1xf32>
    %240 = vector.broadcast %239 : vector<16x1xf32> to vector<16x16xf32>
    %241 = arith.mulf %236, %240 : vector<16x16xf32>
    %242 = vector.extract_strided_slice %209 {offsets = [0, 8], sizes = [16, 8], strides = [1, 1]} : vector<16x32xf32> to vector<16x8xf32>
    %cst_97 = arith.constant dense<0.000000e+00> : vector<16x8xf32>
    %243 = tpu.matmul %241, %242, %cst_97 {dimension_numbers = #tpu.dot_dimension_numbers<[1], [0], [0], [1], [0, 0, 1, 1], [], []>} : vector<16x16xf32>, vector<16x8xf32>, vector<16x8xf32> -> vector<16x8xf32>
    %244 = vector.extract_strided_slice %207 {offsets = [0, 16], sizes = [16, 8], strides = [1, 1]} : vector<16x32xf32> to vector<16x8xf32>
    %245 = vector.extract_strided_slice %208 {offsets = [0, 16], sizes = [16, 8], strides = [1, 1]} : vector<16x32xf32> to vector<16x8xf32>
    %cst_98 = arith.constant dense<0.000000e+00> : vector<16x16xf32>
    %246 = tpu.matmul %244, %245, %cst_98 {dimension_numbers = #tpu.dot_dimension_numbers<[1], [1], [0], [0], [0, 0, 1, 0], [], []>} : vector<16x8xf32>, vector<16x8xf32>, vector<16x16xf32> -> vector<16x16xf32>
    %cst_99 = arith.constant 0.353553385 : f32
    %247 = vector.broadcast %cst_99 : f32 to vector<16x16xf32>
    %248 = arith.mulf %246, %247 : vector<16x16xf32>
    %cst_100 = arith.constant dense<0xFF800000> : vector<16xf32>
    %249 = vector.multi_reduction <maximumf>, %248, %cst_100 [1] : vector<16x16xf32> to vector<16xf32>
    %250 = vector.shape_cast %249 : vector<16xf32> to vector<16x1xf32>
    %251 = vector.broadcast %250 : vector<16x1xf32> to vector<16x16xf32>
    %252 = arith.subf %248, %251 : vector<16x16xf32>
    %253 = math.exp %252 : vector<16x16xf32>
    %cst_101 = arith.constant dense<0.000000e+00> : vector<16xf32>
    %254 = vector.multi_reduction <add>, %253, %cst_101 [1] : vector<16x16xf32> to vector<16xf32>
    %255 = vector.shape_cast %254 : vector<16xf32> to vector<16x1xf32>
    %256 = tpu.reciprocal %255 : vector<16x1xf32> -> vector<16x1xf32>
    %257 = vector.broadcast %256 : vector<16x1xf32> to vector<16x16xf32>
    %258 = arith.mulf %253, %257 : vector<16x16xf32>
    %259 = vector.extract_strided_slice %209 {offsets = [0, 16], sizes = [16, 8], strides = [1, 1]} : vector<16x32xf32> to vector<16x8xf32>
    %cst_102 = arith.constant dense<0.000000e+00> : vector<16x8xf32>
    %260 = tpu.matmul %258, %259, %cst_102 {dimension_numbers = #tpu.dot_dimension_numbers<[1], [0], [0], [1], [0, 0, 1, 1], [], []>} : vector<16x16xf32>, vector<16x8xf32>, vector<16x8xf32> -> vector<16x8xf32>
    %261 = vector.extract_strided_slice %207 {offsets = [0, 24], sizes = [16, 8], strides = [1, 1]} : vector<16x32xf32> to vector<16x8xf32>
    %262 = vector.extract_strided_slice %208 {offsets = [0, 24], sizes = [16, 8], strides = [1, 1]} : vector<16x32xf32> to vector<16x8xf32>
    %cst_103 = arith.constant dense<0.000000e+00> : vector<16x16xf32>
    %263 = tpu.matmul %261, %262, %cst_103 {dimension_numbers = #tpu.dot_dimension_numbers<[1], [1], [0], [0], [0, 0, 1, 0], [], []>} : vector<16x8xf32>, vector<16x8xf32>, vector<16x16xf32> -> vector<16x16xf32>
    %cst_104 = arith.constant 0.353553385 : f32
    %264 = vector.broadcast %cst_104 : f32 to vector<16x16xf32>
    %265 = arith.mulf %263, %264 : vector<16x16xf32>
    %cst_105 = arith.constant dense<0xFF800000> : vector<16xf32>
    %266 = vector.multi_reduction <maximumf>, %265, %cst_105 [1] : vector<16x16xf32> to vector<16xf32>
    %267 = vector.shape_cast %266 : vector<16xf32> to vector<16x1xf32>
    %268 = vector.broadcast %267 : vector<16x1xf32> to vector<16x16xf32>
    %269 = arith.subf %265, %268 : vector<16x16xf32>
    %270 = math.exp %269 : vector<16x16xf32>
    %cst_106 = arith.constant dense<0.000000e+00> : vector<16xf32>
    %271 = vector.multi_reduction <add>, %270, %cst_106 [1] : vector<16x16xf32> to vector<16xf32>
    %272 = vector.shape_cast %271 : vector<16xf32> to vector<16x1xf32>
    %273 = tpu.reciprocal %272 : vector<16x1xf32> -> vector<16x1xf32>
    %274 = vector.broadcast %273 : vector<16x1xf32> to vector<16x16xf32>
    %275 = arith.mulf %270, %274 : vector<16x16xf32>
    %276 = vector.extract_strided_slice %209 {offsets = [0, 24], sizes = [16, 8], strides = [1, 1]} : vector<16x32xf32> to vector<16x8xf32>
    %cst_107 = arith.constant dense<0.000000e+00> : vector<16x8xf32>
    %277 = tpu.matmul %275, %276, %cst_107 {dimension_numbers = #tpu.dot_dimension_numbers<[1], [0], [0], [1], [0, 0, 1, 1], [], []>} : vector<16x16xf32>, vector<16x8xf32>, vector<16x8xf32> -> vector<16x8xf32>
    %278 = tpu.concatenate %226, %243, %260, %277 in 1 : vector<16x8xf32>, vector<16x8xf32>, vector<16x8xf32>, vector<16x8xf32> -> vector<16x32xf32>
    %cst_108 = arith.constant dense<0.000000e+00> : vector<16x32xf32>
    %279 = tpu.matmul %278, %173, %cst_108 {dimension_numbers = #tpu.dot_dimension_numbers<[1], [0], [0], [1], [0, 0, 1, 1], [], []>} : vector<16x32xf32>, vector<32x32xf32>, vector<16x32xf32> -> vector<16x32xf32>
    %280 = vector.broadcast %203 : vector<1x32xf32> to vector<16x32xf32>
    %281 = arith.addf %279, %280 : vector<16x32xf32>
    %282 = arith.addf %169, %281 : vector<16x32xf32>
    %283 = vector.extract_strided_slice %179 {offsets = [6, 0], sizes = [1, 32], strides = [1, 1]} : vector<8x128xf32> to vector<1x32xf32>
    %284 = vector.extract_strided_slice %179 {offsets = [7, 0], sizes = [1, 32], strides = [1, 1]} : vector<8x128xf32> to vector<1x32xf32>
    %cst_109 = arith.constant dense<0.000000e+00> : vector<16xf32>
    %285 = vector.multi_reduction <add>, %282, %cst_109 [1] : vector<16x32xf32> to vector<16xf32>
    %286 = vector.shape_cast %285 : vector<16xf32> to vector<16x1xf32>
    %cst_110 = arith.constant 3.200000e+01 : f32
    %287 = vector.broadcast %cst_110 : f32 to vector<16x1xf32>
    %288 = arith.divf %286, %287 : vector<16x1xf32>
    %289 = vector.broadcast %288 : vector<16x1xf32> to vector<16x32xf32>
    %290 = arith.subf %282, %289 : vector<16x32xf32>
    %291 = arith.mulf %290, %290 : vector<16x32xf32>
    %cst_111 = arith.constant dense<0.000000e+00> : vector<16xf32>
    %292 = vector.multi_reduction <add>, %291, %cst_111 [1] : vector<16x32xf32> to vector<16xf32>
    %293 = vector.shape_cast %292 : vector<16xf32> to vector<16x1xf32>
    %cst_112 = arith.constant 3.200000e+01 : f32
    %294 = vector.broadcast %cst_112 : f32 to vector<16x1xf32>
    %295 = arith.divf %293, %294 : vector<16x1xf32>
    %cst_113 = arith.constant 9.99999974E-6 : f32
    %296 = vector.broadcast %cst_113 : f32 to vector<16x1xf32>
    %297 = arith.addf %295, %296 : vector<16x1xf32>
    %298 = math.rsqrt %297 : vector<16x1xf32>
    %299 = vector.broadcast %298 : vector<16x1xf32> to vector<16x32xf32>
    %300 = arith.mulf %290, %299 : vector<16x32xf32>
    %301 = vector.broadcast %283 : vector<1x32xf32> to vector<16x32xf32>
    %302 = arith.mulf %300, %301 : vector<16x32xf32>
    %303 = vector.broadcast %284 : vector<1x32xf32> to vector<16x32xf32>
    %304 = arith.addf %302, %303 : vector<16x32xf32>
    %cst_114 = arith.constant dense<0.000000e+00> : vector<16x64xf32>
    %305 = tpu.matmul %304, %175, %cst_114 {dimension_numbers = #tpu.dot_dimension_numbers<[1], [0], [0], [1], [0, 0, 1, 1], [], []>} : vector<16x32xf32>, vector<32x64xf32>, vector<16x64xf32> -> vector<16x64xf32>
    %306 = vector.extract_strided_slice %179 {offsets = [2, 0], sizes = [1, 64], strides = [1, 1]} : vector<8x128xf32> to vector<1x64xf32>
    %307 = vector.broadcast %306 : vector<1x64xf32> to vector<16x64xf32>
    %308 = arith.addf %305, %307 : vector<16x64xf32>
    %309 = arith.mulf %308, %308 : vector<16x64xf32>
    %310 = arith.mulf %308, %309 : vector<16x64xf32>
    %cst_115 = arith.constant 4.471500e-02 : f32
    %311 = vector.broadcast %cst_115 : f32 to vector<16x64xf32>
    %312 = arith.mulf %311, %310 : vector<16x64xf32>
    %313 = arith.addf %308, %312 : vector<16x64xf32>
    %cst_116 = arith.constant 0.797884583 : f32
    %314 = vector.broadcast %cst_116 : f32 to vector<16x64xf32>
    %315 = arith.mulf %314, %313 : vector<16x64xf32>
    %316 = math.tanh %315 : vector<16x64xf32>
    %cst_117 = arith.constant 1.000000e+00 : f32
    %317 = vector.broadcast %cst_117 : f32 to vector<16x64xf32>
    %318 = arith.addf %317, %316 : vector<16x64xf32>
    %cst_118 = arith.constant 5.000000e-01 : f32
    %319 = vector.broadcast %cst_118 : f32 to vector<16x64xf32>
    %320 = arith.mulf %319, %318 : vector<16x64xf32>
    %321 = arith.mulf %308, %320 : vector<16x64xf32>
    %cst_119 = arith.constant dense<0.000000e+00> : vector<16x32xf32>
    %322 = tpu.matmul %321, %177, %cst_119 {dimension_numbers = #tpu.dot_dimension_numbers<[1], [0], [0], [1], [0, 0, 1, 1], [], []>} : vector<16x64xf32>, vector<64x32xf32>, vector<16x32xf32> -> vector<16x32xf32>
    %323 = arith.addf %282, %322 : vector<16x32xf32>
    %324 = vector.extract_strided_slice %179 {offsets = [3, 0], sizes = [1, 32], strides = [1, 1]} : vector<8x128xf32> to vector<1x32xf32>
    %325 = vector.broadcast %324 : vector<1x32xf32> to vector<16x32xf32>
    %326 = arith.addf %323, %325 : vector<16x32xf32>
    %327 = vector.extract_strided_slice %0 {offsets = [0, 0], sizes = [1, 32], strides = [1, 1]} : vector<8x128xf32> to vector<1x32xf32>
    %328 = vector.extract_strided_slice %0 {offsets = [1, 0], sizes = [1, 32], strides = [1, 1]} : vector<8x128xf32> to vector<1x32xf32>
    %cst_120 = arith.constant dense<0.000000e+00> : vector<16xf32>
    %329 = vector.multi_reduction <add>, %326, %cst_120 [1] : vector<16x32xf32> to vector<16xf32>
    %330 = vector.shape_cast %329 : vector<16xf32> to vector<16x1xf32>
    %cst_121 = arith.constant 3.200000e+01 : f32
    %331 = vector.broadcast %cst_121 : f32 to vector<16x1xf32>
    %332 = arith.divf %330, %331 : vector<16x1xf32>
    %333 = vector.broadcast %332 : vector<16x1xf32> to vector<16x32xf32>
    %334 = arith.subf %326, %333 : vector<16x32xf32>
    %335 = arith.mulf %334, %334 : vector<16x32xf32>
    %cst_122 = arith.constant dense<0.000000e+00> : vector<16xf32>
    %336 = vector.multi_reduction <add>, %335, %cst_122 [1] : vector<16x32xf32> to vector<16xf32>
    %337 = vector.shape_cast %336 : vector<16xf32> to vector<16x1xf32>
    %cst_123 = arith.constant 3.200000e+01 : f32
    %338 = vector.broadcast %cst_123 : f32 to vector<16x1xf32>
    %339 = arith.divf %337, %338 : vector<16x1xf32>
    %cst_124 = arith.constant 9.99999974E-6 : f32
    %340 = vector.broadcast %cst_124 : f32 to vector<16x1xf32>
    %341 = arith.addf %339, %340 : vector<16x1xf32>
    %342 = math.rsqrt %341 : vector<16x1xf32>
    %343 = vector.broadcast %342 : vector<16x1xf32> to vector<16x32xf32>
    %344 = arith.mulf %334, %343 : vector<16x32xf32>
    %345 = vector.broadcast %327 : vector<1x32xf32> to vector<16x32xf32>
    %346 = arith.mulf %344, %345 : vector<16x32xf32>
    %347 = vector.broadcast %328 : vector<1x32xf32> to vector<16x32xf32>
    %348 = arith.addf %346, %347 : vector<16x32xf32>
    %c0_125 = arith.constant 0 : index
    %c0_126 = arith.constant 0 : index
    %c0_127 = arith.constant 0 : index
    %349 = vector.load %arg27[%c0_125, %c0_126, %c0_127] : memref<1x16x32xf32, #tpu.memory_space<vmem>>, vector<1x16x32xf32>
    %350 = vector.shape_cast %349 : vector<1x16x32xf32> to vector<16x32xf32>
    %351 = vector.shape_cast %348 : vector<16x32xf32> to vector<1x16x32xf32>
    tpu.vector_store %arg27[%c0_125, %c0_126, %c0_127], %351 {strides = array<i32>} : memref<1x16x32xf32, #tpu.memory_space<vmem>>, vector<1x16x32xf32>,
    %c0_128 = arith.constant 0 : index
    %c0_129 = arith.constant 0 : index
    %c0_130 = arith.constant 0 : index
    %352 = vector.load %arg3[%c0_128, %c0_129, %c0_130] : memref<1x8x32xf32, #tpu.memory_space<vmem>>, vector<1x8x32xf32>
    %353 = vector.shape_cast %352 : vector<1x8x32xf32> to vector<8x32xf32>
    %354 = tpu.concatenate %348, %353 in 0 : vector<16x32xf32>, vector<8x32xf32> -> vector<24x32xf32>
    %c0_131 = arith.constant 0 : index
    %c0_132 = arith.constant 0 : index
    %c0_133 = arith.constant 0 : index
    %355 = vector.load %arg14[%c0_131, %c0_132, %c0_133] : memref<2x32x96xf32, #tpu.memory_space<vmem>>, vector<1x32x96xf32>
    %356 = vector.shape_cast %355 : vector<1x32x96xf32> to vector<32x96xf32>
    %c0_134 = arith.constant 0 : index
    %c0_135 = arith.constant 0 : index
    %c0_136 = arith.constant 0 : index
    %357 = vector.load %arg15[%c0_134, %c0_135, %c0_136] : memref<2x32x32xf32, #tpu.memory_space<vmem>>, vector<1x32x32xf32>
    %358 = vector.shape_cast %357 : vector<1x32x32xf32> to vector<32x32xf32>
    %c0_137 = arith.constant 0 : index
    %c0_138 = arith.constant 0 : index
    %c0_139 = arith.constant 0 : index
    %359 = vector.load %arg16[%c0_137, %c0_138, %c0_139] : memref<2x32x64xf32, #tpu.memory_space<vmem>>, vector<1x32x64xf32>
    %360 = vector.shape_cast %359 : vector<1x32x64xf32> to vector<32x64xf32>
    %c0_140 = arith.constant 0 : index
    %c0_141 = arith.constant 0 : index
    %c0_142 = arith.constant 0 : index
    %361 = vector.load %arg17[%c0_140, %c0_141, %c0_142] : memref<2x64x32xf32, #tpu.memory_space<vmem>>, vector<1x64x32xf32>
    %362 = vector.shape_cast %361 : vector<1x64x32xf32> to vector<64x32xf32>
    %c0_143 = arith.constant 0 : index
    %c0_144 = arith.constant 0 : index
    %c0_145 = arith.constant 0 : index
    %363 = vector.load %arg18[%c0_143, %c0_144, %c0_145] : memref<2x8x128xf32, #tpu.memory_space<vmem>>, vector<1x8x128xf32>
    %364 = vector.shape_cast %363 : vector<1x8x128xf32> to vector<8x128xf32>
    %365 = vector.extract_strided_slice %364 {offsets = [4, 0], sizes = [1, 32], strides = [1, 1]} : vector<8x128xf32> to vector<1x32xf32>
    %366 = vector.extract_strided_slice %364 {offsets = [5, 0], sizes = [1, 32], strides = [1, 1]} : vector<8x128xf32> to vector<1x32xf32>
    %cst_146 = arith.constant dense<0.000000e+00> : vector<24xf32>
    %367 = vector.multi_reduction <add>, %354, %cst_146 [1] : vector<24x32xf32> to vector<24xf32>
    %368 = vector.shape_cast %367 : vector<24xf32> to vector<24x1xf32>
    %cst_147 = arith.constant 3.200000e+01 : f32
    %369 = vector.broadcast %cst_147 : f32 to vector<24x1xf32>
    %370 = arith.divf %368, %369 : vector<24x1xf32>
    %371 = vector.broadcast %370 : vector<24x1xf32> to vector<24x32xf32>
    %372 = arith.subf %354, %371 : vector<24x32xf32>
    %373 = arith.mulf %372, %372 : vector<24x32xf32>
    %cst_148 = arith.constant dense<0.000000e+00> : vector<24xf32>
    %374 = vector.multi_reduction <add>, %373, %cst_148 [1] : vector<24x32xf32> to vector<24xf32>
    %375 = vector.shape_cast %374 : vector<24xf32> to vector<24x1xf32>
    %cst_149 = arith.constant 3.200000e+01 : f32
    %376 = vector.broadcast %cst_149 : f32 to vector<24x1xf32>
    %377 = arith.divf %375, %376 : vector<24x1xf32>
    %cst_150 = arith.constant 9.99999974E-6 : f32
    %378 = vector.broadcast %cst_150 : f32 to vector<24x1xf32>
    %379 = arith.addf %377, %378 : vector<24x1xf32>
    %380 = math.rsqrt %379 : vector<24x1xf32>
    %381 = vector.broadcast %380 : vector<24x1xf32> to vector<24x32xf32>
    %382 = arith.mulf %372, %381 : vector<24x32xf32>
    %383 = vector.broadcast %365 : vector<1x32xf32> to vector<24x32xf32>
    %384 = arith.mulf %382, %383 : vector<24x32xf32>
    %385 = vector.broadcast %366 : vector<1x32xf32> to vector<24x32xf32>
    %386 = arith.addf %384, %385 : vector<24x32xf32>
    %387 = vector.extract_strided_slice %364 {offsets = [0, 0], sizes = [1, 96], strides = [1, 1]} : vector<8x128xf32> to vector<1x96xf32>
    %388 = vector.extract_strided_slice %364 {offsets = [1, 0], sizes = [1, 32], strides = [1, 1]} : vector<8x128xf32> to vector<1x32xf32>
    %cst_151 = arith.constant dense<0.000000e+00> : vector<24x96xf32>
    %389 = tpu.matmul %386, %356, %cst_151 {dimension_numbers = #tpu.dot_dimension_numbers<[1], [0], [0], [1], [0, 0, 1, 1], [], []>} : vector<24x32xf32>, vector<32x96xf32>, vector<24x96xf32> -> vector<24x96xf32>
    %390 = vector.broadcast %387 : vector<1x96xf32> to vector<24x96xf32>
    %391 = arith.addf %389, %390 : vector<24x96xf32>
    %392 = vector.extract_strided_slice %391 {offsets = [0, 0], sizes = [24, 32], strides = [1, 1]} : vector<24x96xf32> to vector<24x32xf32>
    %393 = vector.extract_strided_slice %391 {offsets = [0, 32], sizes = [24, 32], strides = [1, 1]} : vector<24x96xf32> to vector<24x32xf32>
    %394 = vector.extract_strided_slice %391 {offsets = [0, 64], sizes = [24, 32], strides = [1, 1]} : vector<24x96xf32> to vector<24x32xf32>
    %395 = vector.extract_strided_slice %392 {offsets = [0, 0], sizes = [24, 8], strides = [1, 1]} : vector<24x32xf32> to vector<24x8xf32>
    %396 = vector.extract_strided_slice %393 {offsets = [0, 0], sizes = [24, 8], strides = [1, 1]} : vector<24x32xf32> to vector<24x8xf32>
    %cst_152 = arith.constant dense<0.000000e+00> : vector<24x24xf32>
    %397 = tpu.matmul %395, %396, %cst_152 {dimension_numbers = #tpu.dot_dimension_numbers<[1], [1], [0], [0], [0, 0, 1, 0], [], []>} : vector<24x8xf32>, vector<24x8xf32>, vector<24x24xf32> -> vector<24x24xf32>
    %cst_153 = arith.constant 0.353553385 : f32
    %398 = vector.broadcast %cst_153 : f32 to vector<24x24xf32>
    %399 = arith.mulf %397, %398 : vector<24x24xf32>
    %400 = vector.broadcast %2 : vector<1x24xf32> to vector<24x24xf32>
    %401 = arith.addf %399, %400 : vector<24x24xf32>
    %cst_154 = arith.constant dense<0xFF800000> : vector<24xf32>
    %402 = vector.multi_reduction <maximumf>, %401, %cst_154 [1] : vector<24x24xf32> to vector<24xf32>
    %403 = vector.shape_cast %402 : vector<24xf32> to vector<24x1xf32>
    %404 = vector.broadcast %403 : vector<24x1xf32> to vector<24x24xf32>
    %405 = arith.subf %401, %404 : vector<24x24xf32>
    %406 = math.exp %405 : vector<24x24xf32>
    %cst_155 = arith.constant dense<0.000000e+00> : vector<24xf32>
    %407 = vector.multi_reduction <add>, %406, %cst_155 [1] : vector<24x24xf32> to vector<24xf32>
    %408 = vector.shape_cast %407 : vector<24xf32> to vector<24x1xf32>
    %409 = tpu.reciprocal %408 : vector<24x1xf32> -> vector<24x1xf32>
    %410 = vector.broadcast %409 : vector<24x1xf32> to vector<24x24xf32>
    %411 = arith.mulf %406, %410 : vector<24x24xf32>
    %412 = vector.extract_strided_slice %394 {offsets = [0, 0], sizes = [24, 8], strides = [1, 1]} : vector<24x32xf32> to vector<24x8xf32>
    %cst_156 = arith.constant dense<0.000000e+00> : vector<24x8xf32>
    %413 = tpu.matmul %411, %412, %cst_156 {dimension_numbers = #tpu.dot_dimension_numbers<[1], [0], [0], [1], [0, 0, 1, 1], [], []>} : vector<24x24xf32>, vector<24x8xf32>, vector<24x8xf32> -> vector<24x8xf32>
    %414 = vector.extract_strided_slice %392 {offsets = [0, 8], sizes = [24, 8], strides = [1, 1]} : vector<24x32xf32> to vector<24x8xf32>
    %415 = vector.extract_strided_slice %393 {offsets = [0, 8], sizes = [24, 8], strides = [1, 1]} : vector<24x32xf32> to vector<24x8xf32>
    %cst_157 = arith.constant dense<0.000000e+00> : vector<24x24xf32>
    %416 = tpu.matmul %414, %415, %cst_157 {dimension_numbers = #tpu.dot_dimension_numbers<[1], [1], [0], [0], [0, 0, 1, 0], [], []>} : vector<24x8xf32>, vector<24x8xf32>, vector<24x24xf32> -> vector<24x24xf32>
    %cst_158 = arith.constant 0.353553385 : f32
    %417 = vector.broadcast %cst_158 : f32 to vector<24x24xf32>
    %418 = arith.mulf %416, %417 : vector<24x24xf32>
    %419 = vector.broadcast %2 : vector<1x24xf32> to vector<24x24xf32>
    %420 = arith.addf %418, %419 : vector<24x24xf32>
    %cst_159 = arith.constant dense<0xFF800000> : vector<24xf32>
    %421 = vector.multi_reduction <maximumf>, %420, %cst_159 [1] : vector<24x24xf32> to vector<24xf32>
    %422 = vector.shape_cast %421 : vector<24xf32> to vector<24x1xf32>
    %423 = vector.broadcast %422 : vector<24x1xf32> to vector<24x24xf32>
    %424 = arith.subf %420, %423 : vector<24x24xf32>
    %425 = math.exp %424 : vector<24x24xf32>
    %cst_160 = arith.constant dense<0.000000e+00> : vector<24xf32>
    %426 = vector.multi_reduction <add>, %425, %cst_160 [1] : vector<24x24xf32> to vector<24xf32>
    %427 = vector.shape_cast %426 : vector<24xf32> to vector<24x1xf32>
    %428 = tpu.reciprocal %427 : vector<24x1xf32> -> vector<24x1xf32>
    %429 = vector.broadcast %428 : vector<24x1xf32> to vector<24x24xf32>
    %430 = arith.mulf %425, %429 : vector<24x24xf32>
    %431 = vector.extract_strided_slice %394 {offsets = [0, 8], sizes = [24, 8], strides = [1, 1]} : vector<24x32xf32> to vector<24x8xf32>
    %cst_161 = arith.constant dense<0.000000e+00> : vector<24x8xf32>
    %432 = tpu.matmul %430, %431, %cst_161 {dimension_numbers = #tpu.dot_dimension_numbers<[1], [0], [0], [1], [0, 0, 1, 1], [], []>} : vector<24x24xf32>, vector<24x8xf32>, vector<24x8xf32> -> vector<24x8xf32>
    %433 = vector.extract_strided_slice %392 {offsets = [0, 16], sizes = [24, 8], strides = [1, 1]} : vector<24x32xf32> to vector<24x8xf32>
    %434 = vector.extract_strided_slice %393 {offsets = [0, 16], sizes = [24, 8], strides = [1, 1]} : vector<24x32xf32> to vector<24x8xf32>
    %cst_162 = arith.constant dense<0.000000e+00> : vector<24x24xf32>
    %435 = tpu.matmul %433, %434, %cst_162 {dimension_numbers = #tpu.dot_dimension_numbers<[1], [1], [0], [0], [0, 0, 1, 0], [], []>} : vector<24x8xf32>, vector<24x8xf32>, vector<24x24xf32> -> vector<24x24xf32>
    %cst_163 = arith.constant 0.353553385 : f32
    %436 = vector.broadcast %cst_163 : f32 to vector<24x24xf32>
    %437 = arith.mulf %435, %436 : vector<24x24xf32>
    %438 = vector.broadcast %2 : vector<1x24xf32> to vector<24x24xf32>
    %439 = arith.addf %437, %438 : vector<24x24xf32>
    %cst_164 = arith.constant dense<0xFF800000> : vector<24xf32>
    %440 = vector.multi_reduction <maximumf>, %439, %cst_164 [1] : vector<24x24xf32> to vector<24xf32>
    %441 = vector.shape_cast %440 : vector<24xf32> to vector<24x1xf32>
    %442 = vector.broadcast %441 : vector<24x1xf32> to vector<24x24xf32>
    %443 = arith.subf %439, %442 : vector<24x24xf32>
    %444 = math.exp %443 : vector<24x24xf32>
    %cst_165 = arith.constant dense<0.000000e+00> : vector<24xf32>
    %445 = vector.multi_reduction <add>, %444, %cst_165 [1] : vector<24x24xf32> to vector<24xf32>
    %446 = vector.shape_cast %445 : vector<24xf32> to vector<24x1xf32>
    %447 = tpu.reciprocal %446 : vector<24x1xf32> -> vector<24x1xf32>
    %448 = vector.broadcast %447 : vector<24x1xf32> to vector<24x24xf32>
    %449 = arith.mulf %444, %448 : vector<24x24xf32>
    %450 = vector.extract_strided_slice %394 {offsets = [0, 16], sizes = [24, 8], strides = [1, 1]} : vector<24x32xf32> to vector<24x8xf32>
    %cst_166 = arith.constant dense<0.000000e+00> : vector<24x8xf32>
    %451 = tpu.matmul %449, %450, %cst_166 {dimension_numbers = #tpu.dot_dimension_numbers<[1], [0], [0], [1], [0, 0, 1, 1], [], []>} : vector<24x24xf32>, vector<24x8xf32>, vector<24x8xf32> -> vector<24x8xf32>
    %452 = vector.extract_strided_slice %392 {offsets = [0, 24], sizes = [24, 8], strides = [1, 1]} : vector<24x32xf32> to vector<24x8xf32>
    %453 = vector.extract_strided_slice %393 {offsets = [0, 24], sizes = [24, 8], strides = [1, 1]} : vector<24x32xf32> to vector<24x8xf32>
    %cst_167 = arith.constant dense<0.000000e+00> : vector<24x24xf32>
    %454 = tpu.matmul %452, %453, %cst_167 {dimension_numbers = #tpu.dot_dimension_numbers<[1], [1], [0], [0], [0, 0, 1, 0], [], []>} : vector<24x8xf32>, vector<24x8xf32>, vector<24x24xf32> -> vector<24x24xf32>
    %cst_168 = arith.constant 0.353553385 : f32
    %455 = vector.broadcast %cst_168 : f32 to vector<24x24xf32>
    %456 = arith.mulf %454, %455 : vector<24x24xf32>
    %457 = vector.broadcast %2 : vector<1x24xf32> to vector<24x24xf32>
    %458 = arith.addf %456, %457 : vector<24x24xf32>
    %cst_169 = arith.constant dense<0xFF800000> : vector<24xf32>
    %459 = vector.multi_reduction <maximumf>, %458, %cst_169 [1] : vector<24x24xf32> to vector<24xf32>
    %460 = vector.shape_cast %459 : vector<24xf32> to vector<24x1xf32>
    %461 = vector.broadcast %460 : vector<24x1xf32> to vector<24x24xf32>
    %462 = arith.subf %458, %461 : vector<24x24xf32>
    %463 = math.exp %462 : vector<24x24xf32>
    %cst_170 = arith.constant dense<0.000000e+00> : vector<24xf32>
    %464 = vector.multi_reduction <add>, %463, %cst_170 [1] : vector<24x24xf32> to vector<24xf32>
    %465 = vector.shape_cast %464 : vector<24xf32> to vector<24x1xf32>
    %466 = tpu.reciprocal %465 : vector<24x1xf32> -> vector<24x1xf32>
    %467 = vector.broadcast %466 : vector<24x1xf32> to vector<24x24xf32>
    %468 = arith.mulf %463, %467 : vector<24x24xf32>
    %469 = vector.extract_strided_slice %394 {offsets = [0, 24], sizes = [24, 8], strides = [1, 1]} : vector<24x32xf32> to vector<24x8xf32>
    %cst_171 = arith.constant dense<0.000000e+00> : vector<24x8xf32>
    %470 = tpu.matmul %468, %469, %cst_171 {dimension_numbers = #tpu.dot_dimension_numbers<[1], [0], [0], [1], [0, 0, 1, 1], [], []>} : vector<24x24xf32>, vector<24x8xf32>, vector<24x8xf32> -> vector<24x8xf32>
    %471 = tpu.concatenate %413, %432, %451, %470 in 1 : vector<24x8xf32>, vector<24x8xf32>, vector<24x8xf32>, vector<24x8xf32> -> vector<24x32xf32>
    %cst_172 = arith.constant dense<0.000000e+00> : vector<24x32xf32>
    %472 = tpu.matmul %471, %358, %cst_172 {dimension_numbers = #tpu.dot_dimension_numbers<[1], [0], [0], [1], [0, 0, 1, 1], [], []>} : vector<24x32xf32>, vector<32x32xf32>, vector<24x32xf32> -> vector<24x32xf32>
    %473 = vector.broadcast %388 : vector<1x32xf32> to vector<24x32xf32>
    %474 = arith.addf %472, %473 : vector<24x32xf32>
    %475 = arith.addf %354, %474 : vector<24x32xf32>
    %476 = vector.extract_strided_slice %364 {offsets = [6, 0], sizes = [1, 32], strides = [1, 1]} : vector<8x128xf32> to vector<1x32xf32>
    %477 = vector.extract_strided_slice %364 {offsets = [7, 0], sizes = [1, 32], strides = [1, 1]} : vector<8x128xf32> to vector<1x32xf32>
    %cst_173 = arith.constant dense<0.000000e+00> : vector<24xf32>
    %478 = vector.multi_reduction <add>, %475, %cst_173 [1] : vector<24x32xf32> to vector<24xf32>
    %479 = vector.shape_cast %478 : vector<24xf32> to vector<24x1xf32>
    %cst_174 = arith.constant 3.200000e+01 : f32
    %480 = vector.broadcast %cst_174 : f32 to vector<24x1xf32>
    %481 = arith.divf %479, %480 : vector<24x1xf32>
    %482 = vector.broadcast %481 : vector<24x1xf32> to vector<24x32xf32>
    %483 = arith.subf %475, %482 : vector<24x32xf32>
    %484 = arith.mulf %483, %483 : vector<24x32xf32>
    %cst_175 = arith.constant dense<0.000000e+00> : vector<24xf32>
    %485 = vector.multi_reduction <add>, %484, %cst_175 [1] : vector<24x32xf32> to vector<24xf32>
    %486 = vector.shape_cast %485 : vector<24xf32> to vector<24x1xf32>
    %cst_176 = arith.constant 3.200000e+01 : f32
    %487 = vector.broadcast %cst_176 : f32 to vector<24x1xf32>
    %488 = arith.divf %486, %487 : vector<24x1xf32>
    %cst_177 = arith.constant 9.99999974E-6 : f32
    %489 = vector.broadcast %cst_177 : f32 to vector<24x1xf32>
    %490 = arith.addf %488, %489 : vector<24x1xf32>
    %491 = math.rsqrt %490 : vector<24x1xf32>
    %492 = vector.broadcast %491 : vector<24x1xf32> to vector<24x32xf32>
    %493 = arith.mulf %483, %492 : vector<24x32xf32>
    %494 = vector.broadcast %476 : vector<1x32xf32> to vector<24x32xf32>
    %495 = arith.mulf %493, %494 : vector<24x32xf32>
    %496 = vector.broadcast %477 : vector<1x32xf32> to vector<24x32xf32>
    %497 = arith.addf %495, %496 : vector<24x32xf32>
    %cst_178 = arith.constant dense<0.000000e+00> : vector<24x64xf32>
    %498 = tpu.matmul %497, %360, %cst_178 {dimension_numbers = #tpu.dot_dimension_numbers<[1], [0], [0], [1], [0, 0, 1, 1], [], []>} : vector<24x32xf32>, vector<32x64xf32>, vector<24x64xf32> -> vector<24x64xf32>
    %499 = vector.extract_strided_slice %364 {offsets = [2, 0], sizes = [1, 64], strides = [1, 1]} : vector<8x128xf32> to vector<1x64xf32>
    %500 = vector.broadcast %499 : vector<1x64xf32> to vector<24x64xf32>
    %501 = arith.addf %498, %500 : vector<24x64xf32>
    %502 = arith.mulf %501, %501 : vector<24x64xf32>
    %503 = arith.mulf %501, %502 : vector<24x64xf32>
    %cst_179 = arith.constant 4.471500e-02 : f32
    %504 = vector.broadcast %cst_179 : f32 to vector<24x64xf32>
    %505 = arith.mulf %504, %503 : vector<24x64xf32>
    %506 = arith.addf %501, %505 : vector<24x64xf32>
    %cst_180 = arith.constant 0.797884583 : f32
    %507 = vector.broadcast %cst_180 : f32 to vector<24x64xf32>
    %508 = arith.mulf %507, %506 : vector<24x64xf32>
    %509 = math.tanh %508 : vector<24x64xf32>
    %cst_181 = arith.constant 1.000000e+00 : f32
    %510 = vector.broadcast %cst_181 : f32 to vector<24x64xf32>
    %511 = arith.addf %510, %509 : vector<24x64xf32>
    %cst_182 = arith.constant 5.000000e-01 : f32
    %512 = vector.broadcast %cst_182 : f32 to vector<24x64xf32>
    %513 = arith.mulf %512, %511 : vector<24x64xf32>
    %514 = arith.mulf %501, %513 : vector<24x64xf32>
    %cst_183 = arith.constant dense<0.000000e+00> : vector<24x32xf32>
    %515 = tpu.matmul %514, %362, %cst_183 {dimension_numbers = #tpu.dot_dimension_numbers<[1], [0], [0], [1], [0, 0, 1, 1], [], []>} : vector<24x64xf32>, vector<64x32xf32>, vector<24x32xf32> -> vector<24x32xf32>
    %516 = arith.addf %475, %515 : vector<24x32xf32>
    %517 = vector.extract_strided_slice %364 {offsets = [3, 0], sizes = [1, 32], strides = [1, 1]} : vector<8x128xf32> to vector<1x32xf32>
    %518 = vector.broadcast %517 : vector<1x32xf32> to vector<24x32xf32>
    %519 = arith.addf %516, %518 : vector<24x32xf32>
    %c1_184 = arith.constant 1 : index
    %c0_185 = arith.constant 0 : index
    %c0_186 = arith.constant 0 : index
    %520 = vector.load %arg14[%c1_184, %c0_185, %c0_186] : memref<2x32x96xf32, #tpu.memory_space<vmem>>, vector<1x32x96xf32>
    %521 = vector.shape_cast %520 : vector<1x32x96xf32> to vector<32x96xf32>
    %c1_187 = arith.constant 1 : index
    %c0_188 = arith.constant 0 : index
    %c0_189 = arith.constant 0 : index
    %522 = vector.load %arg15[%c1_187, %c0_188, %c0_189] : memref<2x32x32xf32, #tpu.memory_space<vmem>>, vector<1x32x32xf32>
    %523 = vector.shape_cast %522 : vector<1x32x32xf32> to vector<32x32xf32>
    %c1_190 = arith.constant 1 : index
    %c0_191 = arith.constant 0 : index
    %c0_192 = arith.constant 0 : index
    %524 = vector.load %arg16[%c1_190, %c0_191, %c0_192] : memref<2x32x64xf32, #tpu.memory_space<vmem>>, vector<1x32x64xf32>
    %525 = vector.shape_cast %524 : vector<1x32x64xf32> to vector<32x64xf32>
    %c1_193 = arith.constant 1 : index
    %c0_194 = arith.constant 0 : index
    %c0_195 = arith.constant 0 : index
    %526 = vector.load %arg17[%c1_193, %c0_194, %c0_195] : memref<2x64x32xf32, #tpu.memory_space<vmem>>, vector<1x64x32xf32>
    %527 = vector.shape_cast %526 : vector<1x64x32xf32> to vector<64x32xf32>
    %c1_196 = arith.constant 1 : index
    %c0_197 = arith.constant 0 : index
    %c0_198 = arith.constant 0 : index
    %528 = vector.load %arg18[%c1_196, %c0_197, %c0_198] : memref<2x8x128xf32, #tpu.memory_space<vmem>>, vector<1x8x128xf32>
    %529 = vector.shape_cast %528 : vector<1x8x128xf32> to vector<8x128xf32>
    %530 = vector.extract_strided_slice %529 {offsets = [4, 0], sizes = [1, 32], strides = [1, 1]} : vector<8x128xf32> to vector<1x32xf32>
    %531 = vector.extract_strided_slice %529 {offsets = [5, 0], sizes = [1, 32], strides = [1, 1]} : vector<8x128xf32> to vector<1x32xf32>
    %cst_199 = arith.constant dense<0.000000e+00> : vector<24xf32>
    %532 = vector.multi_reduction <add>, %519, %cst_199 [1] : vector<24x32xf32> to vector<24xf32>
    %533 = vector.shape_cast %532 : vector<24xf32> to vector<24x1xf32>
    %cst_200 = arith.constant 3.200000e+01 : f32
    %534 = vector.broadcast %cst_200 : f32 to vector<24x1xf32>
    %535 = arith.divf %533, %534 : vector<24x1xf32>
    %536 = vector.broadcast %535 : vector<24x1xf32> to vector<24x32xf32>
    %537 = arith.subf %519, %536 : vector<24x32xf32>
    %538 = arith.mulf %537, %537 : vector<24x32xf32>
    %cst_201 = arith.constant dense<0.000000e+00> : vector<24xf32>
    %539 = vector.multi_reduction <add>, %538, %cst_201 [1] : vector<24x32xf32> to vector<24xf32>
    %540 = vector.shape_cast %539 : vector<24xf32> to vector<24x1xf32>
    %cst_202 = arith.constant 3.200000e+01 : f32
    %541 = vector.broadcast %cst_202 : f32 to vector<24x1xf32>
    %542 = arith.divf %540, %541 : vector<24x1xf32>
    %cst_203 = arith.constant 9.99999974E-6 : f32
    %543 = vector.broadcast %cst_203 : f32 to vector<24x1xf32>
    %544 = arith.addf %542, %543 : vector<24x1xf32>
    %545 = math.rsqrt %544 : vector<24x1xf32>
    %546 = vector.broadcast %545 : vector<24x1xf32> to vector<24x32xf32>
    %547 = arith.mulf %537, %546 : vector<24x32xf32>
    %548 = vector.broadcast %530 : vector<1x32xf32> to vector<24x32xf32>
    %549 = arith.mulf %547, %548 : vector<24x32xf32>
    %550 = vector.broadcast %531 : vector<1x32xf32> to vector<24x32xf32>
    %551 = arith.addf %549, %550 : vector<24x32xf32>
    %552 = vector.extract_strided_slice %529 {offsets = [0, 0], sizes = [1, 96], strides = [1, 1]} : vector<8x128xf32> to vector<1x96xf32>
    %553 = vector.extract_strided_slice %529 {offsets = [1, 0], sizes = [1, 32], strides = [1, 1]} : vector<8x128xf32> to vector<1x32xf32>
    %cst_204 = arith.constant dense<0.000000e+00> : vector<24x96xf32>
    %554 = tpu.matmul %551, %521, %cst_204 {dimension_numbers = #tpu.dot_dimension_numbers<[1], [0], [0], [1], [0, 0, 1, 1], [], []>} : vector<24x32xf32>, vector<32x96xf32>, vector<24x96xf32> -> vector<24x96xf32>
    %555 = vector.broadcast %552 : vector<1x96xf32> to vector<24x96xf32>
    %556 = arith.addf %554, %555 : vector<24x96xf32>
    %557 = vector.extract_strided_slice %556 {offsets = [0, 0], sizes = [24, 32], strides = [1, 1]} : vector<24x96xf32> to vector<24x32xf32>
    %558 = vector.extract_strided_slice %556 {offsets = [0, 32], sizes = [24, 32], strides = [1, 1]} : vector<24x96xf32> to vector<24x32xf32>
    %559 = vector.extract_strided_slice %556 {offsets = [0, 64], sizes = [24, 32], strides = [1, 1]} : vector<24x96xf32> to vector<24x32xf32>
    %560 = vector.extract_strided_slice %557 {offsets = [0, 0], sizes = [24, 8], strides = [1, 1]} : vector<24x32xf32> to vector<24x8xf32>
    %561 = vector.extract_strided_slice %558 {offsets = [0, 0], sizes = [24, 8], strides = [1, 1]} : vector<24x32xf32> to vector<24x8xf32>
    %cst_205 = arith.constant dense<0.000000e+00> : vector<24x24xf32>
    %562 = tpu.matmul %560, %561, %cst_205 {dimension_numbers = #tpu.dot_dimension_numbers<[1], [1], [0], [0], [0, 0, 1, 0], [], []>} : vector<24x8xf32>, vector<24x8xf32>, vector<24x24xf32> -> vector<24x24xf32>
    %cst_206 = arith.constant 0.353553385 : f32
    %563 = vector.broadcast %cst_206 : f32 to vector<24x24xf32>
    %564 = arith.mulf %562, %563 : vector<24x24xf32>
    %565 = vector.broadcast %2 : vector<1x24xf32> to vector<24x24xf32>
    %566 = arith.addf %564, %565 : vector<24x24xf32>
    %cst_207 = arith.constant dense<0xFF800000> : vector<24xf32>
    %567 = vector.multi_reduction <maximumf>, %566, %cst_207 [1] : vector<24x24xf32> to vector<24xf32>
    %568 = vector.shape_cast %567 : vector<24xf32> to vector<24x1xf32>
    %569 = vector.broadcast %568 : vector<24x1xf32> to vector<24x24xf32>
    %570 = arith.subf %566, %569 : vector<24x24xf32>
    %571 = math.exp %570 : vector<24x24xf32>
    %cst_208 = arith.constant dense<0.000000e+00> : vector<24xf32>
    %572 = vector.multi_reduction <add>, %571, %cst_208 [1] : vector<24x24xf32> to vector<24xf32>
    %573 = vector.shape_cast %572 : vector<24xf32> to vector<24x1xf32>
    %574 = tpu.reciprocal %573 : vector<24x1xf32> -> vector<24x1xf32>
    %575 = vector.broadcast %574 : vector<24x1xf32> to vector<24x24xf32>
    %576 = arith.mulf %571, %575 : vector<24x24xf32>
    %577 = vector.extract_strided_slice %559 {offsets = [0, 0], sizes = [24, 8], strides = [1, 1]} : vector<24x32xf32> to vector<24x8xf32>
    %cst_209 = arith.constant dense<0.000000e+00> : vector<24x8xf32>
    %578 = tpu.matmul %576, %577, %cst_209 {dimension_numbers = #tpu.dot_dimension_numbers<[1], [0], [0], [1], [0, 0, 1, 1], [], []>} : vector<24x24xf32>, vector<24x8xf32>, vector<24x8xf32> -> vector<24x8xf32>
    %579 = vector.extract_strided_slice %557 {offsets = [0, 8], sizes = [24, 8], strides = [1, 1]} : vector<24x32xf32> to vector<24x8xf32>
    %580 = vector.extract_strided_slice %558 {offsets = [0, 8], sizes = [24, 8], strides = [1, 1]} : vector<24x32xf32> to vector<24x8xf32>
    %cst_210 = arith.constant dense<0.000000e+00> : vector<24x24xf32>
    %581 = tpu.matmul %579, %580, %cst_210 {dimension_numbers = #tpu.dot_dimension_numbers<[1], [1], [0], [0], [0, 0, 1, 0], [], []>} : vector<24x8xf32>, vector<24x8xf32>, vector<24x24xf32> -> vector<24x24xf32>
    %cst_211 = arith.constant 0.353553385 : f32
    %582 = vector.broadcast %cst_211 : f32 to vector<24x24xf32>
    %583 = arith.mulf %581, %582 : vector<24x24xf32>
    %584 = vector.broadcast %2 : vector<1x24xf32> to vector<24x24xf32>
    %585 = arith.addf %583, %584 : vector<24x24xf32>
    %cst_212 = arith.constant dense<0xFF800000> : vector<24xf32>
    %586 = vector.multi_reduction <maximumf>, %585, %cst_212 [1] : vector<24x24xf32> to vector<24xf32>
    %587 = vector.shape_cast %586 : vector<24xf32> to vector<24x1xf32>
    %588 = vector.broadcast %587 : vector<24x1xf32> to vector<24x24xf32>
    %589 = arith.subf %585, %588 : vector<24x24xf32>
    %590 = math.exp %589 : vector<24x24xf32>
    %cst_213 = arith.constant dense<0.000000e+00> : vector<24xf32>
    %591 = vector.multi_reduction <add>, %590, %cst_213 [1] : vector<24x24xf32> to vector<24xf32>
    %592 = vector.shape_cast %591 : vector<24xf32> to vector<24x1xf32>
    %593 = tpu.reciprocal %592 : vector<24x1xf32> -> vector<24x1xf32>
    %594 = vector.broadcast %593 : vector<24x1xf32> to vector<24x24xf32>
    %595 = arith.mulf %590, %594 : vector<24x24xf32>
    %596 = vector.extract_strided_slice %559 {offsets = [0, 8], sizes = [24, 8], strides = [1, 1]} : vector<24x32xf32> to vector<24x8xf32>
    %cst_214 = arith.constant dense<0.000000e+00> : vector<24x8xf32>
    %597 = tpu.matmul %595, %596, %cst_214 {dimension_numbers = #tpu.dot_dimension_numbers<[1], [0], [0], [1], [0, 0, 1, 1], [], []>} : vector<24x24xf32>, vector<24x8xf32>, vector<24x8xf32> -> vector<24x8xf32>
    %598 = vector.extract_strided_slice %557 {offsets = [0, 16], sizes = [24, 8], strides = [1, 1]} : vector<24x32xf32> to vector<24x8xf32>
    %599 = vector.extract_strided_slice %558 {offsets = [0, 16], sizes = [24, 8], strides = [1, 1]} : vector<24x32xf32> to vector<24x8xf32>
    %cst_215 = arith.constant dense<0.000000e+00> : vector<24x24xf32>
    %600 = tpu.matmul %598, %599, %cst_215 {dimension_numbers = #tpu.dot_dimension_numbers<[1], [1], [0], [0], [0, 0, 1, 0], [], []>} : vector<24x8xf32>, vector<24x8xf32>, vector<24x24xf32> -> vector<24x24xf32>
    %cst_216 = arith.constant 0.353553385 : f32
    %601 = vector.broadcast %cst_216 : f32 to vector<24x24xf32>
    %602 = arith.mulf %600, %601 : vector<24x24xf32>
    %603 = vector.broadcast %2 : vector<1x24xf32> to vector<24x24xf32>
    %604 = arith.addf %602, %603 : vector<24x24xf32>
    %cst_217 = arith.constant dense<0xFF800000> : vector<24xf32>
    %605 = vector.multi_reduction <maximumf>, %604, %cst_217 [1] : vector<24x24xf32> to vector<24xf32>
    %606 = vector.shape_cast %605 : vector<24xf32> to vector<24x1xf32>
    %607 = vector.broadcast %606 : vector<24x1xf32> to vector<24x24xf32>
    %608 = arith.subf %604, %607 : vector<24x24xf32>
    %609 = math.exp %608 : vector<24x24xf32>
    %cst_218 = arith.constant dense<0.000000e+00> : vector<24xf32>
    %610 = vector.multi_reduction <add>, %609, %cst_218 [1] : vector<24x24xf32> to vector<24xf32>
    %611 = vector.shape_cast %610 : vector<24xf32> to vector<24x1xf32>
    %612 = tpu.reciprocal %611 : vector<24x1xf32> -> vector<24x1xf32>
    %613 = vector.broadcast %612 : vector<24x1xf32> to vector<24x24xf32>
    %614 = arith.mulf %609, %613 : vector<24x24xf32>
    %615 = vector.extract_strided_slice %559 {offsets = [0, 16], sizes = [24, 8], strides = [1, 1]} : vector<24x32xf32> to vector<24x8xf32>
    %cst_219 = arith.constant dense<0.000000e+00> : vector<24x8xf32>
    %616 = tpu.matmul %614, %615, %cst_219 {dimension_numbers = #tpu.dot_dimension_numbers<[1], [0], [0], [1], [0, 0, 1, 1], [], []>} : vector<24x24xf32>, vector<24x8xf32>, vector<24x8xf32> -> vector<24x8xf32>
    %617 = vector.extract_strided_slice %557 {offsets = [0, 24], sizes = [24, 8], strides = [1, 1]} : vector<24x32xf32> to vector<24x8xf32>
    %618 = vector.extract_strided_slice %558 {offsets = [0, 24], sizes = [24, 8], strides = [1, 1]} : vector<24x32xf32> to vector<24x8xf32>
    %cst_220 = arith.constant dense<0.000000e+00> : vector<24x24xf32>
    %619 = tpu.matmul %617, %618, %cst_220 {dimension_numbers = #tpu.dot_dimension_numbers<[1], [1], [0], [0], [0, 0, 1, 0], [], []>} : vector<24x8xf32>, vector<24x8xf32>, vector<24x24xf32> -> vector<24x24xf32>
    %cst_221 = arith.constant 0.353553385 : f32
    %620 = vector.broadcast %cst_221 : f32 to vector<24x24xf32>
    %621 = arith.mulf %619, %620 : vector<24x24xf32>
    %622 = vector.broadcast %2 : vector<1x24xf32> to vector<24x24xf32>
    %623 = arith.addf %621, %622 : vector<24x24xf32>
    %cst_222 = arith.constant dense<0xFF800000> : vector<24xf32>
    %624 = vector.multi_reduction <maximumf>, %623, %cst_222 [1] : vector<24x24xf32> to vector<24xf32>
    %625 = vector.shape_cast %624 : vector<24xf32> to vector<24x1xf32>
    %626 = vector.broadcast %625 : vector<24x1xf32> to vector<24x24xf32>
    %627 = arith.subf %623, %626 : vector<24x24xf32>
    %628 = math.exp %627 : vector<24x24xf32>
    %cst_223 = arith.constant dense<0.000000e+00> : vector<24xf32>
    %629 = vector.multi_reduction <add>, %628, %cst_223 [1] : vector<24x24xf32> to vector<24xf32>
    %630 = vector.shape_cast %629 : vector<24xf32> to vector<24x1xf32>
    %631 = tpu.reciprocal %630 : vector<24x1xf32> -> vector<24x1xf32>
    %632 = vector.broadcast %631 : vector<24x1xf32> to vector<24x24xf32>
    %633 = arith.mulf %628, %632 : vector<24x24xf32>
    %634 = vector.extract_strided_slice %559 {offsets = [0, 24], sizes = [24, 8], strides = [1, 1]} : vector<24x32xf32> to vector<24x8xf32>
    %cst_224 = arith.constant dense<0.000000e+00> : vector<24x8xf32>
    %635 = tpu.matmul %633, %634, %cst_224 {dimension_numbers = #tpu.dot_dimension_numbers<[1], [0], [0], [1], [0, 0, 1, 1], [], []>} : vector<24x24xf32>, vector<24x8xf32>, vector<24x8xf32> -> vector<24x8xf32>
    %636 = tpu.concatenate %578, %597, %616, %635 in 1 : vector<24x8xf32>, vector<24x8xf32>, vector<24x8xf32>, vector<24x8xf32> -> vector<24x32xf32>
    %cst_225 = arith.constant dense<0.000000e+00> : vector<24x32xf32>
    %637 = tpu.matmul %636, %523, %cst_225 {dimension_numbers = #tpu.dot_dimension_numbers<[1], [0], [0], [1], [0, 0, 1, 1], [], []>} : vector<24x32xf32>, vector<32x32xf32>, vector<24x32xf32> -> vector<24x32xf32>
    %638 = vector.broadcast %553 : vector<1x32xf32> to vector<24x32xf32>
    %639 = arith.addf %637, %638 : vector<24x32xf32>
    %640 = arith.addf %519, %639 : vector<24x32xf32>
    %641 = vector.extract_strided_slice %529 {offsets = [6, 0], sizes = [1, 32], strides = [1, 1]} : vector<8x128xf32> to vector<1x32xf32>
    %642 = vector.extract_strided_slice %529 {offsets = [7, 0], sizes = [1, 32], strides = [1, 1]} : vector<8x128xf32> to vector<1x32xf32>
    %cst_226 = arith.constant dense<0.000000e+00> : vector<24xf32>
    %643 = vector.multi_reduction <add>, %640, %cst_226 [1] : vector<24x32xf32> to vector<24xf32>
    %644 = vector.shape_cast %643 : vector<24xf32> to vector<24x1xf32>
    %cst_227 = arith.constant 3.200000e+01 : f32
    %645 = vector.broadcast %cst_227 : f32 to vector<24x1xf32>
    %646 = arith.divf %644, %645 : vector<24x1xf32>
    %647 = vector.broadcast %646 : vector<24x1xf32> to vector<24x32xf32>
    %648 = arith.subf %640, %647 : vector<24x32xf32>
    %649 = arith.mulf %648, %648 : vector<24x32xf32>
    %cst_228 = arith.constant dense<0.000000e+00> : vector<24xf32>
    %650 = vector.multi_reduction <add>, %649, %cst_228 [1] : vector<24x32xf32> to vector<24xf32>
    %651 = vector.shape_cast %650 : vector<24xf32> to vector<24x1xf32>
    %cst_229 = arith.constant 3.200000e+01 : f32
    %652 = vector.broadcast %cst_229 : f32 to vector<24x1xf32>
    %653 = arith.divf %651, %652 : vector<24x1xf32>
    %cst_230 = arith.constant 9.99999974E-6 : f32
    %654 = vector.broadcast %cst_230 : f32 to vector<24x1xf32>
    %655 = arith.addf %653, %654 : vector<24x1xf32>
    %656 = math.rsqrt %655 : vector<24x1xf32>
    %657 = vector.broadcast %656 : vector<24x1xf32> to vector<24x32xf32>
    %658 = arith.mulf %648, %657 : vector<24x32xf32>
    %659 = vector.broadcast %641 : vector<1x32xf32> to vector<24x32xf32>
    %660 = arith.mulf %658, %659 : vector<24x32xf32>
    %661 = vector.broadcast %642 : vector<1x32xf32> to vector<24x32xf32>
    %662 = arith.addf %660, %661 : vector<24x32xf32>
    %cst_231 = arith.constant dense<0.000000e+00> : vector<24x64xf32>
    %663 = tpu.matmul %662, %525, %cst_231 {dimension_numbers = #tpu.dot_dimension_numbers<[1], [0], [0], [1], [0, 0, 1, 1], [], []>} : vector<24x32xf32>, vector<32x64xf32>, vector<24x64xf32> -> vector<24x64xf32>
    %664 = vector.extract_strided_slice %529 {offsets = [2, 0], sizes = [1, 64], strides = [1, 1]} : vector<8x128xf32> to vector<1x64xf32>
    %665 = vector.broadcast %664 : vector<1x64xf32> to vector<24x64xf32>
    %666 = arith.addf %663, %665 : vector<24x64xf32>
    %667 = arith.mulf %666, %666 : vector<24x64xf32>
    %668 = arith.mulf %666, %667 : vector<24x64xf32>
    %cst_232 = arith.constant 4.471500e-02 : f32
    %669 = vector.broadcast %cst_232 : f32 to vector<24x64xf32>
    %670 = arith.mulf %669, %668 : vector<24x64xf32>
    %671 = arith.addf %666, %670 : vector<24x64xf32>
    %cst_233 = arith.constant 0.797884583 : f32
    %672 = vector.broadcast %cst_233 : f32 to vector<24x64xf32>
    %673 = arith.mulf %672, %671 : vector<24x64xf32>
    %674 = math.tanh %673 : vector<24x64xf32>
    %cst_234 = arith.constant 1.000000e+00 : f32
    %675 = vector.broadcast %cst_234 : f32 to vector<24x64xf32>
    %676 = arith.addf %675, %674 : vector<24x64xf32>
    %cst_235 = arith.constant 5.000000e-01 : f32
    %677 = vector.broadcast %cst_235 : f32 to vector<24x64xf32>
    %678 = arith.mulf %677, %676 : vector<24x64xf32>
    %679 = arith.mulf %666, %678 : vector<24x64xf32>
    %cst_236 = arith.constant dense<0.000000e+00> : vector<24x32xf32>
    %680 = tpu.matmul %679, %527, %cst_236 {dimension_numbers = #tpu.dot_dimension_numbers<[1], [0], [0], [1], [0, 0, 1, 1], [], []>} : vector<24x64xf32>, vector<64x32xf32>, vector<24x32xf32> -> vector<24x32xf32>
    %681 = arith.addf %640, %680 : vector<24x32xf32>
    %682 = vector.extract_strided_slice %529 {offsets = [3, 0], sizes = [1, 32], strides = [1, 1]} : vector<8x128xf32> to vector<1x32xf32>
    %683 = vector.broadcast %682 : vector<1x32xf32> to vector<24x32xf32>
    %684 = arith.addf %681, %683 : vector<24x32xf32>
    %685 = vector.extract_strided_slice %0 {offsets = [2, 0], sizes = [1, 32], strides = [1, 1]} : vector<8x128xf32> to vector<1x32xf32>
    %686 = vector.extract_strided_slice %0 {offsets = [3, 0], sizes = [1, 32], strides = [1, 1]} : vector<8x128xf32> to vector<1x32xf32>
    %cst_237 = arith.constant dense<0.000000e+00> : vector<24xf32>
    %687 = vector.multi_reduction <add>, %684, %cst_237 [1] : vector<24x32xf32> to vector<24xf32>
    %688 = vector.shape_cast %687 : vector<24xf32> to vector<24x1xf32>
    %cst_238 = arith.constant 3.200000e+01 : f32
    %689 = vector.broadcast %cst_238 : f32 to vector<24x1xf32>
    %690 = arith.divf %688, %689 : vector<24x1xf32>
    %691 = vector.broadcast %690 : vector<24x1xf32> to vector<24x32xf32>
    %692 = arith.subf %684, %691 : vector<24x32xf32>
    %693 = arith.mulf %692, %692 : vector<24x32xf32>
    %cst_239 = arith.constant dense<0.000000e+00> : vector<24xf32>
    %694 = vector.multi_reduction <add>, %693, %cst_239 [1] : vector<24x32xf32> to vector<24xf32>
    %695 = vector.shape_cast %694 : vector<24xf32> to vector<24x1xf32>
    %cst_240 = arith.constant 3.200000e+01 : f32
    %696 = vector.broadcast %cst_240 : f32 to vector<24x1xf32>
    %697 = arith.divf %695, %696 : vector<24x1xf32>
    %cst_241 = arith.constant 9.99999974E-6 : f32
    %698 = vector.broadcast %cst_241 : f32 to vector<24x1xf32>
    %699 = arith.addf %697, %698 : vector<24x1xf32>
    %700 = math.rsqrt %699 : vector<24x1xf32>
    %701 = vector.broadcast %700 : vector<24x1xf32> to vector<24x32xf32>
    %702 = arith.mulf %692, %701 : vector<24x32xf32>
    %703 = vector.broadcast %685 : vector<1x32xf32> to vector<24x32xf32>
    %704 = arith.mulf %702, %703 : vector<24x32xf32>
    %705 = vector.broadcast %686 : vector<1x32xf32> to vector<24x32xf32>
    %706 = arith.addf %704, %705 : vector<24x32xf32>
    %c0_242 = arith.constant 0 : index
    %c0_243 = arith.constant 0 : index
    %c0_244 = arith.constant 0 : index
    %707 = vector.load %arg28[%c0_242, %c0_243, %c0_244] : memref<1x24x32xf32, #tpu.memory_space<vmem>>, vector<1x24x32xf32>
    %708 = vector.shape_cast %707 : vector<1x24x32xf32> to vector<24x32xf32>
    %709 = vector.shape_cast %706 : vector<24x32xf32> to vector<1x24x32xf32>
    tpu.vector_store %arg28[%c0_242, %c0_243, %c0_244], %709 {strides = array<i32>} : memref<1x24x32xf32, #tpu.memory_space<vmem>>, vector<1x24x32xf32>,
    %c0_245 = arith.constant 0 : index
    %c0_246 = arith.constant 0 : index
    %c0_247 = arith.constant 0 : index
    %710 = vector.load %arg5[%c0_245, %c0_246, %c0_247] : memref<1x16x32xf32, #tpu.memory_space<vmem>>, vector<1x16x32xf32>
    %711 = vector.shape_cast %710 : vector<1x16x32xf32> to vector<16x32xf32>
    %c0_248 = arith.constant 0 : index
    %c0_249 = arith.constant 0 : index
    %c0_250 = arith.constant 0 : index
    %712 = vector.load %arg25[%c0_248, %c0_249, %c0_250] : memref<2x16x128xf32, #tpu.memory_space<vmem>>, vector<1x16x128xf32>
    %713 = vector.shape_cast %712 : vector<1x16x128xf32> to vector<16x128xf32>
    %714 = vector.extract_strided_slice %713 {offsets = [6, 0], sizes = [1, 32], strides = [1, 1]} : vector<16x128xf32> to vector<1x32xf32>
    %715 = vector.extract_strided_slice %713 {offsets = [7, 0], sizes = [1, 32], strides = [1, 1]} : vector<16x128xf32> to vector<1x32xf32>
    %cst_251 = arith.constant dense<0.000000e+00> : vector<16xf32>
    %716 = vector.multi_reduction <add>, %711, %cst_251 [1] : vector<16x32xf32> to vector<16xf32>
    %717 = vector.shape_cast %716 : vector<16xf32> to vector<16x1xf32>
    %cst_252 = arith.constant 3.200000e+01 : f32
    %718 = vector.broadcast %cst_252 : f32 to vector<16x1xf32>
    %719 = arith.divf %717, %718 : vector<16x1xf32>
    %720 = vector.broadcast %719 : vector<16x1xf32> to vector<16x32xf32>
    %721 = arith.subf %711, %720 : vector<16x32xf32>
    %722 = arith.mulf %721, %721 : vector<16x32xf32>
    %cst_253 = arith.constant dense<0.000000e+00> : vector<16xf32>
    %723 = vector.multi_reduction <add>, %722, %cst_253 [1] : vector<16x32xf32> to vector<16xf32>
    %724 = vector.shape_cast %723 : vector<16xf32> to vector<16x1xf32>
    %cst_254 = arith.constant 3.200000e+01 : f32
    %725 = vector.broadcast %cst_254 : f32 to vector<16x1xf32>
    %726 = arith.divf %724, %725 : vector<16x1xf32>
    %cst_255 = arith.constant 9.99999974E-6 : f32
    %727 = vector.broadcast %cst_255 : f32 to vector<16x1xf32>
    %728 = arith.addf %726, %727 : vector<16x1xf32>
    %729 = math.rsqrt %728 : vector<16x1xf32>
    %730 = vector.broadcast %729 : vector<16x1xf32> to vector<16x32xf32>
    %731 = arith.mulf %721, %730 : vector<16x32xf32>
    %732 = vector.broadcast %714 : vector<1x32xf32> to vector<16x32xf32>
    %733 = arith.mulf %731, %732 : vector<16x32xf32>
    %734 = vector.broadcast %715 : vector<1x32xf32> to vector<16x32xf32>
    %735 = arith.addf %733, %734 : vector<16x32xf32>
    %c0_256 = arith.constant 0 : index
    %c0_257 = arith.constant 0 : index
    %c0_258 = arith.constant 0 : index
    %736 = vector.load %arg19[%c0_256, %c0_257, %c0_258] : memref<2x32x96xf32, #tpu.memory_space<vmem>>, vector<1x32x96xf32>
    %737 = vector.shape_cast %736 : vector<1x32x96xf32> to vector<32x96xf32>
    %738 = vector.extract_strided_slice %713 {offsets = [0, 0], sizes = [1, 96], strides = [1, 1]} : vector<16x128xf32> to vector<1x96xf32>
    %c0_259 = arith.constant 0 : index
    %c0_260 = arith.constant 0 : index
    %c0_261 = arith.constant 0 : index
    %739 = vector.load %arg20[%c0_259, %c0_260, %c0_261] : memref<2x32x32xf32, #tpu.memory_space<vmem>>, vector<1x32x32xf32>
    %740 = vector.shape_cast %739 : vector<1x32x32xf32> to vector<32x32xf32>
    %741 = vector.extract_strided_slice %713 {offsets = [1, 0], sizes = [1, 32], strides = [1, 1]} : vector<16x128xf32> to vector<1x32xf32>
    %cst_262 = arith.constant dense<0.000000e+00> : vector<16x96xf32>
    %742 = tpu.matmul %735, %737, %cst_262 {dimension_numbers = #tpu.dot_dimension_numbers<[1], [0], [0], [1], [0, 0, 1, 1], [], []>} : vector<16x32xf32>, vector<32x96xf32>, vector<16x96xf32> -> vector<16x96xf32>
    %743 = vector.broadcast %738 : vector<1x96xf32> to vector<16x96xf32>
    %744 = arith.addf %742, %743 : vector<16x96xf32>
    %745 = vector.extract_strided_slice %744 {offsets = [0, 0], sizes = [16, 32], strides = [1, 1]} : vector<16x96xf32> to vector<16x32xf32>
    %746 = vector.extract_strided_slice %744 {offsets = [0, 32], sizes = [16, 32], strides = [1, 1]} : vector<16x96xf32> to vector<16x32xf32>
    %747 = vector.extract_strided_slice %744 {offsets = [0, 64], sizes = [16, 32], strides = [1, 1]} : vector<16x96xf32> to vector<16x32xf32>
    %748 = vector.extract_strided_slice %745 {offsets = [0, 0], sizes = [16, 8], strides = [1, 1]} : vector<16x32xf32> to vector<16x8xf32>
    %749 = vector.extract_strided_slice %746 {offsets = [0, 0], sizes = [16, 8], strides = [1, 1]} : vector<16x32xf32> to vector<16x8xf32>
    %cst_263 = arith.constant dense<0.000000e+00> : vector<16x16xf32>
    %750 = tpu.matmul %748, %749, %cst_263 {dimension_numbers = #tpu.dot_dimension_numbers<[1], [1], [0], [0], [0, 0, 1, 0], [], []>} : vector<16x8xf32>, vector<16x8xf32>, vector<16x16xf32> -> vector<16x16xf32>
    %cst_264 = arith.constant 0.353553385 : f32
    %751 = vector.broadcast %cst_264 : f32 to vector<16x16xf32>
    %752 = arith.mulf %750, %751 : vector<16x16xf32>
    %cst_265 = arith.constant dense<0xFF800000> : vector<16xf32>
    %753 = vector.multi_reduction <maximumf>, %752, %cst_265 [1] : vector<16x16xf32> to vector<16xf32>
    %754 = vector.shape_cast %753 : vector<16xf32> to vector<16x1xf32>
    %755 = vector.broadcast %754 : vector<16x1xf32> to vector<16x16xf32>
    %756 = arith.subf %752, %755 : vector<16x16xf32>
    %757 = math.exp %756 : vector<16x16xf32>
    %cst_266 = arith.constant dense<0.000000e+00> : vector<16xf32>
    %758 = vector.multi_reduction <add>, %757, %cst_266 [1] : vector<16x16xf32> to vector<16xf32>
    %759 = vector.shape_cast %758 : vector<16xf32> to vector<16x1xf32>
    %760 = tpu.reciprocal %759 : vector<16x1xf32> -> vector<16x1xf32>
    %761 = vector.broadcast %760 : vector<16x1xf32> to vector<16x16xf32>
    %762 = arith.mulf %757, %761 : vector<16x16xf32>
    %763 = vector.extract_strided_slice %747 {offsets = [0, 0], sizes = [16, 8], strides = [1, 1]} : vector<16x32xf32> to vector<16x8xf32>
    %cst_267 = arith.constant dense<0.000000e+00> : vector<16x8xf32>
    %764 = tpu.matmul %762, %763, %cst_267 {dimension_numbers = #tpu.dot_dimension_numbers<[1], [0], [0], [1], [0, 0, 1, 1], [], []>} : vector<16x16xf32>, vector<16x8xf32>, vector<16x8xf32> -> vector<16x8xf32>
    %765 = vector.extract_strided_slice %745 {offsets = [0, 8], sizes = [16, 8], strides = [1, 1]} : vector<16x32xf32> to vector<16x8xf32>
    %766 = vector.extract_strided_slice %746 {offsets = [0, 8], sizes = [16, 8], strides = [1, 1]} : vector<16x32xf32> to vector<16x8xf32>
    %cst_268 = arith.constant dense<0.000000e+00> : vector<16x16xf32>
    %767 = tpu.matmul %765, %766, %cst_268 {dimension_numbers = #tpu.dot_dimension_numbers<[1], [1], [0], [0], [0, 0, 1, 0], [], []>} : vector<16x8xf32>, vector<16x8xf32>, vector<16x16xf32> -> vector<16x16xf32>
    %cst_269 = arith.constant 0.353553385 : f32
    %768 = vector.broadcast %cst_269 : f32 to vector<16x16xf32>
    %769 = arith.mulf %767, %768 : vector<16x16xf32>
    %cst_270 = arith.constant dense<0xFF800000> : vector<16xf32>
    %770 = vector.multi_reduction <maximumf>, %769, %cst_270 [1] : vector<16x16xf32> to vector<16xf32>
    %771 = vector.shape_cast %770 : vector<16xf32> to vector<16x1xf32>
    %772 = vector.broadcast %771 : vector<16x1xf32> to vector<16x16xf32>
    %773 = arith.subf %769, %772 : vector<16x16xf32>
    %774 = math.exp %773 : vector<16x16xf32>
    %cst_271 = arith.constant dense<0.000000e+00> : vector<16xf32>
    %775 = vector.multi_reduction <add>, %774, %cst_271 [1] : vector<16x16xf32> to vector<16xf32>
    %776 = vector.shape_cast %775 : vector<16xf32> to vector<16x1xf32>
    %777 = tpu.reciprocal %776 : vector<16x1xf32> -> vector<16x1xf32>
    %778 = vector.broadcast %777 : vector<16x1xf32> to vector<16x16xf32>
    %779 = arith.mulf %774, %778 : vector<16x16xf32>
    %780 = vector.extract_strided_slice %747 {offsets = [0, 8], sizes = [16, 8], strides = [1, 1]} : vector<16x32xf32> to vector<16x8xf32>
    %cst_272 = arith.constant dense<0.000000e+00> : vector<16x8xf32>
    %781 = tpu.matmul %779, %780, %cst_272 {dimension_numbers = #tpu.dot_dimension_numbers<[1], [0], [0], [1], [0, 0, 1, 1], [], []>} : vector<16x16xf32>, vector<16x8xf32>, vector<16x8xf32> -> vector<16x8xf32>
    %782 = vector.extract_strided_slice %745 {offsets = [0, 16], sizes = [16, 8], strides = [1, 1]} : vector<16x32xf32> to vector<16x8xf32>
    %783 = vector.extract_strided_slice %746 {offsets = [0, 16], sizes = [16, 8], strides = [1, 1]} : vector<16x32xf32> to vector<16x8xf32>
    %cst_273 = arith.constant dense<0.000000e+00> : vector<16x16xf32>
    %784 = tpu.matmul %782, %783, %cst_273 {dimension_numbers = #tpu.dot_dimension_numbers<[1], [1], [0], [0], [0, 0, 1, 0], [], []>} : vector<16x8xf32>, vector<16x8xf32>, vector<16x16xf32> -> vector<16x16xf32>
    %cst_274 = arith.constant 0.353553385 : f32
    %785 = vector.broadcast %cst_274 : f32 to vector<16x16xf32>
    %786 = arith.mulf %784, %785 : vector<16x16xf32>
    %cst_275 = arith.constant dense<0xFF800000> : vector<16xf32>
    %787 = vector.multi_reduction <maximumf>, %786, %cst_275 [1] : vector<16x16xf32> to vector<16xf32>
    %788 = vector.shape_cast %787 : vector<16xf32> to vector<16x1xf32>
    %789 = vector.broadcast %788 : vector<16x1xf32> to vector<16x16xf32>
    %790 = arith.subf %786, %789 : vector<16x16xf32>
    %791 = math.exp %790 : vector<16x16xf32>
    %cst_276 = arith.constant dense<0.000000e+00> : vector<16xf32>
    %792 = vector.multi_reduction <add>, %791, %cst_276 [1] : vector<16x16xf32> to vector<16xf32>
    %793 = vector.shape_cast %792 : vector<16xf32> to vector<16x1xf32>
    %794 = tpu.reciprocal %793 : vector<16x1xf32> -> vector<16x1xf32>
    %795 = vector.broadcast %794 : vector<16x1xf32> to vector<16x16xf32>
    %796 = arith.mulf %791, %795 : vector<16x16xf32>
    %797 = vector.extract_strided_slice %747 {offsets = [0, 16], sizes = [16, 8], strides = [1, 1]} : vector<16x32xf32> to vector<16x8xf32>
    %cst_277 = arith.constant dense<0.000000e+00> : vector<16x8xf32>
    %798 = tpu.matmul %796, %797, %cst_277 {dimension_numbers = #tpu.dot_dimension_numbers<[1], [0], [0], [1], [0, 0, 1, 1], [], []>} : vector<16x16xf32>, vector<16x8xf32>, vector<16x8xf32> -> vector<16x8xf32>
    %799 = vector.extract_strided_slice %745 {offsets = [0, 24], sizes = [16, 8], strides = [1, 1]} : vector<16x32xf32> to vector<16x8xf32>
    %800 = vector.extract_strided_slice %746 {offsets = [0, 24], sizes = [16, 8], strides = [1, 1]} : vector<16x32xf32> to vector<16x8xf32>
    %cst_278 = arith.constant dense<0.000000e+00> : vector<16x16xf32>
    %801 = tpu.matmul %799, %800, %cst_278 {dimension_numbers = #tpu.dot_dimension_numbers<[1], [1], [0], [0], [0, 0, 1, 0], [], []>} : vector<16x8xf32>, vector<16x8xf32>, vector<16x16xf32> -> vector<16x16xf32>
    %cst_279 = arith.constant 0.353553385 : f32
    %802 = vector.broadcast %cst_279 : f32 to vector<16x16xf32>
    %803 = arith.mulf %801, %802 : vector<16x16xf32>
    %cst_280 = arith.constant dense<0xFF800000> : vector<16xf32>
    %804 = vector.multi_reduction <maximumf>, %803, %cst_280 [1] : vector<16x16xf32> to vector<16xf32>
    %805 = vector.shape_cast %804 : vector<16xf32> to vector<16x1xf32>
    %806 = vector.broadcast %805 : vector<16x1xf32> to vector<16x16xf32>
    %807 = arith.subf %803, %806 : vector<16x16xf32>
    %808 = math.exp %807 : vector<16x16xf32>
    %cst_281 = arith.constant dense<0.000000e+00> : vector<16xf32>
    %809 = vector.multi_reduction <add>, %808, %cst_281 [1] : vector<16x16xf32> to vector<16xf32>
    %810 = vector.shape_cast %809 : vector<16xf32> to vector<16x1xf32>
    %811 = tpu.reciprocal %810 : vector<16x1xf32> -> vector<16x1xf32>
    %812 = vector.broadcast %811 : vector<16x1xf32> to vector<16x16xf32>
    %813 = arith.mulf %808, %812 : vector<16x16xf32>
    %814 = vector.extract_strided_slice %747 {offsets = [0, 24], sizes = [16, 8], strides = [1, 1]} : vector<16x32xf32> to vector<16x8xf32>
    %cst_282 = arith.constant dense<0.000000e+00> : vector<16x8xf32>
    %815 = tpu.matmul %813, %814, %cst_282 {dimension_numbers = #tpu.dot_dimension_numbers<[1], [0], [0], [1], [0, 0, 1, 1], [], []>} : vector<16x16xf32>, vector<16x8xf32>, vector<16x8xf32> -> vector<16x8xf32>
    %816 = tpu.concatenate %764, %781, %798, %815 in 1 : vector<16x8xf32>, vector<16x8xf32>, vector<16x8xf32>, vector<16x8xf32> -> vector<16x32xf32>
    %cst_283 = arith.constant dense<0.000000e+00> : vector<16x32xf32>
    %817 = tpu.matmul %816, %740, %cst_283 {dimension_numbers = #tpu.dot_dimension_numbers<[1], [0], [0], [1], [0, 0, 1, 1], [], []>} : vector<16x32xf32>, vector<32x32xf32>, vector<16x32xf32> -> vector<16x32xf32>
    %818 = vector.broadcast %741 : vector<1x32xf32> to vector<16x32xf32>
    %819 = arith.addf %817, %818 : vector<16x32xf32>
    %820 = arith.addf %711, %819 : vector<16x32xf32>
    %821 = vector.extract_strided_slice %713 {offsets = [8, 0], sizes = [1, 32], strides = [1, 1]} : vector<16x128xf32> to vector<1x32xf32>
    %822 = vector.extract_strided_slice %713 {offsets = [9, 0], sizes = [1, 32], strides = [1, 1]} : vector<16x128xf32> to vector<1x32xf32>
    %cst_284 = arith.constant dense<0.000000e+00> : vector<16xf32>
    %823 = vector.multi_reduction <add>, %820, %cst_284 [1] : vector<16x32xf32> to vector<16xf32>
    %824 = vector.shape_cast %823 : vector<16xf32> to vector<16x1xf32>
    %cst_285 = arith.constant 3.200000e+01 : f32
    %825 = vector.broadcast %cst_285 : f32 to vector<16x1xf32>
    %826 = arith.divf %824, %825 : vector<16x1xf32>
    %827 = vector.broadcast %826 : vector<16x1xf32> to vector<16x32xf32>
    %828 = arith.subf %820, %827 : vector<16x32xf32>
    %829 = arith.mulf %828, %828 : vector<16x32xf32>
    %cst_286 = arith.constant dense<0.000000e+00> : vector<16xf32>
    %830 = vector.multi_reduction <add>, %829, %cst_286 [1] : vector<16x32xf32> to vector<16xf32>
    %831 = vector.shape_cast %830 : vector<16xf32> to vector<16x1xf32>
    %cst_287 = arith.constant 3.200000e+01 : f32
    %832 = vector.broadcast %cst_287 : f32 to vector<16x1xf32>
    %833 = arith.divf %831, %832 : vector<16x1xf32>
    %cst_288 = arith.constant 9.99999974E-6 : f32
    %834 = vector.broadcast %cst_288 : f32 to vector<16x1xf32>
    %835 = arith.addf %833, %834 : vector<16x1xf32>
    %836 = math.rsqrt %835 : vector<16x1xf32>
    %837 = vector.broadcast %836 : vector<16x1xf32> to vector<16x32xf32>
    %838 = arith.mulf %828, %837 : vector<16x32xf32>
    %839 = vector.broadcast %821 : vector<1x32xf32> to vector<16x32xf32>
    %840 = arith.mulf %838, %839 : vector<16x32xf32>
    %841 = vector.broadcast %822 : vector<1x32xf32> to vector<16x32xf32>
    %842 = arith.addf %840, %841 : vector<16x32xf32>
    %c0_289 = arith.constant 0 : index
    %c0_290 = arith.constant 0 : index
    %c0_291 = arith.constant 0 : index
    %843 = vector.load %arg21[%c0_289, %c0_290, %c0_291] : memref<2x32x96xf32, #tpu.memory_space<vmem>>, vector<1x32x96xf32>
    %844 = vector.shape_cast %843 : vector<1x32x96xf32> to vector<32x96xf32>
    %845 = vector.extract_strided_slice %713 {offsets = [2, 0], sizes = [1, 96], strides = [1, 1]} : vector<16x128xf32> to vector<1x96xf32>
    %c0_292 = arith.constant 0 : index
    %c0_293 = arith.constant 0 : index
    %c0_294 = arith.constant 0 : index
    %846 = vector.load %arg22[%c0_292, %c0_293, %c0_294] : memref<2x32x32xf32, #tpu.memory_space<vmem>>, vector<1x32x32xf32>
    %847 = vector.shape_cast %846 : vector<1x32x32xf32> to vector<32x32xf32>
    %848 = vector.extract_strided_slice %713 {offsets = [3, 0], sizes = [1, 32], strides = [1, 1]} : vector<16x128xf32> to vector<1x32xf32>
    %849 = vector.extract_strided_slice %844 {offsets = [0, 0], sizes = [32, 32], strides = [1, 1]} : vector<32x96xf32> to vector<32x32xf32>
    %cst_295 = arith.constant dense<0.000000e+00> : vector<16x32xf32>
    %850 = tpu.matmul %842, %849, %cst_295 {dimension_numbers = #tpu.dot_dimension_numbers<[1], [0], [0], [1], [0, 0, 1, 1], [], []>} : vector<16x32xf32>, vector<32x32xf32>, vector<16x32xf32> -> vector<16x32xf32>
    %851 = vector.extract_strided_slice %845 {offsets = [0, 0], sizes = [1, 32], strides = [1, 1]} : vector<1x96xf32> to vector<1x32xf32>
    %852 = vector.broadcast %851 : vector<1x32xf32> to vector<16x32xf32>
    %853 = arith.addf %850, %852 : vector<16x32xf32>
    %854 = vector.extract_strided_slice %844 {offsets = [0, 32], sizes = [32, 64], strides = [1, 1]} : vector<32x96xf32> to vector<32x64xf32>
    %cst_296 = arith.constant dense<0.000000e+00> : vector<24x64xf32>
    %855 = tpu.matmul %706, %854, %cst_296 {dimension_numbers = #tpu.dot_dimension_numbers<[1], [0], [0], [1], [0, 0, 1, 1], [], []>} : vector<24x32xf32>, vector<32x64xf32>, vector<24x64xf32> -> vector<24x64xf32>
    %856 = vector.extract_strided_slice %845 {offsets = [0, 32], sizes = [1, 64], strides = [1, 1]} : vector<1x96xf32> to vector<1x64xf32>
    %857 = vector.broadcast %856 : vector<1x64xf32> to vector<24x64xf32>
    %858 = arith.addf %855, %857 : vector<24x64xf32>
    %859 = vector.extract_strided_slice %858 {offsets = [0, 0], sizes = [24, 32], strides = [1, 1]} : vector<24x64xf32> to vector<24x32xf32>
    %860 = vector.extract_strided_slice %858 {offsets = [0, 32], sizes = [24, 32], strides = [1, 1]} : vector<24x64xf32> to vector<24x32xf32>
    %861 = vector.extract_strided_slice %853 {offsets = [0, 0], sizes = [16, 8], strides = [1, 1]} : vector<16x32xf32> to vector<16x8xf32>
    %862 = vector.extract_strided_slice %859 {offsets = [0, 0], sizes = [24, 8], strides = [1, 1]} : vector<24x32xf32> to vector<24x8xf32>
    %cst_297 = arith.constant dense<0.000000e+00> : vector<16x24xf32>
    %863 = tpu.matmul %861, %862, %cst_297 {dimension_numbers = #tpu.dot_dimension_numbers<[1], [1], [0], [0], [0, 0, 1, 0], [], []>} : vector<16x8xf32>, vector<24x8xf32>, vector<16x24xf32> -> vector<16x24xf32>
    %cst_298 = arith.constant 0.353553385 : f32
    %864 = vector.broadcast %cst_298 : f32 to vector<16x24xf32>
    %865 = arith.mulf %863, %864 : vector<16x24xf32>
    %866 = vector.broadcast %2 : vector<1x24xf32> to vector<16x24xf32>
    %867 = arith.addf %865, %866 : vector<16x24xf32>
    %cst_299 = arith.constant dense<0xFF800000> : vector<16xf32>
    %868 = vector.multi_reduction <maximumf>, %867, %cst_299 [1] : vector<16x24xf32> to vector<16xf32>
    %869 = vector.shape_cast %868 : vector<16xf32> to vector<16x1xf32>
    %870 = vector.broadcast %869 : vector<16x1xf32> to vector<16x24xf32>
    %871 = arith.subf %867, %870 : vector<16x24xf32>
    %872 = math.exp %871 : vector<16x24xf32>
    %cst_300 = arith.constant dense<0.000000e+00> : vector<16xf32>
    %873 = vector.multi_reduction <add>, %872, %cst_300 [1] : vector<16x24xf32> to vector<16xf32>
    %874 = vector.shape_cast %873 : vector<16xf32> to vector<16x1xf32>
    %875 = tpu.reciprocal %874 : vector<16x1xf32> -> vector<16x1xf32>
    %876 = vector.broadcast %875 : vector<16x1xf32> to vector<16x24xf32>
    %877 = arith.mulf %872, %876 : vector<16x24xf32>
    %878 = vector.extract_strided_slice %860 {offsets = [0, 0], sizes = [24, 8], strides = [1, 1]} : vector<24x32xf32> to vector<24x8xf32>
    %cst_301 = arith.constant dense<0.000000e+00> : vector<16x8xf32>
    %879 = tpu.matmul %877, %878, %cst_301 {dimension_numbers = #tpu.dot_dimension_numbers<[1], [0], [0], [1], [0, 0, 1, 1], [], []>} : vector<16x24xf32>, vector<24x8xf32>, vector<16x8xf32> -> vector<16x8xf32>
    %880 = vector.extract_strided_slice %853 {offsets = [0, 8], sizes = [16, 8], strides = [1, 1]} : vector<16x32xf32> to vector<16x8xf32>
    %881 = vector.extract_strided_slice %859 {offsets = [0, 8], sizes = [24, 8], strides = [1, 1]} : vector<24x32xf32> to vector<24x8xf32>
    %cst_302 = arith.constant dense<0.000000e+00> : vector<16x24xf32>
    %882 = tpu.matmul %880, %881, %cst_302 {dimension_numbers = #tpu.dot_dimension_numbers<[1], [1], [0], [0], [0, 0, 1, 0], [], []>} : vector<16x8xf32>, vector<24x8xf32>, vector<16x24xf32> -> vector<16x24xf32>
    %cst_303 = arith.constant 0.353553385 : f32
    %883 = vector.broadcast %cst_303 : f32 to vector<16x24xf32>
    %884 = arith.mulf %882, %883 : vector<16x24xf32>
    %885 = vector.broadcast %2 : vector<1x24xf32> to vector<16x24xf32>
    %886 = arith.addf %884, %885 : vector<16x24xf32>
    %cst_304 = arith.constant dense<0xFF800000> : vector<16xf32>
    %887 = vector.multi_reduction <maximumf>, %886, %cst_304 [1] : vector<16x24xf32> to vector<16xf32>
    %888 = vector.shape_cast %887 : vector<16xf32> to vector<16x1xf32>
    %889 = vector.broadcast %888 : vector<16x1xf32> to vector<16x24xf32>
    %890 = arith.subf %886, %889 : vector<16x24xf32>
    %891 = math.exp %890 : vector<16x24xf32>
    %cst_305 = arith.constant dense<0.000000e+00> : vector<16xf32>
    %892 = vector.multi_reduction <add>, %891, %cst_305 [1] : vector<16x24xf32> to vector<16xf32>
    %893 = vector.shape_cast %892 : vector<16xf32> to vector<16x1xf32>
    %894 = tpu.reciprocal %893 : vector<16x1xf32> -> vector<16x1xf32>
    %895 = vector.broadcast %894 : vector<16x1xf32> to vector<16x24xf32>
    %896 = arith.mulf %891, %895 : vector<16x24xf32>
    %897 = vector.extract_strided_slice %860 {offsets = [0, 8], sizes = [24, 8], strides = [1, 1]} : vector<24x32xf32> to vector<24x8xf32>
    %cst_306 = arith.constant dense<0.000000e+00> : vector<16x8xf32>
    %898 = tpu.matmul %896, %897, %cst_306 {dimension_numbers = #tpu.dot_dimension_numbers<[1], [0], [0], [1], [0, 0, 1, 1], [], []>} : vector<16x24xf32>, vector<24x8xf32>, vector<16x8xf32> -> vector<16x8xf32>
    %899 = vector.extract_strided_slice %853 {offsets = [0, 16], sizes = [16, 8], strides = [1, 1]} : vector<16x32xf32> to vector<16x8xf32>
    %900 = vector.extract_strided_slice %859 {offsets = [0, 16], sizes = [24, 8], strides = [1, 1]} : vector<24x32xf32> to vector<24x8xf32>
    %cst_307 = arith.constant dense<0.000000e+00> : vector<16x24xf32>
    %901 = tpu.matmul %899, %900, %cst_307 {dimension_numbers = #tpu.dot_dimension_numbers<[1], [1], [0], [0], [0, 0, 1, 0], [], []>} : vector<16x8xf32>, vector<24x8xf32>, vector<16x24xf32> -> vector<16x24xf32>
    %cst_308 = arith.constant 0.353553385 : f32
    %902 = vector.broadcast %cst_308 : f32 to vector<16x24xf32>
    %903 = arith.mulf %901, %902 : vector<16x24xf32>
    %904 = vector.broadcast %2 : vector<1x24xf32> to vector<16x24xf32>
    %905 = arith.addf %903, %904 : vector<16x24xf32>
    %cst_309 = arith.constant dense<0xFF800000> : vector<16xf32>
    %906 = vector.multi_reduction <maximumf>, %905, %cst_309 [1] : vector<16x24xf32> to vector<16xf32>
    %907 = vector.shape_cast %906 : vector<16xf32> to vector<16x1xf32>
    %908 = vector.broadcast %907 : vector<16x1xf32> to vector<16x24xf32>
    %909 = arith.subf %905, %908 : vector<16x24xf32>
    %910 = math.exp %909 : vector<16x24xf32>
    %cst_310 = arith.constant dense<0.000000e+00> : vector<16xf32>
    %911 = vector.multi_reduction <add>, %910, %cst_310 [1] : vector<16x24xf32> to vector<16xf32>
    %912 = vector.shape_cast %911 : vector<16xf32> to vector<16x1xf32>
    %913 = tpu.reciprocal %912 : vector<16x1xf32> -> vector<16x1xf32>
    %914 = vector.broadcast %913 : vector<16x1xf32> to vector<16x24xf32>
    %915 = arith.mulf %910, %914 : vector<16x24xf32>
    %916 = vector.extract_strided_slice %860 {offsets = [0, 16], sizes = [24, 8], strides = [1, 1]} : vector<24x32xf32> to vector<24x8xf32>
    %cst_311 = arith.constant dense<0.000000e+00> : vector<16x8xf32>
    %917 = tpu.matmul %915, %916, %cst_311 {dimension_numbers = #tpu.dot_dimension_numbers<[1], [0], [0], [1], [0, 0, 1, 1], [], []>} : vector<16x24xf32>, vector<24x8xf32>, vector<16x8xf32> -> vector<16x8xf32>
    %918 = vector.extract_strided_slice %853 {offsets = [0, 24], sizes = [16, 8], strides = [1, 1]} : vector<16x32xf32> to vector<16x8xf32>
    %919 = vector.extract_strided_slice %859 {offsets = [0, 24], sizes = [24, 8], strides = [1, 1]} : vector<24x32xf32> to vector<24x8xf32>
    %cst_312 = arith.constant dense<0.000000e+00> : vector<16x24xf32>
    %920 = tpu.matmul %918, %919, %cst_312 {dimension_numbers = #tpu.dot_dimension_numbers<[1], [1], [0], [0], [0, 0, 1, 0], [], []>} : vector<16x8xf32>, vector<24x8xf32>, vector<16x24xf32> -> vector<16x24xf32>
    %cst_313 = arith.constant 0.353553385 : f32
    %921 = vector.broadcast %cst_313 : f32 to vector<16x24xf32>
    %922 = arith.mulf %920, %921 : vector<16x24xf32>
    %923 = vector.broadcast %2 : vector<1x24xf32> to vector<16x24xf32>
    %924 = arith.addf %922, %923 : vector<16x24xf32>
    %cst_314 = arith.constant dense<0xFF800000> : vector<16xf32>
    %925 = vector.multi_reduction <maximumf>, %924, %cst_314 [1] : vector<16x24xf32> to vector<16xf32>
    %926 = vector.shape_cast %925 : vector<16xf32> to vector<16x1xf32>
    %927 = vector.broadcast %926 : vector<16x1xf32> to vector<16x24xf32>
    %928 = arith.subf %924, %927 : vector<16x24xf32>
    %929 = math.exp %928 : vector<16x24xf32>
    %cst_315 = arith.constant dense<0.000000e+00> : vector<16xf32>
    %930 = vector.multi_reduction <add>, %929, %cst_315 [1] : vector<16x24xf32> to vector<16xf32>
    %931 = vector.shape_cast %930 : vector<16xf32> to vector<16x1xf32>
    %932 = tpu.reciprocal %931 : vector<16x1xf32> -> vector<16x1xf32>
    %933 = vector.broadcast %932 : vector<16x1xf32> to vector<16x24xf32>
    %934 = arith.mulf %929, %933 : vector<16x24xf32>
    %935 = vector.extract_strided_slice %860 {offsets = [0, 24], sizes = [24, 8], strides = [1, 1]} : vector<24x32xf32> to vector<24x8xf32>
    %cst_316 = arith.constant dense<0.000000e+00> : vector<16x8xf32>
    %936 = tpu.matmul %934, %935, %cst_316 {dimension_numbers = #tpu.dot_dimension_numbers<[1], [0], [0], [1], [0, 0, 1, 1], [], []>} : vector<16x24xf32>, vector<24x8xf32>, vector<16x8xf32> -> vector<16x8xf32>
    %937 = tpu.concatenate %879, %898, %917, %936 in 1 : vector<16x8xf32>, vector<16x8xf32>, vector<16x8xf32>, vector<16x8xf32> -> vector<16x32xf32>
    %cst_317 = arith.constant dense<0.000000e+00> : vector<16x32xf32>
    %938 = tpu.matmul %937, %847, %cst_317 {dimension_numbers = #tpu.dot_dimension_numbers<[1], [0], [0], [1], [0, 0, 1, 1], [], []>} : vector<16x32xf32>, vector<32x32xf32>, vector<16x32xf32> -> vector<16x32xf32>
    %939 = vector.broadcast %848 : vector<1x32xf32> to vector<16x32xf32>
    %940 = arith.addf %938, %939 : vector<16x32xf32>
    %941 = arith.addf %820, %940 : vector<16x32xf32>
    %942 = vector.extract_strided_slice %713 {offsets = [10, 0], sizes = [1, 32], strides = [1, 1]} : vector<16x128xf32> to vector<1x32xf32>
    %943 = vector.extract_strided_slice %713 {offsets = [11, 0], sizes = [1, 32], strides = [1, 1]} : vector<16x128xf32> to vector<1x32xf32>
    %cst_318 = arith.constant dense<0.000000e+00> : vector<16xf32>
    %944 = vector.multi_reduction <add>, %941, %cst_318 [1] : vector<16x32xf32> to vector<16xf32>
    %945 = vector.shape_cast %944 : vector<16xf32> to vector<16x1xf32>
    %cst_319 = arith.constant 3.200000e+01 : f32
    %946 = vector.broadcast %cst_319 : f32 to vector<16x1xf32>
    %947 = arith.divf %945, %946 : vector<16x1xf32>
    %948 = vector.broadcast %947 : vector<16x1xf32> to vector<16x32xf32>
    %949 = arith.subf %941, %948 : vector<16x32xf32>
    %950 = arith.mulf %949, %949 : vector<16x32xf32>
    %cst_320 = arith.constant dense<0.000000e+00> : vector<16xf32>
    %951 = vector.multi_reduction <add>, %950, %cst_320 [1] : vector<16x32xf32> to vector<16xf32>
    %952 = vector.shape_cast %951 : vector<16xf32> to vector<16x1xf32>
    %cst_321 = arith.constant 3.200000e+01 : f32
    %953 = vector.broadcast %cst_321 : f32 to vector<16x1xf32>
    %954 = arith.divf %952, %953 : vector<16x1xf32>
    %cst_322 = arith.constant 9.99999974E-6 : f32
    %955 = vector.broadcast %cst_322 : f32 to vector<16x1xf32>
    %956 = arith.addf %954, %955 : vector<16x1xf32>
    %957 = math.rsqrt %956 : vector<16x1xf32>
    %958 = vector.broadcast %957 : vector<16x1xf32> to vector<16x32xf32>
    %959 = arith.mulf %949, %958 : vector<16x32xf32>
    %960 = vector.broadcast %942 : vector<1x32xf32> to vector<16x32xf32>
    %961 = arith.mulf %959, %960 : vector<16x32xf32>
    %962 = vector.broadcast %943 : vector<1x32xf32> to vector<16x32xf32>
    %963 = arith.addf %961, %962 : vector<16x32xf32>
    %c0_323 = arith.constant 0 : index
    %c0_324 = arith.constant 0 : index
    %c0_325 = arith.constant 0 : index
    %964 = vector.load %arg23[%c0_323, %c0_324, %c0_325] : memref<2x32x64xf32, #tpu.memory_space<vmem>>, vector<1x32x64xf32>
    %965 = vector.shape_cast %964 : vector<1x32x64xf32> to vector<32x64xf32>
    %cst_326 = arith.constant dense<0.000000e+00> : vector<16x64xf32>
    %966 = tpu.matmul %963, %965, %cst_326 {dimension_numbers = #tpu.dot_dimension_numbers<[1], [0], [0], [1], [0, 0, 1, 1], [], []>} : vector<16x32xf32>, vector<32x64xf32>, vector<16x64xf32> -> vector<16x64xf32>
    %967 = vector.extract_strided_slice %713 {offsets = [4, 0], sizes = [1, 64], strides = [1, 1]} : vector<16x128xf32> to vector<1x64xf32>
    %968 = vector.broadcast %967 : vector<1x64xf32> to vector<16x64xf32>
    %969 = arith.addf %966, %968 : vector<16x64xf32>
    %970 = arith.mulf %969, %969 : vector<16x64xf32>
    %971 = arith.mulf %969, %970 : vector<16x64xf32>
    %cst_327 = arith.constant 4.471500e-02 : f32
    %972 = vector.broadcast %cst_327 : f32 to vector<16x64xf32>
    %973 = arith.mulf %972, %971 : vector<16x64xf32>
    %974 = arith.addf %969, %973 : vector<16x64xf32>
    %cst_328 = arith.constant 0.797884583 : f32
    %975 = vector.broadcast %cst_328 : f32 to vector<16x64xf32>
    %976 = arith.mulf %975, %974 : vector<16x64xf32>
    %977 = math.tanh %976 : vector<16x64xf32>
    %cst_329 = arith.constant 1.000000e+00 : f32
    %978 = vector.broadcast %cst_329 : f32 to vector<16x64xf32>
    %979 = arith.addf %978, %977 : vector<16x64xf32>
    %cst_330 = arith.constant 5.000000e-01 : f32
    %980 = vector.broadcast %cst_330 : f32 to vector<16x64xf32>
    %981 = arith.mulf %980, %979 : vector<16x64xf32>
    %982 = arith.mulf %969, %981 : vector<16x64xf32>
    %c0_331 = arith.constant 0 : index
    %c0_332 = arith.constant 0 : index
    %c0_333 = arith.constant 0 : index
    %983 = vector.load %arg24[%c0_331, %c0_332, %c0_333] : memref<2x64x32xf32, #tpu.memory_space<vmem>>, vector<1x64x32xf32>
    %984 = vector.shape_cast %983 : vector<1x64x32xf32> to vector<64x32xf32>
    %cst_334 = arith.constant dense<0.000000e+00> : vector<16x32xf32>
    %985 = tpu.matmul %982, %984, %cst_334 {dimension_numbers = #tpu.dot_dimension_numbers<[1], [0], [0], [1], [0, 0, 1, 1], [], []>} : vector<16x64xf32>, vector<64x32xf32>, vector<16x32xf32> -> vector<16x32xf32>
    %986 = arith.addf %941, %985 : vector<16x32xf32>
    %987 = vector.extract_strided_slice %713 {offsets = [5, 0], sizes = [1, 32], strides = [1, 1]} : vector<16x128xf32> to vector<1x32xf32>
    %988 = vector.broadcast %987 : vector<1x32xf32> to vector<16x32xf32>
    %989 = arith.addf %986, %988 : vector<16x32xf32>
    %c1_335 = arith.constant 1 : index
    %c0_336 = arith.constant 0 : index
    %c0_337 = arith.constant 0 : index
    %990 = vector.load %arg25[%c1_335, %c0_336, %c0_337] : memref<2x16x128xf32, #tpu.memory_space<vmem>>, vector<1x16x128xf32>
    %991 = vector.shape_cast %990 : vector<1x16x128xf32> to vector<16x128xf32>
    %992 = vector.extract_strided_slice %991 {offsets = [6, 0], sizes = [1, 32], strides = [1, 1]} : vector<16x128xf32> to vector<1x32xf32>
    %993 = vector.extract_strided_slice %991 {offsets = [7, 0], sizes = [1, 32], strides = [1, 1]} : vector<16x128xf32> to vector<1x32xf32>
    %cst_338 = arith.constant dense<0.000000e+00> : vector<16xf32>
    %994 = vector.multi_reduction <add>, %989, %cst_338 [1] : vector<16x32xf32> to vector<16xf32>
    %995 = vector.shape_cast %994 : vector<16xf32> to vector<16x1xf32>
    %cst_339 = arith.constant 3.200000e+01 : f32
    %996 = vector.broadcast %cst_339 : f32 to vector<16x1xf32>
    %997 = arith.divf %995, %996 : vector<16x1xf32>
    %998 = vector.broadcast %997 : vector<16x1xf32> to vector<16x32xf32>
    %999 = arith.subf %989, %998 : vector<16x32xf32>
    %1000 = arith.mulf %999, %999 : vector<16x32xf32>
    %cst_340 = arith.constant dense<0.000000e+00> : vector<16xf32>
    %1001 = vector.multi_reduction <add>, %1000, %cst_340 [1] : vector<16x32xf32> to vector<16xf32>
    %1002 = vector.shape_cast %1001 : vector<16xf32> to vector<16x1xf32>
    %cst_341 = arith.constant 3.200000e+01 : f32
    %1003 = vector.broadcast %cst_341 : f32 to vector<16x1xf32>
    %1004 = arith.divf %1002, %1003 : vector<16x1xf32>
    %cst_342 = arith.constant 9.99999974E-6 : f32
    %1005 = vector.broadcast %cst_342 : f32 to vector<16x1xf32>
    %1006 = arith.addf %1004, %1005 : vector<16x1xf32>
    %1007 = math.rsqrt %1006 : vector<16x1xf32>
    %1008 = vector.broadcast %1007 : vector<16x1xf32> to vector<16x32xf32>
    %1009 = arith.mulf %999, %1008 : vector<16x32xf32>
    %1010 = vector.broadcast %992 : vector<1x32xf32> to vector<16x32xf32>
    %1011 = arith.mulf %1009, %1010 : vector<16x32xf32>
    %1012 = vector.broadcast %993 : vector<1x32xf32> to vector<16x32xf32>
    %1013 = arith.addf %1011, %1012 : vector<16x32xf32>
    %c1_343 = arith.constant 1 : index
    %c0_344 = arith.constant 0 : index
    %c0_345 = arith.constant 0 : index
    %1014 = vector.load %arg19[%c1_343, %c0_344, %c0_345] : memref<2x32x96xf32, #tpu.memory_space<vmem>>, vector<1x32x96xf32>
    %1015 = vector.shape_cast %1014 : vector<1x32x96xf32> to vector<32x96xf32>
    %1016 = vector.extract_strided_slice %991 {offsets = [0, 0], sizes = [1, 96], strides = [1, 1]} : vector<16x128xf32> to vector<1x96xf32>
    %c1_346 = arith.constant 1 : index
    %c0_347 = arith.constant 0 : index
    %c0_348 = arith.constant 0 : index
    %1017 = vector.load %arg20[%c1_346, %c0_347, %c0_348] : memref<2x32x32xf32, #tpu.memory_space<vmem>>, vector<1x32x32xf32>
    %1018 = vector.shape_cast %1017 : vector<1x32x32xf32> to vector<32x32xf32>
    %1019 = vector.extract_strided_slice %991 {offsets = [1, 0], sizes = [1, 32], strides = [1, 1]} : vector<16x128xf32> to vector<1x32xf32>
    %cst_349 = arith.constant dense<0.000000e+00> : vector<16x96xf32>
    %1020 = tpu.matmul %1013, %1015, %cst_349 {dimension_numbers = #tpu.dot_dimension_numbers<[1], [0], [0], [1], [0, 0, 1, 1], [], []>} : vector<16x32xf32>, vector<32x96xf32>, vector<16x96xf32> -> vector<16x96xf32>
    %1021 = vector.broadcast %1016 : vector<1x96xf32> to vector<16x96xf32>
    %1022 = arith.addf %1020, %1021 : vector<16x96xf32>
    %1023 = vector.extract_strided_slice %1022 {offsets = [0, 0], sizes = [16, 32], strides = [1, 1]} : vector<16x96xf32> to vector<16x32xf32>
    %1024 = vector.extract_strided_slice %1022 {offsets = [0, 32], sizes = [16, 32], strides = [1, 1]} : vector<16x96xf32> to vector<16x32xf32>
    %1025 = vector.extract_strided_slice %1022 {offsets = [0, 64], sizes = [16, 32], strides = [1, 1]} : vector<16x96xf32> to vector<16x32xf32>
    %1026 = vector.extract_strided_slice %1023 {offsets = [0, 0], sizes = [16, 8], strides = [1, 1]} : vector<16x32xf32> to vector<16x8xf32>
    %1027 = vector.extract_strided_slice %1024 {offsets = [0, 0], sizes = [16, 8], strides = [1, 1]} : vector<16x32xf32> to vector<16x8xf32>
    %cst_350 = arith.constant dense<0.000000e+00> : vector<16x16xf32>
    %1028 = tpu.matmul %1026, %1027, %cst_350 {dimension_numbers = #tpu.dot_dimension_numbers<[1], [1], [0], [0], [0, 0, 1, 0], [], []>} : vector<16x8xf32>, vector<16x8xf32>, vector<16x16xf32> -> vector<16x16xf32>
    %cst_351 = arith.constant 0.353553385 : f32
    %1029 = vector.broadcast %cst_351 : f32 to vector<16x16xf32>
    %1030 = arith.mulf %1028, %1029 : vector<16x16xf32>
    %cst_352 = arith.constant dense<0xFF800000> : vector<16xf32>
    %1031 = vector.multi_reduction <maximumf>, %1030, %cst_352 [1] : vector<16x16xf32> to vector<16xf32>
    %1032 = vector.shape_cast %1031 : vector<16xf32> to vector<16x1xf32>
    %1033 = vector.broadcast %1032 : vector<16x1xf32> to vector<16x16xf32>
    %1034 = arith.subf %1030, %1033 : vector<16x16xf32>
    %1035 = math.exp %1034 : vector<16x16xf32>
    %cst_353 = arith.constant dense<0.000000e+00> : vector<16xf32>
    %1036 = vector.multi_reduction <add>, %1035, %cst_353 [1] : vector<16x16xf32> to vector<16xf32>
    %1037 = vector.shape_cast %1036 : vector<16xf32> to vector<16x1xf32>
    %1038 = tpu.reciprocal %1037 : vector<16x1xf32> -> vector<16x1xf32>
    %1039 = vector.broadcast %1038 : vector<16x1xf32> to vector<16x16xf32>
    %1040 = arith.mulf %1035, %1039 : vector<16x16xf32>
    %1041 = vector.extract_strided_slice %1025 {offsets = [0, 0], sizes = [16, 8], strides = [1, 1]} : vector<16x32xf32> to vector<16x8xf32>
    %cst_354 = arith.constant dense<0.000000e+00> : vector<16x8xf32>
    %1042 = tpu.matmul %1040, %1041, %cst_354 {dimension_numbers = #tpu.dot_dimension_numbers<[1], [0], [0], [1], [0, 0, 1, 1], [], []>} : vector<16x16xf32>, vector<16x8xf32>, vector<16x8xf32> -> vector<16x8xf32>
    %1043 = vector.extract_strided_slice %1023 {offsets = [0, 8], sizes = [16, 8], strides = [1, 1]} : vector<16x32xf32> to vector<16x8xf32>
    %1044 = vector.extract_strided_slice %1024 {offsets = [0, 8], sizes = [16, 8], strides = [1, 1]} : vector<16x32xf32> to vector<16x8xf32>
    %cst_355 = arith.constant dense<0.000000e+00> : vector<16x16xf32>
    %1045 = tpu.matmul %1043, %1044, %cst_355 {dimension_numbers = #tpu.dot_dimension_numbers<[1], [1], [0], [0], [0, 0, 1, 0], [], []>} : vector<16x8xf32>, vector<16x8xf32>, vector<16x16xf32> -> vector<16x16xf32>
    %cst_356 = arith.constant 0.353553385 : f32
    %1046 = vector.broadcast %cst_356 : f32 to vector<16x16xf32>
    %1047 = arith.mulf %1045, %1046 : vector<16x16xf32>
    %cst_357 = arith.constant dense<0xFF800000> : vector<16xf32>
    %1048 = vector.multi_reduction <maximumf>, %1047, %cst_357 [1] : vector<16x16xf32> to vector<16xf32>
    %1049 = vector.shape_cast %1048 : vector<16xf32> to vector<16x1xf32>
    %1050 = vector.broadcast %1049 : vector<16x1xf32> to vector<16x16xf32>
    %1051 = arith.subf %1047, %1050 : vector<16x16xf32>
    %1052 = math.exp %1051 : vector<16x16xf32>
    %cst_358 = arith.constant dense<0.000000e+00> : vector<16xf32>
    %1053 = vector.multi_reduction <add>, %1052, %cst_358 [1] : vector<16x16xf32> to vector<16xf32>
    %1054 = vector.shape_cast %1053 : vector<16xf32> to vector<16x1xf32>
    %1055 = tpu.reciprocal %1054 : vector<16x1xf32> -> vector<16x1xf32>
    %1056 = vector.broadcast %1055 : vector<16x1xf32> to vector<16x16xf32>
    %1057 = arith.mulf %1052, %1056 : vector<16x16xf32>
    %1058 = vector.extract_strided_slice %1025 {offsets = [0, 8], sizes = [16, 8], strides = [1, 1]} : vector<16x32xf32> to vector<16x8xf32>
    %cst_359 = arith.constant dense<0.000000e+00> : vector<16x8xf32>
    %1059 = tpu.matmul %1057, %1058, %cst_359 {dimension_numbers = #tpu.dot_dimension_numbers<[1], [0], [0], [1], [0, 0, 1, 1], [], []>} : vector<16x16xf32>, vector<16x8xf32>, vector<16x8xf32> -> vector<16x8xf32>
    %1060 = vector.extract_strided_slice %1023 {offsets = [0, 16], sizes = [16, 8], strides = [1, 1]} : vector<16x32xf32> to vector<16x8xf32>
    %1061 = vector.extract_strided_slice %1024 {offsets = [0, 16], sizes = [16, 8], strides = [1, 1]} : vector<16x32xf32> to vector<16x8xf32>
    %cst_360 = arith.constant dense<0.000000e+00> : vector<16x16xf32>
    %1062 = tpu.matmul %1060, %1061, %cst_360 {dimension_numbers = #tpu.dot_dimension_numbers<[1], [1], [0], [0], [0, 0, 1, 0], [], []>} : vector<16x8xf32>, vector<16x8xf32>, vector<16x16xf32> -> vector<16x16xf32>
    %cst_361 = arith.constant 0.353553385 : f32
    %1063 = vector.broadcast %cst_361 : f32 to vector<16x16xf32>
    %1064 = arith.mulf %1062, %1063 : vector<16x16xf32>
    %cst_362 = arith.constant dense<0xFF800000> : vector<16xf32>
    %1065 = vector.multi_reduction <maximumf>, %1064, %cst_362 [1] : vector<16x16xf32> to vector<16xf32>
    %1066 = vector.shape_cast %1065 : vector<16xf32> to vector<16x1xf32>
    %1067 = vector.broadcast %1066 : vector<16x1xf32> to vector<16x16xf32>
    %1068 = arith.subf %1064, %1067 : vector<16x16xf32>
    %1069 = math.exp %1068 : vector<16x16xf32>
    %cst_363 = arith.constant dense<0.000000e+00> : vector<16xf32>
    %1070 = vector.multi_reduction <add>, %1069, %cst_363 [1] : vector<16x16xf32> to vector<16xf32>
    %1071 = vector.shape_cast %1070 : vector<16xf32> to vector<16x1xf32>
    %1072 = tpu.reciprocal %1071 : vector<16x1xf32> -> vector<16x1xf32>
    %1073 = vector.broadcast %1072 : vector<16x1xf32> to vector<16x16xf32>
    %1074 = arith.mulf %1069, %1073 : vector<16x16xf32>
    %1075 = vector.extract_strided_slice %1025 {offsets = [0, 16], sizes = [16, 8], strides = [1, 1]} : vector<16x32xf32> to vector<16x8xf32>
    %cst_364 = arith.constant dense<0.000000e+00> : vector<16x8xf32>
    %1076 = tpu.matmul %1074, %1075, %cst_364 {dimension_numbers = #tpu.dot_dimension_numbers<[1], [0], [0], [1], [0, 0, 1, 1], [], []>} : vector<16x16xf32>, vector<16x8xf32>, vector<16x8xf32> -> vector<16x8xf32>
    %1077 = vector.extract_strided_slice %1023 {offsets = [0, 24], sizes = [16, 8], strides = [1, 1]} : vector<16x32xf32> to vector<16x8xf32>
    %1078 = vector.extract_strided_slice %1024 {offsets = [0, 24], sizes = [16, 8], strides = [1, 1]} : vector<16x32xf32> to vector<16x8xf32>
    %cst_365 = arith.constant dense<0.000000e+00> : vector<16x16xf32>
    %1079 = tpu.matmul %1077, %1078, %cst_365 {dimension_numbers = #tpu.dot_dimension_numbers<[1], [1], [0], [0], [0, 0, 1, 0], [], []>} : vector<16x8xf32>, vector<16x8xf32>, vector<16x16xf32> -> vector<16x16xf32>
    %cst_366 = arith.constant 0.353553385 : f32
    %1080 = vector.broadcast %cst_366 : f32 to vector<16x16xf32>
    %1081 = arith.mulf %1079, %1080 : vector<16x16xf32>
    %cst_367 = arith.constant dense<0xFF800000> : vector<16xf32>
    %1082 = vector.multi_reduction <maximumf>, %1081, %cst_367 [1] : vector<16x16xf32> to vector<16xf32>
    %1083 = vector.shape_cast %1082 : vector<16xf32> to vector<16x1xf32>
    %1084 = vector.broadcast %1083 : vector<16x1xf32> to vector<16x16xf32>
    %1085 = arith.subf %1081, %1084 : vector<16x16xf32>
    %1086 = math.exp %1085 : vector<16x16xf32>
    %cst_368 = arith.constant dense<0.000000e+00> : vector<16xf32>
    %1087 = vector.multi_reduction <add>, %1086, %cst_368 [1] : vector<16x16xf32> to vector<16xf32>
    %1088 = vector.shape_cast %1087 : vector<16xf32> to vector<16x1xf32>
    %1089 = tpu.reciprocal %1088 : vector<16x1xf32> -> vector<16x1xf32>
    %1090 = vector.broadcast %1089 : vector<16x1xf32> to vector<16x16xf32>
    %1091 = arith.mulf %1086, %1090 : vector<16x16xf32>
    %1092 = vector.extract_strided_slice %1025 {offsets = [0, 24], sizes = [16, 8], strides = [1, 1]} : vector<16x32xf32> to vector<16x8xf32>
    %cst_369 = arith.constant dense<0.000000e+00> : vector<16x8xf32>
    %1093 = tpu.matmul %1091, %1092, %cst_369 {dimension_numbers = #tpu.dot_dimension_numbers<[1], [0], [0], [1], [0, 0, 1, 1], [], []>} : vector<16x16xf32>, vector<16x8xf32>, vector<16x8xf32> -> vector<16x8xf32>
    %1094 = tpu.concatenate %1042, %1059, %1076, %1093 in 1 : vector<16x8xf32>, vector<16x8xf32>, vector<16x8xf32>, vector<16x8xf32> -> vector<16x32xf32>
    %cst_370 = arith.constant dense<0.000000e+00> : vector<16x32xf32>
    %1095 = tpu.matmul %1094, %1018, %cst_370 {dimension_numbers = #tpu.dot_dimension_numbers<[1], [0], [0], [1], [0, 0, 1, 1], [], []>} : vector<16x32xf32>, vector<32x32xf32>, vector<16x32xf32> -> vector<16x32xf32>
    %1096 = vector.broadcast %1019 : vector<1x32xf32> to vector<16x32xf32>
    %1097 = arith.addf %1095, %1096 : vector<16x32xf32>
    %1098 = arith.addf %989, %1097 : vector<16x32xf32>
    %1099 = vector.extract_strided_slice %991 {offsets = [8, 0], sizes = [1, 32], strides = [1, 1]} : vector<16x128xf32> to vector<1x32xf32>
    %1100 = vector.extract_strided_slice %991 {offsets = [9, 0], sizes = [1, 32], strides = [1, 1]} : vector<16x128xf32> to vector<1x32xf32>
    %cst_371 = arith.constant dense<0.000000e+00> : vector<16xf32>
    %1101 = vector.multi_reduction <add>, %1098, %cst_371 [1] : vector<16x32xf32> to vector<16xf32>
    %1102 = vector.shape_cast %1101 : vector<16xf32> to vector<16x1xf32>
    %cst_372 = arith.constant 3.200000e+01 : f32
    %1103 = vector.broadcast %cst_372 : f32 to vector<16x1xf32>
    %1104 = arith.divf %1102, %1103 : vector<16x1xf32>
    %1105 = vector.broadcast %1104 : vector<16x1xf32> to vector<16x32xf32>
    %1106 = arith.subf %1098, %1105 : vector<16x32xf32>
    %1107 = arith.mulf %1106, %1106 : vector<16x32xf32>
    %cst_373 = arith.constant dense<0.000000e+00> : vector<16xf32>
    %1108 = vector.multi_reduction <add>, %1107, %cst_373 [1] : vector<16x32xf32> to vector<16xf32>
    %1109 = vector.shape_cast %1108 : vector<16xf32> to vector<16x1xf32>
    %cst_374 = arith.constant 3.200000e+01 : f32
    %1110 = vector.broadcast %cst_374 : f32 to vector<16x1xf32>
    %1111 = arith.divf %1109, %1110 : vector<16x1xf32>
    %cst_375 = arith.constant 9.99999974E-6 : f32
    %1112 = vector.broadcast %cst_375 : f32 to vector<16x1xf32>
    %1113 = arith.addf %1111, %1112 : vector<16x1xf32>
    %1114 = math.rsqrt %1113 : vector<16x1xf32>
    %1115 = vector.broadcast %1114 : vector<16x1xf32> to vector<16x32xf32>
    %1116 = arith.mulf %1106, %1115 : vector<16x32xf32>
    %1117 = vector.broadcast %1099 : vector<1x32xf32> to vector<16x32xf32>
    %1118 = arith.mulf %1116, %1117 : vector<16x32xf32>
    %1119 = vector.broadcast %1100 : vector<1x32xf32> to vector<16x32xf32>
    %1120 = arith.addf %1118, %1119 : vector<16x32xf32>
    %c1_376 = arith.constant 1 : index
    %c0_377 = arith.constant 0 : index
    %c0_378 = arith.constant 0 : index
    %1121 = vector.load %arg21[%c1_376, %c0_377, %c0_378] : memref<2x32x96xf32, #tpu.memory_space<vmem>>, vector<1x32x96xf32>
    %1122 = vector.shape_cast %1121 : vector<1x32x96xf32> to vector<32x96xf32>
    %1123 = vector.extract_strided_slice %991 {offsets = [2, 0], sizes = [1, 96], strides = [1, 1]} : vector<16x128xf32> to vector<1x96xf32>
    %c1_379 = arith.constant 1 : index
    %c0_380 = arith.constant 0 : index
    %c0_381 = arith.constant 0 : index
    %1124 = vector.load %arg22[%c1_379, %c0_380, %c0_381] : memref<2x32x32xf32, #tpu.memory_space<vmem>>, vector<1x32x32xf32>
    %1125 = vector.shape_cast %1124 : vector<1x32x32xf32> to vector<32x32xf32>
    %1126 = vector.extract_strided_slice %991 {offsets = [3, 0], sizes = [1, 32], strides = [1, 1]} : vector<16x128xf32> to vector<1x32xf32>
    %1127 = vector.extract_strided_slice %1122 {offsets = [0, 0], sizes = [32, 32], strides = [1, 1]} : vector<32x96xf32> to vector<32x32xf32>
    %cst_382 = arith.constant dense<0.000000e+00> : vector<16x32xf32>
    %1128 = tpu.matmul %1120, %1127, %cst_382 {dimension_numbers = #tpu.dot_dimension_numbers<[1], [0], [0], [1], [0, 0, 1, 1], [], []>} : vector<16x32xf32>, vector<32x32xf32>, vector<16x32xf32> -> vector<16x32xf32>
    %1129 = vector.extract_strided_slice %1123 {offsets = [0, 0], sizes = [1, 32], strides = [1, 1]} : vector<1x96xf32> to vector<1x32xf32>
    %1130 = vector.broadcast %1129 : vector<1x32xf32> to vector<16x32xf32>
    %1131 = arith.addf %1128, %1130 : vector<16x32xf32>
    %1132 = vector.extract_strided_slice %1122 {offsets = [0, 32], sizes = [32, 64], strides = [1, 1]} : vector<32x96xf32> to vector<32x64xf32>
    %cst_383 = arith.constant dense<0.000000e+00> : vector<24x64xf32>
    %1133 = tpu.matmul %706, %1132, %cst_383 {dimension_numbers = #tpu.dot_dimension_numbers<[1], [0], [0], [1], [0, 0, 1, 1], [], []>} : vector<24x32xf32>, vector<32x64xf32>, vector<24x64xf32> -> vector<24x64xf32>
    %1134 = vector.extract_strided_slice %1123 {offsets = [0, 32], sizes = [1, 64], strides = [1, 1]} : vector<1x96xf32> to vector<1x64xf32>
    %1135 = vector.broadcast %1134 : vector<1x64xf32> to vector<24x64xf32>
    %1136 = arith.addf %1133, %1135 : vector<24x64xf32>
    %1137 = vector.extract_strided_slice %1136 {offsets = [0, 0], sizes = [24, 32], strides = [1, 1]} : vector<24x64xf32> to vector<24x32xf32>
    %1138 = vector.extract_strided_slice %1136 {offsets = [0, 32], sizes = [24, 32], strides = [1, 1]} : vector<24x64xf32> to vector<24x32xf32>
    %1139 = vector.extract_strided_slice %1131 {offsets = [0, 0], sizes = [16, 8], strides = [1, 1]} : vector<16x32xf32> to vector<16x8xf32>
    %1140 = vector.extract_strided_slice %1137 {offsets = [0, 0], sizes = [24, 8], strides = [1, 1]} : vector<24x32xf32> to vector<24x8xf32>
    %cst_384 = arith.constant dense<0.000000e+00> : vector<16x24xf32>
    %1141 = tpu.matmul %1139, %1140, %cst_384 {dimension_numbers = #tpu.dot_dimension_numbers<[1], [1], [0], [0], [0, 0, 1, 0], [], []>} : vector<16x8xf32>, vector<24x8xf32>, vector<16x24xf32> -> vector<16x24xf32>
    %cst_385 = arith.constant 0.353553385 : f32
    %1142 = vector.broadcast %cst_385 : f32 to vector<16x24xf32>
    %1143 = arith.mulf %1141, %1142 : vector<16x24xf32>
    %1144 = vector.broadcast %2 : vector<1x24xf32> to vector<16x24xf32>
    %1145 = arith.addf %1143, %1144 : vector<16x24xf32>
    %cst_386 = arith.constant dense<0xFF800000> : vector<16xf32>
    %1146 = vector.multi_reduction <maximumf>, %1145, %cst_386 [1] : vector<16x24xf32> to vector<16xf32>
    %1147 = vector.shape_cast %1146 : vector<16xf32> to vector<16x1xf32>
    %1148 = vector.broadcast %1147 : vector<16x1xf32> to vector<16x24xf32>
    %1149 = arith.subf %1145, %1148 : vector<16x24xf32>
    %1150 = math.exp %1149 : vector<16x24xf32>
    %cst_387 = arith.constant dense<0.000000e+00> : vector<16xf32>
    %1151 = vector.multi_reduction <add>, %1150, %cst_387 [1] : vector<16x24xf32> to vector<16xf32>
    %1152 = vector.shape_cast %1151 : vector<16xf32> to vector<16x1xf32>
    %1153 = tpu.reciprocal %1152 : vector<16x1xf32> -> vector<16x1xf32>
    %1154 = vector.broadcast %1153 : vector<16x1xf32> to vector<16x24xf32>
    %1155 = arith.mulf %1150, %1154 : vector<16x24xf32>
    %1156 = vector.extract_strided_slice %1138 {offsets = [0, 0], sizes = [24, 8], strides = [1, 1]} : vector<24x32xf32> to vector<24x8xf32>
    %cst_388 = arith.constant dense<0.000000e+00> : vector<16x8xf32>
    %1157 = tpu.matmul %1155, %1156, %cst_388 {dimension_numbers = #tpu.dot_dimension_numbers<[1], [0], [0], [1], [0, 0, 1, 1], [], []>} : vector<16x24xf32>, vector<24x8xf32>, vector<16x8xf32> -> vector<16x8xf32>
    %1158 = vector.extract_strided_slice %1131 {offsets = [0, 8], sizes = [16, 8], strides = [1, 1]} : vector<16x32xf32> to vector<16x8xf32>
    %1159 = vector.extract_strided_slice %1137 {offsets = [0, 8], sizes = [24, 8], strides = [1, 1]} : vector<24x32xf32> to vector<24x8xf32>
    %cst_389 = arith.constant dense<0.000000e+00> : vector<16x24xf32>
    %1160 = tpu.matmul %1158, %1159, %cst_389 {dimension_numbers = #tpu.dot_dimension_numbers<[1], [1], [0], [0], [0, 0, 1, 0], [], []>} : vector<16x8xf32>, vector<24x8xf32>, vector<16x24xf32> -> vector<16x24xf32>
    %cst_390 = arith.constant 0.353553385 : f32
    %1161 = vector.broadcast %cst_390 : f32 to vector<16x24xf32>
    %1162 = arith.mulf %1160, %1161 : vector<16x24xf32>
    %1163 = vector.broadcast %2 : vector<1x24xf32> to vector<16x24xf32>
    %1164 = arith.addf %1162, %1163 : vector<16x24xf32>
    %cst_391 = arith.constant dense<0xFF800000> : vector<16xf32>
    %1165 = vector.multi_reduction <maximumf>, %1164, %cst_391 [1] : vector<16x24xf32> to vector<16xf32>
    %1166 = vector.shape_cast %1165 : vector<16xf32> to vector<16x1xf32>
    %1167 = vector.broadcast %1166 : vector<16x1xf32> to vector<16x24xf32>
    %1168 = arith.subf %1164, %1167 : vector<16x24xf32>
    %1169 = math.exp %1168 : vector<16x24xf32>
    %cst_392 = arith.constant dense<0.000000e+00> : vector<16xf32>
    %1170 = vector.multi_reduction <add>, %1169, %cst_392 [1] : vector<16x24xf32> to vector<16xf32>
    %1171 = vector.shape_cast %1170 : vector<16xf32> to vector<16x1xf32>
    %1172 = tpu.reciprocal %1171 : vector<16x1xf32> -> vector<16x1xf32>
    %1173 = vector.broadcast %1172 : vector<16x1xf32> to vector<16x24xf32>
    %1174 = arith.mulf %1169, %1173 : vector<16x24xf32>
    %1175 = vector.extract_strided_slice %1138 {offsets = [0, 8], sizes = [24, 8], strides = [1, 1]} : vector<24x32xf32> to vector<24x8xf32>
    %cst_393 = arith.constant dense<0.000000e+00> : vector<16x8xf32>
    %1176 = tpu.matmul %1174, %1175, %cst_393 {dimension_numbers = #tpu.dot_dimension_numbers<[1], [0], [0], [1], [0, 0, 1, 1], [], []>} : vector<16x24xf32>, vector<24x8xf32>, vector<16x8xf32> -> vector<16x8xf32>
    %1177 = vector.extract_strided_slice %1131 {offsets = [0, 16], sizes = [16, 8], strides = [1, 1]} : vector<16x32xf32> to vector<16x8xf32>
    %1178 = vector.extract_strided_slice %1137 {offsets = [0, 16], sizes = [24, 8], strides = [1, 1]} : vector<24x32xf32> to vector<24x8xf32>
    %cst_394 = arith.constant dense<0.000000e+00> : vector<16x24xf32>
    %1179 = tpu.matmul %1177, %1178, %cst_394 {dimension_numbers = #tpu.dot_dimension_numbers<[1], [1], [0], [0], [0, 0, 1, 0], [], []>} : vector<16x8xf32>, vector<24x8xf32>, vector<16x24xf32> -> vector<16x24xf32>
    %cst_395 = arith.constant 0.353553385 : f32
    %1180 = vector.broadcast %cst_395 : f32 to vector<16x24xf32>
    %1181 = arith.mulf %1179, %1180 : vector<16x24xf32>
    %1182 = vector.broadcast %2 : vector<1x24xf32> to vector<16x24xf32>
    %1183 = arith.addf %1181, %1182 : vector<16x24xf32>
    %cst_396 = arith.constant dense<0xFF800000> : vector<16xf32>
    %1184 = vector.multi_reduction <maximumf>, %1183, %cst_396 [1] : vector<16x24xf32> to vector<16xf32>
    %1185 = vector.shape_cast %1184 : vector<16xf32> to vector<16x1xf32>
    %1186 = vector.broadcast %1185 : vector<16x1xf32> to vector<16x24xf32>
    %1187 = arith.subf %1183, %1186 : vector<16x24xf32>
    %1188 = math.exp %1187 : vector<16x24xf32>
    %cst_397 = arith.constant dense<0.000000e+00> : vector<16xf32>
    %1189 = vector.multi_reduction <add>, %1188, %cst_397 [1] : vector<16x24xf32> to vector<16xf32>
    %1190 = vector.shape_cast %1189 : vector<16xf32> to vector<16x1xf32>
    %1191 = tpu.reciprocal %1190 : vector<16x1xf32> -> vector<16x1xf32>
    %1192 = vector.broadcast %1191 : vector<16x1xf32> to vector<16x24xf32>
    %1193 = arith.mulf %1188, %1192 : vector<16x24xf32>
    %1194 = vector.extract_strided_slice %1138 {offsets = [0, 16], sizes = [24, 8], strides = [1, 1]} : vector<24x32xf32> to vector<24x8xf32>
    %cst_398 = arith.constant dense<0.000000e+00> : vector<16x8xf32>
    %1195 = tpu.matmul %1193, %1194, %cst_398 {dimension_numbers = #tpu.dot_dimension_numbers<[1], [0], [0], [1], [0, 0, 1, 1], [], []>} : vector<16x24xf32>, vector<24x8xf32>, vector<16x8xf32> -> vector<16x8xf32>
    %1196 = vector.extract_strided_slice %1131 {offsets = [0, 24], sizes = [16, 8], strides = [1, 1]} : vector<16x32xf32> to vector<16x8xf32>
    %1197 = vector.extract_strided_slice %1137 {offsets = [0, 24], sizes = [24, 8], strides = [1, 1]} : vector<24x32xf32> to vector<24x8xf32>
    %cst_399 = arith.constant dense<0.000000e+00> : vector<16x24xf32>
    %1198 = tpu.matmul %1196, %1197, %cst_399 {dimension_numbers = #tpu.dot_dimension_numbers<[1], [1], [0], [0], [0, 0, 1, 0], [], []>} : vector<16x8xf32>, vector<24x8xf32>, vector<16x24xf32> -> vector<16x24xf32>
    %cst_400 = arith.constant 0.353553385 : f32
    %1199 = vector.broadcast %cst_400 : f32 to vector<16x24xf32>
    %1200 = arith.mulf %1198, %1199 : vector<16x24xf32>
    %1201 = vector.broadcast %2 : vector<1x24xf32> to vector<16x24xf32>
    %1202 = arith.addf %1200, %1201 : vector<16x24xf32>
    %cst_401 = arith.constant dense<0xFF800000> : vector<16xf32>
    %1203 = vector.multi_reduction <maximumf>, %1202, %cst_401 [1] : vector<16x24xf32> to vector<16xf32>
    %1204 = vector.shape_cast %1203 : vector<16xf32> to vector<16x1xf32>
    %1205 = vector.broadcast %1204 : vector<16x1xf32> to vector<16x24xf32>
    %1206 = arith.subf %1202, %1205 : vector<16x24xf32>
    %1207 = math.exp %1206 : vector<16x24xf32>
    %cst_402 = arith.constant dense<0.000000e+00> : vector<16xf32>
    %1208 = vector.multi_reduction <add>, %1207, %cst_402 [1] : vector<16x24xf32> to vector<16xf32>
    %1209 = vector.shape_cast %1208 : vector<16xf32> to vector<16x1xf32>
    %1210 = tpu.reciprocal %1209 : vector<16x1xf32> -> vector<16x1xf32>
    %1211 = vector.broadcast %1210 : vector<16x1xf32> to vector<16x24xf32>
    %1212 = arith.mulf %1207, %1211 : vector<16x24xf32>
    %1213 = vector.extract_strided_slice %1138 {offsets = [0, 24], sizes = [24, 8], strides = [1, 1]} : vector<24x32xf32> to vector<24x8xf32>
    %cst_403 = arith.constant dense<0.000000e+00> : vector<16x8xf32>
    %1214 = tpu.matmul %1212, %1213, %cst_403 {dimension_numbers = #tpu.dot_dimension_numbers<[1], [0], [0], [1], [0, 0, 1, 1], [], []>} : vector<16x24xf32>, vector<24x8xf32>, vector<16x8xf32> -> vector<16x8xf32>
    %1215 = tpu.concatenate %1157, %1176, %1195, %1214 in 1 : vector<16x8xf32>, vector<16x8xf32>, vector<16x8xf32>, vector<16x8xf32> -> vector<16x32xf32>
    %cst_404 = arith.constant dense<0.000000e+00> : vector<16x32xf32>
    %1216 = tpu.matmul %1215, %1125, %cst_404 {dimension_numbers = #tpu.dot_dimension_numbers<[1], [0], [0], [1], [0, 0, 1, 1], [], []>} : vector<16x32xf32>, vector<32x32xf32>, vector<16x32xf32> -> vector<16x32xf32>
    %1217 = vector.broadcast %1126 : vector<1x32xf32> to vector<16x32xf32>
    %1218 = arith.addf %1216, %1217 : vector<16x32xf32>
    %1219 = arith.addf %1098, %1218 : vector<16x32xf32>
    %1220 = vector.extract_strided_slice %991 {offsets = [10, 0], sizes = [1, 32], strides = [1, 1]} : vector<16x128xf32> to vector<1x32xf32>
    %1221 = vector.extract_strided_slice %991 {offsets = [11, 0], sizes = [1, 32], strides = [1, 1]} : vector<16x128xf32> to vector<1x32xf32>
    %cst_405 = arith.constant dense<0.000000e+00> : vector<16xf32>
    %1222 = vector.multi_reduction <add>, %1219, %cst_405 [1] : vector<16x32xf32> to vector<16xf32>
    %1223 = vector.shape_cast %1222 : vector<16xf32> to vector<16x1xf32>
    %cst_406 = arith.constant 3.200000e+01 : f32
    %1224 = vector.broadcast %cst_406 : f32 to vector<16x1xf32>
    %1225 = arith.divf %1223, %1224 : vector<16x1xf32>
    %1226 = vector.broadcast %1225 : vector<16x1xf32> to vector<16x32xf32>
    %1227 = arith.subf %1219, %1226 : vector<16x32xf32>
    %1228 = arith.mulf %1227, %1227 : vector<16x32xf32>
    %cst_407 = arith.constant dense<0.000000e+00> : vector<16xf32>
    %1229 = vector.multi_reduction <add>, %1228, %cst_407 [1] : vector<16x32xf32> to vector<16xf32>
    %1230 = vector.shape_cast %1229 : vector<16xf32> to vector<16x1xf32>
    %cst_408 = arith.constant 3.200000e+01 : f32
    %1231 = vector.broadcast %cst_408 : f32 to vector<16x1xf32>
    %1232 = arith.divf %1230, %1231 : vector<16x1xf32>
    %cst_409 = arith.constant 9.99999974E-6 : f32
    %1233 = vector.broadcast %cst_409 : f32 to vector<16x1xf32>
    %1234 = arith.addf %1232, %1233 : vector<16x1xf32>
    %1235 = math.rsqrt %1234 : vector<16x1xf32>
    %1236 = vector.broadcast %1235 : vector<16x1xf32> to vector<16x32xf32>
    %1237 = arith.mulf %1227, %1236 : vector<16x32xf32>
    %1238 = vector.broadcast %1220 : vector<1x32xf32> to vector<16x32xf32>
    %1239 = arith.mulf %1237, %1238 : vector<16x32xf32>
    %1240 = vector.broadcast %1221 : vector<1x32xf32> to vector<16x32xf32>
    %1241 = arith.addf %1239, %1240 : vector<16x32xf32>
    %c1_410 = arith.constant 1 : index
    %c0_411 = arith.constant 0 : index
    %c0_412 = arith.constant 0 : index
    %1242 = vector.load %arg23[%c1_410, %c0_411, %c0_412] : memref<2x32x64xf32, #tpu.memory_space<vmem>>, vector<1x32x64xf32>
    %1243 = vector.shape_cast %1242 : vector<1x32x64xf32> to vector<32x64xf32>
    %cst_413 = arith.constant dense<0.000000e+00> : vector<16x64xf32>
    %1244 = tpu.matmul %1241, %1243, %cst_413 {dimension_numbers = #tpu.dot_dimension_numbers<[1], [0], [0], [1], [0, 0, 1, 1], [], []>} : vector<16x32xf32>, vector<32x64xf32>, vector<16x64xf32> -> vector<16x64xf32>
    %1245 = vector.extract_strided_slice %991 {offsets = [4, 0], sizes = [1, 64], strides = [1, 1]} : vector<16x128xf32> to vector<1x64xf32>
    %1246 = vector.broadcast %1245 : vector<1x64xf32> to vector<16x64xf32>
    %1247 = arith.addf %1244, %1246 : vector<16x64xf32>
    %1248 = arith.mulf %1247, %1247 : vector<16x64xf32>
    %1249 = arith.mulf %1247, %1248 : vector<16x64xf32>
    %cst_414 = arith.constant 4.471500e-02 : f32
    %1250 = vector.broadcast %cst_414 : f32 to vector<16x64xf32>
    %1251 = arith.mulf %1250, %1249 : vector<16x64xf32>
    %1252 = arith.addf %1247, %1251 : vector<16x64xf32>
    %cst_415 = arith.constant 0.797884583 : f32
    %1253 = vector.broadcast %cst_415 : f32 to vector<16x64xf32>
    %1254 = arith.mulf %1253, %1252 : vector<16x64xf32>
    %1255 = math.tanh %1254 : vector<16x64xf32>
    %cst_416 = arith.constant 1.000000e+00 : f32
    %1256 = vector.broadcast %cst_416 : f32 to vector<16x64xf32>
    %1257 = arith.addf %1256, %1255 : vector<16x64xf32>
    %cst_417 = arith.constant 5.000000e-01 : f32
    %1258 = vector.broadcast %cst_417 : f32 to vector<16x64xf32>
    %1259 = arith.mulf %1258, %1257 : vector<16x64xf32>
    %1260 = arith.mulf %1247, %1259 : vector<16x64xf32>
    %c1_418 = arith.constant 1 : index
    %c0_419 = arith.constant 0 : index
    %c0_420 = arith.constant 0 : index
    %1261 = vector.load %arg24[%c1_418, %c0_419, %c0_420] : memref<2x64x32xf32, #tpu.memory_space<vmem>>, vector<1x64x32xf32>
    %1262 = vector.shape_cast %1261 : vector<1x64x32xf32> to vector<64x32xf32>
    %cst_421 = arith.constant dense<0.000000e+00> : vector<16x32xf32>
    %1263 = tpu.matmul %1260, %1262, %cst_421 {dimension_numbers = #tpu.dot_dimension_numbers<[1], [0], [0], [1], [0, 0, 1, 1], [], []>} : vector<16x64xf32>, vector<64x32xf32>, vector<16x32xf32> -> vector<16x32xf32>
    %1264 = arith.addf %1219, %1263 : vector<16x32xf32>
    %1265 = vector.extract_strided_slice %991 {offsets = [5, 0], sizes = [1, 32], strides = [1, 1]} : vector<16x128xf32> to vector<1x32xf32>
    %1266 = vector.broadcast %1265 : vector<1x32xf32> to vector<16x32xf32>
    %1267 = arith.addf %1264, %1266 : vector<16x32xf32>
    %1268 = vector.extract_strided_slice %0 {offsets = [4, 0], sizes = [1, 32], strides = [1, 1]} : vector<8x128xf32> to vector<1x32xf32>
    %1269 = vector.extract_strided_slice %0 {offsets = [5, 0], sizes = [1, 32], strides = [1, 1]} : vector<8x128xf32> to vector<1x32xf32>
    %cst_422 = arith.constant dense<0.000000e+00> : vector<16xf32>
    %1270 = vector.multi_reduction <add>, %1267, %cst_422 [1] : vector<16x32xf32> to vector<16xf32>
    %1271 = vector.shape_cast %1270 : vector<16xf32> to vector<16x1xf32>
    %cst_423 = arith.constant 3.200000e+01 : f32
    %1272 = vector.broadcast %cst_423 : f32 to vector<16x1xf32>
    %1273 = arith.divf %1271, %1272 : vector<16x1xf32>
    %1274 = vector.broadcast %1273 : vector<16x1xf32> to vector<16x32xf32>
    %1275 = arith.subf %1267, %1274 : vector<16x32xf32>
    %1276 = arith.mulf %1275, %1275 : vector<16x32xf32>
    %cst_424 = arith.constant dense<0.000000e+00> : vector<16xf32>
    %1277 = vector.multi_reduction <add>, %1276, %cst_424 [1] : vector<16x32xf32> to vector<16xf32>
    %1278 = vector.shape_cast %1277 : vector<16xf32> to vector<16x1xf32>
    %cst_425 = arith.constant 3.200000e+01 : f32
    %1279 = vector.broadcast %cst_425 : f32 to vector<16x1xf32>
    %1280 = arith.divf %1278, %1279 : vector<16x1xf32>
    %cst_426 = arith.constant 9.99999974E-6 : f32
    %1281 = vector.broadcast %cst_426 : f32 to vector<16x1xf32>
    %1282 = arith.addf %1280, %1281 : vector<16x1xf32>
    %1283 = math.rsqrt %1282 : vector<16x1xf32>
    %1284 = vector.broadcast %1283 : vector<16x1xf32> to vector<16x32xf32>
    %1285 = arith.mulf %1275, %1284 : vector<16x32xf32>
    %1286 = vector.broadcast %1268 : vector<1x32xf32> to vector<16x32xf32>
    %1287 = arith.mulf %1285, %1286 : vector<16x32xf32>
    %1288 = vector.broadcast %1269 : vector<1x32xf32> to vector<16x32xf32>
    %1289 = arith.addf %1287, %1288 : vector<16x32xf32>
    %c0_427 = arith.constant 0 : index
    %c0_428 = arith.constant 0 : index
    %1290 = vector.load %arg7[%c0_427, %c0_428] : memref<32x128xf32, #tpu.memory_space<vmem>>, vector<32x128xf32>
    %cst_429 = arith.constant dense<0.000000e+00> : vector<16x128xf32>
    %1291 = tpu.matmul %1289, %1290, %cst_429 {dimension_numbers = #tpu.dot_dimension_numbers<[1], [0], [0], [1], [0, 0, 1, 1], [], []>} : vector<16x32xf32>, vector<32x128xf32>, vector<16x128xf32> -> vector<16x128xf32>
    %1292 = vector.extract_strided_slice %0 {offsets = [6, 0], sizes = [1, 128], strides = [1, 1]} : vector<8x128xf32> to vector<1x128xf32>
    %1293 = vector.broadcast %1292 : vector<1x128xf32> to vector<16x128xf32>
    %1294 = arith.addf %1291, %1293 : vector<16x128xf32>
    %c0_430 = arith.constant 0 : index
    %c0_431 = arith.constant 0 : index
    %c0_432 = arith.constant 0 : index
    %1295 = vector.load %arg29[%c0_430, %c0_431, %c0_432] : memref<1x16x128xf32, #tpu.memory_space<vmem>>, vector<1x16x128xf32>
    %1296 = vector.shape_cast %1295 : vector<1x16x128xf32> to vector<16x128xf32>
    %1297 = vector.shape_cast %1294 : vector<16x128xf32> to vector<1x16x128xf32>
    tpu.vector_store %arg29[%c0_430, %c0_431, %c0_432], %1297 {strides = array<i32>} : memref<1x16x128xf32, #tpu.memory_space<vmem>>, vector<1x16x128xf32>,
    return
  }
  func.func @transform_0(%arg0: i32) -> (i32, i32, i32) {
    %c0_i32 = arith.constant 0 : i32
    %c0_i32_0 = arith.constant 0 : i32
    %c0_i32_1 = arith.constant 0 : i32
    return %arg0, %c0_i32, %c0_i32_0 : i32, i32, i32
  }
  func.func @transform_1(%arg0: i32) -> (i32, i32, i32) {
    %c0_i32 = arith.constant 0 : i32
    %c0_i32_0 = arith.constant 0 : i32
    %c0_i32_1 = arith.constant 0 : i32
    return %arg0, %c0_i32, %c0_i32_0 : i32, i32, i32
  }
  func.func @transform_2(%arg0: i32) -> (i32, i32, i32) {
    %c0_i32 = arith.constant 0 : i32
    %c0_i32_0 = arith.constant 0 : i32
    %c0_i32_1 = arith.constant 0 : i32
    return %arg0, %c0_i32, %c0_i32_0 : i32, i32, i32
  }
  func.func @transform_3(%arg0: i32) -> (i32, i32, i32) {
    %c0_i32 = arith.constant 0 : i32
    %c0_i32_0 = arith.constant 0 : i32
    %c0_i32_1 = arith.constant 0 : i32
    return %arg0, %c0_i32, %c0_i32_0 : i32, i32, i32
  }
  func.func @transform_4(%arg0: i32) -> (i32, i32, i32) {
    %c0_i32 = arith.constant 0 : i32
    %c0_i32_0 = arith.constant 0 : i32
    %c0_i32_1 = arith.constant 0 : i32
    return %arg0, %c0_i32, %c0_i32_0 : i32, i32, i32
  }
  func.func @transform_5(%arg0: i32) -> (i32, i32) {
    %c0_i32 = arith.constant 0 : i32
    %c0_i32_0 = arith.constant 0 : i32
    %c0_i32_1 = arith.constant 0 : i32
    return %c0_i32, %c0_i32_0 : i32, i32
  }
  func.func @transform_6(%arg0: i32) -> (i32, i32) {
    %c0_i32 = arith.constant 0 : i32
    %c0_i32_0 = arith.constant 0 : i32
    %c0_i32_1 = arith.constant 0 : i32
    return %c0_i32, %c0_i32_0 : i32, i32
  }
  func.func @transform_7(%arg0: i32) -> (i32, i32) {
    %c0_i32 = arith.constant 0 : i32
    %c0_i32_0 = arith.constant 0 : i32
    %c0_i32_1 = arith.constant 0 : i32
    return %c0_i32, %c0_i32_0 : i32, i32
  }
  func.func @transform_8(%arg0: i32) -> (i32, i32, i32) {
    %c0_i32 = arith.constant 0 : i32
    %c0_i32_0 = arith.constant 0 : i32
    %c0_i32_1 = arith.constant 0 : i32
    %c0_i32_2 = arith.constant 0 : i32
    return %c0_i32, %c0_i32_0, %c0_i32_1 : i32, i32, i32
  }
  func.func @transform_9(%arg0: i32) -> (i32, i32, i32) {
    %c0_i32 = arith.constant 0 : i32
    %c0_i32_0 = arith.constant 0 : i32
    %c0_i32_1 = arith.constant 0 : i32
    %c0_i32_2 = arith.constant 0 : i32
    return %c0_i32, %c0_i32_0, %c0_i32_1 : i32, i32, i32
  }
  func.func @transform_10(%arg0: i32) -> (i32, i32, i32) {
    %c0_i32 = arith.constant 0 : i32
    %c0_i32_0 = arith.constant 0 : i32
    %c0_i32_1 = arith.constant 0 : i32
    %c0_i32_2 = arith.constant 0 : i32
    return %c0_i32, %c0_i32_0, %c0_i32_1 : i32, i32, i32
  }
  func.func @transform_11(%arg0: i32) -> (i32, i32, i32) {
    %c0_i32 = arith.constant 0 : i32
    %c0_i32_0 = arith.constant 0 : i32
    %c0_i32_1 = arith.constant 0 : i32
    %c0_i32_2 = arith.constant 0 : i32
    return %c0_i32, %c0_i32_0, %c0_i32_1 : i32, i32, i32
  }
  func.func @transform_12(%arg0: i32) -> (i32, i32, i32) {
    %c0_i32 = arith.constant 0 : i32
    %c0_i32_0 = arith.constant 0 : i32
    %c0_i32_1 = arith.constant 0 : i32
    %c0_i32_2 = arith.constant 0 : i32
    return %c0_i32, %c0_i32_0, %c0_i32_1 : i32, i32, i32
  }
  func.func @transform_13(%arg0: i32) -> (i32, i32, i32) {
    %c0_i32 = arith.constant 0 : i32
    %c0_i32_0 = arith.constant 0 : i32
    %c0_i32_1 = arith.constant 0 : i32
    %c0_i32_2 = arith.constant 0 : i32
    return %c0_i32, %c0_i32_0, %c0_i32_1 : i32, i32, i32
  }
  func.func @transform_14(%arg0: i32) -> (i32, i32, i32) {
    %c0_i32 = arith.constant 0 : i32
    %c0_i32_0 = arith.constant 0 : i32
    %c0_i32_1 = arith.constant 0 : i32
    %c0_i32_2 = arith.constant 0 : i32
    return %c0_i32, %c0_i32_0, %c0_i32_1 : i32, i32, i32
  }
  func.func @transform_15(%arg0: i32) -> (i32, i32, i32) {
    %c0_i32 = arith.constant 0 : i32
    %c0_i32_0 = arith.constant 0 : i32
    %c0_i32_1 = arith.constant 0 : i32
    %c0_i32_2 = arith.constant 0 : i32
    return %c0_i32, %c0_i32_0, %c0_i32_1 : i32, i32, i32
  }
  func.func @transform_16(%arg0: i32) -> (i32, i32, i32) {
    %c0_i32 = arith.constant 0 : i32
    %c0_i32_0 = arith.constant 0 : i32
    %c0_i32_1 = arith.constant 0 : i32
    %c0_i32_2 = arith.constant 0 : i32
    return %c0_i32, %c0_i32_0, %c0_i32_1 : i32, i32, i32
  }
  func.func @transform_17(%arg0: i32) -> (i32, i32, i32) {
    %c0_i32 = arith.constant 0 : i32
    %c0_i32_0 = arith.constant 0 : i32
    %c0_i32_1 = arith.constant 0 : i32
    %c0_i32_2 = arith.constant 0 : i32
    return %c0_i32, %c0_i32_0, %c0_i32_1 : i32, i32, i32
  }
  func.func @transform_18(%arg0: i32) -> (i32, i32, i32) {
    %c0_i32 = arith.constant 0 : i32
    %c0_i32_0 = arith.constant 0 : i32
    %c0_i32_1 = arith.constant 0 : i32
    %c0_i32_2 = arith.constant 0 : i32
    return %c0_i32, %c0_i32_0, %c0_i32_1 : i32, i32, i32
  }
  func.func @transform_19(%arg0: i32) -> (i32, i32, i32) {
    %c0_i32 = arith.constant 0 : i32
    %c0_i32_0 = arith.constant 0 : i32
    %c0_i32_1 = arith.constant 0 : i32
    %c0_i32_2 = arith.constant 0 : i32
    return %c0_i32, %c0_i32_0, %c0_i32_1 : i32, i32, i32
  }
  func.func @transform_20(%arg0: i32) -> (i32, i32, i32) {
    %c0_i32 = arith.constant 0 : i32
    %c0_i32_0 = arith.constant 0 : i32
    %c0_i32_1 = arith.constant 0 : i32
    %c0_i32_2 = arith.constant 0 : i32
    return %c0_i32, %c0_i32_0, %c0_i32_1 : i32, i32, i32
  }
  func.func @transform_21(%arg0: i32) -> (i32, i32, i32) {
    %c0_i32 = arith.constant 0 : i32
    %c0_i32_0 = arith.constant 0 : i32
    %c0_i32_1 = arith.constant 0 : i32
    %c0_i32_2 = arith.constant 0 : i32
    return %c0_i32, %c0_i32_0, %c0_i32_1 : i32, i32, i32
  }
  func.func @transform_22(%arg0: i32) -> (i32, i32, i32) {
    %c0_i32 = arith.constant 0 : i32
    %c0_i32_0 = arith.constant 0 : i32
    %c0_i32_1 = arith.constant 0 : i32
    %c0_i32_2 = arith.constant 0 : i32
    return %c0_i32, %c0_i32_0, %c0_i32_1 : i32, i32, i32
  }
  func.func @transform_23(%arg0: i32) -> (i32, i32, i32) {
    %c0_i32 = arith.constant 0 : i32
    %c0_i32_0 = arith.constant 0 : i32
    %c0_i32_1 = arith.constant 0 : i32
    %c0_i32_2 = arith.constant 0 : i32
    return %c0_i32, %c0_i32_0, %c0_i32_1 : i32, i32, i32
  }
  func.func @transform_24(%arg0: i32) -> (i32, i32, i32) {
    %c0_i32 = arith.constant 0 : i32
    %c0_i32_0 = arith.constant 0 : i32
    %c0_i32_1 = arith.constant 0 : i32
    %c0_i32_2 = arith.constant 0 : i32
    return %c0_i32, %c0_i32_0, %c0_i32_1 : i32, i32, i32
  }
  func.func @transform_25(%arg0: i32) -> (i32, i32, i32) {
    %c0_i32 = arith.constant 0 : i32
    %c0_i32_0 = arith.constant 0 : i32
    %c0_i32_1 = arith.constant 0 : i32
    return %arg0, %c0_i32, %c0_i32_0 : i32, i32, i32
  }
  func.func @transform_26(%arg0: i32) -> (i32, i32, i32) {
    %c0_i32 = arith.constant 0 : i32
    %c0_i32_0 = arith.constant 0 : i32
    %c0_i32_1 = arith.constant 0 : i32
    return %arg0, %c0_i32, %c0_i32_0 : i32, i32, i32
  }
  func.func @transform_27(%arg0: i32) -> (i32, i32, i32) {
    %c0_i32 = arith.constant 0 : i32
    %c0_i32_0 = arith.constant 0 : i32
    %c0_i32_1 = arith.constant 0 : i32
    return %arg0, %c0_i32, %c0_i32_0 : i32, i32, i32
  }
  func.func @transform_28(%arg0: i32) -> (i32, i32, i32) {
    %c0_i32 = arith.constant 0 : i32
    %c0_i32_0 = arith.constant 0 : i32
    %c0_i32_1 = arith.constant 0 : i32
    return %arg0, %c0_i32, %c0_i32_0 : i32, i32, i32
  }
}

</mosaic_0001>

<llo_original>
// kernel: prose_fwd.1
$region0: #{prose_fwd.1}
  #allocation0 [shape = 'u32[]', space=smem, size = 0x4, offset = 0x4, fixed_abs, tag = 'smem constant byte address 0x4 - core index']
  #allocation1 [shape = 'u32[72,128]{1,0:T(1,128)}', space=vmem, size = 0x9000, scoped, tag = 'internal scratch']
  %s0 = inlined_call_operand.vmem [shape: f32[2,16,8], index: 0, kind: input, shape index: {}]
  %s1 = inlined_call_operand.vmem [shape: f32[2,16,32], index: 1, kind: input, shape index: {}]
  %s2 = inlined_call_operand.vmem [shape: f32[2,8,32], index: 2, kind: input, shape index: {}]
  %s3 = inlined_call_operand.vmem [shape: f32[2,1,24], index: 3, kind: input, shape index: {}]
  %s4 = inlined_call_operand.vmem [shape: f32[2,16,32], index: 4, kind: input, shape index: {}]
  %s5 = inlined_call_operand.vmem [shape: f32[8,32], index: 5, kind: input, shape index: {}]
  %s6 = inlined_call_operand.vmem [shape: f32[32,128], index: 6, kind: input, shape index: {}]
  %s7 = inlined_call_operand.vmem [shape: f32[8,128], index: 7, kind: input, shape index: {}]
  %s8 = inlined_call_operand.vmem [shape: f32[2,32,96], index: 8, kind: input, shape index: {}]
  %s9 = inlined_call_operand.vmem [shape: f32[2,32,32], index: 9, kind: input, shape index: {}]
  %s10 = inlined_call_operand.vmem [shape: f32[2,32,64], index: 10, kind: input, shape index: {}]
  %s11 = inlined_call_operand.vmem [shape: f32[2,64,32], index: 11, kind: input, shape index: {}]
  %s12 = inlined_call_operand.vmem [shape: f32[2,8,128], index: 12, kind: input, shape index: {}]
  %s13 = inlined_call_operand.vmem [shape: f32[2,32,96], index: 13, kind: input, shape index: {}]
  %s14 = inlined_call_operand.vmem [shape: f32[2,32,32], index: 14, kind: input, shape index: {}]
  %s15 = inlined_call_operand.vmem [shape: f32[2,32,64], index: 15, kind: input, shape index: {}]
  %s16 = inlined_call_operand.vmem [shape: f32[2,64,32], index: 16, kind: input, shape index: {}]
  %s17 = inlined_call_operand.vmem [shape: f32[2,8,128], index: 17, kind: input, shape index: {}]
  %s18 = inlined_call_operand.vmem [shape: f32[2,32,96], index: 18, kind: input, shape index: {}]
  %s19 = inlined_call_operand.vmem [shape: f32[2,32,32], index: 19, kind: input, shape index: {}]
  %s20 = inlined_call_operand.vmem [shape: f32[2,32,96], index: 20, kind: input, shape index: {}]
  %s21 = inlined_call_operand.vmem [shape: f32[2,32,32], index: 21, kind: input, shape index: {}]
  %s22 = inlined_call_operand.vmem [shape: f32[2,32,64], index: 22, kind: input, shape index: {}]
  %s23 = inlined_call_operand.vmem [shape: f32[2,64,32], index: 23, kind: input, shape index: {}]
  %s24 = inlined_call_operand.vmem [shape: f32[2,16,128], index: 24, kind: input, shape index: {}]
  %s25 = inlined_call_operand.hbm [shape: f32[2,16,32], index: 25, kind: output, shape index: {0}]
  %s26 = inlined_call_operand.hbm [shape: f32[2,16,32], index: 26, kind: output, shape index: {1}]
  %s27 = inlined_call_operand.hbm [shape: f32[2,24,32], index: 27, kind: output, shape index: {2}]
  %s28 = inlined_call_operand.vmem [shape: f32[2,16,128], index: 28, kind: output, shape index: {3}]
  %29 = xla_tuple %s25, %s26, %s27, %s28
  %s30 = sld [smem:[#allocation0]]
  $region157: #{prose_fwd.1} parent=0
    _
  %s32 = ssub.s32 1, %s30
  %s33 = scalar_select 0, %s32, %s30
  $region1: #{prose_fwd.1} parent=0
    #allocation2 [shape = 'u8[16384]{0}', space=vmem, size = 0x4000, scoped, tag = 'output window, operand 0']
    #allocation3 [shape = 's32[2]{0}', space=sflag, size = 0x8, scoped, tag = 'scoped memory for prose_fwd.1']
    #allocation4 [shape = 'u8[16384]{0}', space=vmem, size = 0x4000, scoped, tag = 'output window, operand 1']
    #allocation5 [shape = 's32[2]{0}', space=sflag, size = 0x8, scoped, tag = 'scoped memory for prose_fwd.1']
    #allocation6 [shape = 'u8[24576]{0}', space=vmem, size = 0x6000, scoped, tag = 'output window, operand 2']
    %34 = vsyncpa [#allocation3], 0
    %s35 = scalar_lea.sflag [#allocation3], 1
    %36 = vsyncpa %s35, 0
    %37 = vsyncpa [#allocation5], 0
    %s38 = scalar_lea.sflag [#allocation5], 1
    %39 = vsyncpa %s38, 0
    loop: start=0, step=1, limit=4
    $region2: #{prose_fwd.1} parent=1 // loop_pre_header
      _
    $region3: #{prose_fwd.1} parent=1 // loop_header
      %s41 = sphi 0, %s45
      %p42 = scmp.ge.s32.totalorder %s41, 4
      %s51 = sphi 0, %s53
      %s54 = sphi 0, %s51
      %s55 = sphi 0, %s54
      %s71 = sphi 0, %s55
      %s77 = sphi 0, %s79
      %s80 = sphi 0, %s77
      %s81 = sphi 0, %s80
      %s97 = sphi 0, %s81
      %s103 = sphi 0, %s105
      %s106 = sphi 0, %s103
      %s107 = sphi 0, %s106
      %s123 = sphi 0, %s107
      %s129 = sphi 0, %s131
      %s132 = sphi 0, %s129
      %s133 = sphi 0, %s132
      %s149 = sphi 0, %s133
      %s155 = sphi 0, %s157
      %s158 = sphi 0, %s155
      %s159 = sphi 0, %s158
      %s175 = sphi 0, %s159
      %s179 = sphi 0, %s179
      %s181 = sphi 0, %s179
      %s182 = sphi 0, %s181
      %s196 = sphi 0, %s182
      %s200 = sphi 0, %s200
      %s202 = sphi 0, %s200
      %s203 = sphi 0, %s202
      %s217 = sphi 0, %s203
      %s221 = sphi 0, %s221
      %s223 = sphi 0, %s221
      %s224 = sphi 0, %s223
      %s238 = sphi 0, %s224
      %s242 = sphi 0, %s242
      %s244 = sphi 0, %s242
      %s245 = sphi 0, %s244
      %s259 = sphi 0, %s245
      %s263 = sphi 0, %s263
      %s265 = sphi 0, %s263
      %s266 = sphi 0, %s265
      %s280 = sphi 0, %s266
      %s284 = sphi 0, %s284
      %s286 = sphi 0, %s284
      %s287 = sphi 0, %s286
      %s301 = sphi 0, %s287
      %s305 = sphi 0, %s305
      %s307 = sphi 0, %s305
      %s308 = sphi 0, %s307
      %s322 = sphi 0, %s308
      %s326 = sphi 0, %s326
      %s328 = sphi 0, %s326
      %s329 = sphi 0, %s328
      %s343 = sphi 0, %s329
      %s347 = sphi 0, %s347
      %s349 = sphi 0, %s347
      %s350 = sphi 0, %s349
      %s364 = sphi 0, %s350
      %s368 = sphi 0, %s368
      %s370 = sphi 0, %s368
      %s371 = sphi 0, %s370
      %s385 = sphi 0, %s371
      %s389 = sphi 0, %s389
      %s391 = sphi 0, %s389
      %s392 = sphi 0, %s391
      %s406 = sphi 0, %s392
      %s410 = sphi 0, %s410
      %s412 = sphi 0, %s410
      %s413 = sphi 0, %s412
      %s427 = sphi 0, %s413
      %s431 = sphi 0, %s431
      %s433 = sphi 0, %s431
      %s434 = sphi 0, %s433
      %s448 = sphi 0, %s434
      %s452 = sphi 0, %s452
      %s454 = sphi 0, %s452
      %s455 = sphi 0, %s454
      %s469 = sphi 0, %s455
      %s473 = sphi 0, %s473
      %s475 = sphi 0, %s473
      %s476 = sphi 0, %s475
      %s490 = sphi 0, %s476
      %s494 = sphi 0, %s494
      %s496 = sphi 0, %s494
      %s497 = sphi 0, %s496
      %s511 = sphi 0, %s497
      %s515 = sphi 0, %s515
      %s517 = sphi 0, %s515
      %s518 = sphi 0, %s517
      %s532 = sphi 0, %s518
      %s536 = sphi 0, %s536
      %s538 = sphi 0, %s536
      %s539 = sphi 0, %s538
      %s553 = sphi 0, %s539
      %s557 = sphi 0, %s557
      %s559 = sphi 0, %s557
      %s560 = sphi 0, %s559
      %s574 = sphi 0, %s560
      %s578 = sphi 0, %s578
      %s580 = sphi 0, %s578
      %s581 = sphi 0, %s580
      %s595 = sphi 0, %s581
      %s601 = sphi 0, %s603
      %s604 = sphi 0, %s601
      %s605 = sphi 0, %s604
      %s621 = sphi 0, %s605
      %s627 = sphi 0, %s629
      %s630 = sphi 0, %s627
      %s631 = sphi 0, %s630
      %s647 = sphi 0, %s631
      %s653 = sphi 0, %s655
      %s656 = sphi 0, %s653
      %s657 = sphi 0, %s656
      %s673 = sphi 0, %s657
      %s679 = sphi 0, %s681
      %s682 = sphi 0, %s679
      %s683 = sphi 0, %s682
      %s699 = sphi 0, %s683
    $region4: #{prose_fwd.1} parent=1 // loop_header_branch
      %44 = sbr.rel (%p42) target = $region8
    $region5: #{prose_fwd.1} parent=1 // loop_body
      %s46 = ssub.s32 %s41, 1
      %s47 = ssub.s32 %s41, 2
      %s48 = sadd.s32 %s41, 1
      %s49 = ssub.s32 %s41, %s48
      %p50 = scmp.eq.s32.totalorder %s49, 0
      %s52 = sadd.s32 %s51, 1
      %s53 = scalar_select %p50, %s51, %s52
      %p56 = pneg %p50
      %p57 = scmp.eq.s32.totalorder %s41, 1
      %p58 = por %p56, %p57
      %p59 = scmp.ne.s32.totalorder %s51, %s54
      %p60 = scmp.eq.s32.totalorder %s41, 0
      %p61 = por %p59, %p60
      %p62 = scmp.ne.s32.totalorder %s51, %s54
      %p63 = scmp.eq.s32.totalorder %s46, 1
      %p64 = por %p62, %p63
      %p65 = scmp.ne.s32.totalorder %s54, %s55
      %p66 = scmp.eq.s32.totalorder %s46, 0
      %p67 = por %p65, %p66
      %p68 = scmp.ne.s32.totalorder %s54, %s55
      %p69 = scmp.eq.s32.totalorder %s47, 1
      %p70 = por %p68, %p69
      %p72 = scmp.ne.s32.totalorder %s55, %s71
      %p73 = scmp.eq.s32.totalorder %s47, 0
      %p74 = por %p72, %p73
      %s75 = ssub.s32 %s41, %s48
      %p76 = scmp.eq.s32.totalorder %s75, 0
      %s78 = sadd.s32 %s77, 1
      %s79 = scalar_select %p76, %s77, %s78
      %p82 = pneg %p76
      %p83 = scmp.eq.s32.totalorder %s41, 1
      %p84 = por %p82, %p83
      %p85 = scmp.ne.s32.totalorder %s77, %s80
      %p86 = scmp.eq.s32.totalorder %s41, 0
      %p87 = por %p85, %p86
      %p88 = scmp.ne.s32.totalorder %s77, %s80
      %p89 = scmp.eq.s32.totalorder %s46, 1
      %p90 = por %p88, %p89
      %p91 = scmp.ne.s32.totalorder %s80, %s81
      %p92 = scmp.eq.s32.totalorder %s46, 0
      %p93 = por %p91, %p92
      %p94 = scmp.ne.s32.totalorder %s80, %s81
      %p95 = scmp.eq.s32.totalorder %s47, 1
      %p96 = por %p94, %p95
      %p98 = scmp.ne.s32.totalorder %s81, %s97
      %p99 = scmp.eq.s32.totalorder %s47, 0
      %p100 = por %p98, %p99
      %s101 = ssub.s32 %s41, %s48
      %p102 = scmp.eq.s32.totalorder %s101, 0
      %s104 = sadd.s32 %s103, 1
      %s105 = scalar_select %p102, %s103, %s104
      %p108 = pneg %p102
      %p109 = scmp.eq.s32.totalorder %s41, 1
      %p110 = por %p108, %p109
      %p111 = scmp.ne.s32.totalorder %s103, %s106
      %p112 = scmp.eq.s32.totalorder %s41, 0
      %p113 = por %p111, %p112
      %p114 = scmp.ne.s32.totalorder %s103, %s106
      %p115 = scmp.eq.s32.totalorder %s46, 1
      %p116 = por %p114, %p115
      %p117 = scmp.ne.s32.totalorder %s106, %s107
      %p118 = scmp.eq.s32.totalorder %s46, 0
      %p119 = por %p117, %p118
      %p120 = scmp.ne.s32.totalorder %s106, %s107
      %p121 = scmp.eq.s32.totalorder %s47, 1
      %p122 = por %p120, %p121
      %p124 = scmp.ne.s32.totalorder %s107, %s123
      %p125 = scmp.eq.s32.totalorder %s47, 0
      %p126 = por %p124, %p125
      %s127 = ssub.s32 %s41, %s48
      %p128 = scmp.eq.s32.totalorder %s127, 0
      %s130 = sadd.s32 %s129, 1
      %s131 = scalar_select %p128, %s129, %s130
      %p134 = pneg %p128
      %p135 = scmp.eq.s32.totalorder %s41, 1
      %p136 = por %p134, %p135
      %p137 = scmp.ne.s32.totalorder %s129, %s132
      %p138 = scmp.eq.s32.totalorder %s41, 0
      %p139 = por %p137, %p138
      %p140 = scmp.ne.s32.totalorder %s129, %s132
      %p141 = scmp.eq.s32.totalorder %s46, 1
      %p142 = por %p140, %p141
      %p143 = scmp.ne.s32.totalorder %s132, %s133
      %p144 = scmp.eq.s32.totalorder %s46, 0
      %p145 = por %p143, %p144
      %p146 = scmp.ne.s32.totalorder %s132, %s133
      %p147 = scmp.eq.s32.totalorder %s47, 1
      %p148 = por %p146, %p147
      %p150 = scmp.ne.s32.totalorder %s133, %s149
      %p151 = scmp.eq.s32.totalorder %s47, 0
      %p152 = por %p150, %p151
      %s153 = ssub.s32 %s41, %s48
      %p154 = scmp.eq.s32.totalorder %s153, 0
      %s156 = sadd.s32 %s155, 1
      %s157 = scalar_select %p154, %s155, %s156
      %p160 = pneg %p154
      %p161 = scmp.eq.s32.totalorder %s41, 1
      %p162 = por %p160, %p161
      %p163 = scmp.ne.s32.totalorder %s155, %s158
      %p164 = scmp.eq.s32.totalorder %s41, 0
      %p165 = por %p163, %p164
      %p166 = scmp.ne.s32.totalorder %s155, %s158
      %p167 = scmp.eq.s32.totalorder %s46, 1
      %p168 = por %p166, %p167
      %p169 = scmp.ne.s32.totalorder %s158, %s159
      %p170 = scmp.eq.s32.totalorder %s46, 0
      %p171 = por %p169, %p170
      %p172 = scmp.ne.s32.totalorder %s158, %s159
      %p173 = scmp.eq.s32.totalorder %s47, 1
      %p174 = por %p172, %p173
      %p176 = scmp.ne.s32.totalorder %s159, %s175
      %p177 = scmp.eq.s32.totalorder %s47, 0
      %p178 = por %p176, %p177
      %s180 = sadd.s32 %s179, 1
      %p183 = scmp.eq.s32.totalorder %s41, 1
      %p184 = scmp.ne.s32.totalorder %s179, %s181
      %p185 = scmp.eq.s32.totalorder %s41, 0
      %p186 = por %p184, %p185
      %p187 = scmp.ne.s32.totalorder %s179, %s181
      %p188 = scmp.eq.s32.totalorder %s46, 1
      %p189 = por %p187, %p188
      %p190 = scmp.ne.s32.totalorder %s181, %s182
      %p191 = scmp.eq.s32.totalorder %s46, 0
      %p192 = por %p190, %p191
      %p193 = scmp.ne.s32.totalorder %s181, %s182
      %p194 = scmp.eq.s32.totalorder %s47, 1
      %p195 = por %p193, %p194
      %p197 = scmp.ne.s32.totalorder %s182, %s196
      %p198 = scmp.eq.s32.totalorder %s47, 0
      %p199 = por %p197, %p198
      %s201 = sadd.s32 %s200, 1
      %p204 = scmp.eq.s32.totalorder %s41, 1
      %p205 = scmp.ne.s32.totalorder %s200, %s202
      %p206 = scmp.eq.s32.totalorder %s41, 0
      %p207 = por %p205, %p206
      %p208 = scmp.ne.s32.totalorder %s200, %s202
      %p209 = scmp.eq.s32.totalorder %s46, 1
      %p210 = por %p208, %p209
      %p211 = scmp.ne.s32.totalorder %s202, %s203
      %p212 = scmp.eq.s32.totalorder %s46, 0
      %p213 = por %p211, %p212
      %p214 = scmp.ne.s32.totalorder %s202, %s203
      %p215 = scmp.eq.s32.totalorder %s47, 1
      %p216 = por %p214, %p215
      %p218 = scmp.ne.s32.totalorder %s203, %s217
      %p219 = scmp.eq.s32.totalorder %s47, 0
      %p220 = por %p218, %p219
      %s222 = sadd.s32 %s221, 1
      %p225 = scmp.eq.s32.totalorder %s41, 1
      %p226 = scmp.ne.s32.totalorder %s221, %s223
      %p227 = scmp.eq.s32.totalorder %s41, 0
      %p228 = por %p226, %p227
      %p229 = scmp.ne.s32.totalorder %s221, %s223
      %p230 = scmp.eq.s32.totalorder %s46, 1
      %p231 = por %p229, %p230
      %p232 = scmp.ne.s32.totalorder %s223, %s224
      %p233 = scmp.eq.s32.totalorder %s46, 0
      %p234 = por %p232, %p233
      %p235 = scmp.ne.s32.totalorder %s223, %s224
      %p236 = scmp.eq.s32.totalorder %s47, 1
      %p237 = por %p235, %p236
      %p239 = scmp.ne.s32.totalorder %s224, %s238
      %p240 = scmp.eq.s32.totalorder %s47, 0
      %p241 = por %p239, %p240
      %s243 = sadd.s32 %s242, 1
      %p246 = scmp.eq.s32.totalorder %s41, 1
      %p247 = scmp.ne.s32.totalorder %s242, %s244
      %p248 = scmp.eq.s32.totalorder %s41, 0
      %p249 = por %p247, %p248
      %p250 = scmp.ne.s32.totalorder %s242, %s244
      %p251 = scmp.eq.s32.totalorder %s46, 1
      %p252 = por %p250, %p251
      %p253 = scmp.ne.s32.totalorder %s244, %s245
      %p254 = scmp.eq.s32.totalorder %s46, 0
      %p255 = por %p253, %p254
      %p256 = scmp.ne.s32.totalorder %s244, %s245
      %p257 = scmp.eq.s32.totalorder %s47, 1
      %p258 = por %p256, %p257
      %p260 = scmp.ne.s32.totalorder %s245, %s259
      %p261 = scmp.eq.s32.totalorder %s47, 0
      %p262 = por %p260, %p261
      %s264 = sadd.s32 %s263, 1
      %p267 = scmp.eq.s32.totalorder %s41, 1
      %p268 = scmp.ne.s32.totalorder %s263, %s265
      %p269 = scmp.eq.s32.totalorder %s41, 0
      %p270 = por %p268, %p269
      %p271 = scmp.ne.s32.totalorder %s263, %s265
      %p272 = scmp.eq.s32.totalorder %s46, 1
      %p273 = por %p271, %p272
      %p274 = scmp.ne.s32.totalorder %s265, %s266
      %p275 = scmp.eq.s32.totalorder %s46, 0
      %p276 = por %p274, %p275
      %p277 = scmp.ne.s32.totalorder %s265, %s266
      %p278 = scmp.eq.s32.totalorder %s47, 1
      %p279 = por %p277, %p278
      %p281 = scmp.ne.s32.totalorder %s266, %s280
      %p282 = scmp.eq.s32.totalorder %s47, 0
      %p283 = por %p281, %p282
      %s285 = sadd.s32 %s284, 1
      %p288 = scmp.eq.s32.totalorder %s41, 1
      %p289 = scmp.ne.s32.totalorder %s284, %s286
      %p290 = scmp.eq.s32.totalorder %s41, 0
      %p291 = por %p289, %p290
      %p292 = scmp.ne.s32.totalorder %s284, %s286
      %p293 = scmp.eq.s32.totalorder %s46, 1
      %p294 = por %p292, %p293
      %p295 = scmp.ne.s32.totalorder %s286, %s287
      %p296 = scmp.eq.s32.totalorder %s46, 0
      %p297 = por %p295, %p296
      %p298 = scmp.ne.s32.totalorder %s286, %s287
      %p299 = scmp.eq.s32.totalorder %s47, 1
      %p300 = por %p298, %p299
      %p302 = scmp.ne.s32.totalorder %s287, %s301
      %p303 = scmp.eq.s32.totalorder %s47, 0
      %p304 = por %p302, %p303
      %s306 = sadd.s32 %s305, 1
      %p309 = scmp.eq.s32.totalorder %s41, 1
      %p310 = scmp.ne.s32.totalorder %s305, %s307
      %p311 = scmp.eq.s32.totalorder %s41, 0
      %p312 = por %p310, %p311
      %p313 = scmp.ne.s32.totalorder %s305, %s307
      %p314 = scmp.eq.s32.totalorder %s46, 1
      %p315 = por %p313, %p314
      %p316 = scmp.ne.s32.totalorder %s307, %s308
      %p317 = scmp.eq.s32.totalorder %s46, 0
      %p318 = por %p316, %p317
      %p319 = scmp.ne.s32.totalorder %s307, %s308
      %p320 = scmp.eq.s32.totalorder %s47, 1
      %p321 = por %p319, %p320
      %p323 = scmp.ne.s32.totalorder %s308, %s322
      %p324 = scmp.eq.s32.totalorder %s47, 0
      %p325 = por %p323, %p324
      %s327 = sadd.s32 %s326, 1
      %p330 = scmp.eq.s32.totalorder %s41, 1
      %p331 = scmp.ne.s32.totalorder %s326, %s328
      %p332 = scmp.eq.s32.totalorder %s41, 0
      %p333 = por %p331, %p332
      %p334 = scmp.ne.s32.totalorder %s326, %s328
      %p335 = scmp.eq.s32.totalorder %s46, 1
      %p336 = por %p334, %p335
      %p337 = scmp.ne.s32.totalorder %s328, %s329
      %p338 = scmp.eq.s32.totalorder %s46, 0
      %p339 = por %p337, %p338
      %p340 = scmp.ne.s32.totalorder %s328, %s329
      %p341 = scmp.eq.s32.totalorder %s47, 1
      %p342 = por %p340, %p341
      %p344 = scmp.ne.s32.totalorder %s329, %s343
      %p345 = scmp.eq.s32.totalorder %s47, 0
      %p346 = por %p344, %p345
      %s348 = sadd.s32 %s347, 1
      %p351 = scmp.eq.s32.totalorder %s41, 1
      %p352 = scmp.ne.s32.totalorder %s347, %s349
      %p353 = scmp.eq.s32.totalorder %s41, 0
      %p354 = por %p352, %p353
      %p355 = scmp.ne.s32.totalorder %s347, %s349
      %p356 = scmp.eq.s32.totalorder %s46, 1
      %p357 = por %p355, %p356
      %p358 = scmp.ne.s32.totalorder %s349, %s350
      %p359 = scmp.eq.s32.totalorder %s46, 0
      %p360 = por %p358, %p359
      %p361 = scmp.ne.s32.totalorder %s349, %s350
      %p362 = scmp.eq.s32.totalorder %s47, 1
      %p363 = por %p361, %p362
      %p365 = scmp.ne.s32.totalorder %s350, %s364
      %p366 = scmp.eq.s32.totalorder %s47, 0
      %p367 = por %p365, %p366
      %s369 = sadd.s32 %s368, 1
      %p372 = scmp.eq.s32.totalorder %s41, 1
      %p373 = scmp.ne.s32.totalorder %s368, %s370
      %p374 = scmp.eq.s32.totalorder %s41, 0
      %p375 = por %p373, %p374
      %p376 = scmp.ne.s32.totalorder %s368, %s370
      %p377 = scmp.eq.s32.totalorder %s46, 1
      %p378 = por %p376, %p377
      %p379 = scmp.ne.s32.totalorder %s370, %s371
      %p380 = scmp.eq.s32.totalorder %s46, 0
      %p381 = por %p379, %p380
      %p382 = scmp.ne.s32.totalorder %s370, %s371
      %p383 = scmp.eq.s32.totalorder %s47, 1
      %p384 = por %p382, %p383
      %p386 = scmp.ne.s32.totalorder %s371, %s385
      %p387 = scmp.eq.s32.totalorder %s47, 0
      %p388 = por %p386, %p387
      %s390 = sadd.s32 %s389, 1
      %p393 = scmp.eq.s32.totalorder %s41, 1
      %p394 = scmp.ne.s32.totalorder %s389, %s391
      %p395 = scmp.eq.s32.totalorder %s41, 0
      %p396 = por %p394, %p395
      %p397 = scmp.ne.s32.totalorder %s389, %s391
      %p398 = scmp.eq.s32.totalorder %s46, 1
      %p399 = por %p397, %p398
      %p400 = scmp.ne.s32.totalorder %s391, %s392
      %p401 = scmp.eq.s32.totalorder %s46, 0
      %p402 = por %p400, %p401
      %p403 = scmp.ne.s32.totalorder %s391, %s392
      %p404 = scmp.eq.s32.totalorder %s47, 1
      %p405 = por %p403, %p404
      %p407 = scmp.ne.s32.totalorder %s392, %s406
      %p408 = scmp.eq.s32.totalorder %s47, 0
      %p409 = por %p407, %p408
      %s411 = sadd.s32 %s410, 1
      %p414 = scmp.eq.s32.totalorder %s41, 1
      %p415 = scmp.ne.s32.totalorder %s410, %s412
      %p416 = scmp.eq.s32.totalorder %s41, 0
      %p417 = por %p415, %p416
      %p418 = scmp.ne.s32.totalorder %s410, %s412
      %p419 = scmp.eq.s32.totalorder %s46, 1
      %p420 = por %p418, %p419
      %p421 = scmp.ne.s32.totalorder %s412, %s413
      %p422 = scmp.eq.s32.totalorder %s46, 0
      %p423 = por %p421, %p422
      %p424 = scmp.ne.s32.totalorder %s412, %s413
      %p425 = scmp.eq.s32.totalorder %s47, 1
      %p426 = por %p424, %p425
      %p428 = scmp.ne.s32.totalorder %s413, %s427
      %p429 = scmp.eq.s32.totalorder %s47, 0
      %p430 = por %p428, %p429
      %s432 = sadd.s32 %s431, 1
      %p435 = scmp.eq.s32.totalorder %s41, 1
      %p436 = scmp.ne.s32.totalorder %s431, %s433
      %p437 = scmp.eq.s32.totalorder %s41, 0
      %p438 = por %p436, %p437
      %p439 = scmp.ne.s32.totalorder %s431, %s433
      %p440 = scmp.eq.s32.totalorder %s46, 1
      %p441 = por %p439, %p440
      %p442 = scmp.ne.s32.totalorder %s433, %s434
      %p443 = scmp.eq.s32.totalorder %s46, 0
      %p444 = por %p442, %p443
      %p445 = scmp.ne.s32.totalorder %s433, %s434
      %p446 = scmp.eq.s32.totalorder %s47, 1
      %p447 = por %p445, %p446
      %p449 = scmp.ne.s32.totalorder %s434, %s448
      %p450 = scmp.eq.s32.totalorder %s47, 0
      %p451 = por %p449, %p450
      %s453 = sadd.s32 %s452, 1
      %p456 = scmp.eq.s32.totalorder %s41, 1
      %p457 = scmp.ne.s32.totalorder %s452, %s454
      %p458 = scmp.eq.s32.totalorder %s41, 0
      %p459 = por %p457, %p458
      %p460 = scmp.ne.s32.totalorder %s452, %s454
      %p461 = scmp.eq.s32.totalorder %s46, 1
      %p462 = por %p460, %p461
      %p463 = scmp.ne.s32.totalorder %s454, %s455
      %p464 = scmp.eq.s32.totalorder %s46, 0
      %p465 = por %p463, %p464
      %p466 = scmp.ne.s32.totalorder %s454, %s455
      %p467 = scmp.eq.s32.totalorder %s47, 1
      %p468 = por %p466, %p467
      %p470 = scmp.ne.s32.totalorder %s455, %s469
      %p471 = scmp.eq.s32.totalorder %s47, 0
      %p472 = por %p470, %p471
      %s474 = sadd.s32 %s473, 1
      %p477 = scmp.eq.s32.totalorder %s41, 1
      %p478 = scmp.ne.s32.totalorder %s473, %s475
      %p479 = scmp.eq.s32.totalorder %s41, 0
      %p480 = por %p478, %p479
      %p481 = scmp.ne.s32.totalorder %s473, %s475
      %p482 = scmp.eq.s32.totalorder %s46, 1
      %p483 = por %p481, %p482
      %p484 = scmp.ne.s32.totalorder %s475, %s476
      %p485 = scmp.eq.s32.totalorder %s46, 0
      %p486 = por %p484, %p485
      %p487 = scmp.ne.s32.totalorder %s475, %s476
      %p488 = scmp.eq.s32.totalorder %s47, 1
      %p489 = por %p487, %p488
      %p491 = scmp.ne.s32.totalorder %s476, %s490
      %p492 = scmp.eq.s32.totalorder %s47, 0
      %p493 = por %p491, %p492
      %s495 = sadd.s32 %s494, 1
      %p498 = scmp.eq.s32.totalorder %s41, 1
      %p499 = scmp.ne.s32.totalorder %s494, %s496
      %p500 = scmp.eq.s32.totalorder %s41, 0
      %p501 = por %p499, %p500
      %p502 = scmp.ne.s32.totalorder %s494, %s496
      %p503 = scmp.eq.s32.totalorder %s46, 1
      %p504 = por %p502, %p503
      %p505 = scmp.ne.s32.totalorder %s496, %s497
      %p506 = scmp.eq.s32.totalorder %s46, 0
      %p507 = por %p505, %p506
      %p508 = scmp.ne.s32.totalorder %s496, %s497
      %p509 = scmp.eq.s32.totalorder %s47, 1
      %p510 = por %p508, %p509
      %p512 = scmp.ne.s32.totalorder %s497, %s511
      %p513 = scmp.eq.s32.totalorder %s47, 0
      %p514 = por %p512, %p513
      %s516 = sadd.s32 %s515, 1
      %p519 = scmp.eq.s32.totalorder %s41, 1
      %p520 = scmp.ne.s32.totalorder %s515, %s517
      %p521 = scmp.eq.s32.totalorder %s41, 0
      %p522 = por %p520, %p521
      %p523 = scmp.ne.s32.totalorder %s515, %s517
      %p524 = scmp.eq.s32.totalorder %s46, 1
      %p525 = por %p523, %p524
      %p526 = scmp.ne.s32.totalorder %s517, %s518
      %p527 = scmp.eq.s32.totalorder %s46, 0
      %p528 = por %p526, %p527
      %p529 = scmp.ne.s32.totalorder %s517, %s518
      %p530 = scmp.eq.s32.totalorder %s47, 1
      %p531 = por %p529, %p530
      %p533 = scmp.ne.s32.totalorder %s518, %s532
      %p534 = scmp.eq.s32.totalorder %s47, 0
      %p535 = por %p533, %p534
      %s537 = sadd.s32 %s536, 1
      %p540 = scmp.eq.s32.totalorder %s41, 1
      %p541 = scmp.ne.s32.totalorder %s536, %s538
      %p542 = scmp.eq.s32.totalorder %s41, 0
      %p543 = por %p541, %p542
      %p544 = scmp.ne.s32.totalorder %s536, %s538
      %p545 = scmp.eq.s32.totalorder %s46, 1
      %p546 = por %p544, %p545
      %p547 = scmp.ne.s32.totalorder %s538, %s539
      %p548 = scmp.eq.s32.totalorder %s46, 0
      %p549 = por %p547, %p548
      %p550 = scmp.ne.s32.totalorder %s538, %s539
      %p551 = scmp.eq.s32.totalorder %s47, 1
      %p552 = por %p550, %p551
      %p554 = scmp.ne.s32.totalorder %s539, %s553
      %p555 = scmp.eq.s32.totalorder %s47, 0
      %p556 = por %p554, %p555
      %s558 = sadd.s32 %s557, 1
      %p561 = scmp.eq.s32.totalorder %s41, 1
      %p562 = scmp.ne.s32.totalorder %s557, %s559
      %p563 = scmp.eq.s32.totalorder %s41, 0
      %p564 = por %p562, %p563
      %p565 = scmp.ne.s32.totalorder %s557, %s559
      %p566 = scmp.eq.s32.totalorder %s46, 1
      %p567 = por %p565, %p566
      %p568 = scmp.ne.s32.totalorder %s559, %s560
      %p569 = scmp.eq.s32.totalorder %s46, 0
      %p570 = por %p568, %p569
      %p571 = scmp.ne.s32.totalorder %s559, %s560
      %p572 = scmp.eq.s32.totalorder %s47, 1
      %p573 = por %p571, %p572
      %p575 = scmp.ne.s32.totalorder %s560, %s574
      %p576 = scmp.eq.s32.totalorder %s47, 0
      %p577 = por %p575, %p576
      %s579 = sadd.s32 %s578, 1
      %p582 = scmp.eq.s32.totalorder %s41, 1
      %p583 = scmp.ne.s32.totalorder %s578, %s580
      %p584 = scmp.eq.s32.totalorder %s41, 0
      %p585 = por %p583, %p584
      %p586 = scmp.ne.s32.totalorder %s578, %s580
      %p587 = scmp.eq.s32.totalorder %s46, 1
      %p588 = por %p586, %p587
      %p589 = scmp.ne.s32.totalorder %s580, %s581
      %p590 = scmp.eq.s32.totalorder %s46, 0
      %p591 = por %p589, %p590
      %p592 = scmp.ne.s32.totalorder %s580, %s581
      %p593 = scmp.eq.s32.totalorder %s47, 1
      %p594 = por %p592, %p593
      %p596 = scmp.ne.s32.totalorder %s581, %s595
      %p597 = scmp.eq.s32.totalorder %s47, 0
      %p598 = por %p596, %p597
      %s599 = ssub.s32 %s41, %s48
      %p600 = scmp.eq.s32.totalorder %s599, 0
      %s602 = sadd.s32 %s601, 1
      %s603 = scalar_select %p600, %s601, %s602
      %p606 = pneg %p600
      %p607 = scmp.eq.s32.totalorder %s41, 1
      %p608 = por %p606, %p607
      %p609 = scmp.ne.s32.totalorder %s601, %s604
      %p610 = scmp.eq.s32.totalorder %s41, 0
      %p611 = por %p609, %p610
      %p612 = scmp.ne.s32.totalorder %s601, %s604
      %p613 = scmp.eq.s32.totalorder %s46, 1
      %p614 = por %p612, %p613
      %p615 = scmp.ne.s32.totalorder %s604, %s605
      %p616 = scmp.eq.s32.totalorder %s46, 0
      %p617 = por %p615, %p616
      %p618 = scmp.ne.s32.totalorder %s604, %s605
      %p619 = scmp.eq.s32.totalorder %s47, 1
      %p620 = por %p618, %p619
      %p622 = scmp.ne.s32.totalorder %s605, %s621
      %p623 = scmp.eq.s32.totalorder %s47, 0
      %p624 = por %p622, %p623
      %s625 = ssub.s32 %s41, %s48
      %p626 = scmp.eq.s32.totalorder %s625, 0
      %s628 = sadd.s32 %s627, 1
      %s629 = scalar_select %p626, %s627, %s628
      %p632 = pneg %p626
      %p633 = scmp.eq.s32.totalorder %s41, 1
      %p634 = por %p632, %p633
      %p635 = scmp.ne.s32.totalorder %s627, %s630
      %p636 = scmp.eq.s32.totalorder %s41, 0
      %p637 = por %p635, %p636
      %p638 = scmp.ne.s32.totalorder %s627, %s630
      %p639 = scmp.eq.s32.totalorder %s46, 1
      %p640 = por %p638, %p639
      %p641 = scmp.ne.s32.totalorder %s630, %s631
      %p642 = scmp.eq.s32.totalorder %s46, 0
      %p643 = por %p641, %p642
      %p644 = scmp.ne.s32.totalorder %s630, %s631
      %p645 = scmp.eq.s32.totalorder %s47, 1
      %p646 = por %p644, %p645
      %p648 = scmp.ne.s32.totalorder %s631, %s647
      %p649 = scmp.eq.s32.totalorder %s47, 0
      %p650 = por %p648, %p649
      %s651 = ssub.s32 %s41, %s48
      %p652 = scmp.eq.s32.totalorder %s651, 0
      %s654 = sadd.s32 %s653, 1
      %s655 = scalar_select %p652, %s653, %s654
      %p658 = pneg %p652
      %p659 = scmp.eq.s32.totalorder %s41, 1
      %p660 = por %p658, %p659
      %p661 = scmp.ne.s32.totalorder %s653, %s656
      %p662 = scmp.eq.s32.totalorder %s41, 0
      %p663 = por %p661, %p662
      %p664 = scmp.ne.s32.totalorder %s653, %s656
      %p665 = scmp.eq.s32.totalorder %s46, 1
      %p666 = por %p664, %p665
      %p667 = scmp.ne.s32.totalorder %s656, %s657
      %p668 = scmp.eq.s32.totalorder %s46, 0
      %p669 = por %p667, %p668
      %p670 = scmp.ne.s32.totalorder %s656, %s657
      %p671 = scmp.eq.s32.totalorder %s47, 1
      %p672 = por %p670, %p671
      %p674 = scmp.ne.s32.totalorder %s657, %s673
      %p675 = scmp.eq.s32.totalorder %s47, 0
      %p676 = por %p674, %p675
      %s677 = ssub.s32 %s41, %s48
      %p678 = scmp.eq.s32.totalorder %s677, 0
      %s680 = sadd.s32 %s679, 1
      %s681 = scalar_select %p678, %s679, %s680
      %p684 = pneg %p678
      %p685 = scmp.eq.s32.totalorder %s41, 1
      %p686 = por %p684, %p685
      %p687 = scmp.ne.s32.totalorder %s679, %s682
      %p688 = scmp.eq.s32.totalorder %s41, 0
      %p689 = por %p687, %p688
      %p690 = scmp.ne.s32.totalorder %s679, %s682
      %p691 = scmp.eq.s32.totalorder %s46, 1
      %p692 = por %p690, %p691
      %p693 = scmp.ne.s32.totalorder %s682, %s683
      %p694 = scmp.eq.s32.totalorder %s46, 0
      %p695 = por %p693, %p694
      %p696 = scmp.ne.s32.totalorder %s682, %s683
      %p697 = scmp.eq.s32.totalorder %s47, 1
      %p698 = por %p696, %p697
      %p700 = scmp.ne.s32.totalorder %s683, %s699
      %p701 = scmp.eq.s32.totalorder %s47, 0
      %p702 = por %p700, %p701
      %p703 = scmp.le.s32.totalorder 1, %s41
      %p704 = scmp.lt.s32.totalorder %s41, 3
      %p705 = pnand %p703, %p704
      %p706 = pneg %p705
      // Predicated region
      $region9: #{prose_fwd.1} parent=5 // pred_check
        _
      $region10: #{prose_fwd.1} parent=5 // pred_check_branch
        %708 = sbr.rel (%p705) target = $region12
      $region11: #{prose_fwd.1} parent=5 // pred_region
        %s709 = ssub.s32 %s41, 1
        // Predicated region
        $region13: #{prose_fwd.1} parent=11 // pred_check
          %p710 = pneg %p192
        $region14: #{prose_fwd.1} parent=11 // pred_check_branch
          %712 = sbr.rel (%p710) target = $region16
        $region15: #{prose_fwd.1} parent=11 // pred_region
          _
        $region16: #{prose_fwd.1} parent=11 // pred_fallthru
          _
        // Predicated region
        $region17: #{prose_fwd.1} parent=11 // pred_check
          %p713 = pneg %p213
        $region18: #{prose_fwd.1} parent=11 // pred_check_branch
          %715 = sbr.rel (%p713) target = $region20
        $region19: #{prose_fwd.1} parent=11 // pred_region
          _
        $region20: #{prose_fwd.1} parent=11 // pred_fallthru
          _
        // Predicated region
        $region21: #{prose_fwd.1} parent=11 // pred_check
          %p716 = pneg %p234
        $region22: #{prose_fwd.1} parent=11 // pred_check_branch
          %718 = sbr.rel (%p716) target = $region24
        $region23: #{prose_fwd.1} parent=11 // pred_region
          _
        $region24: #{prose_fwd.1} parent=11 // pred_fallthru
          _
        // Predicated region
        $region25: #{prose_fwd.1} parent=11 // pred_check
          %p719 = pneg %p255
        $region26: #{prose_fwd.1} parent=11 // pred_check_branch
          %721 = sbr.rel (%p719) target = $region28
        $region27: #{prose_fwd.1} parent=11 // pred_region
          _
        $region28: #{prose_fwd.1} parent=11 // pred_fallthru
          _
        // Predicated region
        $region29: #{prose_fwd.1} parent=11 // pred_check
          %p722 = pneg %p276
        $region30: #{prose_fwd.1} parent=11 // pred_check_branch
          %724 = sbr.rel (%p722) target = $region32
        $region31: #{prose_fwd.1} parent=11 // pred_region
          _
        $region32: #{prose_fwd.1} parent=11 // pred_fallthru
          _
        // Predicated region
        $region33: #{prose_fwd.1} parent=11 // pred_check
          %p725 = pneg %p297
        $region34: #{prose_fwd.1} parent=11 // pred_check_branch
          %727 = sbr.rel (%p725) target = $region36
        $region35: #{prose_fwd.1} parent=11 // pred_region
          _
        $region36: #{prose_fwd.1} parent=11 // pred_fallthru
          _
        // Predicated region
        $region37: #{prose_fwd.1} parent=11 // pred_check
          %p728 = pneg %p318
        $region38: #{prose_fwd.1} parent=11 // pred_check_branch
          %730 = sbr.rel (%p728) target = $region40
        $region39: #{prose_fwd.1} parent=11 // pred_region
          _
        $region40: #{prose_fwd.1} parent=11 // pred_fallthru
          _
        // Predicated region
        $region41: #{prose_fwd.1} parent=11 // pred_check
          %p731 = pneg %p339
        $region42: #{prose_fwd.1} parent=11 // pred_check_branch
          %733 = sbr.rel (%p731) target = $region44
        $region43: #{prose_fwd.1} parent=11 // pred_region
          _
        $region44: #{prose_fwd.1} parent=11 // pred_fallthru
          _
        // Predicated region
        $region45: #{prose_fwd.1} parent=11 // pred_check
          %p734 = pneg %p360
        $region46: #{prose_fwd.1} parent=11 // pred_check_branch
          %736 = sbr.rel (%p734) target = $region48
        $region47: #{prose_fwd.1} parent=11 // pred_region
          _
        $region48: #{prose_fwd.1} parent=11 // pred_fallthru
          _
        // Predicated region
        $region49: #{prose_fwd.1} parent=11 // pred_check
          %p737 = pneg %p381
        $region50: #{prose_fwd.1} parent=11 // pred_check_branch
          %739 = sbr.rel (%p737) target = $region52
        $region51: #{prose_fwd.1} parent=11 // pred_region
          _
        $region52: #{prose_fwd.1} parent=11 // pred_fallthru
          _
        // Predicated region
        $region53: #{prose_fwd.1} parent=11 // pred_check
          %p740 = pneg %p402
        $region54: #{prose_fwd.1} parent=11 // pred_check_branch
          %742 = sbr.rel (%p740) target = $region56
        $region55: #{prose_fwd.1} parent=11 // pred_region
          _
        $region56: #{prose_fwd.1} parent=11 // pred_fallthru
          _
        // Predicated region
        $region57: #{prose_fwd.1} parent=11 // pred_check
          %p743 = pneg %p423
        $region58: #{prose_fwd.1} parent=11 // pred_check_branch
          %745 = sbr.rel (%p743) target = $region60
        $region59: #{prose_fwd.1} parent=11 // pred_region
          _
        $region60: #{prose_fwd.1} parent=11 // pred_fallthru
          _
        // Predicated region
        $region61: #{prose_fwd.1} parent=11 // pred_check
          %p746 = pneg %p444
        $region62: #{prose_fwd.1} parent=11 // pred_check_branch
          %748 = sbr.rel (%p746) target = $region64
        $region63: #{prose_fwd.1} parent=11 // pred_region
          _
        $region64: #{prose_fwd.1} parent=11 // pred_fallthru
          _
        // Predicated region
        $region65: #{prose_fwd.1} parent=11 // pred_check
          %p749 = pneg %p465
        $region66: #{prose_fwd.1} parent=11 // pred_check_branch
          %751 = sbr.rel (%p749) target = $region68
        $region67: #{prose_fwd.1} parent=11 // pred_region
          _
        $region68: #{prose_fwd.1} parent=11 // pred_fallthru
          _
        // Predicated region
        $region69: #{prose_fwd.1} parent=11 // pred_check
          %p752 = pneg %p486
        $region70: #{prose_fwd.1} parent=11 // pred_check_branch
          %754 = sbr.rel (%p752) target = $region72
        $region71: #{prose_fwd.1} parent=11 // pred_region
          _
        $region72: #{prose_fwd.1} parent=11 // pred_fallthru
          _
        // Predicated region
        $region73: #{prose_fwd.1} parent=11 // pred_check
          %p755 = pneg %p507
        $region74: #{prose_fwd.1} parent=11 // pred_check_branch
          %757 = sbr.rel (%p755) target = $region76
        $region75: #{prose_fwd.1} parent=11 // pred_region
          _
        $region76: #{prose_fwd.1} parent=11 // pred_fallthru
          _
        // Predicated region
        $region77: #{prose_fwd.1} parent=11 // pred_check
          %p758 = pneg %p528
        $region78: #{prose_fwd.1} parent=11 // pred_check_branch
          %760 = sbr.rel (%p758) target = $region80
        $region79: #{prose_fwd.1} parent=11 // pred_region
          _
        $region80: #{prose_fwd.1} parent=11 // pred_fallthru
          _
        // Predicated region
        $region81: #{prose_fwd.1} parent=11 // pred_check
          %p761 = pneg %p549
        $region82: #{prose_fwd.1} parent=11 // pred_check_branch
          %763 = sbr.rel (%p761) target = $region84
        $region83: #{prose_fwd.1} parent=11 // pred_region
          _
        $region84: #{prose_fwd.1} parent=11 // pred_fallthru
          _
        // Predicated region
        $region85: #{prose_fwd.1} parent=11 // pred_check
          %p764 = pneg %p570
        $region86: #{prose_fwd.1} parent=11 // pred_check_branch
          %766 = sbr.rel (%p764) target = $region88
        $region87: #{prose_fwd.1} parent=11 // pred_region
          _
        $region88: #{prose_fwd.1} parent=11 // pred_fallthru
          _
        // Predicated region
        $region89: #{prose_fwd.1} parent=11 // pred_check
          %p767 = pneg %p591
        $region90: #{prose_fwd.1} parent=11 // pred_check_branch
          %769 = sbr.rel (%p767) target = $region92
        $region91: #{prose_fwd.1} parent=11 // pred_region
          _
        $region92: #{prose_fwd.1} parent=11 // pred_fallthru
          _
      $region12: #{prose_fwd.1} parent=5 // pred_fallthru
        _
      %p770 = scmp.lt.s32.totalorder %s41, 2
      // Predicated region
      $region93: #{prose_fwd.1} parent=5 // pred_check
        %p771 = pneg %p770
      $region94: #{prose_fwd.1} parent=5 // pred_check_branch
        %773 = sbr.rel (%p771) target = $region96
      $region95: #{prose_fwd.1} parent=5 // pred_region
        // Predicated region
        $region97: #{prose_fwd.1} parent=95 // pred_check
          %p774 = pneg %p61
        $region98: #{prose_fwd.1} parent=95 // pred_check_branch
          %776 = sbr.rel (%p774) target = $region100
        $region99: #{prose_fwd.1} parent=95 // pred_region
          %p777 = scmp.lt.s32.totalorder %s41, 1
          %s778 = scalar_select %p777, %s41, 1
          %s779 = smul.addr %s778, 2
          %s780 = smul.addr %s779, 8
          %s781 = scalar_lea.vmem %s0, %s780
        $region100: #{prose_fwd.1} parent=95 // pred_fallthru
          _
        // Predicated region
        $region101: #{prose_fwd.1} parent=95 // pred_check
          %p782 = pneg %p87
        $region102: #{prose_fwd.1} parent=95 // pred_check_branch
          %784 = sbr.rel (%p782) target = $region104
        $region103: #{prose_fwd.1} parent=95 // pred_region
          %p785 = scmp.lt.s32.totalorder %s41, 1
          %s786 = scalar_select %p785, %s41, 1
          %s787 = smul.addr %s786, 2
          %s788 = smul.addr %s787, 8
          %s789 = scalar_lea.vmem %s1, %s788
        $region104: #{prose_fwd.1} parent=95 // pred_fallthru
          _
        // Predicated region
        $region105: #{prose_fwd.1} parent=95 // pred_check
          %p790 = pneg %p113
        $region106: #{prose_fwd.1} parent=95 // pred_check_branch
          %792 = sbr.rel (%p790) target = $region108
        $region107: #{prose_fwd.1} parent=95 // pred_region
          %p793 = scmp.lt.s32.totalorder %s41, 1
          %s794 = scalar_select %p793, %s41, 1
          %s795 = smul.addr %s794, 8
          %s796 = scalar_lea.vmem %s2, %s795
        $region108: #{prose_fwd.1} parent=95 // pred_fallthru
          _
        // Predicated region
        $region109: #{prose_fwd.1} parent=95 // pred_check
          %p797 = pneg %p139
        $region110: #{prose_fwd.1} parent=95 // pred_check_branch
          %799 = sbr.rel (%p797) target = $region112
        $region111: #{prose_fwd.1} parent=95 // pred_region
          %p800 = scmp.lt.s32.totalorder %s41, 1
          %s801 = scalar_select %p800, %s41, 1
          %s802 = scalar_lea.vmem %s3, %s801
        $region112: #{prose_fwd.1} parent=95 // pred_fallthru
          _
        // Predicated region
        $region113: #{prose_fwd.1} parent=95 // pred_check
          %p803 = pneg %p165
        $region114: #{prose_fwd.1} parent=95 // pred_check_branch
          %805 = sbr.rel (%p803) target = $region116
        $region115: #{prose_fwd.1} parent=95 // pred_region
          %p806 = scmp.lt.s32.totalorder %s41, 1
          %s807 = scalar_select %p806, %s41, 1
          %s808 = smul.addr %s807, 2
          %s809 = smul.addr %s808, 8
          %s810 = scalar_lea.vmem %s4, %s809
        $region116: #{prose_fwd.1} parent=95 // pred_fallthru
          _
      $region96: #{prose_fwd.1} parent=5 // pred_fallthru
        _
      %p811 = scmp.le.s32.totalorder 1, %s41
      %p812 = scmp.lt.s32.totalorder %s41, 3
      %p813 = pnand %p811, %p812
      %p814 = pneg %p813
      // Predicated region
      $region117: #{prose_fwd.1} parent=5 // pred_check
        _
      $region118: #{prose_fwd.1} parent=5 // pred_check_branch
        %816 = sbr.rel (%p813) target = $region120
      $region119: #{prose_fwd.1} parent=5 // pred_region
        %s817 = ssub.s32 %s41, 1
        %p818 = scmp.lt.s32.totalorder %s46, 1
        %s819 = scalar_select %p818, %s46, 1
        %s820 = smul.addr %s819, 2
        %s821 = smul.addr %s820, 8
        %s822 = scalar_lea.vmem %s0, %s821
        %p823 = pneg %p67
        %p824 = pneg %p64
        %p825 = scmp.lt.s32.totalorder %s46, 1
        %s826 = scalar_select %p825, %s46, 1
        %s827 = smul.addr %s826, 2
        %s828 = smul.addr %s827, 8
        %s829 = scalar_lea.vmem %s1, %s828
        %p830 = pneg %p93
        %p831 = pneg %p90
        %p832 = scmp.lt.s32.totalorder %s46, 1
        %s833 = scalar_select %p832, %s46, 1
        %s834 = smul.addr %s833, 8
        %s835 = scalar_lea.vmem %s2, %s834
        %p836 = pneg %p119
        %p837 = pneg %p116
        %p838 = scmp.lt.s32.totalorder %s46, 1
        %s839 = scalar_select %p838, %s46, 1
        %s840 = scalar_lea.vmem %s3, %s839
        %p841 = pneg %p145
        %p842 = pneg %p142
        %p843 = scmp.lt.s32.totalorder %s46, 1
        %s844 = scalar_select %p843, %s46, 1
        %s845 = smul.addr %s844, 2
        %s846 = smul.addr %s845, 8
        %s847 = scalar_lea.vmem %s4, %s846
        %p848 = pneg %p171
        %p849 = pneg %p168
        %p850 = pneg %p192
        %p851 = pneg %p189
        %p852 = pneg %p213
        %p853 = pneg %p210
        %p854 = pneg %p234
        %p855 = pneg %p231
        %p856 = pneg %p255
        %p857 = pneg %p252
        %p858 = pneg %p276
        %p859 = pneg %p273
        %p860 = pneg %p297
        %p861 = pneg %p294
        %p862 = pneg %p318
        %p863 = pneg %p315
        %p864 = pneg %p339
        %p865 = pneg %p336
        %p866 = pneg %p360
        %p867 = pneg %p357
        %p868 = pneg %p381
        %p869 = pneg %p378
        %p870 = pneg %p402
        %p871 = pneg %p399
        %p872 = pneg %p423
        %p873 = pneg %p420
        %p874 = pneg %p444
        %p875 = pneg %p441
        %p876 = pneg %p465
        %p877 = pneg %p462
        %p878 = pneg %p486
        %p879 = pneg %p483
        %p880 = pneg %p507
        %p881 = pneg %p504
        %p882 = pneg %p528
        %p883 = pneg %p525
        %p884 = pneg %p549
        %p885 = pneg %p546
        %p886 = pneg %p570
        %p887 = pneg %p567
        %p888 = pneg %p591
        %p889 = pneg %p588
        %p890 = pneg %p617
        %p891 = pneg %p614
        %s892 = sand.u32 %s604, 1
        %s893 = scalar_lea.sflag [#allocation3], %s892
        %s894 = sand.u32 %s604, 1
        %s895 = smul.addr %s894, 16
        %s896 = scalar_lea.vmem [#allocation2], %s895
        %p897 = pneg %p643
        %p898 = pneg %p640
        %s899 = sand.u32 %s46, 1
        %s900 = scalar_lea.sflag [#allocation5], %s899
        %s901 = sand.u32 %s630, 1
        %s902 = smul.addr %s901, 16
        %s903 = scalar_lea.vmem [#allocation4], %s902
        %p904 = pneg %p669
        %p905 = pneg %p666
        %s906 = sand.u32 %s46, 1
        %s907 = scalar_lea.sflag [#allocation5], %s906
        %s908 = sand.u32 %s656, 1
        %s909 = smul.addr %s908, 24
        %s910 = scalar_lea.vmem [#allocation6], %s909
        %p911 = pneg %p695
        %p912 = pneg %p692
        %p913 = scmp.lt.s32.totalorder %s46, 1
        %s914 = scalar_select %p913, %s46, 1
        %s915 = smul.addr %s914, 2
        %s916 = smul.addr %s915, 8
        %s917 = scalar_lea.vmem %s28, %s916
        %p918 = scmp.lt.s32.totalorder %s46, 1
        %s919 = scalar_select %p918, %s46, 1
        %s920 = smul.addr %s919, 2
        %s921 = smul.addr %s920, 8
        %s922 = scalar_lea.vmem %s0, %s921
        %p923 = scmp.lt.s32.totalorder %s46, 1
        %s924 = scalar_select %p923, %s46, 1
        %s925 = smul.addr %s924, 2
        %s926 = smul.addr %s925, 8
        %s927 = scalar_lea.vmem %s1, %s926
        %p928 = scmp.lt.s32.totalorder %s46, 1
        %s929 = scalar_select %p928, %s46, 1
        %s930 = smul.addr %s929, 8
        %s931 = scalar_lea.vmem %s2, %s930
        %p932 = scmp.lt.s32.totalorder %s46, 1
        %s933 = scalar_select %p932, %s46, 1
        %s934 = scalar_lea.vmem %s3, %s933
        %p935 = scmp.lt.s32.totalorder %s46, 1
        %s936 = scalar_select %p935, %s46, 1
        %s937 = smul.addr %s936, 2
        %s938 = smul.addr %s937, 8
        %s939 = scalar_lea.vmem %s4, %s938
        %p940 = scmp.lt.s32.totalorder %s46, 1
        %s941 = scalar_select %p940, %s46, 1
        %s942 = smul.addr %s941, 2
        %s943 = smul.addr %s942, 8
        %s944 = scalar_lea.vmem %s28, %s943
        %v945 = vld [vmem:[%s7] sm:$0xff]
        %v946 = vld [vmem:[%s934] sm:$0x1]
        %v947 = vld [vmem:[%s922] sm:$0xff]
        %v948 = vld [vmem:[%s922 + $0x8] sm:$0xff]
        %v949 = vld [vmem:[%s5] sm:$0xff]
        %v950 = vld [vmem:[%s927] sm:$0xff]
        %v951 = vld [vmem:[%s927 + $0x8] sm:$0xff]
        %vm952 = vcmask 64512
        %v954 = vsel %vm952, %v947, 0
        %v957 = vsel %vm952, %v948, 0
        %959 = vmatpush.msra.mxu0 0.0
        %960 = vmatpush.msra.mxu0 0.0
        %961 = vmatpush.msra.mxu0 0.0
        %962 = vmatpush.msra.mxu0 0.0
        %963 = vmatpush.msra.mxu0 0.0
        %964 = vmatpush.msra.mxu0 0.0
        %965 = vmatpush.msra.mxu0 0.0
        %966 = vmatpush.msra.mxu0 0.0
        %967 = vmatpush.msra.mxu0 0.0
        %968 = vmatpush.msra.mxu0 0.0
        %969 = vmatpush.msra.mxu0 0.0
        %970 = vmatpush.msra.mxu0 0.0
        %971 = vmatpush.msra.mxu0 0.0
        %972 = vmatpush.msra.mxu0 0.0
        %973 = vmatpush.msra.mxu0 0.0
        %974 = vmatpush.msra.mxu0 %v949
        %975 = vmatmul.f32.gmra.mxu0 %v954
        %v976 = vpop.f32.mrf.mxu0
        %v977 = vadd.f32 %v950, %v976
        %978 = vmatmul.f32.gmra.mxu0 %v957
        %v979 = vpop.f32.mrf.mxu0
        %v980 = vadd.f32 %v951, %v979
        %981 = vdwg.mxu0
        %vm982 = vcmask 261120
        %983 = vst.msk [vmem:[%s896] sm:$0xff] %vm982, %v977
        %984 = vst.msk [vmem:[%s896 + $0x8] sm:$0xff] %vm982, %v980
        %v985 = vld [vmem:[%s8] sm:$0xff]
        %v986 = vld [vmem:[%s8 + $0x8] sm:$0xff]
        %v987 = vld [vmem:[%s8 + $0x10] sm:$0xff]
        %v988 = vld [vmem:[%s8 + $0x18] sm:$0xff]
        %v989 = vld [vmem:[%s9] sm:$0xff]
        %v990 = vld [vmem:[%s9 + $0x8] sm:$0xff]
        %v991 = vld [vmem:[%s9 + $0x10] sm:$0xff]
        %v992 = vld [vmem:[%s9 + $0x18] sm:$0xff]
        %v993 = vld [vmem:[%s10] sm:$0xff]
        %v994 = vld [vmem:[%s10 + $0x8] sm:$0xff]
        %v995 = vld [vmem:[%s10 + $0x10] sm:$0xff]
        %v996 = vld [vmem:[%s10 + $0x18] sm:$0xff]
        %v997 = vld [vmem:[%s11] sm:$0xff]
        %v998 = vld [vmem:[%s11 + $0x8] sm:$0xff]
        %v999 = vld [vmem:[%s11 + $0x10] sm:$0xff]
        %v1000 = vld [vmem:[%s11 + $0x18] sm:$0xff]
        %v1001 = vld [vmem:[%s11 + $0x20] sm:$0xff]
        %v1002 = vld [vmem:[%s11 + $0x28] sm:$0xff]
        %v1003 = vld [vmem:[%s11 + $0x30] sm:$0xff]
        %v1004 = vld [vmem:[%s11 + $0x38] sm:$0xff]
        %v1005 = vld [vmem:[%s12] sm:$0xff]
        %v1006 = vsel %vm982, %v977, 0.0
        %1007 = vadd.xlane.f32.xlu0 %v1006
        %v1008 = vpop.xlane.xlu0 %1007
        %v1009 = vsel %vm982, %v980, 0.0
        %1010 = vadd.xlane.f32.xlu0 %v1009
        %v1011 = vpop.xlane.xlu0 %1010
        %v1012 = vrcp.pop 32.0
        %v1013 = vmul.f32 32.0, %v1012
        %v1014 = vsub.f32 1.0, %v1013
        %v1015 = vmul.f32 %v1012, %v1014
        %v1016 = vadd.f32 %v1012, %v1015
        %vm1017 = vweird.f32 %v1012
        %v1018 = vsel %vm1017, %v1012, %v1016
        %v1019 = vmul.f32 %v1008, %v1018
        %v1020 = vmul.f32 %v1011, %v1018
        %v1021 = vsub.f32 %v977, %v1019
        %v1022 = vsub.f32 %v980, %v1020
        %v1023 = vmul.f32 %v1021, %v1021
        %v1024 = vmul.f32 %v1022, %v1022
        %v1025 = vsel %vm982, %v1023, 0.0
        %1026 = vadd.xlane.f32.xlu0 %v1025
        %v1027 = vpop.xlane.xlu0 %1026
        %v1028 = vsel %vm982, %v1024, 0.0
        %1029 = vadd.xlane.f32.xlu0 %v1028
        %v1030 = vpop.xlane.xlu0 %1029
        %v1031 = vmul.f32 %v1027, %v1018
        %v1032 = vmul.f32 %v1030, %v1018
        %v1033 = vadd.f32 %v1031, 1e-05
        %v1034 = vadd.f32 %v1032, 1e-05
        %v1035 = vrsqrt.pop %v1033
        %v1036 = vmul.f32 %v1035, %v1033
        %v1037 = vmul.f32 %v1036, %v1035
        %v1038 = vmul.f32 0.5, %v1037
        %v1039 = vsub.f32 1.5, %v1038
        %v1040 = vmul.f32 %v1035, %v1039
        %vm1041 = vweird.f32 %v1033
        %vm1042 = vweird.f32 %v1035
        %vm1043 = vmor %vm1041, %vm1042
        %v1044 = vsel %vm1043, %v1035, %v1040
        %v1045 = vrsqrt.pop %v1034
        %v1046 = vmul.f32 %v1045, %v1034
        %v1047 = vmul.f32 %v1046, %v1045
        %v1048 = vmul.f32 0.5, %v1047
        %v1049 = vsub.f32 1.5, %v1048
        %v1050 = vmul.f32 %v1045, %v1049
        %vm1051 = vweird.f32 %v1034
        %vm1052 = vweird.f32 %v1045
        %vm1053 = vmor %vm1051, %vm1052
        %v1054 = vsel %vm1053, %v1045, %v1050
        %v1055 = vmul.f32 %v1021, %v1044
        %v1056 = vmul.f32 %v1022, %v1054
        %v1057 = vperm.slane %v1005, 4
        %v1058 = vmul.f32 %v1055, %v1057
        %v1059 = vmul.f32 %v1056, %v1057
        %v1060 = vperm.slane %v1005, 5
        %v1061 = vadd.f32 %v1058, %v1060
        %v1062 = vadd.f32 %v1059, %v1060
        %v1063 = vperm.slane %v1005, 0
        %v1065 = vsel %vm982, %v1061, 0
        %v1068 = vsel %vm982, %v1062, 0
        %1070 = vmatpush.msra.mxu0 0.0
        %1071 = vmatpush.msra.mxu0 0.0
        %1072 = vmatpush.msra.mxu0 0.0
        %1073 = vmatpush.msra.mxu0 0.0
        %1074 = vmatpush.msra.mxu0 0.0
        %1075 = vmatpush.msra.mxu0 0.0
        %1076 = vmatpush.msra.mxu0 0.0
        %1077 = vmatpush.msra.mxu0 0.0
        %1078 = vmatpush.msra.mxu0 0.0
        %1079 = vmatpush.msra.mxu0 0.0
        %1080 = vmatpush.msra.mxu0 0.0
        %1081 = vmatpush.msra.mxu0 0.0
        %1082 = vmatpush.msra.mxu0 %v988
        %1083 = vmatpush.msra.mxu0 %v987
        %1084 = vmatpush.msra.mxu0 %v986
        %1085 = vmatpush.msra.mxu0 %v985
        %1086 = vmatmul.f32.gmra.mxu0 %v1065
        %v1087 = vpop.f32.mrf.mxu0
        %v1088 = vadd.f32 %v1063, %v1087
        %1089 = vmatmul.f32.gmra.mxu0 %v1068
        %v1090 = vpop.f32.mrf.mxu0
        %v1091 = vadd.f32 %v1063, %v1090
        %1092 = vdwg.mxu0
        %1095 = vrot.lane.b32.xlu0 %v1088, 96
        %v1096 = vpop.permute.xlu0 %1095
        %1097 = vrot.lane.b32.xlu0 %v1091, 96
        %v1098 = vpop.permute.xlu0 %1097
        %v1099 = vsel %vm952, %v1088, 0
        %v1101 = vsel %vm952, %v1091, 0
        %v1103 = vsel %vm952, %v1096, 0
        %v1105 = vsel %vm952, %v1098, 0
        %1107 = vmatpush.xpose.msra.mxu0 0.0
        %1108 = vmatpush.xpose.msra.mxu0 0.0
        %1109 = vmatpush.xpose.msra.mxu0 0.0
        %1110 = vmatpush.xpose.msra.mxu0 0.0
        %1111 = vmatpush.xpose.msra.mxu0 0.0
        %1112 = vmatpush.xpose.msra.mxu0 0.0
        %1113 = vmatpush.xpose.msra.mxu0 0.0
        %1114 = vmatpush.xpose.msra.mxu0 0.0
        %1115 = vmatpush.xpose.msra.mxu0 0.0
        %1116 = vmatpush.xpose.msra.mxu0 0.0
        %1117 = vmatpush.xpose.msra.mxu0 0.0
        %1118 = vmatpush.xpose.msra.mxu0 0.0
        %1119 = vmatpush.xpose.msra.mxu0 0.0
        %1120 = vmatpush.xpose.msra.mxu0 0.0
        %1121 = vmatpush.xpose.msra.mxu0 %v1105
        %1122 = vmatpush.xpose.msra.mxu0 %v1103
        %1123 = vmatmul.f32.gmra.mxu0 %v1099
        %v1124 = vpop.f32.mrf.mxu0
        %v1125 = vadd.f32 0.0, %v1124
        %1126 = vmatmul.f32.gmra.mxu0 %v1101
        %v1127 = vpop.f32.mrf.mxu0
        %v1128 = vadd.f32 0.0, %v1127
        %1129 = vdwg.mxu0
        %v1130 = vmul.f32 %v1125, 0.35355338
        %v1131 = vmul.f32 %v1128, 0.35355338
        %vm1132 = vcmask 130048
        %v1133 = vsel %vm1132, %v1130, -inf
        %1134 = vmax.xlane.f32.xlu0 %v1133
        %v1135 = vpop.xlane.xlu0 %1134
        %v1136 = vsel %vm1132, %v1131, -inf
        %1137 = vmax.xlane.f32.xlu0 %v1136
        %v1138 = vpop.xlane.xlu0 %1137
        %v1139 = vsub.f32 %v1130, %v1135
        %v1140 = vsub.f32 %v1131, %v1138
        %v1141 = vmul.f32 %v1139, 1.442695
        %v1142 = vpow.pop %v1141
        %v1143 = vmul.f32 %v1140, 1.442695
        %v1144 = vpow.pop %v1143
        %v1145 = vsel %vm1132, %v1142, 0.0
        %1146 = vadd.xlane.f32.xlu0 %v1145
        %v1147 = vpop.xlane.xlu0 %1146
        %v1148 = vsel %vm1132, %v1144, 0.0
        %1149 = vadd.xlane.f32.xlu0 %v1148
        %v1150 = vpop.xlane.xlu0 %1149
        %v1151 = vrcp.pop %v1147
        %v1152 = vmul.f32 %v1147, %v1151
        %v1153 = vsub.f32 1.0, %v1152
        %v1154 = vmul.f32 %v1151, %v1153
        %v1155 = vadd.f32 %v1151, %v1154
        %vm1156 = vweird.f32 %v1147
        %vm1157 = vweird.f32 %v1151
        %vm1158 = vmor %vm1156, %vm1157
        %v1159 = vsel %vm1158, %v1151, %v1155
        %v1160 = vand.u32 2147483647, %v1147
        %vm1161 = vcmp.eq.f32.partialorder %v1160, 8.507059e+37
        %v1162 = vand.u32 %v1147, 2147483648
        %v1163 = vor.u32 1.1754944e-38, %v1162
        %v1164 = vsel %vm1161, %v1163, %v1159
        %v1165 = vrcp.pop %v1150
        %v1166 = vmul.f32 %v1150, %v1165
        %v1167 = vsub.f32 1.0, %v1166
        %v1168 = vmul.f32 %v1165, %v1167
        %v1169 = vadd.f32 %v1165, %v1168
        %vm1170 = vweird.f32 %v1150
        %vm1171 = vweird.f32 %v1165
        %vm1172 = vmor %vm1170, %vm1171
        %v1173 = vsel %vm1172, %v1165, %v1169
        %v1174 = vand.u32 2147483647, %v1150
        %vm1175 = vcmp.eq.f32.partialorder %v1174, 8.507059e+37
        %v1176 = vand.u32 %v1150, 2147483648
        %v1177 = vor.u32 1.1754944e-38, %v1176
        %v1178 = vsel %vm1175, %v1177, %v1173
        %v1179 = vmul.f32 %v1142, %v1164
        %v1180 = vmul.f32 %v1144, %v1178
        %1181 = vrot.lane.b32.xlu0 %v1088, 64
        %v1182 = vpop.permute.xlu0 %1181
        %1183 = vrot.lane.b32.xlu0 %v1091, 64
        %v1184 = vpop.permute.xlu0 %1183
        %v1188 = vsel %vm1132, %v1179, 0
        %v1191 = vsel %vm1132, %v1180, 0
        %1193 = vmatpush.msra.mxu0 0.0
        %1194 = vmatpush.msra.mxu0 0.0
        %1195 = vmatpush.msra.mxu0 0.0
        %1196 = vmatpush.msra.mxu0 0.0
        %1197 = vmatpush.msra.mxu0 0.0
        %1198 = vmatpush.msra.mxu0 0.0
        %1199 = vmatpush.msra.mxu0 0.0
        %1200 = vmatpush.msra.mxu0 0.0
        %1201 = vmatpush.msra.mxu0 0.0
        %1202 = vmatpush.msra.mxu0 0.0
        %1203 = vmatpush.msra.mxu0 0.0
        %1204 = vmatpush.msra.mxu0 0.0
        %1205 = vmatpush.msra.mxu0 0.0
        %1206 = vmatpush.msra.mxu0 0.0
        %1207 = vmatpush.msra.mxu0 %v1184
        %1208 = vmatpush.msra.mxu0 %v1182
        %1209 = vmatmul.f32.gmra.mxu0 %v1188
        %v1210 = vpop.f32.mrf.mxu0
        %v1211 = vadd.f32 0.0, %v1210
        %1212 = vmatmul.f32.gmra.mxu0 %v1191
        %v1213 = vpop.f32.mrf.mxu0
        %v1214 = vadd.f32 0.0, %v1213
        %1215 = vdwg.mxu0
        %1216 = vrot.lane.b32.xlu0 %v1088, 120
        %v1217 = vpop.permute.xlu0 %1216
        %1218 = vrot.lane.b32.xlu0 %v1091, 120
        %v1219 = vpop.permute.xlu0 %1218
        %1220 = vrot.lane.b32.xlu0 %v1088, 88
        %v1221 = vpop.permute.xlu0 %1220
        %1222 = vrot.lane.b32.xlu0 %v1091, 88
        %v1223 = vpop.permute.xlu0 %1222
        %v1224 = vsel %vm952, %v1217, 0
        %v1226 = vsel %vm952, %v1219, 0
        %v1228 = vsel %vm952, %v1221, 0
        %v1230 = vsel %vm952, %v1223, 0
        %1232 = vmatpush.xpose.msra.mxu0 0.0
        %1233 = vmatpush.xpose.msra.mxu0 0.0
        %1234 = vmatpush.xpose.msra.mxu0 0.0
        %1235 = vmatpush.xpose.msra.mxu0 0.0
        %1236 = vmatpush.xpose.msra.mxu0 0.0
        %1237 = vmatpush.xpose.msra.mxu0 0.0
        %1238 = vmatpush.xpose.msra.mxu0 0.0
        %1239 = vmatpush.xpose.msra.mxu0 0.0
        %1240 = vmatpush.xpose.msra.mxu0 0.0
        %1241 = vmatpush.xpose.msra.mxu0 0.0
        %1242 = vmatpush.xpose.msra.mxu0 0.0
        %1243 = vmatpush.xpose.msra.mxu0 0.0
        %1244 = vmatpush.xpose.msra.mxu0 0.0
        %1245 = vmatpush.xpose.msra.mxu0 0.0
        %1246 = vmatpush.xpose.msra.mxu0 %v1230
        %1247 = vmatpush.xpose.msra.mxu0 %v1228
        %1248 = vmatmul.f32.gmra.mxu0 %v1224
        %v1249 = vpop.f32.mrf.mxu0
        %v1250 = vadd.f32 0.0, %v1249
        %1251 = vmatmul.f32.gmra.mxu0 %v1226
        %v1252 = vpop.f32.mrf.mxu0
        %v1253 = vadd.f32 0.0, %v1252
        %1254 = vdwg.mxu0
        %v1255 = vmul.f32 %v1250, 0.35355338
        %v1256 = vmul.f32 %v1253, 0.35355338
        %v1257 = vsel %vm1132, %v1255, -inf
        %1258 = vmax.xlane.f32.xlu0 %v1257
        %v1259 = vpop.xlane.xlu0 %1258
        %v1260 = vsel %vm1132, %v1256, -inf
        %1261 = vmax.xlane.f32.xlu0 %v1260
        %v1262 = vpop.xlane.xlu0 %1261
        %v1263 = vsub.f32 %v1255, %v1259
        %v1264 = vsub.f32 %v1256, %v1262
        %v1265 = vmul.f32 %v1263, 1.442695
        %v1266 = vpow.pop %v1265
        %v1267 = vmul.f32 %v1264, 1.442695
        %v1268 = vpow.pop %v1267
        %v1269 = vsel %vm1132, %v1266, 0.0
        %1270 = vadd.xlane.f32.xlu0 %v1269
        %v1271 = vpop.xlane.xlu0 %1270
        %v1272 = vsel %vm1132, %v1268, 0.0
        %1273 = vadd.xlane.f32.xlu0 %v1272
        %v1274 = vpop.xlane.xlu0 %1273
        %v1275 = vrcp.pop %v1271
        %v1276 = vmul.f32 %v1271, %v1275
        %v1277 = vsub.f32 1.0, %v1276
        %v1278 = vmul.f32 %v1275, %v1277
        %v1279 = vadd.f32 %v1275, %v1278
        %vm1280 = vweird.f32 %v1271
        %vm1281 = vweird.f32 %v1275
        %vm1282 = vmor %vm1280, %vm1281
        %v1283 = vsel %vm1282, %v1275, %v1279
        %v1284 = vand.u32 2147483647, %v1271
        %vm1285 = vcmp.eq.f32.partialorder %v1284, 8.507059e+37
        %v1286 = vand.u32 %v1271, 2147483648
        %v1287 = vor.u32 1.1754944e-38, %v1286
        %v1288 = vsel %vm1285, %v1287, %v1283
        %v1289 = vrcp.pop %v1274
        %v1290 = vmul.f32 %v1274, %v1289
        %v1291 = vsub.f32 1.0, %v1290
        %v1292 = vmul.f32 %v1289, %v1291
        %v1293 = vadd.f32 %v1289, %v1292
        %vm1294 = vweird.f32 %v1274
        %vm1295 = vweird.f32 %v1289
        %vm1296 = vmor %vm1294, %vm1295
        %v1297 = vsel %vm1296, %v1289, %v1293
        %v1298 = vand.u32 2147483647, %v1274
        %vm1299 = vcmp.eq.f32.partialorder %v1298, 8.507059e+37
        %v1300 = vand.u32 %v1274, 2147483648
        %v1301 = vor.u32 1.1754944e-38, %v1300
        %v1302 = vsel %vm1299, %v1301, %v1297
        %v1303 = vmul.f32 %v1266, %v1288
        %v1304 = vmul.f32 %v1268, %v1302
        %1305 = vrot.lane.b32.xlu0 %v1088, 56
        %v1306 = vpop.permute.xlu0 %1305
        %1307 = vrot.lane.b32.xlu0 %v1091, 56
        %v1308 = vpop.permute.xlu0 %1307
        %v1312 = vsel %vm1132, %v1303, 0
        %v1315 = vsel %vm1132, %v1304, 0
        %1317 = vmatpush.msra.mxu0 0.0
        %1318 = vmatpush.msra.mxu0 0.0
        %1319 = vmatpush.msra.mxu0 0.0
        %1320 = vmatpush.msra.mxu0 0.0
        %1321 = vmatpush.msra.mxu0 0.0
        %1322 = vmatpush.msra.mxu0 0.0
        %1323 = vmatpush.msra.mxu0 0.0
        %1324 = vmatpush.msra.mxu0 0.0
        %1325 = vmatpush.msra.mxu0 0.0
        %1326 = vmatpush.msra.mxu0 0.0
        %1327 = vmatpush.msra.mxu0 0.0
        %1328 = vmatpush.msra.mxu0 0.0
        %1329 = vmatpush.msra.mxu0 0.0
        %1330 = vmatpush.msra.mxu0 0.0
        %1331 = vmatpush.msra.mxu0 %v1308
        %1332 = vmatpush.msra.mxu0 %v1306
        %1333 = vmatmul.f32.gmra.mxu0 %v1312
        %v1334 = vpop.f32.mrf.mxu0
        %v1335 = vadd.f32 0.0, %v1334
        %1336 = vmatmul.f32.gmra.mxu0 %v1315
        %v1337 = vpop.f32.mrf.mxu0
        %v1338 = vadd.f32 0.0, %v1337
        %1339 = vdwg.mxu0
        %1340 = vrot.lane.b32.xlu0 %v1088, 112
        %v1341 = vpop.permute.xlu0 %1340
        %1342 = vrot.lane.b32.xlu0 %v1091, 112
        %v1343 = vpop.permute.xlu0 %1342
        %1344 = vrot.lane.b32.xlu0 %v1088, 80
        %v1345 = vpop.permute.xlu0 %1344
        %1346 = vrot.lane.b32.xlu0 %v1091, 80
        %v1347 = vpop.permute.xlu0 %1346
        %v1348 = vsel %vm952, %v1341, 0
        %v1350 = vsel %vm952, %v1343, 0
        %v1352 = vsel %vm952, %v1345, 0
        %v1354 = vsel %vm952, %v1347, 0
        %1356 = vmatpush.xpose.msra.mxu0 0.0
        %1357 = vmatpush.xpose.msra.mxu0 0.0
        %1358 = vmatpush.xpose.msra.mxu0 0.0
        %1359 = vmatpush.xpose.msra.mxu0 0.0
        %1360 = vmatpush.xpose.msra.mxu0 0.0
        %1361 = vmatpush.xpose.msra.mxu0 0.0
        %1362 = vmatpush.xpose.msra.mxu0 0.0
        %1363 = vmatpush.xpose.msra.mxu0 0.0
        %1364 = vmatpush.xpose.msra.mxu0 0.0
        %1365 = vmatpush.xpose.msra.mxu0 0.0
        %1366 = vmatpush.xpose.msra.mxu0 0.0
        %1367 = vmatpush.xpose.msra.mxu0 0.0
        %1368 = vmatpush.xpose.msra.mxu0 0.0
        %1369 = vmatpush.xpose.msra.mxu0 0.0
        %1370 = vmatpush.xpose.msra.mxu0 %v1354
        %1371 = vmatpush.xpose.msra.mxu0 %v1352
        %1372 = vmatmul.f32.gmra.mxu0 %v1348
        %v1373 = vpop.f32.mrf.mxu0
        %v1374 = vadd.f32 0.0, %v1373
        %1375 = vmatmul.f32.gmra.mxu0 %v1350
        %v1376 = vpop.f32.mrf.mxu0
        %v1377 = vadd.f32 0.0, %v1376
        %1378 = vdwg.mxu0
        %v1379 = vmul.f32 %v1374, 0.35355338
        %v1380 = vmul.f32 %v1377, 0.35355338
        %v1381 = vsel %vm1132, %v1379, -inf
        %1382 = vmax.xlane.f32.xlu0 %v1381
        %v1383 = vpop.xlane.xlu0 %1382
        %v1384 = vsel %vm1132, %v1380, -inf
        %1385 = vmax.xlane.f32.xlu0 %v1384
        %v1386 = vpop.xlane.xlu0 %1385
        %v1387 = vsub.f32 %v1379, %v1383
        %v1388 = vsub.f32 %v1380, %v1386
        %v1389 = vmul.f32 %v1387, 1.442695
        %v1390 = vpow.pop %v1389
        %v1391 = vmul.f32 %v1388, 1.442695
        %v1392 = vpow.pop %v1391
        %v1393 = vsel %vm1132, %v1390, 0.0
        %1394 = vadd.xlane.f32.xlu0 %v1393
        %v1395 = vpop.xlane.xlu0 %1394
        %v1396 = vsel %vm1132, %v1392, 0.0
        %1397 = vadd.xlane.f32.xlu0 %v1396
        %v1398 = vpop.xlane.xlu0 %1397
        %v1399 = vrcp.pop %v1395
        %v1400 = vmul.f32 %v1395, %v1399
        %v1401 = vsub.f32 1.0, %v1400
        %v1402 = vmul.f32 %v1399, %v1401
        %v1403 = vadd.f32 %v1399, %v1402
        %vm1404 = vweird.f32 %v1395
        %vm1405 = vweird.f32 %v1399
        %vm1406 = vmor %vm1404, %vm1405
        %v1407 = vsel %vm1406, %v1399, %v1403
        %v1408 = vand.u32 2147483647, %v1395
        %vm1409 = vcmp.eq.f32.partialorder %v1408, 8.507059e+37
        %v1410 = vand.u32 %v1395, 2147483648
        %v1411 = vor.u32 1.1754944e-38, %v1410
        %v1412 = vsel %vm1409, %v1411, %v1407
        %v1413 = vrcp.pop %v1398
        %v1414 = vmul.f32 %v1398, %v1413
        %v1415 = vsub.f32 1.0, %v1414
        %v1416 = vmul.f32 %v1413, %v1415
        %v1417 = vadd.f32 %v1413, %v1416
        %vm1418 = vweird.f32 %v1398
        %vm1419 = vweird.f32 %v1413
        %vm1420 = vmor %vm1418, %vm1419
        %v1421 = vsel %vm1420, %v1413, %v1417
        %v1422 = vand.u32 2147483647, %v1398
        %vm1423 = vcmp.eq.f32.partialorder %v1422, 8.507059e+37
        %v1424 = vand.u32 %v1398, 2147483648
        %v1425 = vor.u32 1.1754944e-38, %v1424
        %v1426 = vsel %vm1423, %v1425, %v1421
        %v1427 = vmul.f32 %v1390, %v1412
        %v1428 = vmul.f32 %v1392, %v1426
        %1429 = vrot.lane.b32.xlu0 %v1088, 48
        %v1430 = vpop.permute.xlu0 %1429
        %1431 = vrot.lane.b32.xlu0 %v1091, 48
        %v1432 = vpop.permute.xlu0 %1431
        %v1436 = vsel %vm1132, %v1427, 0
        %v1439 = vsel %vm1132, %v1428, 0
        %1441 = vmatpush.msra.mxu0 0.0
        %1442 = vmatpush.msra.mxu0 0.0
        %1443 = vmatpush.msra.mxu0 0.0
        %1444 = vmatpush.msra.mxu0 0.0
        %1445 = vmatpush.msra.mxu0 0.0
        %1446 = vmatpush.msra.mxu0 0.0
        %1447 = vmatpush.msra.mxu0 0.0
        %1448 = vmatpush.msra.mxu0 0.0
        %1449 = vmatpush.msra.mxu0 0.0
        %1450 = vmatpush.msra.mxu0 0.0
        %1451 = vmatpush.msra.mxu0 0.0
        %1452 = vmatpush.msra.mxu0 0.0
        %1453 = vmatpush.msra.mxu0 0.0
        %1454 = vmatpush.msra.mxu0 0.0
        %1455 = vmatpush.msra.mxu0 %v1432
        %1456 = vmatpush.msra.mxu0 %v1430
        %1457 = vmatmul.f32.gmra.mxu0 %v1436
        %v1458 = vpop.f32.mrf.mxu0
        %v1459 = vadd.f32 0.0, %v1458
        %1460 = vmatmul.f32.gmra.mxu0 %v1439
        %v1461 = vpop.f32.mrf.mxu0
        %v1462 = vadd.f32 0.0, %v1461
        %1463 = vdwg.mxu0
        %1464 = vrot.lane.b32.xlu0 %v1088, 104
        %v1465 = vpop.permute.xlu0 %1464
        %1466 = vrot.lane.b32.xlu0 %v1091, 104
        %v1467 = vpop.permute.xlu0 %1466
        %1468 = vrot.lane.b32.xlu0 %v1088, 72
        %v1469 = vpop.permute.xlu0 %1468
        %1470 = vrot.lane.b32.xlu0 %v1091, 72
        %v1471 = vpop.permute.xlu0 %1470
        %v1472 = vsel %vm952, %v1465, 0
        %v1474 = vsel %vm952, %v1467, 0
        %v1476 = vsel %vm952, %v1469, 0
        %v1478 = vsel %vm952, %v1471, 0
        %1480 = vmatpush.xpose.msra.mxu0 0.0
        %1481 = vmatpush.xpose.msra.mxu0 0.0
        %1482 = vmatpush.xpose.msra.mxu0 0.0
        %1483 = vmatpush.xpose.msra.mxu0 0.0
        %1484 = vmatpush.xpose.msra.mxu0 0.0
        %1485 = vmatpush.xpose.msra.mxu0 0.0
        %1486 = vmatpush.xpose.msra.mxu0 0.0
        %1487 = vmatpush.xpose.msra.mxu0 0.0
        %1488 = vmatpush.xpose.msra.mxu0 0.0
        %1489 = vmatpush.xpose.msra.mxu0 0.0
        %1490 = vmatpush.xpose.msra.mxu0 0.0
        %1491 = vmatpush.xpose.msra.mxu0 0.0
        %1492 = vmatpush.xpose.msra.mxu0 0.0
        %1493 = vmatpush.xpose.msra.mxu0 0.0
        %1494 = vmatpush.xpose.msra.mxu0 %v1478
        %1495 = vmatpush.xpose.msra.mxu0 %v1476
        %1496 = vmatmul.f32.gmra.mxu0 %v1472
        %v1497 = vpop.f32.mrf.mxu0
        %v1498 = vadd.f32 0.0, %v1497
        %1499 = vmatmul.f32.gmra.mxu0 %v1474
        %v1500 = vpop.f32.mrf.mxu0
        %v1501 = vadd.f32 0.0, %v1500
        %1502 = vdwg.mxu0
        %v1503 = vmul.f32 %v1498, 0.35355338
        %v1504 = vmul.f32 %v1501, 0.35355338
        %v1505 = vsel %vm1132, %v1503, -inf
        %1506 = vmax.xlane.f32.xlu0 %v1505
        %v1507 = vpop.xlane.xlu0 %1506
        %v1508 = vsel %vm1132, %v1504, -inf
        %1509 = vmax.xlane.f32.xlu0 %v1508
        %v1510 = vpop.xlane.xlu0 %1509
        %v1511 = vsub.f32 %v1503, %v1507
        %v1512 = vsub.f32 %v1504, %v1510
        %v1513 = vmul.f32 %v1511, 1.442695
        %v1514 = vpow.pop %v1513
        %v1515 = vmul.f32 %v1512, 1.442695
        %v1516 = vpow.pop %v1515
        %v1517 = vsel %vm1132, %v1514, 0.0
        %1518 = vadd.xlane.f32.xlu0 %v1517
        %v1519 = vpop.xlane.xlu0 %1518
        %v1520 = vsel %vm1132, %v1516, 0.0
        %1521 = vadd.xlane.f32.xlu0 %v1520
        %v1522 = vpop.xlane.xlu0 %1521
        %v1523 = vrcp.pop %v1519
        %v1524 = vmul.f32 %v1519, %v1523
        %v1525 = vsub.f32 1.0, %v1524
        %v1526 = vmul.f32 %v1523, %v1525
        %v1527 = vadd.f32 %v1523, %v1526
        %vm1528 = vweird.f32 %v1519
        %vm1529 = vweird.f32 %v1523
        %vm1530 = vmor %vm1528, %vm1529
        %v1531 = vsel %vm1530, %v1523, %v1527
        %v1532 = vand.u32 2147483647, %v1519
        %vm1533 = vcmp.eq.f32.partialorder %v1532, 8.507059e+37
        %v1534 = vand.u32 %v1519, 2147483648
        %v1535 = vor.u32 1.1754944e-38, %v1534
        %v1536 = vsel %vm1533, %v1535, %v1531
        %v1537 = vrcp.pop %v1522
        %v1538 = vmul.f32 %v1522, %v1537
        %v1539 = vsub.f32 1.0, %v1538
        %v1540 = vmul.f32 %v1537, %v1539
        %v1541 = vadd.f32 %v1537, %v1540
        %vm1542 = vweird.f32 %v1522
        %vm1543 = vweird.f32 %v1537
        %vm1544 = vmor %vm1542, %vm1543
        %v1545 = vsel %vm1544, %v1537, %v1541
        %v1546 = vand.u32 2147483647, %v1522
        %vm1547 = vcmp.eq.f32.partialorder %v1546, 8.507059e+37
        %v1548 = vand.u32 %v1522, 2147483648
        %v1549 = vor.u32 1.1754944e-38, %v1548
        %v1550 = vsel %vm1547, %v1549, %v1545
        %v1551 = vmul.f32 %v1514, %v1536
        %v1552 = vmul.f32 %v1516, %v1550
        %1553 = vrot.lane.b32.xlu0 %v1088, 40
        %v1554 = vpop.permute.xlu0 %1553
        %1555 = vrot.lane.b32.xlu0 %v1091, 40
        %v1556 = vpop.permute.xlu0 %1555
        %v1560 = vsel %vm1132, %v1551, 0
        %v1563 = vsel %vm1132, %v1552, 0
        %1565 = vmatpush.msra.mxu0 0.0
        %1566 = vmatpush.msra.mxu0 0.0
        %1567 = vmatpush.msra.mxu0 0.0
        %1568 = vmatpush.msra.mxu0 0.0
        %1569 = vmatpush.msra.mxu0 0.0
        %1570 = vmatpush.msra.mxu0 0.0
        %1571 = vmatpush.msra.mxu0 0.0
        %1572 = vmatpush.msra.mxu0 0.0
        %1573 = vmatpush.msra.mxu0 0.0
        %1574 = vmatpush.msra.mxu0 0.0
        %1575 = vmatpush.msra.mxu0 0.0
        %1576 = vmatpush.msra.mxu0 0.0
        %1577 = vmatpush.msra.mxu0 0.0
        %1578 = vmatpush.msra.mxu0 0.0
        %1579 = vmatpush.msra.mxu0 %v1556
        %1580 = vmatpush.msra.mxu0 %v1554
        %1581 = vmatmul.f32.gmra.mxu0 %v1560
        %v1582 = vpop.f32.mrf.mxu0
        %v1583 = vadd.f32 0.0, %v1582
        %1584 = vmatmul.f32.gmra.mxu0 %v1563
        %v1585 = vpop.f32.mrf.mxu0
        %v1586 = vadd.f32 0.0, %v1585
        %1587 = vdwg.mxu0
        %1590 = vrot.lane.b32.xlu0 %v1335, 8
        %v1591 = vpop.permute.xlu0 %1590
        %1592 = vrot.lane.b32.xlu0 %v1338, 8
        %v1593 = vpop.permute.xlu0 %1592
        %1598 = vrot.lane.b32.xlu0 %v1459, 16
        %v1599 = vpop.permute.xlu0 %1598
        %1600 = vrot.lane.b32.xlu0 %v1462, 16
        %v1601 = vpop.permute.xlu0 %1600
        %1606 = vrot.lane.b32.xlu0 %v1583, 24
        %v1607 = vpop.permute.xlu0 %1606
        %1608 = vrot.lane.b32.xlu0 %v1586, 24
        %v1609 = vpop.permute.xlu0 %1608
        %v1612 = vsel %vm952, %v1211, %v1591
        %v1613 = vsel %vm952, %v1214, %v1593
        %v1614 = vsel %vm1132, %v1612, %v1599
        %v1615 = vsel %vm1132, %v1613, %v1601
        %vm1616 = vcmask 195584
        %v1617 = vsel %vm1616, %v1614, %v1607
        %v1618 = vsel %vm1616, %v1615, %v1609
        %v1619 = vperm.slane %v1005, 1
        %v1621 = vsel %vm982, %v1617, 0
        %v1624 = vsel %vm982, %v1618, 0
        %1626 = vmatpush.msra.mxu0 0.0
        %1627 = vmatpush.msra.mxu0 0.0
        %1628 = vmatpush.msra.mxu0 0.0
        %1629 = vmatpush.msra.mxu0 0.0
        %1630 = vmatpush.msra.mxu0 0.0
        %1631 = vmatpush.msra.mxu0 0.0
        %1632 = vmatpush.msra.mxu0 0.0
        %1633 = vmatpush.msra.mxu0 0.0
        %1634 = vmatpush.msra.mxu0 0.0
        %1635 = vmatpush.msra.mxu0 0.0
        %1636 = vmatpush.msra.mxu0 0.0
        %1637 = vmatpush.msra.mxu0 0.0
        %1638 = vmatpush.msra.mxu0 %v992
        %1639 = vmatpush.msra.mxu0 %v991
        %1640 = vmatpush.msra.mxu0 %v990
        %1641 = vmatpush.msra.mxu0 %v989
        %1642 = vmatmul.f32.gmra.mxu0 %v1621
        %v1643 = vpop.f32.mrf.mxu0
        %v1644 = vadd.f32 %v1619, %v1643
        %1645 = vmatmul.f32.gmra.mxu0 %v1624
        %v1646 = vpop.f32.mrf.mxu0
        %v1647 = vadd.f32 %v1619, %v1646
        %1648 = vdwg.mxu0
        %v1649 = vadd.f32 %v977, %v1644
        %v1650 = vadd.f32 %v980, %v1647
        %v1651 = vsel %vm982, %v1649, 0.0
        %1652 = vadd.xlane.f32.xlu0 %v1651
        %v1653 = vpop.xlane.xlu0 %1652
        %v1654 = vsel %vm982, %v1650, 0.0
        %1655 = vadd.xlane.f32.xlu0 %v1654
        %v1656 = vpop.xlane.xlu0 %1655
        %v1657 = vmul.f32 %v1653, %v1018
        %v1658 = vmul.f32 %v1656, %v1018
        %v1659 = vsub.f32 %v1649, %v1657
        %v1660 = vsub.f32 %v1650, %v1658
        %v1661 = vmul.f32 %v1659, %v1659
        %v1662 = vmul.f32 %v1660, %v1660
        %v1663 = vsel %vm982, %v1661, 0.0
        %1664 = vadd.xlane.f32.xlu0 %v1663
        %v1665 = vpop.xlane.xlu0 %1664
        %v1666 = vsel %vm982, %v1662, 0.0
        %1667 = vadd.xlane.f32.xlu0 %v1666
        %v1668 = vpop.xlane.xlu0 %1667
        %v1669 = vmul.f32 %v1665, %v1018
        %v1670 = vmul.f32 %v1668, %v1018
        %v1671 = vadd.f32 %v1669, 1e-05
        %v1672 = vadd.f32 %v1670, 1e-05
        %v1673 = vrsqrt.pop %v1671
        %v1674 = vmul.f32 %v1673, %v1671
        %v1675 = vmul.f32 %v1674, %v1673
        %v1676 = vmul.f32 0.5, %v1675
        %v1677 = vsub.f32 1.5, %v1676
        %v1678 = vmul.f32 %v1673, %v1677
        %vm1679 = vweird.f32 %v1671
        %vm1680 = vweird.f32 %v1673
        %vm1681 = vmor %vm1679, %vm1680
        %v1682 = vsel %vm1681, %v1673, %v1678
        %v1683 = vrsqrt.pop %v1672
        %v1684 = vmul.f32 %v1683, %v1672
        %v1685 = vmul.f32 %v1684, %v1683
        %v1686 = vmul.f32 0.5, %v1685
        %v1687 = vsub.f32 1.5, %v1686
        %v1688 = vmul.f32 %v1683, %v1687
        %vm1689 = vweird.f32 %v1672
        %vm1690 = vweird.f32 %v1683
        %vm1691 = vmor %vm1689, %vm1690
        %v1692 = vsel %vm1691, %v1683, %v1688
        %v1693 = vmul.f32 %v1659, %v1682
        %v1694 = vmul.f32 %v1660, %v1692
        %v1695 = vperm.slane %v1005, 6
        %v1696 = vmul.f32 %v1693, %v1695
        %v1697 = vmul.f32 %v1694, %v1695
        %v1698 = vperm.slane %v1005, 7
        %v1699 = vadd.f32 %v1696, %v1698
        %v1700 = vadd.f32 %v1697, %v1698
        %v1701 = vperm.slane %v1005, 2
        %v1703 = vsel %vm982, %v1699, 0
        %v1706 = vsel %vm982, %v1700, 0
        %1708 = vmatpush.msra.mxu0 0.0
        %1709 = vmatpush.msra.mxu0 0.0
        %1710 = vmatpush.msra.mxu0 0.0
        %1711 = vmatpush.msra.mxu0 0.0
        %1712 = vmatpush.msra.mxu0 0.0
        %1713 = vmatpush.msra.mxu0 0.0
        %1714 = vmatpush.msra.mxu0 0.0
        %1715 = vmatpush.msra.mxu0 0.0
        %1716 = vmatpush.msra.mxu0 0.0
        %1717 = vmatpush.msra.mxu0 0.0
        %1718 = vmatpush.msra.mxu0 0.0
        %1719 = vmatpush.msra.mxu0 0.0
        %1720 = vmatpush.msra.mxu0 %v996
        %1721 = vmatpush.msra.mxu0 %v995
        %1722 = vmatpush.msra.mxu0 %v994
        %1723 = vmatpush.msra.mxu0 %v993
        %1724 = vmatmul.f32.gmra.mxu0 %v1703
        %v1725 = vpop.f32.mrf.mxu0
        %v1726 = vadd.f32 %v1701, %v1725
        %1727 = vmatmul.f32.gmra.mxu0 %v1706
        %v1728 = vpop.f32.mrf.mxu0
        %v1729 = vadd.f32 %v1701, %v1728
        %1730 = vdwg.mxu0
        %v1731 = vmul.f32 %v1726, %v1726
        %v1732 = vmul.f32 %v1729, %v1729
        %v1733 = vmul.f32 %v1726, %v1731
        %v1734 = vmul.f32 %v1729, %v1732
        %v1735 = vmul.f32 %v1733, 0.044715
        %v1736 = vmul.f32 %v1734, 0.044715
        %v1737 = vadd.f32 %v1726, %v1735
        %v1738 = vadd.f32 %v1729, %v1736
        %v1739 = vmul.f32 %v1737, 0.7978846
        %v1740 = vmul.f32 %v1738, 0.7978846
        %v1741 = vtanh.pop %v1739
        %v1742 = vtanh.pop %v1740
        %v1743 = vadd.f32 %v1741, 1.0
        %v1744 = vadd.f32 %v1742, 1.0
        %v1745 = vmul.f32 %v1743, 0.5
        %v1746 = vmul.f32 %v1744, 0.5
        %v1747 = vmul.f32 %v1726, %v1745
        %v1748 = vmul.f32 %v1729, %v1746
        %vm1749 = vcmask 523264
        %v1751 = vsel %vm1749, %v1747, 0
        %v1754 = vsel %vm1749, %v1748, 0
        %1756 = vmatpush.msra.mxu0 0.0
        %1757 = vmatpush.msra.mxu0 0.0
        %1758 = vmatpush.msra.mxu0 0.0
        %1759 = vmatpush.msra.mxu0 0.0
        %1760 = vmatpush.msra.mxu0 0.0
        %1761 = vmatpush.msra.mxu0 0.0
        %1762 = vmatpush.msra.mxu0 0.0
        %1763 = vmatpush.msra.mxu0 0.0
        %1764 = vmatpush.msra.mxu0 %v1004
        %1765 = vmatpush.msra.mxu0 %v1003
        %1766 = vmatpush.msra.mxu0 %v1002
        %1767 = vmatpush.msra.mxu0 %v1001
        %1768 = vmatpush.msra.mxu0 %v1000
        %1769 = vmatpush.msra.mxu0 %v999
        %1770 = vmatpush.msra.mxu0 %v998
        %1771 = vmatpush.msra.mxu0 %v997
        %1772 = vmatmul.f32.gmra.mxu0 %v1751
        %v1773 = vpop.f32.mrf.mxu0
        %v1774 = vadd.f32 0.0, %v1773
        %1775 = vmatmul.f32.gmra.mxu0 %v1754
        %v1776 = vpop.f32.mrf.mxu0
        %v1777 = vadd.f32 0.0, %v1776
        %1778 = vdwg.mxu0
        %v1779 = vadd.f32 %v1649, %v1774
        %v1780 = vadd.f32 %v1650, %v1777
        %v1781 = vperm.slane %v1005, 3
        %v1782 = vadd.f32 %v1779, %v1781
        %v1783 = vadd.f32 %v1780, %v1781
        %s1784 = scalar_lea.vmem %s8, 32
        %v1785 = vld [vmem:[%s1784] sm:$0xff]
        %v1786 = vld [vmem:[%s1784 + $0x8] sm:$0xff]
        %v1787 = vld [vmem:[%s1784 + $0x10] sm:$0xff]
        %v1788 = vld [vmem:[%s1784 + $0x18] sm:$0xff]
        %s1789 = scalar_lea.vmem %s9, 32
        %v1790 = vld [vmem:[%s1789] sm:$0xff]
        %v1791 = vld [vmem:[%s1789 + $0x8] sm:$0xff]
        %v1792 = vld [vmem:[%s1789 + $0x10] sm:$0xff]
        %v1793 = vld [vmem:[%s1789 + $0x18] sm:$0xff]
        %s1794 = scalar_lea.vmem %s10, 32
        %v1795 = vld [vmem:[%s1794] sm:$0xff]
        %v1796 = vld [vmem:[%s1794 + $0x8] sm:$0xff]
        %v1797 = vld [vmem:[%s1794 + $0x10] sm:$0xff]
        %v1798 = vld [vmem:[%s1794 + $0x18] sm:$0xff]
        %s1799 = scalar_lea.vmem %s11, 64
        %v1800 = vld [vmem:[%s1799] sm:$0xff]
        %v1801 = vld [vmem:[%s1799 + $0x8] sm:$0xff]
        %v1802 = vld [vmem:[%s1799 + $0x10] sm:$0xff]
        %v1803 = vld [vmem:[%s1799 + $0x18] sm:$0xff]
        %v1804 = vld [vmem:[%s1799 + $0x20] sm:$0xff]
        %v1805 = vld [vmem:[%s1799 + $0x28] sm:$0xff]
        %v1806 = vld [vmem:[%s1799 + $0x30] sm:$0xff]
        %v1807 = vld [vmem:[%s1799 + $0x38] sm:$0xff]
        %s1808 = scalar_lea.vmem %s12, 8
        %v1809 = vld [vmem:[%s1808] sm:$0xff]
        %v1810 = vsel %vm982, %v1782, 0.0
        %1811 = vadd.xlane.f32.xlu0 %v1810
        %v1812 = vpop.xlane.xlu0 %1811
        %v1813 = vsel %vm982, %v1783, 0.0
        %1814 = vadd.xlane.f32.xlu0 %v1813
        %v1815 = vpop.xlane.xlu0 %1814
        %v1816 = vmul.f32 %v1812, %v1018
        %v1817 = vmul.f32 %v1815, %v1018
        %v1818 = vsub.f32 %v1782, %v1816
        %v1819 = vsub.f32 %v1783, %v1817
        %v1820 = vmul.f32 %v1818, %v1818
        %v1821 = vmul.f32 %v1819, %v1819
        %v1822 = vsel %vm982, %v1820, 0.0
        %1823 = vadd.xlane.f32.xlu0 %v1822
        %v1824 = vpop.xlane.xlu0 %1823
        %v1825 = vsel %vm982, %v1821, 0.0
        %1826 = vadd.xlane.f32.xlu0 %v1825
        %v1827 = vpop.xlane.xlu0 %1826
        %v1828 = vmul.f32 %v1824, %v1018
        %v1829 = vmul.f32 %v1827, %v1018
        %v1830 = vadd.f32 %v1828, 1e-05
        %v1831 = vadd.f32 %v1829, 1e-05
        %v1832 = vrsqrt.pop %v1830
        %v1833 = vmul.f32 %v1832, %v1830
        %v1834 = vmul.f32 %v1833, %v1832
        %v1835 = vmul.f32 0.5, %v1834
        %v1836 = vsub.f32 1.5, %v1835
        %v1837 = vmul.f32 %v1832, %v1836
        %vm1838 = vweird.f32 %v1830
        %vm1839 = vweird.f32 %v1832
        %vm1840 = vmor %vm1838, %vm1839
        %v1841 = vsel %vm1840, %v1832, %v1837
        %v1842 = vrsqrt.pop %v1831
        %v1843 = vmul.f32 %v1842, %v1831
        %v1844 = vmul.f32 %v1843, %v1842
        %v1845 = vmul.f32 0.5, %v1844
        %v1846 = vsub.f32 1.5, %v1845
        %v1847 = vmul.f32 %v1842, %v1846
        %vm1848 = vweird.f32 %v1831
        %vm1849 = vweird.f32 %v1842
        %vm1850 = vmor %vm1848, %vm1849
        %v1851 = vsel %vm1850, %v1842, %v1847
        %v1852 = vmul.f32 %v1818, %v1841
        %v1853 = vmul.f32 %v1819, %v1851
        %v1854 = vperm.slane %v1809, 4
        %v1855 = vmul.f32 %v1852, %v1854
        %v1856 = vmul.f32 %v1853, %v1854
        %v1857 = vperm.slane %v1809, 5
        %v1858 = vadd.f32 %v1855, %v1857
        %v1859 = vadd.f32 %v1856, %v1857
        %v1860 = vperm.slane %v1809, 0
        %v1862 = vsel %vm982, %v1858, 0
        %v1865 = vsel %vm982, %v1859, 0
        %1867 = vmatpush.msra.mxu0 0.0
        %1868 = vmatpush.msra.mxu0 0.0
        %1869 = vmatpush.msra.mxu0 0.0
        %1870 = vmatpush.msra.mxu0 0.0
        %1871 = vmatpush.msra.mxu0 0.0
        %1872 = vmatpush.msra.mxu0 0.0
        %1873 = vmatpush.msra.mxu0 0.0
        %1874 = vmatpush.msra.mxu0 0.0
        %1875 = vmatpush.msra.mxu0 0.0
        %1876 = vmatpush.msra.mxu0 0.0
        %1877 = vmatpush.msra.mxu0 0.0
        %1878 = vmatpush.msra.mxu0 0.0
        %1879 = vmatpush.msra.mxu0 %v1788
        %1880 = vmatpush.msra.mxu0 %v1787
        %1881 = vmatpush.msra.mxu0 %v1786
        %1882 = vmatpush.msra.mxu0 %v1785
        %1883 = vmatmul.f32.gmra.mxu0 %v1862
        %v1884 = vpop.f32.mrf.mxu0
        %v1885 = vadd.f32 %v1860, %v1884
        %1886 = vmatmul.f32.gmra.mxu0 %v1865
        %v1887 = vpop.f32.mrf.mxu0
        %v1888 = vadd.f32 %v1860, %v1887
        %1889 = vdwg.mxu0
        %1892 = vrot.lane.b32.xlu0 %v1885, 96
        %v1893 = vpop.permute.xlu0 %1892
        %1894 = vrot.lane.b32.xlu0 %v1888, 96
        %v1895 = vpop.permute.xlu0 %1894
        %v1896 = vsel %vm952, %v1885, 0
        %v1898 = vsel %vm952, %v1888, 0
        %v1900 = vsel %vm952, %v1893, 0
        %v1902 = vsel %vm952, %v1895, 0
        %1904 = vmatpush.xpose.msra.mxu0 0.0
        %1905 = vmatpush.xpose.msra.mxu0 0.0
        %1906 = vmatpush.xpose.msra.mxu0 0.0
        %1907 = vmatpush.xpose.msra.mxu0 0.0
        %1908 = vmatpush.xpose.msra.mxu0 0.0
        %1909 = vmatpush.xpose.msra.mxu0 0.0
        %1910 = vmatpush.xpose.msra.mxu0 0.0
        %1911 = vmatpush.xpose.msra.mxu0 0.0
        %1912 = vmatpush.xpose.msra.mxu0 0.0
        %1913 = vmatpush.xpose.msra.mxu0 0.0
        %1914 = vmatpush.xpose.msra.mxu0 0.0
        %1915 = vmatpush.xpose.msra.mxu0 0.0
        %1916 = vmatpush.xpose.msra.mxu0 0.0
        %1917 = vmatpush.xpose.msra.mxu0 0.0
        %1918 = vmatpush.xpose.msra.mxu0 %v1902
        %1919 = vmatpush.xpose.msra.mxu0 %v1900
        %1920 = vmatmul.f32.gmra.mxu0 %v1896
        %v1921 = vpop.f32.mrf.mxu0
        %v1922 = vadd.f32 0.0, %v1921
        %1923 = vmatmul.f32.gmra.mxu0 %v1898
        %v1924 = vpop.f32.mrf.mxu0
        %v1925 = vadd.f32 0.0, %v1924
        %1926 = vdwg.mxu0
        %v1927 = vmul.f32 %v1922, 0.35355338
        %v1928 = vmul.f32 %v1925, 0.35355338
        %v1929 = vsel %vm1132, %v1927, -inf
        %1930 = vmax.xlane.f32.xlu0 %v1929
        %v1931 = vpop.xlane.xlu0 %1930
        %v1932 = vsel %vm1132, %v1928, -inf
        %1933 = vmax.xlane.f32.xlu0 %v1932
        %v1934 = vpop.xlane.xlu0 %1933
        %v1935 = vsub.f32 %v1927, %v1931
        %v1936 = vsub.f32 %v1928, %v1934
        %v1937 = vmul.f32 %v1935, 1.442695
        %v1938 = vpow.pop %v1937
        %v1939 = vmul.f32 %v1936, 1.442695
        %v1940 = vpow.pop %v1939
        %v1941 = vsel %vm1132, %v1938, 0.0
        %1942 = vadd.xlane.f32.xlu0 %v1941
        %v1943 = vpop.xlane.xlu0 %1942
        %v1944 = vsel %vm1132, %v1940, 0.0
        %1945 = vadd.xlane.f32.xlu0 %v1944
        %v1946 = vpop.xlane.xlu0 %1945
        %v1947 = vrcp.pop %v1943
        %v1948 = vmul.f32 %v1943, %v1947
        %v1949 = vsub.f32 1.0, %v1948
        %v1950 = vmul.f32 %v1947, %v1949
        %v1951 = vadd.f32 %v1947, %v1950
        %vm1952 = vweird.f32 %v1943
        %vm1953 = vweird.f32 %v1947
        %vm1954 = vmor %vm1952, %vm1953
        %v1955 = vsel %vm1954, %v1947, %v1951
        %v1956 = vand.u32 2147483647, %v1943
        %vm1957 = vcmp.eq.f32.partialorder %v1956, 8.507059e+37
        %v1958 = vand.u32 %v1943, 2147483648
        %v1959 = vor.u32 1.1754944e-38, %v1958
        %v1960 = vsel %vm1957, %v1959, %v1955
        %v1961 = vrcp.pop %v1946
        %v1962 = vmul.f32 %v1946, %v1961
        %v1963 = vsub.f32 1.0, %v1962
        %v1964 = vmul.f32 %v1961, %v1963
        %v1965 = vadd.f32 %v1961, %v1964
        %vm1966 = vweird.f32 %v1946
        %vm1967 = vweird.f32 %v1961
        %vm1968 = vmor %vm1966, %vm1967
        %v1969 = vsel %vm1968, %v1961, %v1965
        %v1970 = vand.u32 2147483647, %v1946
        %vm1971 = vcmp.eq.f32.partialorder %v1970, 8.507059e+37
        %v1972 = vand.u32 %v1946, 2147483648
        %v1973 = vor.u32 1.1754944e-38, %v1972
        %v1974 = vsel %vm1971, %v1973, %v1969
        %v1975 = vmul.f32 %v1938, %v1960
        %v1976 = vmul.f32 %v1940, %v1974
        %1977 = vrot.lane.b32.xlu0 %v1885, 64
        %v1978 = vpop.permute.xlu0 %1977
        %1979 = vrot.lane.b32.xlu0 %v1888, 64
        %v1980 = vpop.permute.xlu0 %1979
        %v1984 = vsel %vm1132, %v1975, 0
        %v1987 = vsel %vm1132, %v1976, 0
        %1989 = vmatpush.msra.mxu0 0.0
        %1990 = vmatpush.msra.mxu0 0.0
        %1991 = vmatpush.msra.mxu0 0.0
        %1992 = vmatpush.msra.mxu0 0.0
        %1993 = vmatpush.msra.mxu0 0.0
        %1994 = vmatpush.msra.mxu0 0.0
        %1995 = vmatpush.msra.mxu0 0.0
        %1996 = vmatpush.msra.mxu0 0.0
        %1997 = vmatpush.msra.mxu0 0.0
        %1998 = vmatpush.msra.mxu0 0.0
        %1999 = vmatpush.msra.mxu0 0.0
        %2000 = vmatpush.msra.mxu0 0.0
        %2001 = vmatpush.msra.mxu0 0.0
        %2002 = vmatpush.msra.mxu0 0.0
        %2003 = vmatpush.msra.mxu0 %v1980
        %2004 = vmatpush.msra.mxu0 %v1978
        %2005 = vmatmul.f32.gmra.mxu0 %v1984
        %v2006 = vpop.f32.mrf.mxu0
        %v2007 = vadd.f32 0.0, %v2006
        %2008 = vmatmul.f32.gmra.mxu0 %v1987
        %v2009 = vpop.f32.mrf.mxu0
        %v2010 = vadd.f32 0.0, %v2009
        %2011 = vdwg.mxu0
        %2012 = vrot.lane.b32.xlu0 %v1885, 120
        %v2013 = vpop.permute.xlu0 %2012
        %2014 = vrot.lane.b32.xlu0 %v1888, 120
        %v2015 = vpop.permute.xlu0 %2014
        %2016 = vrot.lane.b32.xlu0 %v1885, 88
        %v2017 = vpop.permute.xlu0 %2016
        %2018 = vrot.lane.b32.xlu0 %v1888, 88
        %v2019 = vpop.permute.xlu0 %2018
        %v2020 = vsel %vm952, %v2013, 0
        %v2022 = vsel %vm952, %v2015, 0
        %v2024 = vsel %vm952, %v2017, 0
        %v2026 = vsel %vm952, %v2019, 0
        %2028 = vmatpush.xpose.msra.mxu0 0.0
        %2029 = vmatpush.xpose.msra.mxu0 0.0
        %2030 = vmatpush.xpose.msra.mxu0 0.0
        %2031 = vmatpush.xpose.msra.mxu0 0.0
        %2032 = vmatpush.xpose.msra.mxu0 0.0
        %2033 = vmatpush.xpose.msra.mxu0 0.0
        %2034 = vmatpush.xpose.msra.mxu0 0.0
        %2035 = vmatpush.xpose.msra.mxu0 0.0
        %2036 = vmatpush.xpose.msra.mxu0 0.0
        %2037 = vmatpush.xpose.msra.mxu0 0.0
        %2038 = vmatpush.xpose.msra.mxu0 0.0
        %2039 = vmatpush.xpose.msra.mxu0 0.0
        %2040 = vmatpush.xpose.msra.mxu0 0.0
        %2041 = vmatpush.xpose.msra.mxu0 0.0
        %2042 = vmatpush.xpose.msra.mxu0 %v2026
        %2043 = vmatpush.xpose.msra.mxu0 %v2024
        %2044 = vmatmul.f32.gmra.mxu0 %v2020
        %v2045 = vpop.f32.mrf.mxu0
        %v2046 = vadd.f32 0.0, %v2045
        %2047 = vmatmul.f32.gmra.mxu0 %v2022
        %v2048 = vpop.f32.mrf.mxu0
        %v2049 = vadd.f32 0.0, %v2048
        %2050 = vdwg.mxu0
        %v2051 = vmul.f32 %v2046, 0.35355338
        %v2052 = vmul.f32 %v2049, 0.35355338
        %v2053 = vsel %vm1132, %v2051, -inf
        %2054 = vmax.xlane.f32.xlu0 %v2053
        %v2055 = vpop.xlane.xlu0 %2054
        %v2056 = vsel %vm1132, %v2052, -inf
        %2057 = vmax.xlane.f32.xlu0 %v2056
        %v2058 = vpop.xlane.xlu0 %2057
        %v2059 = vsub.f32 %v2051, %v2055
        %v2060 = vsub.f32 %v2052, %v2058
        %v2061 = vmul.f32 %v2059, 1.442695
        %v2062 = vpow.pop %v2061
        %v2063 = vmul.f32 %v2060, 1.442695
        %v2064 = vpow.pop %v2063
        %v2065 = vsel %vm1132, %v2062, 0.0
        %2066 = vadd.xlane.f32.xlu0 %v2065
        %v2067 = vpop.xlane.xlu0 %2066
        %v2068 = vsel %vm1132, %v2064, 0.0
        %2069 = vadd.xlane.f32.xlu0 %v2068
        %v2070 = vpop.xlane.xlu0 %2069
        %v2071 = vrcp.pop %v2067
        %v2072 = vmul.f32 %v2067, %v2071
        %v2073 = vsub.f32 1.0, %v2072
        %v2074 = vmul.f32 %v2071, %v2073
        %v2075 = vadd.f32 %v2071, %v2074
        %vm2076 = vweird.f32 %v2067
        %vm2077 = vweird.f32 %v2071
        %vm2078 = vmor %vm2076, %vm2077
        %v2079 = vsel %vm2078, %v2071, %v2075
        %v2080 = vand.u32 2147483647, %v2067
        %vm2081 = vcmp.eq.f32.partialorder %v2080, 8.507059e+37
        %v2082 = vand.u32 %v2067, 2147483648
        %v2083 = vor.u32 1.1754944e-38, %v2082
        %v2084 = vsel %vm2081, %v2083, %v2079
        %v2085 = vrcp.pop %v2070
        %v2086 = vmul.f32 %v2070, %v2085
        %v2087 = vsub.f32 1.0, %v2086
        %v2088 = vmul.f32 %v2085, %v2087
        %v2089 = vadd.f32 %v2085, %v2088
        %vm2090 = vweird.f32 %v2070
        %vm2091 = vweird.f32 %v2085
        %vm2092 = vmor %vm2090, %vm2091
        %v2093 = vsel %vm2092, %v2085, %v2089
        %v2094 = vand.u32 2147483647, %v2070
        %vm2095 = vcmp.eq.f32.partialorder %v2094, 8.507059e+37
        %v2096 = vand.u32 %v2070, 2147483648
        %v2097 = vor.u32 1.1754944e-38, %v2096
        %v2098 = vsel %vm2095, %v2097, %v2093
        %v2099 = vmul.f32 %v2062, %v2084
        %v2100 = vmul.f32 %v2064, %v2098
        %2101 = vrot.lane.b32.xlu0 %v1885, 56
        %v2102 = vpop.permute.xlu0 %2101
        %2103 = vrot.lane.b32.xlu0 %v1888, 56
        %v2104 = vpop.permute.xlu0 %2103
        %v2108 = vsel %vm1132, %v2099, 0
        %v2111 = vsel %vm1132, %v2100, 0
        %2113 = vmatpush.msra.mxu0 0.0
        %2114 = vmatpush.msra.mxu0 0.0
        %2115 = vmatpush.msra.mxu0 0.0
        %2116 = vmatpush.msra.mxu0 0.0
        %2117 = vmatpush.msra.mxu0 0.0
        %2118 = vmatpush.msra.mxu0 0.0
        %2119 = vmatpush.msra.mxu0 0.0
        %2120 = vmatpush.msra.mxu0 0.0
        %2121 = vmatpush.msra.mxu0 0.0
        %2122 = vmatpush.msra.mxu0 0.0
        %2123 = vmatpush.msra.mxu0 0.0
        %2124 = vmatpush.msra.mxu0 0.0
        %2125 = vmatpush.msra.mxu0 0.0
        %2126 = vmatpush.msra.mxu0 0.0
        %2127 = vmatpush.msra.mxu0 %v2104
        %2128 = vmatpush.msra.mxu0 %v2102
        %2129 = vmatmul.f32.gmra.mxu0 %v2108
        %v2130 = vpop.f32.mrf.mxu0
        %v2131 = vadd.f32 0.0, %v2130
        %2132 = vmatmul.f32.gmra.mxu0 %v2111
        %v2133 = vpop.f32.mrf.mxu0
        %v2134 = vadd.f32 0.0, %v2133
        %2135 = vdwg.mxu0
        %2136 = vrot.lane.b32.xlu0 %v1885, 112
        %v2137 = vpop.permute.xlu0 %2136
        %2138 = vrot.lane.b32.xlu0 %v1888, 112
        %v2139 = vpop.permute.xlu0 %2138
        %2140 = vrot.lane.b32.xlu0 %v1885, 80
        %v2141 = vpop.permute.xlu0 %2140
        %2142 = vrot.lane.b32.xlu0 %v1888, 80
        %v2143 = vpop.permute.xlu0 %2142
        %v2144 = vsel %vm952, %v2137, 0
        %v2146 = vsel %vm952, %v2139, 0
        %v2148 = vsel %vm952, %v2141, 0
        %v2150 = vsel %vm952, %v2143, 0
        %2152 = vmatpush.xpose.msra.mxu0 0.0
        %2153 = vmatpush.xpose.msra.mxu0 0.0
        %2154 = vmatpush.xpose.msra.mxu0 0.0
        %2155 = vmatpush.xpose.msra.mxu0 0.0
        %2156 = vmatpush.xpose.msra.mxu0 0.0
        %2157 = vmatpush.xpose.msra.mxu0 0.0
        %2158 = vmatpush.xpose.msra.mxu0 0.0
        %2159 = vmatpush.xpose.msra.mxu0 0.0
        %2160 = vmatpush.xpose.msra.mxu0 0.0
        %2161 = vmatpush.xpose.msra.mxu0 0.0
        %2162 = vmatpush.xpose.msra.mxu0 0.0
        %2163 = vmatpush.xpose.msra.mxu0 0.0
        %2164 = vmatpush.xpose.msra.mxu0 0.0
        %2165 = vmatpush.xpose.msra.mxu0 0.0
        %2166 = vmatpush.xpose.msra.mxu0 %v2150
        %2167 = vmatpush.xpose.msra.mxu0 %v2148
        %2168 = vmatmul.f32.gmra.mxu0 %v2144
        %v2169 = vpop.f32.mrf.mxu0
        %v2170 = vadd.f32 0.0, %v2169
        %2171 = vmatmul.f32.gmra.mxu0 %v2146
        %v2172 = vpop.f32.mrf.mxu0
        %v2173 = vadd.f32 0.0, %v2172
        %2174 = vdwg.mxu0
        %v2175 = vmul.f32 %v2170, 0.35355338
        %v2176 = vmul.f32 %v2173, 0.35355338
        %v2177 = vsel %vm1132, %v2175, -inf
        %2178 = vmax.xlane.f32.xlu0 %v2177
        %v2179 = vpop.xlane.xlu0 %2178
        %v2180 = vsel %vm1132, %v2176, -inf
        %2181 = vmax.xlane.f32.xlu0 %v2180
        %v2182 = vpop.xlane.xlu0 %2181
        %v2183 = vsub.f32 %v2175, %v2179
        %v2184 = vsub.f32 %v2176, %v2182
        %v2185 = vmul.f32 %v2183, 1.442695
        %v2186 = vpow.pop %v2185
        %v2187 = vmul.f32 %v2184, 1.442695
        %v2188 = vpow.pop %v2187
        %v2189 = vsel %vm1132, %v2186, 0.0
        %2190 = vadd.xlane.f32.xlu0 %v2189
        %v2191 = vpop.xlane.xlu0 %2190
        %v2192 = vsel %vm1132, %v2188, 0.0
        %2193 = vadd.xlane.f32.xlu0 %v2192
        %v2194 = vpop.xlane.xlu0 %2193
        %v2195 = vrcp.pop %v2191
        %v2196 = vmul.f32 %v2191, %v2195
        %v2197 = vsub.f32 1.0, %v2196
        %v2198 = vmul.f32 %v2195, %v2197
        %v2199 = vadd.f32 %v2195, %v2198
        %vm2200 = vweird.f32 %v2191
        %vm2201 = vweird.f32 %v2195
        %vm2202 = vmor %vm2200, %vm2201
        %v2203 = vsel %vm2202, %v2195, %v2199
        %v2204 = vand.u32 2147483647, %v2191
        %vm2205 = vcmp.eq.f32.partialorder %v2204, 8.507059e+37
        %v2206 = vand.u32 %v2191, 2147483648
        %v2207 = vor.u32 1.1754944e-38, %v2206
        %v2208 = vsel %vm2205, %v2207, %v2203
        %v2209 = vrcp.pop %v2194
        %v2210 = vmul.f32 %v2194, %v2209
        %v2211 = vsub.f32 1.0, %v2210
        %v2212 = vmul.f32 %v2209, %v2211
        %v2213 = vadd.f32 %v2209, %v2212
        %vm2214 = vweird.f32 %v2194
        %vm2215 = vweird.f32 %v2209
        %vm2216 = vmor %vm2214, %vm2215
        %v2217 = vsel %vm2216, %v2209, %v2213
        %v2218 = vand.u32 2147483647, %v2194
        %vm2219 = vcmp.eq.f32.partialorder %v2218, 8.507059e+37
        %v2220 = vand.u32 %v2194, 2147483648
        %v2221 = vor.u32 1.1754944e-38, %v2220
        %v2222 = vsel %vm2219, %v2221, %v2217
        %v2223 = vmul.f32 %v2186, %v2208
        %v2224 = vmul.f32 %v2188, %v2222
        %2225 = vrot.lane.b32.xlu0 %v1885, 48
        %v2226 = vpop.permute.xlu0 %2225
        %2227 = vrot.lane.b32.xlu0 %v1888, 48
        %v2228 = vpop.permute.xlu0 %2227
        %v2232 = vsel %vm1132, %v2223, 0
        %v2235 = vsel %vm1132, %v2224, 0
        %2237 = vmatpush.msra.mxu0 0.0
        %2238 = vmatpush.msra.mxu0 0.0
        %2239 = vmatpush.msra.mxu0 0.0
        %2240 = vmatpush.msra.mxu0 0.0
        %2241 = vmatpush.msra.mxu0 0.0
        %2242 = vmatpush.msra.mxu0 0.0
        %2243 = vmatpush.msra.mxu0 0.0
        %2244 = vmatpush.msra.mxu0 0.0
        %2245 = vmatpush.msra.mxu0 0.0
        %2246 = vmatpush.msra.mxu0 0.0
        %2247 = vmatpush.msra.mxu0 0.0
        %2248 = vmatpush.msra.mxu0 0.0
        %2249 = vmatpush.msra.mxu0 0.0
        %2250 = vmatpush.msra.mxu0 0.0
        %2251 = vmatpush.msra.mxu0 %v2228
        %2252 = vmatpush.msra.mxu0 %v2226
        %2253 = vmatmul.f32.gmra.mxu0 %v2232
        %v2254 = vpop.f32.mrf.mxu0
        %v2255 = vadd.f32 0.0, %v2254
        %2256 = vmatmul.f32.gmra.mxu0 %v2235
        %v2257 = vpop.f32.mrf.mxu0
        %v2258 = vadd.f32 0.0, %v2257
        %2259 = vdwg.mxu0
        %2260 = vrot.lane.b32.xlu0 %v1885, 104
        %v2261 = vpop.permute.xlu0 %2260
        %2262 = vrot.lane.b32.xlu0 %v1888, 104
        %v2263 = vpop.permute.xlu0 %2262
        %2264 = vrot.lane.b32.xlu0 %v1885, 72
        %v2265 = vpop.permute.xlu0 %2264
        %2266 = vrot.lane.b32.xlu0 %v1888, 72
        %v2267 = vpop.permute.xlu0 %2266
        %v2268 = vsel %vm952, %v2261, 0
        %v2270 = vsel %vm952, %v2263, 0
        %v2272 = vsel %vm952, %v2265, 0
        %v2274 = vsel %vm952, %v2267, 0
        %2276 = vmatpush.xpose.msra.mxu0 0.0
        %2277 = vmatpush.xpose.msra.mxu0 0.0
        %2278 = vmatpush.xpose.msra.mxu0 0.0
        %2279 = vmatpush.xpose.msra.mxu0 0.0
        %2280 = vmatpush.xpose.msra.mxu0 0.0
        %2281 = vmatpush.xpose.msra.mxu0 0.0
        %2282 = vmatpush.xpose.msra.mxu0 0.0
        %2283 = vmatpush.xpose.msra.mxu0 0.0
        %2284 = vmatpush.xpose.msra.mxu0 0.0
        %2285 = vmatpush.xpose.msra.mxu0 0.0
        %2286 = vmatpush.xpose.msra.mxu0 0.0
        %2287 = vmatpush.xpose.msra.mxu0 0.0
        %2288 = vmatpush.xpose.msra.mxu0 0.0
        %2289 = vmatpush.xpose.msra.mxu0 0.0
        %2290 = vmatpush.xpose.msra.mxu0 %v2274
        %2291 = vmatpush.xpose.msra.mxu0 %v2272
        %2292 = vmatmul.f32.gmra.mxu0 %v2268
        %v2293 = vpop.f32.mrf.mxu0
        %v2294 = vadd.f32 0.0, %v2293
        %2295 = vmatmul.f32.gmra.mxu0 %v2270
        %v2296 = vpop.f32.mrf.mxu0
        %v2297 = vadd.f32 0.0, %v2296
        %2298 = vdwg.mxu0
        %v2299 = vmul.f32 %v2294, 0.35355338
        %v2300 = vmul.f32 %v2297, 0.35355338
        %v2301 = vsel %vm1132, %v2299, -inf
        %2302 = vmax.xlane.f32.xlu0 %v2301
        %v2303 = vpop.xlane.xlu0 %2302
        %v2304 = vsel %vm1132, %v2300, -inf
        %2305 = vmax.xlane.f32.xlu0 %v2304
        %v2306 = vpop.xlane.xlu0 %2305
        %v2307 = vsub.f32 %v2299, %v2303
        %v2308 = vsub.f32 %v2300, %v2306
        %v2309 = vmul.f32 %v2307, 1.442695
        %v2310 = vpow.pop %v2309
        %v2311 = vmul.f32 %v2308, 1.442695
        %v2312 = vpow.pop %v2311
        %v2313 = vsel %vm1132, %v2310, 0.0
        %2314 = vadd.xlane.f32.xlu0 %v2313
        %v2315 = vpop.xlane.xlu0 %2314
        %v2316 = vsel %vm1132, %v2312, 0.0
        %2317 = vadd.xlane.f32.xlu0 %v2316
        %v2318 = vpop.xlane.xlu0 %2317
        %v2319 = vrcp.pop %v2315
        %v2320 = vmul.f32 %v2315, %v2319
        %v2321 = vsub.f32 1.0, %v2320
        %v2322 = vmul.f32 %v2319, %v2321
        %v2323 = vadd.f32 %v2319, %v2322
        %vm2324 = vweird.f32 %v2315
        %vm2325 = vweird.f32 %v2319
        %vm2326 = vmor %vm2324, %vm2325
        %v2327 = vsel %vm2326, %v2319, %v2323
        %v2328 = vand.u32 2147483647, %v2315
        %vm2329 = vcmp.eq.f32.partialorder %v2328, 8.507059e+37
        %v2330 = vand.u32 %v2315, 2147483648
        %v2331 = vor.u32 1.1754944e-38, %v2330
        %v2332 = vsel %vm2329, %v2331, %v2327
        %v2333 = vrcp.pop %v2318
        %v2334 = vmul.f32 %v2318, %v2333
        %v2335 = vsub.f32 1.0, %v2334
        %v2336 = vmul.f32 %v2333, %v2335
        %v2337 = vadd.f32 %v2333, %v2336
        %vm2338 = vweird.f32 %v2318
        %vm2339 = vweird.f32 %v2333
        %vm2340 = vmor %vm2338, %vm2339
        %v2341 = vsel %vm2340, %v2333, %v2337
        %v2342 = vand.u32 2147483647, %v2318
        %vm2343 = vcmp.eq.f32.partialorder %v2342, 8.507059e+37
        %v2344 = vand.u32 %v2318, 2147483648
        %v2345 = vor.u32 1.1754944e-38, %v2344
        %v2346 = vsel %vm2343, %v2345, %v2341
        %v2347 = vmul.f32 %v2310, %v2332
        %v2348 = vmul.f32 %v2312, %v2346
        %2349 = vrot.lane.b32.xlu0 %v1885, 40
        %v2350 = vpop.permute.xlu0 %2349
        %2351 = vrot.lane.b32.xlu0 %v1888, 40
        %v2352 = vpop.permute.xlu0 %2351
        %v2356 = vsel %vm1132, %v2347, 0
        %v2359 = vsel %vm1132, %v2348, 0
        %2361 = vmatpush.msra.mxu0 0.0
        %2362 = vmatpush.msra.mxu0 0.0
        %2363 = vmatpush.msra.mxu0 0.0
        %2364 = vmatpush.msra.mxu0 0.0
        %2365 = vmatpush.msra.mxu0 0.0
        %2366 = vmatpush.msra.mxu0 0.0
        %2367 = vmatpush.msra.mxu0 0.0
        %2368 = vmatpush.msra.mxu0 0.0
        %2369 = vmatpush.msra.mxu0 0.0
        %2370 = vmatpush.msra.mxu0 0.0
        %2371 = vmatpush.msra.mxu0 0.0
        %2372 = vmatpush.msra.mxu0 0.0
        %2373 = vmatpush.msra.mxu0 0.0
        %2374 = vmatpush.msra.mxu0 0.0
        %2375 = vmatpush.msra.mxu0 %v2352
        %2376 = vmatpush.msra.mxu0 %v2350
        %2377 = vmatmul.f32.gmra.mxu0 %v2356
        %v2378 = vpop.f32.mrf.mxu0
        %v2379 = vadd.f32 0.0, %v2378
        %2380 = vmatmul.f32.gmra.mxu0 %v2359
        %v2381 = vpop.f32.mrf.mxu0
        %v2382 = vadd.f32 0.0, %v2381
        %2383 = vdwg.mxu0
        %2386 = vrot.lane.b32.xlu0 %v2131, 8
        %v2387 = vpop.permute.xlu0 %2386
        %2388 = vrot.lane.b32.xlu0 %v2134, 8
        %v2389 = vpop.permute.xlu0 %2388
        %2394 = vrot.lane.b32.xlu0 %v2255, 16
        %v2395 = vpop.permute.xlu0 %2394
        %2396 = vrot.lane.b32.xlu0 %v2258, 16
        %v2397 = vpop.permute.xlu0 %2396
        %2402 = vrot.lane.b32.xlu0 %v2379, 24
        %v2403 = vpop.permute.xlu0 %2402
        %2404 = vrot.lane.b32.xlu0 %v2382, 24
        %v2405 = vpop.permute.xlu0 %2404
        %v2408 = vsel %vm952, %v2007, %v2387
        %v2409 = vsel %vm952, %v2010, %v2389
        %v2410 = vsel %vm1132, %v2408, %v2395
        %v2411 = vsel %vm1132, %v2409, %v2397
        %v2412 = vsel %vm1616, %v2410, %v2403
        %v2413 = vsel %vm1616, %v2411, %v2405
        %v2414 = vperm.slane %v1809, 1
        %v2416 = vsel %vm982, %v2412, 0
        %v2419 = vsel %vm982, %v2413, 0
        %2421 = vmatpush.msra.mxu0 0.0
        %2422 = vmatpush.msra.mxu0 0.0
        %2423 = vmatpush.msra.mxu0 0.0
        %2424 = vmatpush.msra.mxu0 0.0
        %2425 = vmatpush.msra.mxu0 0.0
        %2426 = vmatpush.msra.mxu0 0.0
        %2427 = vmatpush.msra.mxu0 0.0
        %2428 = vmatpush.msra.mxu0 0.0
        %2429 = vmatpush.msra.mxu0 0.0
        %2430 = vmatpush.msra.mxu0 0.0
        %2431 = vmatpush.msra.mxu0 0.0
        %2432 = vmatpush.msra.mxu0 0.0
        %2433 = vmatpush.msra.mxu0 %v1793
        %2434 = vmatpush.msra.mxu0 %v1792
        %2435 = vmatpush.msra.mxu0 %v1791
        %2436 = vmatpush.msra.mxu0 %v1790
        %2437 = vmatmul.f32.gmra.mxu0 %v2416
        %v2438 = vpop.f32.mrf.mxu0
        %v2439 = vadd.f32 %v2414, %v2438
        %2440 = vmatmul.f32.gmra.mxu0 %v2419
        %v2441 = vpop.f32.mrf.mxu0
        %v2442 = vadd.f32 %v2414, %v2441
        %2443 = vdwg.mxu0
        %v2444 = vadd.f32 %v1782, %v2439
        %v2445 = vadd.f32 %v1783, %v2442
        %v2446 = vsel %vm982, %v2444, 0.0
        %2447 = vadd.xlane.f32.xlu0 %v2446
        %v2448 = vpop.xlane.xlu0 %2447
        %v2449 = vsel %vm982, %v2445, 0.0
        %2450 = vadd.xlane.f32.xlu0 %v2449
        %v2451 = vpop.xlane.xlu0 %2450
        %v2452 = vmul.f32 %v2448, %v1018
        %v2453 = vmul.f32 %v2451, %v1018
        %v2454 = vsub.f32 %v2444, %v2452
        %v2455 = vsub.f32 %v2445, %v2453
        %v2456 = vmul.f32 %v2454, %v2454
        %v2457 = vmul.f32 %v2455, %v2455
        %v2458 = vsel %vm982, %v2456, 0.0
        %2459 = vadd.xlane.f32.xlu0 %v2458
        %v2460 = vpop.xlane.xlu0 %2459
        %v2461 = vsel %vm982, %v2457, 0.0
        %2462 = vadd.xlane.f32.xlu0 %v2461
        %v2463 = vpop.xlane.xlu0 %2462
        %v2464 = vmul.f32 %v2460, %v1018
        %v2465 = vmul.f32 %v2463, %v1018
        %v2466 = vadd.f32 %v2464, 1e-05
        %v2467 = vadd.f32 %v2465, 1e-05
        %v2468 = vrsqrt.pop %v2466
        %v2469 = vmul.f32 %v2468, %v2466
        %v2470 = vmul.f32 %v2469, %v2468
        %v2471 = vmul.f32 0.5, %v2470
        %v2472 = vsub.f32 1.5, %v2471
        %v2473 = vmul.f32 %v2468, %v2472
        %vm2474 = vweird.f32 %v2466
        %vm2475 = vweird.f32 %v2468
        %vm2476 = vmor %vm2474, %vm2475
        %v2477 = vsel %vm2476, %v2468, %v2473
        %v2478 = vrsqrt.pop %v2467
        %v2479 = vmul.f32 %v2478, %v2467
        %v2480 = vmul.f32 %v2479, %v2478
        %v2481 = vmul.f32 0.5, %v2480
        %v2482 = vsub.f32 1.5, %v2481
        %v2483 = vmul.f32 %v2478, %v2482
        %vm2484 = vweird.f32 %v2467
        %vm2485 = vweird.f32 %v2478
        %vm2486 = vmor %vm2484, %vm2485
        %v2487 = vsel %vm2486, %v2478, %v2483
        %v2488 = vmul.f32 %v2454, %v2477
        %v2489 = vmul.f32 %v2455, %v2487
        %v2490 = vperm.slane %v1809, 6
        %v2491 = vmul.f32 %v2488, %v2490
        %v2492 = vmul.f32 %v2489, %v2490
        %v2493 = vperm.slane %v1809, 7
        %v2494 = vadd.f32 %v2491, %v2493
        %v2495 = vadd.f32 %v2492, %v2493
        %v2496 = vperm.slane %v1809, 2
        %v2498 = vsel %vm982, %v2494, 0
        %v2501 = vsel %vm982, %v2495, 0
        %2503 = vmatpush.msra.mxu0 0.0
        %2504 = vmatpush.msra.mxu0 0.0
        %2505 = vmatpush.msra.mxu0 0.0
        %2506 = vmatpush.msra.mxu0 0.0
        %2507 = vmatpush.msra.mxu0 0.0
        %2508 = vmatpush.msra.mxu0 0.0
        %2509 = vmatpush.msra.mxu0 0.0
        %2510 = vmatpush.msra.mxu0 0.0
        %2511 = vmatpush.msra.mxu0 0.0
        %2512 = vmatpush.msra.mxu0 0.0
        %2513 = vmatpush.msra.mxu0 0.0
        %2514 = vmatpush.msra.mxu0 0.0
        %2515 = vmatpush.msra.mxu0 %v1798
        %2516 = vmatpush.msra.mxu0 %v1797
        %2517 = vmatpush.msra.mxu0 %v1796
        %2518 = vmatpush.msra.mxu0 %v1795
        %2519 = vmatmul.f32.gmra.mxu0 %v2498
        %v2520 = vpop.f32.mrf.mxu0
        %v2521 = vadd.f32 %v2496, %v2520
        %2522 = vmatmul.f32.gmra.mxu0 %v2501
        %v2523 = vpop.f32.mrf.mxu0
        %v2524 = vadd.f32 %v2496, %v2523
        %2525 = vdwg.mxu0
        %v2526 = vmul.f32 %v2521, %v2521
        %v2527 = vmul.f32 %v2524, %v2524
        %v2528 = vmul.f32 %v2521, %v2526
        %v2529 = vmul.f32 %v2524, %v2527
        %v2530 = vmul.f32 %v2528, 0.044715
        %v2531 = vmul.f32 %v2529, 0.044715
        %v2532 = vadd.f32 %v2521, %v2530
        %v2533 = vadd.f32 %v2524, %v2531
        %v2534 = vmul.f32 %v2532, 0.7978846
        %v2535 = vmul.f32 %v2533, 0.7978846
        %v2536 = vtanh.pop %v2534
        %v2537 = vtanh.pop %v2535
        %v2538 = vadd.f32 %v2536, 1.0
        %v2539 = vadd.f32 %v2537, 1.0
        %v2540 = vmul.f32 %v2538, 0.5
        %v2541 = vmul.f32 %v2539, 0.5
        %v2542 = vmul.f32 %v2521, %v2540
        %v2543 = vmul.f32 %v2524, %v2541
        %v2545 = vsel %vm1749, %v2542, 0
        %v2548 = vsel %vm1749, %v2543, 0
        %2550 = vmatpush.msra.mxu0 0.0
        %2551 = vmatpush.msra.mxu0 0.0
        %2552 = vmatpush.msra.mxu0 0.0
        %2553 = vmatpush.msra.mxu0 0.0
        %2554 = vmatpush.msra.mxu0 0.0
        %2555 = vmatpush.msra.mxu0 0.0
        %2556 = vmatpush.msra.mxu0 0.0
        %2557 = vmatpush.msra.mxu0 0.0
        %2558 = vmatpush.msra.mxu0 %v1807
        %2559 = vmatpush.msra.mxu0 %v1806
        %2560 = vmatpush.msra.mxu0 %v1805
        %2561 = vmatpush.msra.mxu0 %v1804
        %2562 = vmatpush.msra.mxu0 %v1803
        %2563 = vmatpush.msra.mxu0 %v1802
        %2564 = vmatpush.msra.mxu0 %v1801
        %2565 = vmatpush.msra.mxu0 %v1800
        %2566 = vmatmul.f32.gmra.mxu0 %v2545
        %v2567 = vpop.f32.mrf.mxu0
        %v2568 = vadd.f32 0.0, %v2567
        %2569 = vmatmul.f32.gmra.mxu0 %v2548
        %v2570 = vpop.f32.mrf.mxu0
        %v2571 = vadd.f32 0.0, %v2570
        %2572 = vdwg.mxu0
        %v2573 = vadd.f32 %v2444, %v2568
        %v2574 = vadd.f32 %v2445, %v2571
        %v2575 = vperm.slane %v1809, 3
        %v2576 = vadd.f32 %v2573, %v2575
        %v2577 = vadd.f32 %v2574, %v2575
        %v2578 = vsel %vm982, %v2576, 0.0
        %2579 = vadd.xlane.f32.xlu0 %v2578
        %v2580 = vpop.xlane.xlu0 %2579
        %v2581 = vsel %vm982, %v2577, 0.0
        %2582 = vadd.xlane.f32.xlu0 %v2581
        %v2583 = vpop.xlane.xlu0 %2582
        %v2584 = vmul.f32 %v2580, %v1018
        %v2585 = vmul.f32 %v2583, %v1018
        %v2586 = vsub.f32 %v2576, %v2584
        %v2587 = vsub.f32 %v2577, %v2585
        %v2588 = vmul.f32 %v2586, %v2586
        %v2589 = vmul.f32 %v2587, %v2587
        %v2590 = vsel %vm982, %v2588, 0.0
        %2591 = vadd.xlane.f32.xlu0 %v2590
        %v2592 = vpop.xlane.xlu0 %2591
        %v2593 = vsel %vm982, %v2589, 0.0
        %2594 = vadd.xlane.f32.xlu0 %v2593
        %v2595 = vpop.xlane.xlu0 %2594
        %v2596 = vmul.f32 %v2592, %v1018
        %v2597 = vmul.f32 %v2595, %v1018
        %v2598 = vadd.f32 %v2596, 1e-05
        %v2599 = vadd.f32 %v2597, 1e-05
        %v2600 = vrsqrt.pop %v2598
        %v2601 = vmul.f32 %v2600, %v2598
        %v2602 = vmul.f32 %v2601, %v2600
        %v2603 = vmul.f32 0.5, %v2602
        %v2604 = vsub.f32 1.5, %v2603
        %v2605 = vmul.f32 %v2600, %v2604
        %vm2606 = vweird.f32 %v2598
        %vm2607 = vweird.f32 %v2600
        %vm2608 = vmor %vm2606, %vm2607
        %v2609 = vsel %vm2608, %v2600, %v2605
        %v2610 = vrsqrt.pop %v2599
        %v2611 = vmul.f32 %v2610, %v2599
        %v2612 = vmul.f32 %v2611, %v2610
        %v2613 = vmul.f32 0.5, %v2612
        %v2614 = vsub.f32 1.5, %v2613
        %v2615 = vmul.f32 %v2610, %v2614
        %vm2616 = vweird.f32 %v2599
        %vm2617 = vweird.f32 %v2610
        %vm2618 = vmor %vm2616, %vm2617
        %v2619 = vsel %vm2618, %v2610, %v2615
        %v2620 = vmul.f32 %v2586, %v2609
        %v2621 = vmul.f32 %v2587, %v2619
        %v2622 = vperm.slane %v945, 0
        %v2623 = vmul.f32 %v2620, %v2622
        %v2624 = vmul.f32 %v2621, %v2622
        %v2625 = vperm.slane %v945, 1
        %v2626 = vadd.f32 %v2623, %v2625
        %v2627 = vadd.f32 %v2624, %v2625
        %2628 = vst.msk [vmem:[%s903] sm:$0xff] %vm982, %v2626
        %2629 = vst.msk [vmem:[%s903 + $0x8] sm:$0xff] %vm982, %v2627
        %v2630 = vld [vmem:[%s931] sm:$0xff]
        %v2631 = vld [vmem:[%s13] sm:$0xff]
        %v2632 = vld [vmem:[%s13 + $0x8] sm:$0xff]
        %v2633 = vld [vmem:[%s13 + $0x10] sm:$0xff]
        %v2634 = vld [vmem:[%s13 + $0x18] sm:$0xff]
        %v2635 = vld [vmem:[%s14] sm:$0xff]
        %v2636 = vld [vmem:[%s14 + $0x8] sm:$0xff]
        %v2637 = vld [vmem:[%s14 + $0x10] sm:$0xff]
        %v2638 = vld [vmem:[%s14 + $0x18] sm:$0xff]
        %v2639 = vld [vmem:[%s15] sm:$0xff]
        %v2640 = vld [vmem:[%s15 + $0x8] sm:$0xff]
        %v2641 = vld [vmem:[%s15 + $0x10] sm:$0xff]
        %v2642 = vld [vmem:[%s15 + $0x18] sm:$0xff]
        %v2643 = vld [vmem:[%s16] sm:$0xff]
        %v2644 = vld [vmem:[%s16 + $0x8] sm:$0xff]
        %v2645 = vld [vmem:[%s16 + $0x10] sm:$0xff]
        %v2646 = vld [vmem:[%s16 + $0x18] sm:$0xff]
        %v2647 = vld [vmem:[%s16 + $0x20] sm:$0xff]
        %v2648 = vld [vmem:[%s16 + $0x28] sm:$0xff]
        %v2649 = vld [vmem:[%s16 + $0x30] sm:$0xff]
        %v2650 = vld [vmem:[%s16 + $0x38] sm:$0xff]
        %v2651 = vld [vmem:[%s17] sm:$0xff]
        %v2652 = vsel %vm982, %v2626, 0.0
        %2653 = vadd.xlane.f32.xlu0 %v2652
        %v2654 = vpop.xlane.xlu0 %2653
        %v2655 = vsel %vm982, %v2627, 0.0
        %2656 = vadd.xlane.f32.xlu0 %v2655
        %v2657 = vpop.xlane.xlu0 %2656
        %v2658 = vsel %vm982, %v2630, 0.0
        %2659 = vadd.xlane.f32.xlu0 %v2658
        %v2660 = vpop.xlane.xlu0 %2659
        %v2661 = vmul.f32 %v2654, %v1018
        %v2662 = vmul.f32 %v2657, %v1018
        %v2663 = vmul.f32 %v2660, %v1018
        %v2664 = vsub.f32 %v2626, %v2661
        %v2665 = vsub.f32 %v2627, %v2662
        %v2666 = vsub.f32 %v2630, %v2663
        %v2667 = vmul.f32 %v2664, %v2664
        %v2668 = vmul.f32 %v2665, %v2665
        %v2669 = vmul.f32 %v2666, %v2666
        %v2670 = vsel %vm982, %v2667, 0.0
        %2671 = vadd.xlane.f32.xlu0 %v2670
        %v2672 = vpop.xlane.xlu0 %2671
        %v2673 = vsel %vm982, %v2668, 0.0
        %2674 = vadd.xlane.f32.xlu0 %v2673
        %v2675 = vpop.xlane.xlu0 %2674
        %v2676 = vsel %vm982, %v2669, 0.0
        %2677 = vadd.xlane.f32.xlu0 %v2676
        %v2678 = vpop.xlane.xlu0 %2677
        %v2679 = vmul.f32 %v2672, %v1018
        %v2680 = vmul.f32 %v2675, %v1018
        %v2681 = vmul.f32 %v2678, %v1018
        %v2682 = vadd.f32 %v2679, 1e-05
        %v2683 = vadd.f32 %v2680, 1e-05
        %v2684 = vadd.f32 %v2681, 1e-05
        %v2685 = vrsqrt.pop %v2682
        %v2686 = vmul.f32 %v2685, %v2682
        %v2687 = vmul.f32 %v2686, %v2685
        %v2688 = vmul.f32 0.5, %v2687
        %v2689 = vsub.f32 1.5, %v2688
        %v2690 = vmul.f32 %v2685, %v2689
        %vm2691 = vweird.f32 %v2682
        %vm2692 = vweird.f32 %v2685
        %vm2693 = vmor %vm2691, %vm2692
        %v2694 = vsel %vm2693, %v2685, %v2690
        %v2695 = vrsqrt.pop %v2683
        %v2696 = vmul.f32 %v2695, %v2683
        %v2697 = vmul.f32 %v2696, %v2695
        %v2698 = vmul.f32 0.5, %v2697
        %v2699 = vsub.f32 1.5, %v2698
        %v2700 = vmul.f32 %v2695, %v2699
        %vm2701 = vweird.f32 %v2683
        %vm2702 = vweird.f32 %v2695
        %vm2703 = vmor %vm2701, %vm2702
        %v2704 = vsel %vm2703, %v2695, %v2700
        %v2705 = vrsqrt.pop %v2684
        %v2706 = vmul.f32 %v2705, %v2684
        %v2707 = vmul.f32 %v2706, %v2705
        %v2708 = vmul.f32 0.5, %v2707
        %v2709 = vsub.f32 1.5, %v2708
        %v2710 = vmul.f32 %v2705, %v2709
        %vm2711 = vweird.f32 %v2684
        %vm2712 = vweird.f32 %v2705
        %vm2713 = vmor %vm2711, %vm2712
        %v2714 = vsel %vm2713, %v2705, %v2710
        %v2715 = vmul.f32 %v2664, %v2694
        %v2716 = vmul.f32 %v2665, %v2704
        %v2717 = vmul.f32 %v2666, %v2714
        %v2718 = vperm.slane %v2651, 4
        %v2719 = vmul.f32 %v2715, %v2718
        %v2720 = vmul.f32 %v2716, %v2718
        %v2721 = vmul.f32 %v2717, %v2718
        %v2722 = vperm.slane %v2651, 5
        %v2723 = vadd.f32 %v2719, %v2722
        %v2724 = vadd.f32 %v2720, %v2722
        %v2725 = vadd.f32 %v2721, %v2722
        %v2726 = vperm.slane %v2651, 0
        %v2728 = vsel %vm982, %v2723, 0
        %v2731 = vsel %vm982, %v2724, 0
        %v2734 = vsel %vm982, %v2725, 0
        %2736 = vmatpush.msra.mxu0 0.0
        %2737 = vmatpush.msra.mxu0 0.0
        %2738 = vmatpush.msra.mxu0 0.0
        %2739 = vmatpush.msra.mxu0 0.0
        %2740 = vmatpush.msra.mxu0 0.0
        %2741 = vmatpush.msra.mxu0 0.0
        %2742 = vmatpush.msra.mxu0 0.0
        %2743 = vmatpush.msra.mxu0 0.0
        %2744 = vmatpush.msra.mxu0 0.0
        %2745 = vmatpush.msra.mxu0 0.0
        %2746 = vmatpush.msra.mxu0 0.0
        %2747 = vmatpush.msra.mxu0 0.0
        %2748 = vmatpush.msra.mxu0 %v2634
        %2749 = vmatpush.msra.mxu0 %v2633
        %2750 = vmatpush.msra.mxu0 %v2632
        %2751 = vmatpush.msra.mxu0 %v2631
        %2752 = vmatmul.f32.gmra.mxu0 %v2728
        %v2753 = vpop.f32.mrf.mxu0
        %v2754 = vadd.f32 %v2726, %v2753
        %2755 = vmatmul.f32.gmra.mxu0 %v2731
        %v2756 = vpop.f32.mrf.mxu0
        %v2757 = vadd.f32 %v2726, %v2756
        %2758 = vmatmul.f32.gmra.mxu0 %v2734
        %v2759 = vpop.f32.mrf.mxu0
        %v2760 = vadd.f32 %v2726, %v2759
        %2761 = vdwg.mxu0
        %2765 = vrot.lane.b32.xlu0 %v2754, 96
        %v2766 = vpop.permute.xlu0 %2765
        %2767 = vrot.lane.b32.xlu0 %v2757, 96
        %v2768 = vpop.permute.xlu0 %2767
        %2769 = vrot.lane.b32.xlu0 %v2760, 96
        %v2770 = vpop.permute.xlu0 %2769
        %v2771 = vsel %vm952, %v2754, 0
        %v2773 = vsel %vm952, %v2757, 0
        %v2775 = vsel %vm952, %v2760, 0
        %v2777 = vsel %vm952, %v2766, 0
        %v2779 = vsel %vm952, %v2768, 0
        %v2781 = vsel %vm952, %v2770, 0
        %2783 = vmatpush.xpose.msra.mxu0 0.0
        %2784 = vmatpush.xpose.msra.mxu0 0.0
        %2785 = vmatpush.xpose.msra.mxu0 0.0
        %2786 = vmatpush.xpose.msra.mxu0 0.0
        %2787 = vmatpush.xpose.msra.mxu0 0.0
        %2788 = vmatpush.xpose.msra.mxu0 0.0
        %2789 = vmatpush.xpose.msra.mxu0 0.0
        %2790 = vmatpush.xpose.msra.mxu0 0.0
        %2791 = vmatpush.xpose.msra.mxu0 0.0
        %2792 = vmatpush.xpose.msra.mxu0 0.0
        %2793 = vmatpush.xpose.msra.mxu0 0.0
        %2794 = vmatpush.xpose.msra.mxu0 0.0
        %2795 = vmatpush.xpose.msra.mxu0 0.0
        %2796 = vmatpush.xpose.msra.mxu0 %v2781
        %2797 = vmatpush.xpose.msra.mxu0 %v2779
        %2798 = vmatpush.xpose.msra.mxu0 %v2777
        %2799 = vmatmul.f32.gmra.mxu0 %v2771
        %v2800 = vpop.f32.mrf.mxu0
        %v2801 = vadd.f32 0.0, %v2800
        %2802 = vmatmul.f32.gmra.mxu0 %v2773
        %v2803 = vpop.f32.mrf.mxu0
        %v2804 = vadd.f32 0.0, %v2803
        %2805 = vmatmul.f32.gmra.mxu0 %v2775
        %v2806 = vpop.f32.mrf.mxu0
        %v2807 = vadd.f32 0.0, %v2806
        %2808 = vdwg.mxu0
        %v2809 = vmul.f32 %v2801, 0.35355338
        %v2810 = vmul.f32 %v2804, 0.35355338
        %v2811 = vmul.f32 %v2807, 0.35355338
        %v2813 = vperm.slane %v946, 0
        %v2815 = vadd.f32 %v2809, %v2813
        %v2816 = vadd.f32 %v2810, %v2813
        %v2817 = vadd.f32 %v2811, %v2813
        %v2818 = vsel %vm1616, %v2815, -inf
        %2819 = vmax.xlane.f32.xlu0 %v2818
        %v2820 = vpop.xlane.xlu0 %2819
        %v2821 = vsel %vm1616, %v2816, -inf
        %2822 = vmax.xlane.f32.xlu0 %v2821
        %v2823 = vpop.xlane.xlu0 %2822
        %v2824 = vsel %vm1616, %v2817, -inf
        %2825 = vmax.xlane.f32.xlu0 %v2824
        %v2826 = vpop.xlane.xlu0 %2825
        %v2827 = vsub.f32 %v2815, %v2820
        %v2828 = vsub.f32 %v2816, %v2823
        %v2829 = vsub.f32 %v2817, %v2826
        %v2830 = vmul.f32 %v2827, 1.442695
        %v2831 = vpow.pop %v2830
        %v2832 = vmul.f32 %v2828, 1.442695
        %v2833 = vpow.pop %v2832
        %v2834 = vmul.f32 %v2829, 1.442695
        %v2835 = vpow.pop %v2834
        %v2836 = vsel %vm1616, %v2831, 0.0
        %2837 = vadd.xlane.f32.xlu0 %v2836
        %v2838 = vpop.xlane.xlu0 %2837
        %v2839 = vsel %vm1616, %v2833, 0.0
        %2840 = vadd.xlane.f32.xlu0 %v2839
        %v2841 = vpop.xlane.xlu0 %2840
        %v2842 = vsel %vm1616, %v2835, 0.0
        %2843 = vadd.xlane.f32.xlu0 %v2842
        %v2844 = vpop.xlane.xlu0 %2843
        %v2845 = vrcp.pop %v2838
        %v2846 = vmul.f32 %v2838, %v2845
        %v2847 = vsub.f32 1.0, %v2846
        %v2848 = vmul.f32 %v2845, %v2847
        %v2849 = vadd.f32 %v2845, %v2848
        %vm2850 = vweird.f32 %v2838
        %vm2851 = vweird.f32 %v2845
        %vm2852 = vmor %vm2850, %vm2851
        %v2853 = vsel %vm2852, %v2845, %v2849
        %v2854 = vand.u32 2147483647, %v2838
        %vm2855 = vcmp.eq.f32.partialorder %v2854, 8.507059e+37
        %v2856 = vand.u32 %v2838, 2147483648
        %v2857 = vor.u32 1.1754944e-38, %v2856
        %v2858 = vsel %vm2855, %v2857, %v2853
        %v2859 = vrcp.pop %v2841
        %v2860 = vmul.f32 %v2841, %v2859
        %v2861 = vsub.f32 1.0, %v2860
        %v2862 = vmul.f32 %v2859, %v2861
        %v2863 = vadd.f32 %v2859, %v2862
        %vm2864 = vweird.f32 %v2841
        %vm2865 = vweird.f32 %v2859
        %vm2866 = vmor %vm2864, %vm2865
        %v2867 = vsel %vm2866, %v2859, %v2863
        %v2868 = vand.u32 2147483647, %v2841
        %vm2869 = vcmp.eq.f32.partialorder %v2868, 8.507059e+37
        %v2870 = vand.u32 %v2841, 2147483648
        %v2871 = vor.u32 1.1754944e-38, %v2870
        %v2872 = vsel %vm2869, %v2871, %v2867
        %v2873 = vrcp.pop %v2844
        %v2874 = vmul.f32 %v2844, %v2873
        %v2875 = vsub.f32 1.0, %v2874
        %v2876 = vmul.f32 %v2873, %v2875
        %v2877 = vadd.f32 %v2873, %v2876
        %vm2878 = vweird.f32 %v2844
        %vm2879 = vweird.f32 %v2873
        %vm2880 = vmor %vm2878, %vm2879
        %v2881 = vsel %vm2880, %v2873, %v2877
        %v2882 = vand.u32 2147483647, %v2844
        %vm2883 = vcmp.eq.f32.partialorder %v2882, 8.507059e+37
        %v2884 = vand.u32 %v2844, 2147483648
        %v2885 = vor.u32 1.1754944e-38, %v2884
        %v2886 = vsel %vm2883, %v2885, %v2881
        %v2887 = vmul.f32 %v2831, %v2858
        %v2888 = vmul.f32 %v2833, %v2872
        %v2889 = vmul.f32 %v2835, %v2886
        %2890 = vrot.lane.b32.xlu0 %v2754, 64
        %v2891 = vpop.permute.xlu0 %2890
        %2892 = vrot.lane.b32.xlu0 %v2757, 64
        %v2893 = vpop.permute.xlu0 %2892
        %2894 = vrot.lane.b32.xlu0 %v2760, 64
        %v2895 = vpop.permute.xlu0 %2894
        %v2900 = vsel %vm1616, %v2887, 0
        %v2903 = vsel %vm1616, %v2888, 0
        %v2906 = vsel %vm1616, %v2889, 0
        %2908 = vmatpush.msra.mxu0 0.0
        %2909 = vmatpush.msra.mxu0 0.0
        %2910 = vmatpush.msra.mxu0 0.0
        %2911 = vmatpush.msra.mxu0 0.0
        %2912 = vmatpush.msra.mxu0 0.0
        %2913 = vmatpush.msra.mxu0 0.0
        %2914 = vmatpush.msra.mxu0 0.0
        %2915 = vmatpush.msra.mxu0 0.0
        %2916 = vmatpush.msra.mxu0 0.0
        %2917 = vmatpush.msra.mxu0 0.0
        %2918 = vmatpush.msra.mxu0 0.0
        %2919 = vmatpush.msra.mxu0 0.0
        %2920 = vmatpush.msra.mxu0 0.0
        %2921 = vmatpush.msra.mxu0 %v2895
        %2922 = vmatpush.msra.mxu0 %v2893
        %2923 = vmatpush.msra.mxu0 %v2891
        %2924 = vmatmul.f32.gmra.mxu0 %v2900
        %v2925 = vpop.f32.mrf.mxu0
        %v2926 = vadd.f32 0.0, %v2925
        %2927 = vmatmul.f32.gmra.mxu0 %v2903
        %v2928 = vpop.f32.mrf.mxu0
        %v2929 = vadd.f32 0.0, %v2928
        %2930 = vmatmul.f32.gmra.mxu0 %v2906
        %v2931 = vpop.f32.mrf.mxu0
        %v2932 = vadd.f32 0.0, %v2931
        %2933 = vdwg.mxu0
        %2934 = vrot.lane.b32.xlu0 %v2754, 120
        %v2935 = vpop.permute.xlu0 %2934
        %2936 = vrot.lane.b32.xlu0 %v2757, 120
        %v2937 = vpop.permute.xlu0 %2936
        %2938 = vrot.lane.b32.xlu0 %v2760, 120
        %v2939 = vpop.permute.xlu0 %2938
        %2940 = vrot.lane.b32.xlu0 %v2754, 88
        %v2941 = vpop.permute.xlu0 %2940
        %2942 = vrot.lane.b32.xlu0 %v2757, 88
        %v2943 = vpop.permute.xlu0 %2942
        %2944 = vrot.lane.b32.xlu0 %v2760, 88
        %v2945 = vpop.permute.xlu0 %2944
        %v2946 = vsel %vm952, %v2935, 0
        %v2948 = vsel %vm952, %v2937, 0
        %v2950 = vsel %vm952, %v2939, 0
        %v2952 = vsel %vm952, %v2941, 0
        %v2954 = vsel %vm952, %v2943, 0
        %v2956 = vsel %vm952, %v2945, 0
        %2958 = vmatpush.xpose.msra.mxu0 0.0
        %2959 = vmatpush.xpose.msra.mxu0 0.0
        %2960 = vmatpush.xpose.msra.mxu0 0.0
        %2961 = vmatpush.xpose.msra.mxu0 0.0
        %2962 = vmatpush.xpose.msra.mxu0 0.0
        %2963 = vmatpush.xpose.msra.mxu0 0.0
        %2964 = vmatpush.xpose.msra.mxu0 0.0
        %2965 = vmatpush.xpose.msra.mxu0 0.0
        %2966 = vmatpush.xpose.msra.mxu0 0.0
        %2967 = vmatpush.xpose.msra.mxu0 0.0
        %2968 = vmatpush.xpose.msra.mxu0 0.0
        %2969 = vmatpush.xpose.msra.mxu0 0.0
        %2970 = vmatpush.xpose.msra.mxu0 0.0
        %2971 = vmatpush.xpose.msra.mxu0 %v2956
        %2972 = vmatpush.xpose.msra.mxu0 %v2954
        %2973 = vmatpush.xpose.msra.mxu0 %v2952
        %2974 = vmatmul.f32.gmra.mxu0 %v2946
        %v2975 = vpop.f32.mrf.mxu0
        %v2976 = vadd.f32 0.0, %v2975
        %2977 = vmatmul.f32.gmra.mxu0 %v2948
        %v2978 = vpop.f32.mrf.mxu0
        %v2979 = vadd.f32 0.0, %v2978
        %2980 = vmatmul.f32.gmra.mxu0 %v2950
        %v2981 = vpop.f32.mrf.mxu0
        %v2982 = vadd.f32 0.0, %v2981
        %2983 = vdwg.mxu0
        %v2984 = vmul.f32 %v2976, 0.35355338
        %v2985 = vmul.f32 %v2979, 0.35355338
        %v2986 = vmul.f32 %v2982, 0.35355338
        %v2987 = vadd.f32 %v2984, %v2813
        %v2988 = vadd.f32 %v2985, %v2813
        %v2989 = vadd.f32 %v2986, %v2813
        %v2990 = vsel %vm1616, %v2987, -inf
        %2991 = vmax.xlane.f32.xlu0 %v2990
        %v2992 = vpop.xlane.xlu0 %2991
        %v2993 = vsel %vm1616, %v2988, -inf
        %2994 = vmax.xlane.f32.xlu0 %v2993
        %v2995 = vpop.xlane.xlu0 %2994
        %v2996 = vsel %vm1616, %v2989, -inf
        %2997 = vmax.xlane.f32.xlu0 %v2996
        %v2998 = vpop.xlane.xlu0 %2997
        %v2999 = vsub.f32 %v2987, %v2992
        %v3000 = vsub.f32 %v2988, %v2995
        %v3001 = vsub.f32 %v2989, %v2998
        %v3002 = vmul.f32 %v2999, 1.442695
        %v3003 = vpow.pop %v3002
        %v3004 = vmul.f32 %v3000, 1.442695
        %v3005 = vpow.pop %v3004
        %v3006 = vmul.f32 %v3001, 1.442695
        %v3007 = vpow.pop %v3006
        %v3008 = vsel %vm1616, %v3003, 0.0
        %3009 = vadd.xlane.f32.xlu0 %v3008
        %v3010 = vpop.xlane.xlu0 %3009
        %v3011 = vsel %vm1616, %v3005, 0.0
        %3012 = vadd.xlane.f32.xlu0 %v3011
        %v3013 = vpop.xlane.xlu0 %3012
        %v3014 = vsel %vm1616, %v3007, 0.0
        %3015 = vadd.xlane.f32.xlu0 %v3014
        %v3016 = vpop.xlane.xlu0 %3015
        %v3017 = vrcp.pop %v3010
        %v3018 = vmul.f32 %v3010, %v3017
        %v3019 = vsub.f32 1.0, %v3018
        %v3020 = vmul.f32 %v3017, %v3019
        %v3021 = vadd.f32 %v3017, %v3020
        %vm3022 = vweird.f32 %v3010
        %vm3023 = vweird.f32 %v3017
        %vm3024 = vmor %vm3022, %vm3023
        %v3025 = vsel %vm3024, %v3017, %v3021
        %v3026 = vand.u32 2147483647, %v3010
        %vm3027 = vcmp.eq.f32.partialorder %v3026, 8.507059e+37
        %v3028 = vand.u32 %v3010, 2147483648
        %v3029 = vor.u32 1.1754944e-38, %v3028
        %v3030 = vsel %vm3027, %v3029, %v3025
        %v3031 = vrcp.pop %v3013
        %v3032 = vmul.f32 %v3013, %v3031
        %v3033 = vsub.f32 1.0, %v3032
        %v3034 = vmul.f32 %v3031, %v3033
        %v3035 = vadd.f32 %v3031, %v3034
        %vm3036 = vweird.f32 %v3013
        %vm3037 = vweird.f32 %v3031
        %vm3038 = vmor %vm3036, %vm3037
        %v3039 = vsel %vm3038, %v3031, %v3035
        %v3040 = vand.u32 2147483647, %v3013
        %vm3041 = vcmp.eq.f32.partialorder %v3040, 8.507059e+37
        %v3042 = vand.u32 %v3013, 2147483648
        %v3043 = vor.u32 1.1754944e-38, %v3042
        %v3044 = vsel %vm3041, %v3043, %v3039
        %v3045 = vrcp.pop %v3016
        %v3046 = vmul.f32 %v3016, %v3045
        %v3047 = vsub.f32 1.0, %v3046
        %v3048 = vmul.f32 %v3045, %v3047
        %v3049 = vadd.f32 %v3045, %v3048
        %vm3050 = vweird.f32 %v3016
        %vm3051 = vweird.f32 %v3045
        %vm3052 = vmor %vm3050, %vm3051
        %v3053 = vsel %vm3052, %v3045, %v3049
        %v3054 = vand.u32 2147483647, %v3016
        %vm3055 = vcmp.eq.f32.partialorder %v3054, 8.507059e+37
        %v3056 = vand.u32 %v3016, 2147483648
        %v3057 = vor.u32 1.1754944e-38, %v3056
        %v3058 = vsel %vm3055, %v3057, %v3053
        %v3059 = vmul.f32 %v3003, %v3030
        %v3060 = vmul.f32 %v3005, %v3044
        %v3061 = vmul.f32 %v3007, %v3058
        %3062 = vrot.lane.b32.xlu0 %v2754, 56
        %v3063 = vpop.permute.xlu0 %3062
        %3064 = vrot.lane.b32.xlu0 %v2757, 56
        %v3065 = vpop.permute.xlu0 %3064
        %3066 = vrot.lane.b32.xlu0 %v2760, 56
        %v3067 = vpop.permute.xlu0 %3066
        %v3072 = vsel %vm1616, %v3059, 0
        %v3075 = vsel %vm1616, %v3060, 0
        %v3078 = vsel %vm1616, %v3061, 0
        %3080 = vmatpush.msra.mxu0 0.0
        %3081 = vmatpush.msra.mxu0 0.0
        %3082 = vmatpush.msra.mxu0 0.0
        %3083 = vmatpush.msra.mxu0 0.0
        %3084 = vmatpush.msra.mxu0 0.0
        %3085 = vmatpush.msra.mxu0 0.0
        %3086 = vmatpush.msra.mxu0 0.0
        %3087 = vmatpush.msra.mxu0 0.0
        %3088 = vmatpush.msra.mxu0 0.0
        %3089 = vmatpush.msra.mxu0 0.0
        %3090 = vmatpush.msra.mxu0 0.0
        %3091 = vmatpush.msra.mxu0 0.0
        %3092 = vmatpush.msra.mxu0 0.0
        %3093 = vmatpush.msra.mxu0 %v3067
        %3094 = vmatpush.msra.mxu0 %v3065
        %3095 = vmatpush.msra.mxu0 %v3063
        %3096 = vmatmul.f32.gmra.mxu0 %v3072
        %v3097 = vpop.f32.mrf.mxu0
        %v3098 = vadd.f32 0.0, %v3097
        %3099 = vmatmul.f32.gmra.mxu0 %v3075
        %v3100 = vpop.f32.mrf.mxu0
        %v3101 = vadd.f32 0.0, %v3100
        %3102 = vmatmul.f32.gmra.mxu0 %v3078
        %v3103 = vpop.f32.mrf.mxu0
        %v3104 = vadd.f32 0.0, %v3103
        %3105 = vdwg.mxu0
        %3106 = vrot.lane.b32.xlu0 %v2754, 112
        %v3107 = vpop.permute.xlu0 %3106
        %3108 = vrot.lane.b32.xlu0 %v2757, 112
        %v3109 = vpop.permute.xlu0 %3108
        %3110 = vrot.lane.b32.xlu0 %v2760, 112
        %v3111 = vpop.permute.xlu0 %3110
        %3112 = vrot.lane.b32.xlu0 %v2754, 80
        %v3113 = vpop.permute.xlu0 %3112
        %3114 = vrot.lane.b32.xlu0 %v2757, 80
        %v3115 = vpop.permute.xlu0 %3114
        %3116 = vrot.lane.b32.xlu0 %v2760, 80
        %v3117 = vpop.permute.xlu0 %3116
        %v3118 = vsel %vm952, %v3107, 0
        %v3120 = vsel %vm952, %v3109, 0
        %v3122 = vsel %vm952, %v3111, 0
        %v3124 = vsel %vm952, %v3113, 0
        %v3126 = vsel %vm952, %v3115, 0
        %v3128 = vsel %vm952, %v3117, 0
        %3130 = vmatpush.xpose.msra.mxu0 0.0
        %3131 = vmatpush.xpose.msra.mxu0 0.0
        %3132 = vmatpush.xpose.msra.mxu0 0.0
        %3133 = vmatpush.xpose.msra.mxu0 0.0
        %3134 = vmatpush.xpose.msra.mxu0 0.0
        %3135 = vmatpush.xpose.msra.mxu0 0.0
        %3136 = vmatpush.xpose.msra.mxu0 0.0
        %3137 = vmatpush.xpose.msra.mxu0 0.0
        %3138 = vmatpush.xpose.msra.mxu0 0.0
        %3139 = vmatpush.xpose.msra.mxu0 0.0
        %3140 = vmatpush.xpose.msra.mxu0 0.0
        %3141 = vmatpush.xpose.msra.mxu0 0.0
        %3142 = vmatpush.xpose.msra.mxu0 0.0
        %3143 = vmatpush.xpose.msra.mxu0 %v3128
        %3144 = vmatpush.xpose.msra.mxu0 %v3126
        %3145 = vmatpush.xpose.msra.mxu0 %v3124
        %3146 = vmatmul.f32.gmra.mxu0 %v3118
        %v3147 = vpop.f32.mrf.mxu0
        %v3148 = vadd.f32 0.0, %v3147
        %3149 = vmatmul.f32.gmra.mxu0 %v3120
        %v3150 = vpop.f32.mrf.mxu0
        %v3151 = vadd.f32 0.0, %v3150
        %3152 = vmatmul.f32.gmra.mxu0 %v3122
        %v3153 = vpop.f32.mrf.mxu0
        %v3154 = vadd.f32 0.0, %v3153
        %3155 = vdwg.mxu0
        %v3156 = vmul.f32 %v3148, 0.35355338
        %v3157 = vmul.f32 %v3151, 0.35355338
        %v3158 = vmul.f32 %v3154, 0.35355338
        %v3159 = vadd.f32 %v3156, %v2813
        %v3160 = vadd.f32 %v3157, %v2813
        %v3161 = vadd.f32 %v3158, %v2813
        %v3162 = vsel %vm1616, %v3159, -inf
        %3163 = vmax.xlane.f32.xlu0 %v3162
        %v3164 = vpop.xlane.xlu0 %3163
        %v3165 = vsel %vm1616, %v3160, -inf
        %3166 = vmax.xlane.f32.xlu0 %v3165
        %v3167 = vpop.xlane.xlu0 %3166
        %v3168 = vsel %vm1616, %v3161, -inf
        %3169 = vmax.xlane.f32.xlu0 %v3168
        %v3170 = vpop.xlane.xlu0 %3169
        %v3171 = vsub.f32 %v3159, %v3164
        %v3172 = vsub.f32 %v3160, %v3167
        %v3173 = vsub.f32 %v3161, %v3170
        %v3174 = vmul.f32 %v3171, 1.442695
        %v3175 = vpow.pop %v3174
        %v3176 = vmul.f32 %v3172, 1.442695
        %v3177 = vpow.pop %v3176
        %v3178 = vmul.f32 %v3173, 1.442695
        %v3179 = vpow.pop %v3178
        %v3180 = vsel %vm1616, %v3175, 0.0
        %3181 = vadd.xlane.f32.xlu0 %v3180
        %v3182 = vpop.xlane.xlu0 %3181
        %v3183 = vsel %vm1616, %v3177, 0.0
        %3184 = vadd.xlane.f32.xlu0 %v3183
        %v3185 = vpop.xlane.xlu0 %3184
        %v3186 = vsel %vm1616, %v3179, 0.0
        %3187 = vadd.xlane.f32.xlu0 %v3186
        %v3188 = vpop.xlane.xlu0 %3187
        %v3189 = vrcp.pop %v3182
        %v3190 = vmul.f32 %v3182, %v3189
        %v3191 = vsub.f32 1.0, %v3190
        %v3192 = vmul.f32 %v3189, %v3191
        %v3193 = vadd.f32 %v3189, %v3192
        %vm3194 = vweird.f32 %v3182
        %vm3195 = vweird.f32 %v3189
        %vm3196 = vmor %vm3194, %vm3195
        %v3197 = vsel %vm3196, %v3189, %v3193
        %v3198 = vand.u32 2147483647, %v3182
        %vm3199 = vcmp.eq.f32.partialorder %v3198, 8.507059e+37
        %v3200 = vand.u32 %v3182, 2147483648
        %v3201 = vor.u32 1.1754944e-38, %v3200
        %v3202 = vsel %vm3199, %v3201, %v3197
        %v3203 = vrcp.pop %v3185
        %v3204 = vmul.f32 %v3185, %v3203
        %v3205 = vsub.f32 1.0, %v3204
        %v3206 = vmul.f32 %v3203, %v3205
        %v3207 = vadd.f32 %v3203, %v3206
        %vm3208 = vweird.f32 %v3185
        %vm3209 = vweird.f32 %v3203
        %vm3210 = vmor %vm3208, %vm3209
        %v3211 = vsel %vm3210, %v3203, %v3207
        %v3212 = vand.u32 2147483647, %v3185
        %vm3213 = vcmp.eq.f32.partialorder %v3212, 8.507059e+37
        %v3214 = vand.u32 %v3185, 2147483648
        %v3215 = vor.u32 1.1754944e-38, %v3214
        %v3216 = vsel %vm3213, %v3215, %v3211
        %v3217 = vrcp.pop %v3188
        %v3218 = vmul.f32 %v3188, %v3217
        %v3219 = vsub.f32 1.0, %v3218
        %v3220 = vmul.f32 %v3217, %v3219
        %v3221 = vadd.f32 %v3217, %v3220
        %vm3222 = vweird.f32 %v3188
        %vm3223 = vweird.f32 %v3217
        %vm3224 = vmor %vm3222, %vm3223
        %v3225 = vsel %vm3224, %v3217, %v3221
        %v3226 = vand.u32 2147483647, %v3188
        %vm3227 = vcmp.eq.f32.partialorder %v3226, 8.507059e+37
        %v3228 = vand.u32 %v3188, 2147483648
        %v3229 = vor.u32 1.1754944e-38, %v3228
        %v3230 = vsel %vm3227, %v3229, %v3225
        %v3231 = vmul.f32 %v3175, %v3202
        %v3232 = vmul.f32 %v3177, %v3216
        %v3233 = vmul.f32 %v3179, %v3230
        %3234 = vrot.lane.b32.xlu0 %v2754, 48
        %v3235 = vpop.permute.xlu0 %3234
        %3236 = vrot.lane.b32.xlu0 %v2757, 48
        %v3237 = vpop.permute.xlu0 %3236
        %3238 = vrot.lane.b32.xlu0 %v2760, 48
        %v3239 = vpop.permute.xlu0 %3238
        %v3244 = vsel %vm1616, %v3231, 0
        %v3247 = vsel %vm1616, %v3232, 0
        %v3250 = vsel %vm1616, %v3233, 0
        %3252 = vmatpush.msra.mxu0 0.0
        %3253 = vmatpush.msra.mxu0 0.0
        %3254 = vmatpush.msra.mxu0 0.0
        %3255 = vmatpush.msra.mxu0 0.0
        %3256 = vmatpush.msra.mxu0 0.0
        %3257 = vmatpush.msra.mxu0 0.0
        %3258 = vmatpush.msra.mxu0 0.0
        %3259 = vmatpush.msra.mxu0 0.0
        %3260 = vmatpush.msra.mxu0 0.0
        %3261 = vmatpush.msra.mxu0 0.0
        %3262 = vmatpush.msra.mxu0 0.0
        %3263 = vmatpush.msra.mxu0 0.0
        %3264 = vmatpush.msra.mxu0 0.0
        %3265 = vmatpush.msra.mxu0 %v3239
        %3266 = vmatpush.msra.mxu0 %v3237
        %3267 = vmatpush.msra.mxu0 %v3235
        %3268 = vmatmul.f32.gmra.mxu0 %v3244
        %v3269 = vpop.f32.mrf.mxu0
        %v3270 = vadd.f32 0.0, %v3269
        %3271 = vmatmul.f32.gmra.mxu0 %v3247
        %v3272 = vpop.f32.mrf.mxu0
        %v3273 = vadd.f32 0.0, %v3272
        %3274 = vmatmul.f32.gmra.mxu0 %v3250
        %v3275 = vpop.f32.mrf.mxu0
        %v3276 = vadd.f32 0.0, %v3275
        %3277 = vdwg.mxu0
        %3278 = vrot.lane.b32.xlu0 %v2754, 104
        %v3279 = vpop.permute.xlu0 %3278
        %3280 = vrot.lane.b32.xlu0 %v2757, 104
        %v3281 = vpop.permute.xlu0 %3280
        %3282 = vrot.lane.b32.xlu0 %v2760, 104
        %v3283 = vpop.permute.xlu0 %3282
        %3284 = vrot.lane.b32.xlu0 %v2754, 72
        %v3285 = vpop.permute.xlu0 %3284
        %3286 = vrot.lane.b32.xlu0 %v2757, 72
        %v3287 = vpop.permute.xlu0 %3286
        %3288 = vrot.lane.b32.xlu0 %v2760, 72
        %v3289 = vpop.permute.xlu0 %3288
        %v3290 = vsel %vm952, %v3279, 0
        %v3292 = vsel %vm952, %v3281, 0
        %v3294 = vsel %vm952, %v3283, 0
        %v3296 = vsel %vm952, %v3285, 0
        %v3298 = vsel %vm952, %v3287, 0
        %v3300 = vsel %vm952, %v3289, 0
        %3302 = vmatpush.xpose.msra.mxu0 0.0
        %3303 = vmatpush.xpose.msra.mxu0 0.0
        %3304 = vmatpush.xpose.msra.mxu0 0.0
        %3305 = vmatpush.xpose.msra.mxu0 0.0
        %3306 = vmatpush.xpose.msra.mxu0 0.0
        %3307 = vmatpush.xpose.msra.mxu0 0.0
        %3308 = vmatpush.xpose.msra.mxu0 0.0
        %3309 = vmatpush.xpose.msra.mxu0 0.0
        %3310 = vmatpush.xpose.msra.mxu0 0.0
        %3311 = vmatpush.xpose.msra.mxu0 0.0
        %3312 = vmatpush.xpose.msra.mxu0 0.0
        %3313 = vmatpush.xpose.msra.mxu0 0.0
        %3314 = vmatpush.xpose.msra.mxu0 0.0
        %3315 = vmatpush.xpose.msra.mxu0 %v3300
        %3316 = vmatpush.xpose.msra.mxu0 %v3298
        %3317 = vmatpush.xpose.msra.mxu0 %v3296
        %3318 = vmatmul.f32.gmra.mxu0 %v3290
        %v3319 = vpop.f32.mrf.mxu0
        %v3320 = vadd.f32 0.0, %v3319
        %3321 = vmatmul.f32.gmra.mxu0 %v3292
        %v3322 = vpop.f32.mrf.mxu0
        %v3323 = vadd.f32 0.0, %v3322
        %3324 = vmatmul.f32.gmra.mxu0 %v3294
        %v3325 = vpop.f32.mrf.mxu0
        %v3326 = vadd.f32 0.0, %v3325
        %3327 = vdwg.mxu0
        %v3328 = vmul.f32 %v3320, 0.35355338
        %v3329 = vmul.f32 %v3323, 0.35355338
        %v3330 = vmul.f32 %v3326, 0.35355338
        %v3331 = vadd.f32 %v3328, %v2813
        %v3332 = vadd.f32 %v3329, %v2813
        %v3333 = vadd.f32 %v3330, %v2813
        %v3334 = vsel %vm1616, %v3331, -inf
        %3335 = vmax.xlane.f32.xlu0 %v3334
        %v3336 = vpop.xlane.xlu0 %3335
        %v3337 = vsel %vm1616, %v3332, -inf
        %3338 = vmax.xlane.f32.xlu0 %v3337
        %v3339 = vpop.xlane.xlu0 %3338
        %v3340 = vsel %vm1616, %v3333, -inf
        %3341 = vmax.xlane.f32.xlu0 %v3340
        %v3342 = vpop.xlane.xlu0 %3341
        %v3343 = vsub.f32 %v3331, %v3336
        %v3344 = vsub.f32 %v3332, %v3339
        %v3345 = vsub.f32 %v3333, %v3342
        %v3346 = vmul.f32 %v3343, 1.442695
        %v3347 = vpow.pop %v3346
        %v3348 = vmul.f32 %v3344, 1.442695
        %v3349 = vpow.pop %v3348
        %v3350 = vmul.f32 %v3345, 1.442695
        %v3351 = vpow.pop %v3350
        %v3352 = vsel %vm1616, %v3347, 0.0
        %3353 = vadd.xlane.f32.xlu0 %v3352
        %v3354 = vpop.xlane.xlu0 %3353
        %v3355 = vsel %vm1616, %v3349, 0.0
        %3356 = vadd.xlane.f32.xlu0 %v3355
        %v3357 = vpop.xlane.xlu0 %3356
        %v3358 = vsel %vm1616, %v3351, 0.0
        %3359 = vadd.xlane.f32.xlu0 %v3358
        %v3360 = vpop.xlane.xlu0 %3359
        %v3361 = vrcp.pop %v3354
        %v3362 = vmul.f32 %v3354, %v3361
        %v3363 = vsub.f32 1.0, %v3362
        %v3364 = vmul.f32 %v3361, %v3363
        %v3365 = vadd.f32 %v3361, %v3364
        %vm3366 = vweird.f32 %v3354
        %vm3367 = vweird.f32 %v3361
        %vm3368 = vmor %vm3366, %vm3367
        %v3369 = vsel %vm3368, %v3361, %v3365
        %v3370 = vand.u32 2147483647, %v3354
        %vm3371 = vcmp.eq.f32.partialorder %v3370, 8.507059e+37
        %v3372 = vand.u32 %v3354, 2147483648
        %v3373 = vor.u32 1.1754944e-38, %v3372
        %v3374 = vsel %vm3371, %v3373, %v3369
        %v3375 = vrcp.pop %v3357
        %v3376 = vmul.f32 %v3357, %v3375
        %v3377 = vsub.f32 1.0, %v3376
        %v3378 = vmul.f32 %v3375, %v3377
        %v3379 = vadd.f32 %v3375, %v3378
        %vm3380 = vweird.f32 %v3357
        %vm3381 = vweird.f32 %v3375
        %vm3382 = vmor %vm3380, %vm3381
        %v3383 = vsel %vm3382, %v3375, %v3379
        %v3384 = vand.u32 2147483647, %v3357
        %vm3385 = vcmp.eq.f32.partialorder %v3384, 8.507059e+37
        %v3386 = vand.u32 %v3357, 2147483648
        %v3387 = vor.u32 1.1754944e-38, %v3386
        %v3388 = vsel %vm3385, %v3387, %v3383
        %v3389 = vrcp.pop %v3360
        %v3390 = vmul.f32 %v3360, %v3389
        %v3391 = vsub.f32 1.0, %v3390
        %v3392 = vmul.f32 %v3389, %v3391
        %v3393 = vadd.f32 %v3389, %v3392
        %vm3394 = vweird.f32 %v3360
        %vm3395 = vweird.f32 %v3389
        %vm3396 = vmor %vm3394, %vm3395
        %v3397 = vsel %vm3396, %v3389, %v3393
        %v3398 = vand.u32 2147483647, %v3360
        %vm3399 = vcmp.eq.f32.partialorder %v3398, 8.507059e+37
        %v3400 = vand.u32 %v3360, 2147483648
        %v3401 = vor.u32 1.1754944e-38, %v3400
        %v3402 = vsel %vm3399, %v3401, %v3397
        %v3403 = vmul.f32 %v3347, %v3374
        %v3404 = vmul.f32 %v3349, %v3388
        %v3405 = vmul.f32 %v3351, %v3402
        %3406 = vrot.lane.b32.xlu0 %v2754, 40
        %v3407 = vpop.permute.xlu0 %3406
        %3408 = vrot.lane.b32.xlu0 %v2757, 40
        %v3409 = vpop.permute.xlu0 %3408
        %3410 = vrot.lane.b32.xlu0 %v2760, 40
        %v3411 = vpop.permute.xlu0 %3410
        %v3416 = vsel %vm1616, %v3403, 0
        %v3419 = vsel %vm1616, %v3404, 0
        %v3422 = vsel %vm1616, %v3405, 0
        %3424 = vmatpush.msra.mxu0 0.0
        %3425 = vmatpush.msra.mxu0 0.0
        %3426 = vmatpush.msra.mxu0 0.0
        %3427 = vmatpush.msra.mxu0 0.0
        %3428 = vmatpush.msra.mxu0 0.0
        %3429 = vmatpush.msra.mxu0 0.0
        %3430 = vmatpush.msra.mxu0 0.0
        %3431 = vmatpush.msra.mxu0 0.0
        %3432 = vmatpush.msra.mxu0 0.0
        %3433 = vmatpush.msra.mxu0 0.0
        %3434 = vmatpush.msra.mxu0 0.0
        %3435 = vmatpush.msra.mxu0 0.0
        %3436 = vmatpush.msra.mxu0 0.0
        %3437 = vmatpush.msra.mxu0 %v3411
        %3438 = vmatpush.msra.mxu0 %v3409
        %3439 = vmatpush.msra.mxu0 %v3407
        %3440 = vmatmul.f32.gmra.mxu0 %v3416
        %v3441 = vpop.f32.mrf.mxu0
        %v3442 = vadd.f32 0.0, %v3441
        %3443 = vmatmul.f32.gmra.mxu0 %v3419
        %v3444 = vpop.f32.mrf.mxu0
        %v3445 = vadd.f32 0.0, %v3444
        %3446 = vmatmul.f32.gmra.mxu0 %v3422
        %v3447 = vpop.f32.mrf.mxu0
        %v3448 = vadd.f32 0.0, %v3447
        %3449 = vdwg.mxu0
        %3453 = vrot.lane.b32.xlu0 %v3098, 8
        %v3454 = vpop.permute.xlu0 %3453
        %3455 = vrot.lane.b32.xlu0 %v3101, 8
        %v3456 = vpop.permute.xlu0 %3455
        %3457 = vrot.lane.b32.xlu0 %v3104, 8
        %v3458 = vpop.permute.xlu0 %3457
        %3465 = vrot.lane.b32.xlu0 %v3270, 16
        %v3466 = vpop.permute.xlu0 %3465
        %3467 = vrot.lane.b32.xlu0 %v3273, 16
        %v3468 = vpop.permute.xlu0 %3467
        %3469 = vrot.lane.b32.xlu0 %v3276, 16
        %v3470 = vpop.permute.xlu0 %3469
        %3477 = vrot.lane.b32.xlu0 %v3442, 24
        %v3478 = vpop.permute.xlu0 %3477
        %3479 = vrot.lane.b32.xlu0 %v3445, 24
        %v3480 = vpop.permute.xlu0 %3479
        %3481 = vrot.lane.b32.xlu0 %v3448, 24
        %v3482 = vpop.permute.xlu0 %3481
        %v3486 = vsel %vm952, %v2926, %v3454
        %v3487 = vsel %vm952, %v2929, %v3456
        %v3488 = vsel %vm952, %v2932, %v3458
        %v3489 = vsel %vm1132, %v3486, %v3466
        %v3490 = vsel %vm1132, %v3487, %v3468
        %v3491 = vsel %vm1132, %v3488, %v3470
        %v3492 = vsel %vm1616, %v3489, %v3478
        %v3493 = vsel %vm1616, %v3490, %v3480
        %v3494 = vsel %vm1616, %v3491, %v3482
        %v3495 = vperm.slane %v2651, 1
        %v3497 = vsel %vm982, %v3492, 0
        %v3500 = vsel %vm982, %v3493, 0
        %v3503 = vsel %vm982, %v3494, 0
        %3505 = vmatpush.msra.mxu0 0.0
        %3506 = vmatpush.msra.mxu0 0.0
        %3507 = vmatpush.msra.mxu0 0.0
        %3508 = vmatpush.msra.mxu0 0.0
        %3509 = vmatpush.msra.mxu0 0.0
        %3510 = vmatpush.msra.mxu0 0.0
        %3511 = vmatpush.msra.mxu0 0.0
        %3512 = vmatpush.msra.mxu0 0.0
        %3513 = vmatpush.msra.mxu0 0.0
        %3514 = vmatpush.msra.mxu0 0.0
        %3515 = vmatpush.msra.mxu0 0.0
        %3516 = vmatpush.msra.mxu0 0.0
        %3517 = vmatpush.msra.mxu0 %v2638
        %3518 = vmatpush.msra.mxu0 %v2637
        %3519 = vmatpush.msra.mxu0 %v2636
        %3520 = vmatpush.msra.mxu0 %v2635
        %3521 = vmatmul.f32.gmra.mxu0 %v3497
        %v3522 = vpop.f32.mrf.mxu0
        %v3523 = vadd.f32 %v3495, %v3522
        %3524 = vmatmul.f32.gmra.mxu0 %v3500
        %v3525 = vpop.f32.mrf.mxu0
        %v3526 = vadd.f32 %v3495, %v3525
        %3527 = vmatmul.f32.gmra.mxu0 %v3503
        %v3528 = vpop.f32.mrf.mxu0
        %v3529 = vadd.f32 %v3495, %v3528
        %3530 = vdwg.mxu0
        %v3531 = vadd.f32 %v2626, %v3523
        %v3532 = vadd.f32 %v2627, %v3526
        %v3533 = vadd.f32 %v2630, %v3529
        %v3534 = vsel %vm982, %v3531, 0.0
        %3535 = vadd.xlane.f32.xlu0 %v3534
        %v3536 = vpop.xlane.xlu0 %3535
        %v3537 = vsel %vm982, %v3532, 0.0
        %3538 = vadd.xlane.f32.xlu0 %v3537
        %v3539 = vpop.xlane.xlu0 %3538
        %v3540 = vsel %vm982, %v3533, 0.0
        %3541 = vadd.xlane.f32.xlu0 %v3540
        %v3542 = vpop.xlane.xlu0 %3541
        %v3543 = vmul.f32 %v3536, %v1018
        %v3544 = vmul.f32 %v3539, %v1018
        %v3545 = vmul.f32 %v3542, %v1018
        %v3546 = vsub.f32 %v3531, %v3543
        %v3547 = vsub.f32 %v3532, %v3544
        %v3548 = vsub.f32 %v3533, %v3545
        %v3549 = vmul.f32 %v3546, %v3546
        %v3550 = vmul.f32 %v3547, %v3547
        %v3551 = vmul.f32 %v3548, %v3548
        %v3552 = vsel %vm982, %v3549, 0.0
        %3553 = vadd.xlane.f32.xlu0 %v3552
        %v3554 = vpop.xlane.xlu0 %3553
        %v3555 = vsel %vm982, %v3550, 0.0
        %3556 = vadd.xlane.f32.xlu0 %v3555
        %v3557 = vpop.xlane.xlu0 %3556
        %v3558 = vsel %vm982, %v3551, 0.0
        %3559 = vadd.xlane.f32.xlu0 %v3558
        %v3560 = vpop.xlane.xlu0 %3559
        %v3561 = vmul.f32 %v3554, %v1018
        %v3562 = vmul.f32 %v3557, %v1018
        %v3563 = vmul.f32 %v3560, %v1018
        %v3564 = vadd.f32 %v3561, 1e-05
        %v3565 = vadd.f32 %v3562, 1e-05
        %v3566 = vadd.f32 %v3563, 1e-05
        %v3567 = vrsqrt.pop %v3564
        %v3568 = vmul.f32 %v3567, %v3564
        %v3569 = vmul.f32 %v3568, %v3567
        %v3570 = vmul.f32 0.5, %v3569
        %v3571 = vsub.f32 1.5, %v3570
        %v3572 = vmul.f32 %v3567, %v3571
        %vm3573 = vweird.f32 %v3564
        %vm3574 = vweird.f32 %v3567
        %vm3575 = vmor %vm3573, %vm3574
        %v3576 = vsel %vm3575, %v3567, %v3572
        %v3577 = vrsqrt.pop %v3565
        %v3578 = vmul.f32 %v3577, %v3565
        %v3579 = vmul.f32 %v3578, %v3577
        %v3580 = vmul.f32 0.5, %v3579
        %v3581 = vsub.f32 1.5, %v3580
        %v3582 = vmul.f32 %v3577, %v3581
        %vm3583 = vweird.f32 %v3565
        %vm3584 = vweird.f32 %v3577
        %vm3585 = vmor %vm3583, %vm3584
        %v3586 = vsel %vm3585, %v3577, %v3582
        %v3587 = vrsqrt.pop %v3566
        %v3588 = vmul.f32 %v3587, %v3566
        %v3589 = vmul.f32 %v3588, %v3587
        %v3590 = vmul.f32 0.5, %v3589
        %v3591 = vsub.f32 1.5, %v3590
        %v3592 = vmul.f32 %v3587, %v3591
        %vm3593 = vweird.f32 %v3566
        %vm3594 = vweird.f32 %v3587
        %vm3595 = vmor %vm3593, %vm3594
        %v3596 = vsel %vm3595, %v3587, %v3592
        %v3597 = vmul.f32 %v3546, %v3576
        %v3598 = vmul.f32 %v3547, %v3586
        %v3599 = vmul.f32 %v3548, %v3596
        %v3600 = vperm.slane %v2651, 6
        %v3601 = vmul.f32 %v3597, %v3600
        %v3602 = vmul.f32 %v3598, %v3600
        %v3603 = vmul.f32 %v3599, %v3600
        %v3604 = vperm.slane %v2651, 7
        %v3605 = vadd.f32 %v3601, %v3604
        %v3606 = vadd.f32 %v3602, %v3604
        %v3607 = vadd.f32 %v3603, %v3604
        %v3608 = vperm.slane %v2651, 2
        %v3610 = vsel %vm982, %v3605, 0
        %v3613 = vsel %vm982, %v3606, 0
        %v3616 = vsel %vm982, %v3607, 0
        %3618 = vmatpush.msra.mxu0 0.0
        %3619 = vmatpush.msra.mxu0 0.0
        %3620 = vmatpush.msra.mxu0 0.0
        %3621 = vmatpush.msra.mxu0 0.0
        %3622 = vmatpush.msra.mxu0 0.0
        %3623 = vmatpush.msra.mxu0 0.0
        %3624 = vmatpush.msra.mxu0 0.0
        %3625 = vmatpush.msra.mxu0 0.0
        %3626 = vmatpush.msra.mxu0 0.0
        %3627 = vmatpush.msra.mxu0 0.0
        %3628 = vmatpush.msra.mxu0 0.0
        %3629 = vmatpush.msra.mxu0 0.0
        %3630 = vmatpush.msra.mxu0 %v2642
        %3631 = vmatpush.msra.mxu0 %v2641
        %3632 = vmatpush.msra.mxu0 %v2640
        %3633 = vmatpush.msra.mxu0 %v2639
        %3634 = vmatmul.f32.gmra.mxu0 %v3610
        %v3635 = vpop.f32.mrf.mxu0
        %v3636 = vadd.f32 %v3608, %v3635
        %3637 = vmatmul.f32.gmra.mxu0 %v3613
        %v3638 = vpop.f32.mrf.mxu0
        %v3639 = vadd.f32 %v3608, %v3638
        %3640 = vmatmul.f32.gmra.mxu0 %v3616
        %v3641 = vpop.f32.mrf.mxu0
        %v3642 = vadd.f32 %v3608, %v3641
        %3643 = vdwg.mxu0
        %v3644 = vmul.f32 %v3636, %v3636
        %v3645 = vmul.f32 %v3639, %v3639
        %v3646 = vmul.f32 %v3642, %v3642
        %v3647 = vmul.f32 %v3636, %v3644
        %v3648 = vmul.f32 %v3639, %v3645
        %v3649 = vmul.f32 %v3642, %v3646
        %v3650 = vmul.f32 %v3647, 0.044715
        %v3651 = vmul.f32 %v3648, 0.044715
        %v3652 = vmul.f32 %v3649, 0.044715
        %v3653 = vadd.f32 %v3636, %v3650
        %v3654 = vadd.f32 %v3639, %v3651
        %v3655 = vadd.f32 %v3642, %v3652
        %v3656 = vmul.f32 %v3653, 0.7978846
        %v3657 = vmul.f32 %v3654, 0.7978846
        %v3658 = vmul.f32 %v3655, 0.7978846
        %v3659 = vtanh.pop %v3656
        %v3660 = vtanh.pop %v3657
        %v3661 = vtanh.pop %v3658
        %v3662 = vadd.f32 %v3659, 1.0
        %v3663 = vadd.f32 %v3660, 1.0
        %v3664 = vadd.f32 %v3661, 1.0
        %v3665 = vmul.f32 %v3662, 0.5
        %v3666 = vmul.f32 %v3663, 0.5
        %v3667 = vmul.f32 %v3664, 0.5
        %v3668 = vmul.f32 %v3636, %v3665
        %v3669 = vmul.f32 %v3639, %v3666
        %v3670 = vmul.f32 %v3642, %v3667
        %v3672 = vsel %vm1749, %v3668, 0
        %v3675 = vsel %vm1749, %v3669, 0
        %v3678 = vsel %vm1749, %v3670, 0
        %3680 = vmatpush.msra.mxu0 0.0
        %3681 = vmatpush.msra.mxu0 0.0
        %3682 = vmatpush.msra.mxu0 0.0
        %3683 = vmatpush.msra.mxu0 0.0
        %3684 = vmatpush.msra.mxu0 0.0
        %3685 = vmatpush.msra.mxu0 0.0
        %3686 = vmatpush.msra.mxu0 0.0
        %3687 = vmatpush.msra.mxu0 0.0
        %3688 = vmatpush.msra.mxu0 %v2650
        %3689 = vmatpush.msra.mxu0 %v2649
        %3690 = vmatpush.msra.mxu0 %v2648
        %3691 = vmatpush.msra.mxu0 %v2647
        %3692 = vmatpush.msra.mxu0 %v2646
        %3693 = vmatpush.msra.mxu0 %v2645
        %3694 = vmatpush.msra.mxu0 %v2644
        %3695 = vmatpush.msra.mxu0 %v2643
        %3696 = vmatmul.f32.gmra.mxu0 %v3672
        %v3697 = vpop.f32.mrf.mxu0
        %v3698 = vadd.f32 0.0, %v3697
        %3699 = vmatmul.f32.gmra.mxu0 %v3675
        %v3700 = vpop.f32.mrf.mxu0
        %v3701 = vadd.f32 0.0, %v3700
        %3702 = vmatmul.f32.gmra.mxu0 %v3678
        %v3703 = vpop.f32.mrf.mxu0
        %v3704 = vadd.f32 0.0, %v3703
        %3705 = vdwg.mxu0
        %v3706 = vadd.f32 %v3531, %v3698
        %v3707 = vadd.f32 %v3532, %v3701
        %v3708 = vadd.f32 %v3533, %v3704
        %v3709 = vperm.slane %v2651, 3
        %v3710 = vadd.f32 %v3706, %v3709
        %v3711 = vadd.f32 %v3707, %v3709
        %v3712 = vadd.f32 %v3708, %v3709
        %s3713 = scalar_lea.vmem %s13, 32
        %v3714 = vld [vmem:[%s3713] sm:$0xff]
        %v3715 = vld [vmem:[%s3713 + $0x8] sm:$0xff]
        %v3716 = vld [vmem:[%s3713 + $0x10] sm:$0xff]
        %v3717 = vld [vmem:[%s3713 + $0x18] sm:$0xff]
        %s3718 = scalar_lea.vmem %s14, 32
        %v3719 = vld [vmem:[%s3718] sm:$0xff]
        %v3720 = vld [vmem:[%s3718 + $0x8] sm:$0xff]
        %v3721 = vld [vmem:[%s3718 + $0x10] sm:$0xff]
        %v3722 = vld [vmem:[%s3718 + $0x18] sm:$0xff]
        %s3723 = scalar_lea.vmem %s15, 32
        %v3724 = vld [vmem:[%s3723] sm:$0xff]
        %v3725 = vld [vmem:[%s3723 + $0x8] sm:$0xff]
        %v3726 = vld [vmem:[%s3723 + $0x10] sm:$0xff]
        %v3727 = vld [vmem:[%s3723 + $0x18] sm:$0xff]
        %s3728 = scalar_lea.vmem %s16, 64
        %v3729 = vld [vmem:[%s3728] sm:$0xff]
        %v3730 = vld [vmem:[%s3728 + $0x8] sm:$0xff]
        %v3731 = vld [vmem:[%s3728 + $0x10] sm:$0xff]
        %v3732 = vld [vmem:[%s3728 + $0x18] sm:$0xff]
        %v3733 = vld [vmem:[%s3728 + $0x20] sm:$0xff]
        %v3734 = vld [vmem:[%s3728 + $0x28] sm:$0xff]
        %v3735 = vld [vmem:[%s3728 + $0x30] sm:$0xff]
        %v3736 = vld [vmem:[%s3728 + $0x38] sm:$0xff]
        %s3737 = scalar_lea.vmem %s17, 8
        %v3738 = vld [vmem:[%s3737] sm:$0xff]
        %v3739 = vsel %vm982, %v3710, 0.0
        %3740 = vadd.xlane.f32.xlu0 %v3739
        %v3741 = vpop.xlane.xlu0 %3740
        %v3742 = vsel %vm982, %v3711, 0.0
        %3743 = vadd.xlane.f32.xlu0 %v3742
        %v3744 = vpop.xlane.xlu0 %3743
        %v3745 = vsel %vm982, %v3712, 0.0
        %3746 = vadd.xlane.f32.xlu0 %v3745
        %v3747 = vpop.xlane.xlu0 %3746
        %v3748 = vmul.f32 %v3741, %v1018
        %v3749 = vmul.f32 %v3744, %v1018
        %v3750 = vmul.f32 %v3747, %v1018
        %v3751 = vsub.f32 %v3710, %v3748
        %v3752 = vsub.f32 %v3711, %v3749
        %v3753 = vsub.f32 %v3712, %v3750
        %v3754 = vmul.f32 %v3751, %v3751
        %v3755 = vmul.f32 %v3752, %v3752
        %v3756 = vmul.f32 %v3753, %v3753
        %v3757 = vsel %vm982, %v3754, 0.0
        %3758 = vadd.xlane.f32.xlu0 %v3757
        %v3759 = vpop.xlane.xlu0 %3758
        %v3760 = vsel %vm982, %v3755, 0.0
        %3761 = vadd.xlane.f32.xlu0 %v3760
        %v3762 = vpop.xlane.xlu0 %3761
        %v3763 = vsel %vm982, %v3756, 0.0
        %3764 = vadd.xlane.f32.xlu0 %v3763
        %v3765 = vpop.xlane.xlu0 %3764
        %v3766 = vmul.f32 %v3759, %v1018
        %v3767 = vmul.f32 %v3762, %v1018
        %v3768 = vmul.f32 %v3765, %v1018
        %v3769 = vadd.f32 %v3766, 1e-05
        %v3770 = vadd.f32 %v3767, 1e-05
        %v3771 = vadd.f32 %v3768, 1e-05
        %v3772 = vrsqrt.pop %v3769
        %v3773 = vmul.f32 %v3772, %v3769
        %v3774 = vmul.f32 %v3773, %v3772
        %v3775 = vmul.f32 0.5, %v3774
        %v3776 = vsub.f32 1.5, %v3775
        %v3777 = vmul.f32 %v3772, %v3776
        %vm3778 = vweird.f32 %v3769
        %vm3779 = vweird.f32 %v3772
        %vm3780 = vmor %vm3778, %vm3779
        %v3781 = vsel %vm3780, %v3772, %v3777
        %v3782 = vrsqrt.pop %v3770
        %v3783 = vmul.f32 %v3782, %v3770
        %v3784 = vmul.f32 %v3783, %v3782
        %v3785 = vmul.f32 0.5, %v3784
        %v3786 = vsub.f32 1.5, %v3785
        %v3787 = vmul.f32 %v3782, %v3786
        %vm3788 = vweird.f32 %v3770
        %vm3789 = vweird.f32 %v3782
        %vm3790 = vmor %vm3788, %vm3789
        %v3791 = vsel %vm3790, %v3782, %v3787
        %v3792 = vrsqrt.pop %v3771
        %v3793 = vmul.f32 %v3792, %v3771
        %v3794 = vmul.f32 %v3793, %v3792
        %v3795 = vmul.f32 0.5, %v3794
        %v3796 = vsub.f32 1.5, %v3795
        %v3797 = vmul.f32 %v3792, %v3796
        %vm3798 = vweird.f32 %v3771
        %vm3799 = vweird.f32 %v3792
        %vm3800 = vmor %vm3798, %vm3799
        %v3801 = vsel %vm3800, %v3792, %v3797
        %v3802 = vmul.f32 %v3751, %v3781
        %v3803 = vmul.f32 %v3752, %v3791
        %v3804 = vmul.f32 %v3753, %v3801
        %v3805 = vperm.slane %v3738, 4
        %v3806 = vmul.f32 %v3802, %v3805
        %v3807 = vmul.f32 %v3803, %v3805
        %v3808 = vmul.f32 %v3804, %v3805
        %v3809 = vperm.slane %v3738, 5
        %v3810 = vadd.f32 %v3806, %v3809
        %v3811 = vadd.f32 %v3807, %v3809
        %v3812 = vadd.f32 %v3808, %v3809
        %v3813 = vperm.slane %v3738, 0
        %v3815 = vsel %vm982, %v3810, 0
        %v3818 = vsel %vm982, %v3811, 0
        %v3821 = vsel %vm982, %v3812, 0
        %3823 = vmatpush.msra.mxu0 0.0
        %3824 = vmatpush.msra.mxu0 0.0
        %3825 = vmatpush.msra.mxu0 0.0
        %3826 = vmatpush.msra.mxu0 0.0
        %3827 = vmatpush.msra.mxu0 0.0
        %3828 = vmatpush.msra.mxu0 0.0
        %3829 = vmatpush.msra.mxu0 0.0
        %3830 = vmatpush.msra.mxu0 0.0
        %3831 = vmatpush.msra.mxu0 0.0
        %3832 = vmatpush.msra.mxu0 0.0
        %3833 = vmatpush.msra.mxu0 0.0
        %3834 = vmatpush.msra.mxu0 0.0
        %3835 = vmatpush.msra.mxu0 %v3717
        %3836 = vmatpush.msra.mxu0 %v3716
        %3837 = vmatpush.msra.mxu0 %v3715
        %3838 = vmatpush.msra.mxu0 %v3714
        %3839 = vmatmul.f32.gmra.mxu0 %v3815
        %v3840 = vpop.f32.mrf.mxu0
        %v3841 = vadd.f32 %v3813, %v3840
        %3842 = vmatmul.f32.gmra.mxu0 %v3818
        %v3843 = vpop.f32.mrf.mxu0
        %v3844 = vadd.f32 %v3813, %v3843
        %3845 = vmatmul.f32.gmra.mxu0 %v3821
        %v3846 = vpop.f32.mrf.mxu0
        %v3847 = vadd.f32 %v3813, %v3846
        %3848 = vdwg.mxu0
        %3852 = vrot.lane.b32.xlu0 %v3841, 96
        %v3853 = vpop.permute.xlu0 %3852
        %3854 = vrot.lane.b32.xlu0 %v3844, 96
        %v3855 = vpop.permute.xlu0 %3854
        %3856 = vrot.lane.b32.xlu0 %v3847, 96
        %v3857 = vpop.permute.xlu0 %3856
        %v3858 = vsel %vm952, %v3841, 0
        %v3860 = vsel %vm952, %v3844, 0
        %v3862 = vsel %vm952, %v3847, 0
        %v3864 = vsel %vm952, %v3853, 0
        %v3866 = vsel %vm952, %v3855, 0
        %v3868 = vsel %vm952, %v3857, 0
        %3870 = vmatpush.xpose.msra.mxu0 0.0
        %3871 = vmatpush.xpose.msra.mxu0 0.0
        %3872 = vmatpush.xpose.msra.mxu0 0.0
        %3873 = vmatpush.xpose.msra.mxu0 0.0
        %3874 = vmatpush.xpose.msra.mxu0 0.0
        %3875 = vmatpush.xpose.msra.mxu0 0.0
        %3876 = vmatpush.xpose.msra.mxu0 0.0
        %3877 = vmatpush.xpose.msra.mxu0 0.0
        %3878 = vmatpush.xpose.msra.mxu0 0.0
        %3879 = vmatpush.xpose.msra.mxu0 0.0
        %3880 = vmatpush.xpose.msra.mxu0 0.0
        %3881 = vmatpush.xpose.msra.mxu0 0.0
        %3882 = vmatpush.xpose.msra.mxu0 0.0
        %3883 = vmatpush.xpose.msra.mxu0 %v3868
        %3884 = vmatpush.xpose.msra.mxu0 %v3866
        %3885 = vmatpush.xpose.msra.mxu0 %v3864
        %3886 = vmatmul.f32.gmra.mxu0 %v3858
        %v3887 = vpop.f32.mrf.mxu0
        %v3888 = vadd.f32 0.0, %v3887
        %3889 = vmatmul.f32.gmra.mxu0 %v3860
        %v3890 = vpop.f32.mrf.mxu0
        %v3891 = vadd.f32 0.0, %v3890
        %3892 = vmatmul.f32.gmra.mxu0 %v3862
        %v3893 = vpop.f32.mrf.mxu0
        %v3894 = vadd.f32 0.0, %v3893
        %3895 = vdwg.mxu0
        %v3896 = vmul.f32 %v3888, 0.35355338
        %v3897 = vmul.f32 %v3891, 0.35355338
        %v3898 = vmul.f32 %v3894, 0.35355338
        %v3899 = vadd.f32 %v3896, %v2813
        %v3900 = vadd.f32 %v3897, %v2813
        %v3901 = vadd.f32 %v3898, %v2813
        %v3902 = vsel %vm1616, %v3899, -inf
        %3903 = vmax.xlane.f32.xlu0 %v3902
        %v3904 = vpop.xlane.xlu0 %3903
        %v3905 = vsel %vm1616, %v3900, -inf
        %3906 = vmax.xlane.f32.xlu0 %v3905
        %v3907 = vpop.xlane.xlu0 %3906
        %v3908 = vsel %vm1616, %v3901, -inf
        %3909 = vmax.xlane.f32.xlu0 %v3908
        %v3910 = vpop.xlane.xlu0 %3909
        %v3911 = vsub.f32 %v3899, %v3904
        %v3912 = vsub.f32 %v3900, %v3907
        %v3913 = vsub.f32 %v3901, %v3910
        %v3914 = vmul.f32 %v3911, 1.442695
        %v3915 = vpow.pop %v3914
        %v3916 = vmul.f32 %v3912, 1.442695
        %v3917 = vpow.pop %v3916
        %v3918 = vmul.f32 %v3913, 1.442695
        %v3919 = vpow.pop %v3918
        %v3920 = vsel %vm1616, %v3915, 0.0
        %3921 = vadd.xlane.f32.xlu0 %v3920
        %v3922 = vpop.xlane.xlu0 %3921
        %v3923 = vsel %vm1616, %v3917, 0.0
        %3924 = vadd.xlane.f32.xlu0 %v3923
        %v3925 = vpop.xlane.xlu0 %3924
        %v3926 = vsel %vm1616, %v3919, 0.0
        %3927 = vadd.xlane.f32.xlu0 %v3926
        %v3928 = vpop.xlane.xlu0 %3927
        %v3929 = vrcp.pop %v3922
        %v3930 = vmul.f32 %v3922, %v3929
        %v3931 = vsub.f32 1.0, %v3930
        %v3932 = vmul.f32 %v3929, %v3931
        %v3933 = vadd.f32 %v3929, %v3932
        %vm3934 = vweird.f32 %v3922
        %vm3935 = vweird.f32 %v3929
        %vm3936 = vmor %vm3934, %vm3935
        %v3937 = vsel %vm3936, %v3929, %v3933
        %v3938 = vand.u32 2147483647, %v3922
        %vm3939 = vcmp.eq.f32.partialorder %v3938, 8.507059e+37
        %v3940 = vand.u32 %v3922, 2147483648
        %v3941 = vor.u32 1.1754944e-38, %v3940
        %v3942 = vsel %vm3939, %v3941, %v3937
        %v3943 = vrcp.pop %v3925
        %v3944 = vmul.f32 %v3925, %v3943
        %v3945 = vsub.f32 1.0, %v3944
        %v3946 = vmul.f32 %v3943, %v3945
        %v3947 = vadd.f32 %v3943, %v3946
        %vm3948 = vweird.f32 %v3925
        %vm3949 = vweird.f32 %v3943
        %vm3950 = vmor %vm3948, %vm3949
        %v3951 = vsel %vm3950, %v3943, %v3947
        %v3952 = vand.u32 2147483647, %v3925
        %vm3953 = vcmp.eq.f32.partialorder %v3952, 8.507059e+37
        %v3954 = vand.u32 %v3925, 2147483648
        %v3955 = vor.u32 1.1754944e-38, %v3954
        %v3956 = vsel %vm3953, %v3955, %v3951
        %v3957 = vrcp.pop %v3928
        %v3958 = vmul.f32 %v3928, %v3957
        %v3959 = vsub.f32 1.0, %v3958
        %v3960 = vmul.f32 %v3957, %v3959
        %v3961 = vadd.f32 %v3957, %v3960
        %vm3962 = vweird.f32 %v3928
        %vm3963 = vweird.f32 %v3957
        %vm3964 = vmor %vm3962, %vm3963
        %v3965 = vsel %vm3964, %v3957, %v3961
        %v3966 = vand.u32 2147483647, %v3928
        %vm3967 = vcmp.eq.f32.partialorder %v3966, 8.507059e+37
        %v3968 = vand.u32 %v3928, 2147483648
        %v3969 = vor.u32 1.1754944e-38, %v3968
        %v3970 = vsel %vm3967, %v3969, %v3965
        %v3971 = vmul.f32 %v3915, %v3942
        %v3972 = vmul.f32 %v3917, %v3956
        %v3973 = vmul.f32 %v3919, %v3970
        %3974 = vrot.lane.b32.xlu0 %v3841, 64
        %v3975 = vpop.permute.xlu0 %3974
        %3976 = vrot.lane.b32.xlu0 %v3844, 64
        %v3977 = vpop.permute.xlu0 %3976
        %3978 = vrot.lane.b32.xlu0 %v3847, 64
        %v3979 = vpop.permute.xlu0 %3978
        %v3984 = vsel %vm1616, %v3971, 0
        %v3987 = vsel %vm1616, %v3972, 0
        %v3990 = vsel %vm1616, %v3973, 0
        %3992 = vmatpush.msra.mxu0 0.0
        %3993 = vmatpush.msra.mxu0 0.0
        %3994 = vmatpush.msra.mxu0 0.0
        %3995 = vmatpush.msra.mxu0 0.0
        %3996 = vmatpush.msra.mxu0 0.0
        %3997 = vmatpush.msra.mxu0 0.0
        %3998 = vmatpush.msra.mxu0 0.0
        %3999 = vmatpush.msra.mxu0 0.0
        %4000 = vmatpush.msra.mxu0 0.0
        %4001 = vmatpush.msra.mxu0 0.0
        %4002 = vmatpush.msra.mxu0 0.0
        %4003 = vmatpush.msra.mxu0 0.0
        %4004 = vmatpush.msra.mxu0 0.0
        %4005 = vmatpush.msra.mxu0 %v3979
        %4006 = vmatpush.msra.mxu0 %v3977
        %4007 = vmatpush.msra.mxu0 %v3975
        %4008 = vmatmul.f32.gmra.mxu0 %v3984
        %v4009 = vpop.f32.mrf.mxu0
        %v4010 = vadd.f32 0.0, %v4009
        %4011 = vmatmul.f32.gmra.mxu0 %v3987
        %v4012 = vpop.f32.mrf.mxu0
        %v4013 = vadd.f32 0.0, %v4012
        %4014 = vmatmul.f32.gmra.mxu0 %v3990
        %v4015 = vpop.f32.mrf.mxu0
        %v4016 = vadd.f32 0.0, %v4015
        %4017 = vdwg.mxu0
        %4018 = vrot.lane.b32.xlu0 %v3841, 120
        %v4019 = vpop.permute.xlu0 %4018
        %4020 = vrot.lane.b32.xlu0 %v3844, 120
        %v4021 = vpop.permute.xlu0 %4020
        %4022 = vrot.lane.b32.xlu0 %v3847, 120
        %v4023 = vpop.permute.xlu0 %4022
        %4024 = vrot.lane.b32.xlu0 %v3841, 88
        %v4025 = vpop.permute.xlu0 %4024
        %4026 = vrot.lane.b32.xlu0 %v3844, 88
        %v4027 = vpop.permute.xlu0 %4026
        %4028 = vrot.lane.b32.xlu0 %v3847, 88
        %v4029 = vpop.permute.xlu0 %4028
        %v4030 = vsel %vm952, %v4019, 0
        %v4032 = vsel %vm952, %v4021, 0
        %v4034 = vsel %vm952, %v4023, 0
        %v4036 = vsel %vm952, %v4025, 0
        %v4038 = vsel %vm952, %v4027, 0
        %v4040 = vsel %vm952, %v4029, 0
        %4042 = vmatpush.xpose.msra.mxu0 0.0
        %4043 = vmatpush.xpose.msra.mxu0 0.0
        %4044 = vmatpush.xpose.msra.mxu0 0.0
        %4045 = vmatpush.xpose.msra.mxu0 0.0
        %4046 = vmatpush.xpose.msra.mxu0 0.0
        %4047 = vmatpush.xpose.msra.mxu0 0.0
        %4048 = vmatpush.xpose.msra.mxu0 0.0
        %4049 = vmatpush.xpose.msra.mxu0 0.0
        %4050 = vmatpush.xpose.msra.mxu0 0.0
        %4051 = vmatpush.xpose.msra.mxu0 0.0
        %4052 = vmatpush.xpose.msra.mxu0 0.0
        %4053 = vmatpush.xpose.msra.mxu0 0.0
        %4054 = vmatpush.xpose.msra.mxu0 0.0
        %4055 = vmatpush.xpose.msra.mxu0 %v4040
        %4056 = vmatpush.xpose.msra.mxu0 %v4038
        %4057 = vmatpush.xpose.msra.mxu0 %v4036
        %4058 = vmatmul.f32.gmra.mxu0 %v4030
        %v4059 = vpop.f32.mrf.mxu0
        %v4060 = vadd.f32 0.0, %v4059
        %4061 = vmatmul.f32.gmra.mxu0 %v4032
        %v4062 = vpop.f32.mrf.mxu0
        %v4063 = vadd.f32 0.0, %v4062
        %4064 = vmatmul.f32.gmra.mxu0 %v4034
        %v4065 = vpop.f32.mrf.mxu0
        %v4066 = vadd.f32 0.0, %v4065
        %4067 = vdwg.mxu0
        %v4068 = vmul.f32 %v4060, 0.35355338
        %v4069 = vmul.f32 %v4063, 0.35355338
        %v4070 = vmul.f32 %v4066, 0.35355338
        %v4071 = vadd.f32 %v4068, %v2813
        %v4072 = vadd.f32 %v4069, %v2813
        %v4073 = vadd.f32 %v4070, %v2813
        %v4074 = vsel %vm1616, %v4071, -inf
        %4075 = vmax.xlane.f32.xlu0 %v4074
        %v4076 = vpop.xlane.xlu0 %4075
        %v4077 = vsel %vm1616, %v4072, -inf
        %4078 = vmax.xlane.f32.xlu0 %v4077
        %v4079 = vpop.xlane.xlu0 %4078
        %v4080 = vsel %vm1616, %v4073, -inf
        %4081 = vmax.xlane.f32.xlu0 %v4080
        %v4082 = vpop.xlane.xlu0 %4081
        %v4083 = vsub.f32 %v4071, %v4076
        %v4084 = vsub.f32 %v4072, %v4079
        %v4085 = vsub.f32 %v4073, %v4082
        %v4086 = vmul.f32 %v4083, 1.442695
        %v4087 = vpow.pop %v4086
        %v4088 = vmul.f32 %v4084, 1.442695
        %v4089 = vpow.pop %v4088
        %v4090 = vmul.f32 %v4085, 1.442695
        %v4091 = vpow.pop %v4090
        %v4092 = vsel %vm1616, %v4087, 0.0
        %4093 = vadd.xlane.f32.xlu0 %v4092
        %v4094 = vpop.xlane.xlu0 %4093
        %v4095 = vsel %vm1616, %v4089, 0.0
        %4096 = vadd.xlane.f32.xlu0 %v4095
        %v4097 = vpop.xlane.xlu0 %4096
        %v4098 = vsel %vm1616, %v4091, 0.0
        %4099 = vadd.xlane.f32.xlu0 %v4098
        %v4100 = vpop.xlane.xlu0 %4099
        %v4101 = vrcp.pop %v4094
        %v4102 = vmul.f32 %v4094, %v4101
        %v4103 = vsub.f32 1.0, %v4102
        %v4104 = vmul.f32 %v4101, %v4103
        %v4105 = vadd.f32 %v4101, %v4104
        %vm4106 = vweird.f32 %v4094
        %vm4107 = vweird.f32 %v4101
        %vm4108 = vmor %vm4106, %vm4107
        %v4109 = vsel %vm4108, %v4101, %v4105
        %v4110 = vand.u32 2147483647, %v4094
        %vm4111 = vcmp.eq.f32.partialorder %v4110, 8.507059e+37
        %v4112 = vand.u32 %v4094, 2147483648
        %v4113 = vor.u32 1.1754944e-38, %v4112
        %v4114 = vsel %vm4111, %v4113, %v4109
        %v4115 = vrcp.pop %v4097
        %v4116 = vmul.f32 %v4097, %v4115
        %v4117 = vsub.f32 1.0, %v4116
        %v4118 = vmul.f32 %v4115, %v4117
        %v4119 = vadd.f32 %v4115, %v4118
        %vm4120 = vweird.f32 %v4097
        %vm4121 = vweird.f32 %v4115
        %vm4122 = vmor %vm4120, %vm4121
        %v4123 = vsel %vm4122, %v4115, %v4119
        %v4124 = vand.u32 2147483647, %v4097
        %vm4125 = vcmp.eq.f32.partialorder %v4124, 8.507059e+37
        %v4126 = vand.u32 %v4097, 2147483648
        %v4127 = vor.u32 1.1754944e-38, %v4126
        %v4128 = vsel %vm4125, %v4127, %v4123
        %v4129 = vrcp.pop %v4100
        %v4130 = vmul.f32 %v4100, %v4129
        %v4131 = vsub.f32 1.0, %v4130
        %v4132 = vmul.f32 %v4129, %v4131
        %v4133 = vadd.f32 %v4129, %v4132
        %vm4134 = vweird.f32 %v4100
        %vm4135 = vweird.f32 %v4129
        %vm4136 = vmor %vm4134, %vm4135
        %v4137 = vsel %vm4136, %v4129, %v4133
        %v4138 = vand.u32 2147483647, %v4100
        %vm4139 = vcmp.eq.f32.partialorder %v4138, 8.507059e+37
        %v4140 = vand.u32 %v4100, 2147483648
        %v4141 = vor.u32 1.1754944e-38, %v4140
        %v4142 = vsel %vm4139, %v4141, %v4137
        %v4143 = vmul.f32 %v4087, %v4114
        %v4144 = vmul.f32 %v4089, %v4128
        %v4145 = vmul.f32 %v4091, %v4142
        %4146 = vrot.lane.b32.xlu0 %v3841, 56
        %v4147 = vpop.permute.xlu0 %4146
        %4148 = vrot.lane.b32.xlu0 %v3844, 56
        %v4149 = vpop.permute.xlu0 %4148
        %4150 = vrot.lane.b32.xlu0 %v3847, 56
        %v4151 = vpop.permute.xlu0 %4150
        %v4156 = vsel %vm1616, %v4143, 0
        %v4159 = vsel %vm1616, %v4144, 0
        %v4162 = vsel %vm1616, %v4145, 0
        %4164 = vmatpush.msra.mxu0 0.0
        %4165 = vmatpush.msra.mxu0 0.0
        %4166 = vmatpush.msra.mxu0 0.0
        %4167 = vmatpush.msra.mxu0 0.0
        %4168 = vmatpush.msra.mxu0 0.0
        %4169 = vmatpush.msra.mxu0 0.0
        %4170 = vmatpush.msra.mxu0 0.0
        %4171 = vmatpush.msra.mxu0 0.0
        %4172 = vmatpush.msra.mxu0 0.0
        %4173 = vmatpush.msra.mxu0 0.0
        %4174 = vmatpush.msra.mxu0 0.0
        %4175 = vmatpush.msra.mxu0 0.0
        %4176 = vmatpush.msra.mxu0 0.0
        %4177 = vmatpush.msra.mxu0 %v4151
        %4178 = vmatpush.msra.mxu0 %v4149
        %4179 = vmatpush.msra.mxu0 %v4147
        %4180 = vmatmul.f32.gmra.mxu0 %v4156
        %v4181 = vpop.f32.mrf.mxu0
        %v4182 = vadd.f32 0.0, %v4181
        %4183 = vmatmul.f32.gmra.mxu0 %v4159
        %v4184 = vpop.f32.mrf.mxu0
        %v4185 = vadd.f32 0.0, %v4184
        %4186 = vmatmul.f32.gmra.mxu0 %v4162
        %v4187 = vpop.f32.mrf.mxu0
        %v4188 = vadd.f32 0.0, %v4187
        %4189 = vdwg.mxu0
        %4190 = vrot.lane.b32.xlu0 %v3841, 112
        %v4191 = vpop.permute.xlu0 %4190
        %4192 = vrot.lane.b32.xlu0 %v3844, 112
        %v4193 = vpop.permute.xlu0 %4192
        %4194 = vrot.lane.b32.xlu0 %v3847, 112
        %v4195 = vpop.permute.xlu0 %4194
        %4196 = vrot.lane.b32.xlu0 %v3841, 80
        %v4197 = vpop.permute.xlu0 %4196
        %4198 = vrot.lane.b32.xlu0 %v3844, 80
        %v4199 = vpop.permute.xlu0 %4198
        %4200 = vrot.lane.b32.xlu0 %v3847, 80
        %v4201 = vpop.permute.xlu0 %4200
        %v4202 = vsel %vm952, %v4191, 0
        %v4204 = vsel %vm952, %v4193, 0
        %v4206 = vsel %vm952, %v4195, 0
        %v4208 = vsel %vm952, %v4197, 0
        %v4210 = vsel %vm952, %v4199, 0
        %v4212 = vsel %vm952, %v4201, 0
        %4214 = vmatpush.xpose.msra.mxu0 0.0
        %4215 = vmatpush.xpose.msra.mxu0 0.0
        %4216 = vmatpush.xpose.msra.mxu0 0.0
        %4217 = vmatpush.xpose.msra.mxu0 0.0
        %4218 = vmatpush.xpose.msra.mxu0 0.0
        %4219 = vmatpush.xpose.msra.mxu0 0.0
        %4220 = vmatpush.xpose.msra.mxu0 0.0
        %4221 = vmatpush.xpose.msra.mxu0 0.0
        %4222 = vmatpush.xpose.msra.mxu0 0.0
        %4223 = vmatpush.xpose.msra.mxu0 0.0
        %4224 = vmatpush.xpose.msra.mxu0 0.0
        %4225 = vmatpush.xpose.msra.mxu0 0.0
        %4226 = vmatpush.xpose.msra.mxu0 0.0
        %4227 = vmatpush.xpose.msra.mxu0 %v4212
        %4228 = vmatpush.xpose.msra.mxu0 %v4210
        %4229 = vmatpush.xpose.msra.mxu0 %v4208
        %4230 = vmatmul.f32.gmra.mxu0 %v4202
        %v4231 = vpop.f32.mrf.mxu0
        %v4232 = vadd.f32 0.0, %v4231
        %4233 = vmatmul.f32.gmra.mxu0 %v4204
        %v4234 = vpop.f32.mrf.mxu0
        %v4235 = vadd.f32 0.0, %v4234
        %4236 = vmatmul.f32.gmra.mxu0 %v4206
        %v4237 = vpop.f32.mrf.mxu0
        %v4238 = vadd.f32 0.0, %v4237
        %4239 = vdwg.mxu0
        %v4240 = vmul.f32 %v4232, 0.35355338
        %v4241 = vmul.f32 %v4235, 0.35355338
        %v4242 = vmul.f32 %v4238, 0.35355338
        %v4243 = vadd.f32 %v4240, %v2813
        %v4244 = vadd.f32 %v4241, %v2813
        %v4245 = vadd.f32 %v4242, %v2813
        %v4246 = vsel %vm1616, %v4243, -inf
        %4247 = vmax.xlane.f32.xlu0 %v4246
        %v4248 = vpop.xlane.xlu0 %4247
        %v4249 = vsel %vm1616, %v4244, -inf
        %4250 = vmax.xlane.f32.xlu0 %v4249
        %v4251 = vpop.xlane.xlu0 %4250
        %v4252 = vsel %vm1616, %v4245, -inf
        %4253 = vmax.xlane.f32.xlu0 %v4252
        %v4254 = vpop.xlane.xlu0 %4253
        %v4255 = vsub.f32 %v4243, %v4248
        %v4256 = vsub.f32 %v4244, %v4251
        %v4257 = vsub.f32 %v4245, %v4254
        %v4258 = vmul.f32 %v4255, 1.442695
        %v4259 = vpow.pop %v4258
        %v4260 = vmul.f32 %v4256, 1.442695
        %v4261 = vpow.pop %v4260
        %v4262 = vmul.f32 %v4257, 1.442695
        %v4263 = vpow.pop %v4262
        %v4264 = vsel %vm1616, %v4259, 0.0
        %4265 = vadd.xlane.f32.xlu0 %v4264
        %v4266 = vpop.xlane.xlu0 %4265
        %v4267 = vsel %vm1616, %v4261, 0.0
        %4268 = vadd.xlane.f32.xlu0 %v4267
        %v4269 = vpop.xlane.xlu0 %4268
        %v4270 = vsel %vm1616, %v4263, 0.0
        %4271 = vadd.xlane.f32.xlu0 %v4270
        %v4272 = vpop.xlane.xlu0 %4271
        %v4273 = vrcp.pop %v4266
        %v4274 = vmul.f32 %v4266, %v4273
        %v4275 = vsub.f32 1.0, %v4274
        %v4276 = vmul.f32 %v4273, %v4275
        %v4277 = vadd.f32 %v4273, %v4276
        %vm4278 = vweird.f32 %v4266
        %vm4279 = vweird.f32 %v4273
        %vm4280 = vmor %vm4278, %vm4279
        %v4281 = vsel %vm4280, %v4273, %v4277
        %v4282 = vand.u32 2147483647, %v4266
        %vm4283 = vcmp.eq.f32.partialorder %v4282, 8.507059e+37
        %v4284 = vand.u32 %v4266, 2147483648
        %v4285 = vor.u32 1.1754944e-38, %v4284
        %v4286 = vsel %vm4283, %v4285, %v4281
        %v4287 = vrcp.pop %v4269
        %v4288 = vmul.f32 %v4269, %v4287
        %v4289 = vsub.f32 1.0, %v4288
        %v4290 = vmul.f32 %v4287, %v4289
        %v4291 = vadd.f32 %v4287, %v4290
        %vm4292 = vweird.f32 %v4269
        %vm4293 = vweird.f32 %v4287
        %vm4294 = vmor %vm4292, %vm4293
        %v4295 = vsel %vm4294, %v4287, %v4291
        %v4296 = vand.u32 2147483647, %v4269
        %vm4297 = vcmp.eq.f32.partialorder %v4296, 8.507059e+37
        %v4298 = vand.u32 %v4269, 2147483648
        %v4299 = vor.u32 1.1754944e-38, %v4298
        %v4300 = vsel %vm4297, %v4299, %v4295
        %v4301 = vrcp.pop %v4272
        %v4302 = vmul.f32 %v4272, %v4301
        %v4303 = vsub.f32 1.0, %v4302
        %v4304 = vmul.f32 %v4301, %v4303
        %v4305 = vadd.f32 %v4301, %v4304
        %vm4306 = vweird.f32 %v4272
        %vm4307 = vweird.f32 %v4301
        %vm4308 = vmor %vm4306, %vm4307
        %v4309 = vsel %vm4308, %v4301, %v4305
        %v4310 = vand.u32 2147483647, %v4272
        %vm4311 = vcmp.eq.f32.partialorder %v4310, 8.507059e+37
        %v4312 = vand.u32 %v4272, 2147483648
        %v4313 = vor.u32 1.1754944e-38, %v4312
        %v4314 = vsel %vm4311, %v4313, %v4309
        %v4315 = vmul.f32 %v4259, %v4286
        %v4316 = vmul.f32 %v4261, %v4300
        %v4317 = vmul.f32 %v4263, %v4314
        %4318 = vrot.lane.b32.xlu0 %v3841, 48
        %v4319 = vpop.permute.xlu0 %4318
        %4320 = vrot.lane.b32.xlu0 %v3844, 48
        %v4321 = vpop.permute.xlu0 %4320
        %4322 = vrot.lane.b32.xlu0 %v3847, 48
        %v4323 = vpop.permute.xlu0 %4322
        %v4328 = vsel %vm1616, %v4315, 0
        %v4331 = vsel %vm1616, %v4316, 0
        %v4334 = vsel %vm1616, %v4317, 0
        %4336 = vmatpush.msra.mxu0 0.0
        %4337 = vmatpush.msra.mxu0 0.0
        %4338 = vmatpush.msra.mxu0 0.0
        %4339 = vmatpush.msra.mxu0 0.0
        %4340 = vmatpush.msra.mxu0 0.0
        %4341 = vmatpush.msra.mxu0 0.0
        %4342 = vmatpush.msra.mxu0 0.0
        %4343 = vmatpush.msra.mxu0 0.0
        %4344 = vmatpush.msra.mxu0 0.0
        %4345 = vmatpush.msra.mxu0 0.0
        %4346 = vmatpush.msra.mxu0 0.0
        %4347 = vmatpush.msra.mxu0 0.0
        %4348 = vmatpush.msra.mxu0 0.0
        %4349 = vmatpush.msra.mxu0 %v4323
        %4350 = vmatpush.msra.mxu0 %v4321
        %4351 = vmatpush.msra.mxu0 %v4319
        %4352 = vmatmul.f32.gmra.mxu0 %v4328
        %v4353 = vpop.f32.mrf.mxu0
        %v4354 = vadd.f32 0.0, %v4353
        %4355 = vmatmul.f32.gmra.mxu0 %v4331
        %v4356 = vpop.f32.mrf.mxu0
        %v4357 = vadd.f32 0.0, %v4356
        %4358 = vmatmul.f32.gmra.mxu0 %v4334
        %v4359 = vpop.f32.mrf.mxu0
        %v4360 = vadd.f32 0.0, %v4359
        %4361 = vdwg.mxu0
        %4362 = vrot.lane.b32.xlu0 %v3841, 104
        %v4363 = vpop.permute.xlu0 %4362
        %4364 = vrot.lane.b32.xlu0 %v3844, 104
        %v4365 = vpop.permute.xlu0 %4364
        %4366 = vrot.lane.b32.xlu0 %v3847, 104
        %v4367 = vpop.permute.xlu0 %4366
        %4368 = vrot.lane.b32.xlu0 %v3841, 72
        %v4369 = vpop.permute.xlu0 %4368
        %4370 = vrot.lane.b32.xlu0 %v3844, 72
        %v4371 = vpop.permute.xlu0 %4370
        %4372 = vrot.lane.b32.xlu0 %v3847, 72
        %v4373 = vpop.permute.xlu0 %4372
        %v4374 = vsel %vm952, %v4363, 0
        %v4376 = vsel %vm952, %v4365, 0
        %v4378 = vsel %vm952, %v4367, 0
        %v4380 = vsel %vm952, %v4369, 0
        %v4382 = vsel %vm952, %v4371, 0
        %v4384 = vsel %vm952, %v4373, 0
        %4386 = vmatpush.xpose.msra.mxu0 0.0
        %4387 = vmatpush.xpose.msra.mxu0 0.0
        %4388 = vmatpush.xpose.msra.mxu0 0.0
        %4389 = vmatpush.xpose.msra.mxu0 0.0
        %4390 = vmatpush.xpose.msra.mxu0 0.0
        %4391 = vmatpush.xpose.msra.mxu0 0.0
        %4392 = vmatpush.xpose.msra.mxu0 0.0
        %4393 = vmatpush.xpose.msra.mxu0 0.0
        %4394 = vmatpush.xpose.msra.mxu0 0.0
        %4395 = vmatpush.xpose.msra.mxu0 0.0
        %4396 = vmatpush.xpose.msra.mxu0 0.0
        %4397 = vmatpush.xpose.msra.mxu0 0.0
        %4398 = vmatpush.xpose.msra.mxu0 0.0
        %4399 = vmatpush.xpose.msra.mxu0 %v4384
        %4400 = vmatpush.xpose.msra.mxu0 %v4382
        %4401 = vmatpush.xpose.msra.mxu0 %v4380
        %4402 = vmatmul.f32.gmra.mxu0 %v4374
        %v4403 = vpop.f32.mrf.mxu0
        %v4404 = vadd.f32 0.0, %v4403
        %4405 = vmatmul.f32.gmra.mxu0 %v4376
        %v4406 = vpop.f32.mrf.mxu0
        %v4407 = vadd.f32 0.0, %v4406
        %4408 = vmatmul.f32.gmra.mxu0 %v4378
        %v4409 = vpop.f32.mrf.mxu0
        %v4410 = vadd.f32 0.0, %v4409
        %4411 = vdwg.mxu0
        %v4412 = vmul.f32 %v4404, 0.35355338
        %v4413 = vmul.f32 %v4407, 0.35355338
        %v4414 = vmul.f32 %v4410, 0.35355338
        %v4415 = vadd.f32 %v4412, %v2813
        %v4416 = vadd.f32 %v4413, %v2813
        %v4417 = vadd.f32 %v4414, %v2813
        %v4418 = vsel %vm1616, %v4415, -inf
        %4419 = vmax.xlane.f32.xlu0 %v4418
        %v4420 = vpop.xlane.xlu0 %4419
        %v4421 = vsel %vm1616, %v4416, -inf
        %4422 = vmax.xlane.f32.xlu0 %v4421
        %v4423 = vpop.xlane.xlu0 %4422
        %v4424 = vsel %vm1616, %v4417, -inf
        %4425 = vmax.xlane.f32.xlu0 %v4424
        %v4426 = vpop.xlane.xlu0 %4425
        %v4427 = vsub.f32 %v4415, %v4420
        %v4428 = vsub.f32 %v4416, %v4423
        %v4429 = vsub.f32 %v4417, %v4426
        %v4430 = vmul.f32 %v4427, 1.442695
        %v4431 = vpow.pop %v4430
        %v4432 = vmul.f32 %v4428, 1.442695
        %v4433 = vpow.pop %v4432
        %v4434 = vmul.f32 %v4429, 1.442695
        %v4435 = vpow.pop %v4434
        %v4436 = vsel %vm1616, %v4431, 0.0
        %4437 = vadd.xlane.f32.xlu0 %v4436
        %v4438 = vpop.xlane.xlu0 %4437
        %v4439 = vsel %vm1616, %v4433, 0.0
        %4440 = vadd.xlane.f32.xlu0 %v4439
        %v4441 = vpop.xlane.xlu0 %4440
        %v4442 = vsel %vm1616, %v4435, 0.0
        %4443 = vadd.xlane.f32.xlu0 %v4442
        %v4444 = vpop.xlane.xlu0 %4443
        %v4445 = vrcp.pop %v4438
        %v4446 = vmul.f32 %v4438, %v4445
        %v4447 = vsub.f32 1.0, %v4446
        %v4448 = vmul.f32 %v4445, %v4447
        %v4449 = vadd.f32 %v4445, %v4448
        %vm4450 = vweird.f32 %v4438
        %vm4451 = vweird.f32 %v4445
        %vm4452 = vmor %vm4450, %vm4451
        %v4453 = vsel %vm4452, %v4445, %v4449
        %v4454 = vand.u32 2147483647, %v4438
        %vm4455 = vcmp.eq.f32.partialorder %v4454, 8.507059e+37
        %v4456 = vand.u32 %v4438, 2147483648
        %v4457 = vor.u32 1.1754944e-38, %v4456
        %v4458 = vsel %vm4455, %v4457, %v4453
        %v4459 = vrcp.pop %v4441
        %v4460 = vmul.f32 %v4441, %v4459
        %v4461 = vsub.f32 1.0, %v4460
        %v4462 = vmul.f32 %v4459, %v4461
        %v4463 = vadd.f32 %v4459, %v4462
        %vm4464 = vweird.f32 %v4441
        %vm4465 = vweird.f32 %v4459
        %vm4466 = vmor %vm4464, %vm4465
        %v4467 = vsel %vm4466, %v4459, %v4463
        %v4468 = vand.u32 2147483647, %v4441
        %vm4469 = vcmp.eq.f32.partialorder %v4468, 8.507059e+37
        %v4470 = vand.u32 %v4441, 2147483648
        %v4471 = vor.u32 1.1754944e-38, %v4470
        %v4472 = vsel %vm4469, %v4471, %v4467
        %v4473 = vrcp.pop %v4444
        %v4474 = vmul.f32 %v4444, %v4473
        %v4475 = vsub.f32 1.0, %v4474
        %v4476 = vmul.f32 %v4473, %v4475
        %v4477 = vadd.f32 %v4473, %v4476
        %vm4478 = vweird.f32 %v4444
        %vm4479 = vweird.f32 %v4473
        %vm4480 = vmor %vm4478, %vm4479
        %v4481 = vsel %vm4480, %v4473, %v4477
        %v4482 = vand.u32 2147483647, %v4444
        %vm4483 = vcmp.eq.f32.partialorder %v4482, 8.507059e+37
        %v4484 = vand.u32 %v4444, 2147483648
        %v4485 = vor.u32 1.1754944e-38, %v4484
        %v4486 = vsel %vm4483, %v4485, %v4481
        %v4487 = vmul.f32 %v4431, %v4458
        %v4488 = vmul.f32 %v4433, %v4472
        %v4489 = vmul.f32 %v4435, %v4486
        %4490 = vrot.lane.b32.xlu0 %v3841, 40
        %v4491 = vpop.permute.xlu0 %4490
        %4492 = vrot.lane.b32.xlu0 %v3844, 40
        %v4493 = vpop.permute.xlu0 %4492
        %4494 = vrot.lane.b32.xlu0 %v3847, 40
        %v4495 = vpop.permute.xlu0 %4494
        %v4500 = vsel %vm1616, %v4487, 0
        %v4503 = vsel %vm1616, %v4488, 0
        %v4506 = vsel %vm1616, %v4489, 0
        %4508 = vmatpush.msra.mxu0 0.0
        %4509 = vmatpush.msra.mxu0 0.0
        %4510 = vmatpush.msra.mxu0 0.0
        %4511 = vmatpush.msra.mxu0 0.0
        %4512 = vmatpush.msra.mxu0 0.0
        %4513 = vmatpush.msra.mxu0 0.0
        %4514 = vmatpush.msra.mxu0 0.0
        %4515 = vmatpush.msra.mxu0 0.0
        %4516 = vmatpush.msra.mxu0 0.0
        %4517 = vmatpush.msra.mxu0 0.0
        %4518 = vmatpush.msra.mxu0 0.0
        %4519 = vmatpush.msra.mxu0 0.0
        %4520 = vmatpush.msra.mxu0 0.0
        %4521 = vmatpush.msra.mxu0 %v4495
        %4522 = vmatpush.msra.mxu0 %v4493
        %4523 = vmatpush.msra.mxu0 %v4491
        %4524 = vmatmul.f32.gmra.mxu0 %v4500
        %v4525 = vpop.f32.mrf.mxu0
        %v4526 = vadd.f32 0.0, %v4525
        %4527 = vmatmul.f32.gmra.mxu0 %v4503
        %v4528 = vpop.f32.mrf.mxu0
        %v4529 = vadd.f32 0.0, %v4528
        %4530 = vmatmul.f32.gmra.mxu0 %v4506
        %v4531 = vpop.f32.mrf.mxu0
        %v4532 = vadd.f32 0.0, %v4531
        %4533 = vdwg.mxu0
        %4537 = vrot.lane.b32.xlu0 %v4182, 8
        %v4538 = vpop.permute.xlu0 %4537
        %4539 = vrot.lane.b32.xlu0 %v4185, 8
        %v4540 = vpop.permute.xlu0 %4539
        %4541 = vrot.lane.b32.xlu0 %v4188, 8
        %v4542 = vpop.permute.xlu0 %4541
        %4549 = vrot.lane.b32.xlu0 %v4354, 16
        %v4550 = vpop.permute.xlu0 %4549
        %4551 = vrot.lane.b32.xlu0 %v4357, 16
        %v4552 = vpop.permute.xlu0 %4551
        %4553 = vrot.lane.b32.xlu0 %v4360, 16
        %v4554 = vpop.permute.xlu0 %4553
        %4561 = vrot.lane.b32.xlu0 %v4526, 24
        %v4562 = vpop.permute.xlu0 %4561
        %4563 = vrot.lane.b32.xlu0 %v4529, 24
        %v4564 = vpop.permute.xlu0 %4563
        %4565 = vrot.lane.b32.xlu0 %v4532, 24
        %v4566 = vpop.permute.xlu0 %4565
        %v4570 = vsel %vm952, %v4010, %v4538
        %v4571 = vsel %vm952, %v4013, %v4540
        %v4572 = vsel %vm952, %v4016, %v4542
        %v4573 = vsel %vm1132, %v4570, %v4550
        %v4574 = vsel %vm1132, %v4571, %v4552
        %v4575 = vsel %vm1132, %v4572, %v4554
        %v4576 = vsel %vm1616, %v4573, %v4562
        %v4577 = vsel %vm1616, %v4574, %v4564
        %v4578 = vsel %vm1616, %v4575, %v4566
        %v4579 = vperm.slane %v3738, 1
        %v4581 = vsel %vm982, %v4576, 0
        %v4584 = vsel %vm982, %v4577, 0
        %v4587 = vsel %vm982, %v4578, 0
        %4589 = vmatpush.msra.mxu0 0.0
        %4590 = vmatpush.msra.mxu0 0.0
        %4591 = vmatpush.msra.mxu0 0.0
        %4592 = vmatpush.msra.mxu0 0.0
        %4593 = vmatpush.msra.mxu0 0.0
        %4594 = vmatpush.msra.mxu0 0.0
        %4595 = vmatpush.msra.mxu0 0.0
        %4596 = vmatpush.msra.mxu0 0.0
        %4597 = vmatpush.msra.mxu0 0.0
        %4598 = vmatpush.msra.mxu0 0.0
        %4599 = vmatpush.msra.mxu0 0.0
        %4600 = vmatpush.msra.mxu0 0.0
        %4601 = vmatpush.msra.mxu0 %v3722
        %4602 = vmatpush.msra.mxu0 %v3721
        %4603 = vmatpush.msra.mxu0 %v3720
        %4604 = vmatpush.msra.mxu0 %v3719
        %4605 = vmatmul.f32.gmra.mxu0 %v4581
        %v4606 = vpop.f32.mrf.mxu0
        %v4607 = vadd.f32 %v4579, %v4606
        %4608 = vmatmul.f32.gmra.mxu0 %v4584
        %v4609 = vpop.f32.mrf.mxu0
        %v4610 = vadd.f32 %v4579, %v4609
        %4611 = vmatmul.f32.gmra.mxu0 %v4587
        %v4612 = vpop.f32.mrf.mxu0
        %v4613 = vadd.f32 %v4579, %v4612
        %4614 = vdwg.mxu0
        %v4615 = vadd.f32 %v3710, %v4607
        %v4616 = vadd.f32 %v3711, %v4610
        %v4617 = vadd.f32 %v3712, %v4613
        %v4618 = vsel %vm982, %v4615, 0.0
        %4619 = vadd.xlane.f32.xlu0 %v4618
        %v4620 = vpop.xlane.xlu0 %4619
        %v4621 = vsel %vm982, %v4616, 0.0
        %4622 = vadd.xlane.f32.xlu0 %v4621
        %v4623 = vpop.xlane.xlu0 %4622
        %v4624 = vsel %vm982, %v4617, 0.0
        %4625 = vadd.xlane.f32.xlu0 %v4624
        %v4626 = vpop.xlane.xlu0 %4625
        %v4627 = vmul.f32 %v4620, %v1018
        %v4628 = vmul.f32 %v4623, %v1018
        %v4629 = vmul.f32 %v4626, %v1018
        %v4630 = vsub.f32 %v4615, %v4627
        %v4631 = vsub.f32 %v4616, %v4628
        %v4632 = vsub.f32 %v4617, %v4629
        %v4633 = vmul.f32 %v4630, %v4630
        %v4634 = vmul.f32 %v4631, %v4631
        %v4635 = vmul.f32 %v4632, %v4632
        %v4636 = vsel %vm982, %v4633, 0.0
        %4637 = vadd.xlane.f32.xlu0 %v4636
        %v4638 = vpop.xlane.xlu0 %4637
        %v4639 = vsel %vm982, %v4634, 0.0
        %4640 = vadd.xlane.f32.xlu0 %v4639
        %v4641 = vpop.xlane.xlu0 %4640
        %v4642 = vsel %vm982, %v4635, 0.0
        %4643 = vadd.xlane.f32.xlu0 %v4642
        %v4644 = vpop.xlane.xlu0 %4643
        %v4645 = vmul.f32 %v4638, %v1018
        %v4646 = vmul.f32 %v4641, %v1018
        %v4647 = vmul.f32 %v4644, %v1018
        %v4648 = vadd.f32 %v4645, 1e-05
        %v4649 = vadd.f32 %v4646, 1e-05
        %v4650 = vadd.f32 %v4647, 1e-05
        %v4651 = vrsqrt.pop %v4648
        %v4652 = vmul.f32 %v4651, %v4648
        %v4653 = vmul.f32 %v4652, %v4651
        %v4654 = vmul.f32 0.5, %v4653
        %v4655 = vsub.f32 1.5, %v4654
        %v4656 = vmul.f32 %v4651, %v4655
        %vm4657 = vweird.f32 %v4648
        %vm4658 = vweird.f32 %v4651
        %vm4659 = vmor %vm4657, %vm4658
        %v4660 = vsel %vm4659, %v4651, %v4656
        %v4661 = vrsqrt.pop %v4649
        %v4662 = vmul.f32 %v4661, %v4649
        %v4663 = vmul.f32 %v4662, %v4661
        %v4664 = vmul.f32 0.5, %v4663
        %v4665 = vsub.f32 1.5, %v4664
        %v4666 = vmul.f32 %v4661, %v4665
        %vm4667 = vweird.f32 %v4649
        %vm4668 = vweird.f32 %v4661
        %vm4669 = vmor %vm4667, %vm4668
        %v4670 = vsel %vm4669, %v4661, %v4666
        %v4671 = vrsqrt.pop %v4650
        %v4672 = vmul.f32 %v4671, %v4650
        %v4673 = vmul.f32 %v4672, %v4671
        %v4674 = vmul.f32 0.5, %v4673
        %v4675 = vsub.f32 1.5, %v4674
        %v4676 = vmul.f32 %v4671, %v4675
        %vm4677 = vweird.f32 %v4650
        %vm4678 = vweird.f32 %v4671
        %vm4679 = vmor %vm4677, %vm4678
        %v4680 = vsel %vm4679, %v4671, %v4676
        %v4681 = vmul.f32 %v4630, %v4660
        %v4682 = vmul.f32 %v4631, %v4670
        %v4683 = vmul.f32 %v4632, %v4680
        %v4684 = vperm.slane %v3738, 6
        %v4685 = vmul.f32 %v4681, %v4684
        %v4686 = vmul.f32 %v4682, %v4684
        %v4687 = vmul.f32 %v4683, %v4684
        %v4688 = vperm.slane %v3738, 7
        %v4689 = vadd.f32 %v4685, %v4688
        %v4690 = vadd.f32 %v4686, %v4688
        %v4691 = vadd.f32 %v4687, %v4688
        %v4692 = vperm.slane %v3738, 2
        %v4694 = vsel %vm982, %v4689, 0
        %v4697 = vsel %vm982, %v4690, 0
        %v4700 = vsel %vm982, %v4691, 0
        %4702 = vmatpush.msra.mxu0 0.0
        %4703 = vmatpush.msra.mxu0 0.0
        %4704 = vmatpush.msra.mxu0 0.0
        %4705 = vmatpush.msra.mxu0 0.0
        %4706 = vmatpush.msra.mxu0 0.0
        %4707 = vmatpush.msra.mxu0 0.0
        %4708 = vmatpush.msra.mxu0 0.0
        %4709 = vmatpush.msra.mxu0 0.0
        %4710 = vmatpush.msra.mxu0 0.0
        %4711 = vmatpush.msra.mxu0 0.0
        %4712 = vmatpush.msra.mxu0 0.0
        %4713 = vmatpush.msra.mxu0 0.0
        %4714 = vmatpush.msra.mxu0 %v3727
        %4715 = vmatpush.msra.mxu0 %v3726
        %4716 = vmatpush.msra.mxu0 %v3725
        %4717 = vmatpush.msra.mxu0 %v3724
        %4718 = vmatmul.f32.gmra.mxu0 %v4694
        %v4719 = vpop.f32.mrf.mxu0
        %v4720 = vadd.f32 %v4692, %v4719
        %4721 = vmatmul.f32.gmra.mxu0 %v4697
        %v4722 = vpop.f32.mrf.mxu0
        %v4723 = vadd.f32 %v4692, %v4722
        %4724 = vmatmul.f32.gmra.mxu0 %v4700
        %v4725 = vpop.f32.mrf.mxu0
        %v4726 = vadd.f32 %v4692, %v4725
        %4727 = vdwg.mxu0
        %v4728 = vmul.f32 %v4720, %v4720
        %v4729 = vmul.f32 %v4723, %v4723
        %v4730 = vmul.f32 %v4726, %v4726
        %v4731 = vmul.f32 %v4720, %v4728
        %v4732 = vmul.f32 %v4723, %v4729
        %v4733 = vmul.f32 %v4726, %v4730
        %v4734 = vmul.f32 %v4731, 0.044715
        %v4735 = vmul.f32 %v4732, 0.044715
        %v4736 = vmul.f32 %v4733, 0.044715
        %v4737 = vadd.f32 %v4720, %v4734
        %v4738 = vadd.f32 %v4723, %v4735
        %v4739 = vadd.f32 %v4726, %v4736
        %v4740 = vmul.f32 %v4737, 0.7978846
        %v4741 = vmul.f32 %v4738, 0.7978846
        %v4742 = vmul.f32 %v4739, 0.7978846
        %v4743 = vtanh.pop %v4740
        %v4744 = vtanh.pop %v4741
        %v4745 = vtanh.pop %v4742
        %v4746 = vadd.f32 %v4743, 1.0
        %v4747 = vadd.f32 %v4744, 1.0
        %v4748 = vadd.f32 %v4745, 1.0
        %v4749 = vmul.f32 %v4746, 0.5
        %v4750 = vmul.f32 %v4747, 0.5
        %v4751 = vmul.f32 %v4748, 0.5
        %v4752 = vmul.f32 %v4720, %v4749
        %v4753 = vmul.f32 %v4723, %v4750
        %v4754 = vmul.f32 %v4726, %v4751
        %v4756 = vsel %vm1749, %v4752, 0
        %v4759 = vsel %vm1749, %v4753, 0
        %v4762 = vsel %vm1749, %v4754, 0
        %4764 = vmatpush.msra.mxu0 0.0
        %4765 = vmatpush.msra.mxu0 0.0
        %4766 = vmatpush.msra.mxu0 0.0
        %4767 = vmatpush.msra.mxu0 0.0
        %4768 = vmatpush.msra.mxu0 0.0
        %4769 = vmatpush.msra.mxu0 0.0
        %4770 = vmatpush.msra.mxu0 0.0
        %4771 = vmatpush.msra.mxu0 0.0
        %4772 = vmatpush.msra.mxu0 %v3736
        %4773 = vmatpush.msra.mxu0 %v3735
        %4774 = vmatpush.msra.mxu0 %v3734
        %4775 = vmatpush.msra.mxu0 %v3733
        %4776 = vmatpush.msra.mxu0 %v3732
        %4777 = vmatpush.msra.mxu0 %v3731
        %4778 = vmatpush.msra.mxu0 %v3730
        %4779 = vmatpush.msra.mxu0 %v3729
        %4780 = vmatmul.f32.gmra.mxu0 %v4756
        %v4781 = vpop.f32.mrf.mxu0
        %v4782 = vadd.f32 0.0, %v4781
        %4783 = vmatmul.f32.gmra.mxu0 %v4759
        %v4784 = vpop.f32.mrf.mxu0
        %v4785 = vadd.f32 0.0, %v4784
        %4786 = vmatmul.f32.gmra.mxu0 %v4762
        %v4787 = vpop.f32.mrf.mxu0
        %v4788 = vadd.f32 0.0, %v4787
        %4789 = vdwg.mxu0
        %v4790 = vadd.f32 %v4615, %v4782
        %v4791 = vadd.f32 %v4616, %v4785
        %v4792 = vadd.f32 %v4617, %v4788
        %v4793 = vperm.slane %v3738, 3
        %v4794 = vadd.f32 %v4790, %v4793
        %v4795 = vadd.f32 %v4791, %v4793
        %v4796 = vadd.f32 %v4792, %v4793
        %v4797 = vsel %vm982, %v4794, 0.0
        %4798 = vadd.xlane.f32.xlu0 %v4797
        %v4799 = vpop.xlane.xlu0 %4798
        %v4800 = vsel %vm982, %v4795, 0.0
        %4801 = vadd.xlane.f32.xlu0 %v4800
        %v4802 = vpop.xlane.xlu0 %4801
        %v4803 = vsel %vm982, %v4796, 0.0
        %4804 = vadd.xlane.f32.xlu0 %v4803
        %v4805 = vpop.xlane.xlu0 %4804
        %v4806 = vmul.f32 %v4799, %v1018
        %v4807 = vmul.f32 %v4802, %v1018
        %v4808 = vmul.f32 %v4805, %v1018
        %v4809 = vsub.f32 %v4794, %v4806
        %v4810 = vsub.f32 %v4795, %v4807
        %v4811 = vsub.f32 %v4796, %v4808
        %v4812 = vmul.f32 %v4809, %v4809
        %v4813 = vmul.f32 %v4810, %v4810
        %v4814 = vmul.f32 %v4811, %v4811
        %v4815 = vsel %vm982, %v4812, 0.0
        %4816 = vadd.xlane.f32.xlu0 %v4815
        %v4817 = vpop.xlane.xlu0 %4816
        %v4818 = vsel %vm982, %v4813, 0.0
        %4819 = vadd.xlane.f32.xlu0 %v4818
        %v4820 = vpop.xlane.xlu0 %4819
        %v4821 = vsel %vm982, %v4814, 0.0
        %4822 = vadd.xlane.f32.xlu0 %v4821
        %v4823 = vpop.xlane.xlu0 %4822
        %v4824 = vmul.f32 %v4817, %v1018
        %v4825 = vmul.f32 %v4820, %v1018
        %v4826 = vmul.f32 %v4823, %v1018
        %v4827 = vadd.f32 %v4824, 1e-05
        %v4828 = vadd.f32 %v4825, 1e-05
        %v4829 = vadd.f32 %v4826, 1e-05
        %v4830 = vrsqrt.pop %v4827
        %v4831 = vmul.f32 %v4830, %v4827
        %v4832 = vmul.f32 %v4831, %v4830
        %v4833 = vmul.f32 0.5, %v4832
        %v4834 = vsub.f32 1.5, %v4833
        %v4835 = vmul.f32 %v4830, %v4834
        %vm4836 = vweird.f32 %v4827
        %vm4837 = vweird.f32 %v4830
        %vm4838 = vmor %vm4836, %vm4837
        %v4839 = vsel %vm4838, %v4830, %v4835
        %v4840 = vrsqrt.pop %v4828
        %v4841 = vmul.f32 %v4840, %v4828
        %v4842 = vmul.f32 %v4841, %v4840
        %v4843 = vmul.f32 0.5, %v4842
        %v4844 = vsub.f32 1.5, %v4843
        %v4845 = vmul.f32 %v4840, %v4844
        %vm4846 = vweird.f32 %v4828
        %vm4847 = vweird.f32 %v4840
        %vm4848 = vmor %vm4846, %vm4847
        %v4849 = vsel %vm4848, %v4840, %v4845
        %v4850 = vrsqrt.pop %v4829
        %v4851 = vmul.f32 %v4850, %v4829
        %v4852 = vmul.f32 %v4851, %v4850
        %v4853 = vmul.f32 0.5, %v4852
        %v4854 = vsub.f32 1.5, %v4853
        %v4855 = vmul.f32 %v4850, %v4854
        %vm4856 = vweird.f32 %v4829
        %vm4857 = vweird.f32 %v4850
        %vm4858 = vmor %vm4856, %vm4857
        %v4859 = vsel %vm4858, %v4850, %v4855
        %v4860 = vmul.f32 %v4809, %v4839
        %v4861 = vmul.f32 %v4810, %v4849
        %v4862 = vmul.f32 %v4811, %v4859
        %v4863 = vperm.slane %v945, 2
        %v4864 = vmul.f32 %v4860, %v4863
        %v4865 = vmul.f32 %v4861, %v4863
        %v4866 = vmul.f32 %v4862, %v4863
        %v4867 = vperm.slane %v945, 3
        %v4868 = vadd.f32 %v4864, %v4867
        %v4869 = vadd.f32 %v4865, %v4867
        %v4870 = vadd.f32 %v4866, %v4867
        %4871 = vst.msk [vmem:[%s910] sm:$0xff] %vm982, %v4868
        %4872 = vst.msk [vmem:[%s910 + $0x8] sm:$0xff] %vm982, %v4869
        %4873 = vst.msk [vmem:[%s910 + $0x10] sm:$0xff] %vm982, %v4870
        %v4874 = vld [vmem:[%s939] sm:$0xff]
        %v4875 = vld [vmem:[%s939 + $0x8] sm:$0xff]
        %v4876 = vld [vmem:[%s24] sm:$0xff]
        %v4877 = vld [vmem:[%s24 + $0x8] sm:$0xff]
        %v4878 = vsel %vm982, %v4874, 0.0
        %4879 = vadd.xlane.f32.xlu0 %v4878
        %v4880 = vpop.xlane.xlu0 %4879
        %v4881 = vsel %vm982, %v4875, 0.0
        %4882 = vadd.xlane.f32.xlu0 %v4881
        %v4883 = vpop.xlane.xlu0 %4882
        %v4884 = vmul.f32 %v4880, %v1018
        %v4885 = vmul.f32 %v4883, %v1018
        %v4886 = vsub.f32 %v4874, %v4884
        %v4887 = vsub.f32 %v4875, %v4885
        %v4888 = vmul.f32 %v4886, %v4886
        %v4889 = vmul.f32 %v4887, %v4887
        %v4890 = vsel %vm982, %v4888, 0.0
        %4891 = vadd.xlane.f32.xlu0 %v4890
        %v4892 = vpop.xlane.xlu0 %4891
        %v4893 = vsel %vm982, %v4889, 0.0
        %4894 = vadd.xlane.f32.xlu0 %v4893
        %v4895 = vpop.xlane.xlu0 %4894
        %v4896 = vmul.f32 %v4892, %v1018
        %v4897 = vmul.f32 %v4895, %v1018
        %v4898 = vadd.f32 %v4896, 1e-05
        %v4899 = vadd.f32 %v4897, 1e-05
        %v4900 = vrsqrt.pop %v4898
        %v4901 = vmul.f32 %v4900, %v4898
        %v4902 = vmul.f32 %v4901, %v4900
        %v4903 = vmul.f32 0.5, %v4902
        %v4904 = vsub.f32 1.5, %v4903
        %v4905 = vmul.f32 %v4900, %v4904
        %vm4906 = vweird.f32 %v4898
        %vm4907 = vweird.f32 %v4900
        %vm4908 = vmor %vm4906, %vm4907
        %v4909 = vsel %vm4908, %v4900, %v4905
        %v4910 = vrsqrt.pop %v4899
        %v4911 = vmul.f32 %v4910, %v4899
        %v4912 = vmul.f32 %v4911, %v4910
        %v4913 = vmul.f32 0.5, %v4912
        %v4914 = vsub.f32 1.5, %v4913
        %v4915 = vmul.f32 %v4910, %v4914
        %vm4916 = vweird.f32 %v4899
        %vm4917 = vweird.f32 %v4910
        %vm4918 = vmor %vm4916, %vm4917
        %v4919 = vsel %vm4918, %v4910, %v4915
        %v4920 = vmul.f32 %v4886, %v4909
        %v4921 = vmul.f32 %v4887, %v4919
        %v4922 = vperm.slane %v4876, 6
        %v4923 = vmul.f32 %v4920, %v4922
        %v4924 = vmul.f32 %v4921, %v4922
        %v4925 = vperm.slane %v4876, 7
        %v4926 = vadd.f32 %v4923, %v4925
        %v4927 = vadd.f32 %v4924, %v4925
        %v4928 = vld [vmem:[%s18] sm:$0xff]
        %v4929 = vld [vmem:[%s18 + $0x8] sm:$0xff]
        %v4930 = vld [vmem:[%s18 + $0x10] sm:$0xff]
        %v4931 = vld [vmem:[%s18 + $0x18] sm:$0xff]
        %v4932 = vld [vmem:[%s19] sm:$0xff]
        %v4933 = vld [vmem:[%s19 + $0x8] sm:$0xff]
        %v4934 = vld [vmem:[%s19 + $0x10] sm:$0xff]
        %v4935 = vld [vmem:[%s19 + $0x18] sm:$0xff]
        %v4936 = vperm.slane %v4876, 0
        %v4938 = vsel %vm982, %v4926, 0
        %v4941 = vsel %vm982, %v4927, 0
        %4943 = vmatpush.msra.mxu0 0.0
        %4944 = vmatpush.msra.mxu0 0.0
        %4945 = vmatpush.msra.mxu0 0.0
        %4946 = vmatpush.msra.mxu0 0.0
        %4947 = vmatpush.msra.mxu0 0.0
        %4948 = vmatpush.msra.mxu0 0.0
        %4949 = vmatpush.msra.mxu0 0.0
        %4950 = vmatpush.msra.mxu0 0.0
        %4951 = vmatpush.msra.mxu0 0.0
        %4952 = vmatpush.msra.mxu0 0.0
        %4953 = vmatpush.msra.mxu0 0.0
        %4954 = vmatpush.msra.mxu0 0.0
        %4955 = vmatpush.msra.mxu0 %v4931
        %4956 = vmatpush.msra.mxu0 %v4930
        %4957 = vmatpush.msra.mxu0 %v4929
        %4958 = vmatpush.msra.mxu0 %v4928
        %4959 = vmatmul.f32.gmra.mxu0 %v4938
        %v4960 = vpop.f32.mrf.mxu0
        %v4961 = vadd.f32 %v4936, %v4960
        %4962 = vmatmul.f32.gmra.mxu0 %v4941
        %v4963 = vpop.f32.mrf.mxu0
        %v4964 = vadd.f32 %v4936, %v4963
        %4965 = vdwg.mxu0
        %4968 = vrot.lane.b32.xlu0 %v4961, 96
        %v4969 = vpop.permute.xlu0 %4968
        %4970 = vrot.lane.b32.xlu0 %v4964, 96
        %v4971 = vpop.permute.xlu0 %4970
        %v4972 = vsel %vm952, %v4961, 0
        %v4974 = vsel %vm952, %v4964, 0
        %v4976 = vsel %vm952, %v4969, 0
        %v4978 = vsel %vm952, %v4971, 0
        %4980 = vmatpush.xpose.msra.mxu0 0.0
        %4981 = vmatpush.xpose.msra.mxu0 0.0
        %4982 = vmatpush.xpose.msra.mxu0 0.0
        %4983 = vmatpush.xpose.msra.mxu0 0.0
        %4984 = vmatpush.xpose.msra.mxu0 0.0
        %4985 = vmatpush.xpose.msra.mxu0 0.0
        %4986 = vmatpush.xpose.msra.mxu0 0.0
        %4987 = vmatpush.xpose.msra.mxu0 0.0
        %4988 = vmatpush.xpose.msra.mxu0 0.0
        %4989 = vmatpush.xpose.msra.mxu0 0.0
        %4990 = vmatpush.xpose.msra.mxu0 0.0
        %4991 = vmatpush.xpose.msra.mxu0 0.0
        %4992 = vmatpush.xpose.msra.mxu0 0.0
        %4993 = vmatpush.xpose.msra.mxu0 0.0
        %4994 = vmatpush.xpose.msra.mxu0 %v4978
        %4995 = vmatpush.xpose.msra.mxu0 %v4976
        %4996 = vmatmul.f32.gmra.mxu0 %v4972
        %v4997 = vpop.f32.mrf.mxu0
        %v4998 = vadd.f32 0.0, %v4997
        %4999 = vmatmul.f32.gmra.mxu0 %v4974
        %v5000 = vpop.f32.mrf.mxu0
        %v5001 = vadd.f32 0.0, %v5000
        %5002 = vdwg.mxu0
        %v5003 = vmul.f32 %v4998, 0.35355338
        %v5004 = vmul.f32 %v5001, 0.35355338
        %v5005 = vsel %vm1132, %v5003, -inf
        %5006 = vmax.xlane.f32.xlu0 %v5005
        %v5007 = vpop.xlane.xlu0 %5006
        %v5008 = vsel %vm1132, %v5004, -inf
        %5009 = vmax.xlane.f32.xlu0 %v5008
        %v5010 = vpop.xlane.xlu0 %5009
        %v5011 = vsub.f32 %v5003, %v5007
        %v5012 = vsub.f32 %v5004, %v5010
        %v5013 = vmul.f32 %v5011, 1.442695
        %v5014 = vpow.pop %v5013
        %v5015 = vmul.f32 %v5012, 1.442695
        %v5016 = vpow.pop %v5015
        %v5017 = vsel %vm1132, %v5014, 0.0
        %5018 = vadd.xlane.f32.xlu0 %v5017
        %v5019 = vpop.xlane.xlu0 %5018
        %v5020 = vsel %vm1132, %v5016, 0.0
        %5021 = vadd.xlane.f32.xlu0 %v5020
        %v5022 = vpop.xlane.xlu0 %5021
        %v5023 = vrcp.pop %v5019
        %v5024 = vmul.f32 %v5019, %v5023
        %v5025 = vsub.f32 1.0, %v5024
        %v5026 = vmul.f32 %v5023, %v5025
        %v5027 = vadd.f32 %v5023, %v5026
        %vm5028 = vweird.f32 %v5019
        %vm5029 = vweird.f32 %v5023
        %vm5030 = vmor %vm5028, %vm5029
        %v5031 = vsel %vm5030, %v5023, %v5027
        %v5032 = vand.u32 2147483647, %v5019
        %vm5033 = vcmp.eq.f32.partialorder %v5032, 8.507059e+37
        %v5034 = vand.u32 %v5019, 2147483648
        %v5035 = vor.u32 1.1754944e-38, %v5034
        %v5036 = vsel %vm5033, %v5035, %v5031
        %v5037 = vrcp.pop %v5022
        %v5038 = vmul.f32 %v5022, %v5037
        %v5039 = vsub.f32 1.0, %v5038
        %v5040 = vmul.f32 %v5037, %v5039
        %v5041 = vadd.f32 %v5037, %v5040
        %vm5042 = vweird.f32 %v5022
        %vm5043 = vweird.f32 %v5037
        %vm5044 = vmor %vm5042, %vm5043
        %v5045 = vsel %vm5044, %v5037, %v5041
        %v5046 = vand.u32 2147483647, %v5022
        %vm5047 = vcmp.eq.f32.partialorder %v5046, 8.507059e+37
        %v5048 = vand.u32 %v5022, 2147483648
        %v5049 = vor.u32 1.1754944e-38, %v5048
        %v5050 = vsel %vm5047, %v5049, %v5045
        %v5051 = vmul.f32 %v5014, %v5036
        %v5052 = vmul.f32 %v5016, %v5050
        %5053 = vrot.lane.b32.xlu0 %v4961, 64
        %v5054 = vpop.permute.xlu0 %5053
        %5055 = vrot.lane.b32.xlu0 %v4964, 64
        %v5056 = vpop.permute.xlu0 %5055
        %v5060 = vsel %vm1132, %v5051, 0
        %v5063 = vsel %vm1132, %v5052, 0
        %5065 = vmatpush.msra.mxu0 0.0
        %5066 = vmatpush.msra.mxu0 0.0
        %5067 = vmatpush.msra.mxu0 0.0
        %5068 = vmatpush.msra.mxu0 0.0
        %5069 = vmatpush.msra.mxu0 0.0
        %5070 = vmatpush.msra.mxu0 0.0
        %5071 = vmatpush.msra.mxu0 0.0
        %5072 = vmatpush.msra.mxu0 0.0
        %5073 = vmatpush.msra.mxu0 0.0
        %5074 = vmatpush.msra.mxu0 0.0
        %5075 = vmatpush.msra.mxu0 0.0
        %5076 = vmatpush.msra.mxu0 0.0
        %5077 = vmatpush.msra.mxu0 0.0
        %5078 = vmatpush.msra.mxu0 0.0
        %5079 = vmatpush.msra.mxu0 %v5056
        %5080 = vmatpush.msra.mxu0 %v5054
        %5081 = vmatmul.f32.gmra.mxu0 %v5060
        %v5082 = vpop.f32.mrf.mxu0
        %v5083 = vadd.f32 0.0, %v5082
        %5084 = vmatmul.f32.gmra.mxu0 %v5063
        %v5085 = vpop.f32.mrf.mxu0
        %v5086 = vadd.f32 0.0, %v5085
        %5087 = vdwg.mxu0
        %5088 = vrot.lane.b32.xlu0 %v4961, 120
        %v5089 = vpop.permute.xlu0 %5088
        %5090 = vrot.lane.b32.xlu0 %v4964, 120
        %v5091 = vpop.permute.xlu0 %5090
        %5092 = vrot.lane.b32.xlu0 %v4961, 88
        %v5093 = vpop.permute.xlu0 %5092
        %5094 = vrot.lane.b32.xlu0 %v4964, 88
        %v5095 = vpop.permute.xlu0 %5094
        %v5096 = vsel %vm952, %v5089, 0
        %v5098 = vsel %vm952, %v5091, 0
        %v5100 = vsel %vm952, %v5093, 0
        %v5102 = vsel %vm952, %v5095, 0
        %5104 = vmatpush.xpose.msra.mxu0 0.0
        %5105 = vmatpush.xpose.msra.mxu0 0.0
        %5106 = vmatpush.xpose.msra.mxu0 0.0
        %5107 = vmatpush.xpose.msra.mxu0 0.0
        %5108 = vmatpush.xpose.msra.mxu0 0.0
        %5109 = vmatpush.xpose.msra.mxu0 0.0
        %5110 = vmatpush.xpose.msra.mxu0 0.0
        %5111 = vmatpush.xpose.msra.mxu0 0.0
        %5112 = vmatpush.xpose.msra.mxu0 0.0
        %5113 = vmatpush.xpose.msra.mxu0 0.0
        %5114 = vmatpush.xpose.msra.mxu0 0.0
        %5115 = vmatpush.xpose.msra.mxu0 0.0
        %5116 = vmatpush.xpose.msra.mxu0 0.0
        %5117 = vmatpush.xpose.msra.mxu0 0.0
        %5118 = vmatpush.xpose.msra.mxu0 %v5102
        %5119 = vmatpush.xpose.msra.mxu0 %v5100
        %5120 = vmatmul.f32.gmra.mxu0 %v5096
        %v5121 = vpop.f32.mrf.mxu0
        %v5122 = vadd.f32 0.0, %v5121
        %5123 = vmatmul.f32.gmra.mxu0 %v5098
        %v5124 = vpop.f32.mrf.mxu0
        %v5125 = vadd.f32 0.0, %v5124
        %5126 = vdwg.mxu0
        %v5127 = vmul.f32 %v5122, 0.35355338
        %v5128 = vmul.f32 %v5125, 0.35355338
        %v5129 = vsel %vm1132, %v5127, -inf
        %5130 = vmax.xlane.f32.xlu0 %v5129
        %v5131 = vpop.xlane.xlu0 %5130
        %v5132 = vsel %vm1132, %v5128, -inf
        %5133 = vmax.xlane.f32.xlu0 %v5132
        %v5134 = vpop.xlane.xlu0 %5133
        %v5135 = vsub.f32 %v5127, %v5131
        %v5136 = vsub.f32 %v5128, %v5134
        %v5137 = vmul.f32 %v5135, 1.442695
        %v5138 = vpow.pop %v5137
        %v5139 = vmul.f32 %v5136, 1.442695
        %v5140 = vpow.pop %v5139
        %v5141 = vsel %vm1132, %v5138, 0.0
        %5142 = vadd.xlane.f32.xlu0 %v5141
        %v5143 = vpop.xlane.xlu0 %5142
        %v5144 = vsel %vm1132, %v5140, 0.0
        %5145 = vadd.xlane.f32.xlu0 %v5144
        %v5146 = vpop.xlane.xlu0 %5145
        %v5147 = vrcp.pop %v5143
        %v5148 = vmul.f32 %v5143, %v5147
        %v5149 = vsub.f32 1.0, %v5148
        %v5150 = vmul.f32 %v5147, %v5149
        %v5151 = vadd.f32 %v5147, %v5150
        %vm5152 = vweird.f32 %v5143
        %vm5153 = vweird.f32 %v5147
        %vm5154 = vmor %vm5152, %vm5153
        %v5155 = vsel %vm5154, %v5147, %v5151
        %v5156 = vand.u32 2147483647, %v5143
        %vm5157 = vcmp.eq.f32.partialorder %v5156, 8.507059e+37
        %v5158 = vand.u32 %v5143, 2147483648
        %v5159 = vor.u32 1.1754944e-38, %v5158
        %v5160 = vsel %vm5157, %v5159, %v5155
        %v5161 = vrcp.pop %v5146
        %v5162 = vmul.f32 %v5146, %v5161
        %v5163 = vsub.f32 1.0, %v5162
        %v5164 = vmul.f32 %v5161, %v5163
        %v5165 = vadd.f32 %v5161, %v5164
        %vm5166 = vweird.f32 %v5146
        %vm5167 = vweird.f32 %v5161
        %vm5168 = vmor %vm5166, %vm5167
        %v5169 = vsel %vm5168, %v5161, %v5165
        %v5170 = vand.u32 2147483647, %v5146
        %vm5171 = vcmp.eq.f32.partialorder %v5170, 8.507059e+37
        %v5172 = vand.u32 %v5146, 2147483648
        %v5173 = vor.u32 1.1754944e-38, %v5172
        %v5174 = vsel %vm5171, %v5173, %v5169
        %v5175 = vmul.f32 %v5138, %v5160
        %v5176 = vmul.f32 %v5140, %v5174
        %5177 = vrot.lane.b32.xlu0 %v4961, 56
        %v5178 = vpop.permute.xlu0 %5177
        %5179 = vrot.lane.b32.xlu0 %v4964, 56
        %v5180 = vpop.permute.xlu0 %5179
        %v5184 = vsel %vm1132, %v5175, 0
        %v5187 = vsel %vm1132, %v5176, 0
        %5189 = vmatpush.msra.mxu0 0.0
        %5190 = vmatpush.msra.mxu0 0.0
        %5191 = vmatpush.msra.mxu0 0.0
        %5192 = vmatpush.msra.mxu0 0.0
        %5193 = vmatpush.msra.mxu0 0.0
        %5194 = vmatpush.msra.mxu0 0.0
        %5195 = vmatpush.msra.mxu0 0.0
        %5196 = vmatpush.msra.mxu0 0.0
        %5197 = vmatpush.msra.mxu0 0.0
        %5198 = vmatpush.msra.mxu0 0.0
        %5199 = vmatpush.msra.mxu0 0.0
        %5200 = vmatpush.msra.mxu0 0.0
        %5201 = vmatpush.msra.mxu0 0.0
        %5202 = vmatpush.msra.mxu0 0.0
        %5203 = vmatpush.msra.mxu0 %v5180
        %5204 = vmatpush.msra.mxu0 %v5178
        %5205 = vmatmul.f32.gmra.mxu0 %v5184
        %v5206 = vpop.f32.mrf.mxu0
        %v5207 = vadd.f32 0.0, %v5206
        %5208 = vmatmul.f32.gmra.mxu0 %v5187
        %v5209 = vpop.f32.mrf.mxu0
        %v5210 = vadd.f32 0.0, %v5209
        %5211 = vdwg.mxu0
        %5212 = vrot.lane.b32.xlu0 %v4961, 112
        %v5213 = vpop.permute.xlu0 %5212
        %5214 = vrot.lane.b32.xlu0 %v4964, 112
        %v5215 = vpop.permute.xlu0 %5214
        %5216 = vrot.lane.b32.xlu0 %v4961, 80
        %v5217 = vpop.permute.xlu0 %5216
        %5218 = vrot.lane.b32.xlu0 %v4964, 80
        %v5219 = vpop.permute.xlu0 %5218
        %v5220 = vsel %vm952, %v5213, 0
        %v5222 = vsel %vm952, %v5215, 0
        %v5224 = vsel %vm952, %v5217, 0
        %v5226 = vsel %vm952, %v5219, 0
        %5228 = vmatpush.xpose.msra.mxu0 0.0
        %5229 = vmatpush.xpose.msra.mxu0 0.0
        %5230 = vmatpush.xpose.msra.mxu0 0.0
        %5231 = vmatpush.xpose.msra.mxu0 0.0
        %5232 = vmatpush.xpose.msra.mxu0 0.0
        %5233 = vmatpush.xpose.msra.mxu0 0.0
        %5234 = vmatpush.xpose.msra.mxu0 0.0
        %5235 = vmatpush.xpose.msra.mxu0 0.0
        %5236 = vmatpush.xpose.msra.mxu0 0.0
        %5237 = vmatpush.xpose.msra.mxu0 0.0
        %5238 = vmatpush.xpose.msra.mxu0 0.0
        %5239 = vmatpush.xpose.msra.mxu0 0.0
        %5240 = vmatpush.xpose.msra.mxu0 0.0
        %5241 = vmatpush.xpose.msra.mxu0 0.0
        %5242 = vmatpush.xpose.msra.mxu0 %v5226
        %5243 = vmatpush.xpose.msra.mxu0 %v5224
        %5244 = vmatmul.f32.gmra.mxu0 %v5220
        %v5245 = vpop.f32.mrf.mxu0
        %v5246 = vadd.f32 0.0, %v5245
        %5247 = vmatmul.f32.gmra.mxu0 %v5222
        %v5248 = vpop.f32.mrf.mxu0
        %v5249 = vadd.f32 0.0, %v5248
        %5250 = vdwg.mxu0
        %v5251 = vmul.f32 %v5246, 0.35355338
        %v5252 = vmul.f32 %v5249, 0.35355338
        %v5253 = vsel %vm1132, %v5251, -inf
        %5254 = vmax.xlane.f32.xlu0 %v5253
        %v5255 = vpop.xlane.xlu0 %5254
        %v5256 = vsel %vm1132, %v5252, -inf
        %5257 = vmax.xlane.f32.xlu0 %v5256
        %v5258 = vpop.xlane.xlu0 %5257
        %v5259 = vsub.f32 %v5251, %v5255
        %v5260 = vsub.f32 %v5252, %v5258
        %v5261 = vmul.f32 %v5259, 1.442695
        %v5262 = vpow.pop %v5261
        %v5263 = vmul.f32 %v5260, 1.442695
        %v5264 = vpow.pop %v5263
        %v5265 = vsel %vm1132, %v5262, 0.0
        %5266 = vadd.xlane.f32.xlu0 %v5265
        %v5267 = vpop.xlane.xlu0 %5266
        %v5268 = vsel %vm1132, %v5264, 0.0
        %5269 = vadd.xlane.f32.xlu0 %v5268
        %v5270 = vpop.xlane.xlu0 %5269
        %v5271 = vrcp.pop %v5267
        %v5272 = vmul.f32 %v5267, %v5271
        %v5273 = vsub.f32 1.0, %v5272
        %v5274 = vmul.f32 %v5271, %v5273
        %v5275 = vadd.f32 %v5271, %v5274
        %vm5276 = vweird.f32 %v5267
        %vm5277 = vweird.f32 %v5271
        %vm5278 = vmor %vm5276, %vm5277
        %v5279 = vsel %vm5278, %v5271, %v5275
        %v5280 = vand.u32 2147483647, %v5267
        %vm5281 = vcmp.eq.f32.partialorder %v5280, 8.507059e+37
        %v5282 = vand.u32 %v5267, 2147483648
        %v5283 = vor.u32 1.1754944e-38, %v5282
        %v5284 = vsel %vm5281, %v5283, %v5279
        %v5285 = vrcp.pop %v5270
        %v5286 = vmul.f32 %v5270, %v5285
        %v5287 = vsub.f32 1.0, %v5286
        %v5288 = vmul.f32 %v5285, %v5287
        %v5289 = vadd.f32 %v5285, %v5288
        %vm5290 = vweird.f32 %v5270
        %vm5291 = vweird.f32 %v5285
        %vm5292 = vmor %vm5290, %vm5291
        %v5293 = vsel %vm5292, %v5285, %v5289
        %v5294 = vand.u32 2147483647, %v5270
        %vm5295 = vcmp.eq.f32.partialorder %v5294, 8.507059e+37
        %v5296 = vand.u32 %v5270, 2147483648
        %v5297 = vor.u32 1.1754944e-38, %v5296
        %v5298 = vsel %vm5295, %v5297, %v5293
        %v5299 = vmul.f32 %v5262, %v5284
        %v5300 = vmul.f32 %v5264, %v5298
        %5301 = vrot.lane.b32.xlu0 %v4961, 48
        %v5302 = vpop.permute.xlu0 %5301
        %5303 = vrot.lane.b32.xlu0 %v4964, 48
        %v5304 = vpop.permute.xlu0 %5303
        %v5308 = vsel %vm1132, %v5299, 0
        %v5311 = vsel %vm1132, %v5300, 0
        %5313 = vmatpush.msra.mxu0 0.0
        %5314 = vmatpush.msra.mxu0 0.0
        %5315 = vmatpush.msra.mxu0 0.0
        %5316 = vmatpush.msra.mxu0 0.0
        %5317 = vmatpush.msra.mxu0 0.0
        %5318 = vmatpush.msra.mxu0 0.0
        %5319 = vmatpush.msra.mxu0 0.0
        %5320 = vmatpush.msra.mxu0 0.0
        %5321 = vmatpush.msra.mxu0 0.0
        %5322 = vmatpush.msra.mxu0 0.0
        %5323 = vmatpush.msra.mxu0 0.0
        %5324 = vmatpush.msra.mxu0 0.0
        %5325 = vmatpush.msra.mxu0 0.0
        %5326 = vmatpush.msra.mxu0 0.0
        %5327 = vmatpush.msra.mxu0 %v5304
        %5328 = vmatpush.msra.mxu0 %v5302
        %5329 = vmatmul.f32.gmra.mxu0 %v5308
        %v5330 = vpop.f32.mrf.mxu0
        %v5331 = vadd.f32 0.0, %v5330
        %5332 = vmatmul.f32.gmra.mxu0 %v5311
        %v5333 = vpop.f32.mrf.mxu0
        %v5334 = vadd.f32 0.0, %v5333
        %5335 = vdwg.mxu0
        %5336 = vrot.lane.b32.xlu0 %v4961, 104
        %v5337 = vpop.permute.xlu0 %5336
        %5338 = vrot.lane.b32.xlu0 %v4964, 104
        %v5339 = vpop.permute.xlu0 %5338
        %5340 = vrot.lane.b32.xlu0 %v4961, 72
        %v5341 = vpop.permute.xlu0 %5340
        %5342 = vrot.lane.b32.xlu0 %v4964, 72
        %v5343 = vpop.permute.xlu0 %5342
        %v5344 = vsel %vm952, %v5337, 0
        %v5346 = vsel %vm952, %v5339, 0
        %v5348 = vsel %vm952, %v5341, 0
        %v5350 = vsel %vm952, %v5343, 0
        %5352 = vmatpush.xpose.msra.mxu0 0.0
        %5353 = vmatpush.xpose.msra.mxu0 0.0
        %5354 = vmatpush.xpose.msra.mxu0 0.0
        %5355 = vmatpush.xpose.msra.mxu0 0.0
        %5356 = vmatpush.xpose.msra.mxu0 0.0
        %5357 = vmatpush.xpose.msra.mxu0 0.0
        %5358 = vmatpush.xpose.msra.mxu0 0.0
        %5359 = vmatpush.xpose.msra.mxu0 0.0
        %5360 = vmatpush.xpose.msra.mxu0 0.0
        %5361 = vmatpush.xpose.msra.mxu0 0.0
        %5362 = vmatpush.xpose.msra.mxu0 0.0
        %5363 = vmatpush.xpose.msra.mxu0 0.0
        %5364 = vmatpush.xpose.msra.mxu0 0.0
        %5365 = vmatpush.xpose.msra.mxu0 0.0
        %5366 = vmatpush.xpose.msra.mxu0 %v5350
        %5367 = vmatpush.xpose.msra.mxu0 %v5348
        %5368 = vmatmul.f32.gmra.mxu0 %v5344
        %v5369 = vpop.f32.mrf.mxu0
        %v5370 = vadd.f32 0.0, %v5369
        %5371 = vmatmul.f32.gmra.mxu0 %v5346
        %v5372 = vpop.f32.mrf.mxu0
        %v5373 = vadd.f32 0.0, %v5372
        %5374 = vdwg.mxu0
        %v5375 = vmul.f32 %v5370, 0.35355338
        %v5376 = vmul.f32 %v5373, 0.35355338
        %v5377 = vsel %vm1132, %v5375, -inf
        %5378 = vmax.xlane.f32.xlu0 %v5377
        %v5379 = vpop.xlane.xlu0 %5378
        %v5380 = vsel %vm1132, %v5376, -inf
        %5381 = vmax.xlane.f32.xlu0 %v5380
        %v5382 = vpop.xlane.xlu0 %5381
        %v5383 = vsub.f32 %v5375, %v5379
        %v5384 = vsub.f32 %v5376, %v5382
        %v5385 = vmul.f32 %v5383, 1.442695
        %v5386 = vpow.pop %v5385
        %v5387 = vmul.f32 %v5384, 1.442695
        %v5388 = vpow.pop %v5387
        %v5389 = vsel %vm1132, %v5386, 0.0
        %5390 = vadd.xlane.f32.xlu0 %v5389
        %v5391 = vpop.xlane.xlu0 %5390
        %v5392 = vsel %vm1132, %v5388, 0.0
        %5393 = vadd.xlane.f32.xlu0 %v5392
        %v5394 = vpop.xlane.xlu0 %5393
        %v5395 = vrcp.pop %v5391
        %v5396 = vmul.f32 %v5391, %v5395
        %v5397 = vsub.f32 1.0, %v5396
        %v5398 = vmul.f32 %v5395, %v5397
        %v5399 = vadd.f32 %v5395, %v5398
        %vm5400 = vweird.f32 %v5391
        %vm5401 = vweird.f32 %v5395
        %vm5402 = vmor %vm5400, %vm5401
        %v5403 = vsel %vm5402, %v5395, %v5399
        %v5404 = vand.u32 2147483647, %v5391
        %vm5405 = vcmp.eq.f32.partialorder %v5404, 8.507059e+37
        %v5406 = vand.u32 %v5391, 2147483648
        %v5407 = vor.u32 1.1754944e-38, %v5406
        %v5408 = vsel %vm5405, %v5407, %v5403
        %v5409 = vrcp.pop %v5394
        %v5410 = vmul.f32 %v5394, %v5409
        %v5411 = vsub.f32 1.0, %v5410
        %v5412 = vmul.f32 %v5409, %v5411
        %v5413 = vadd.f32 %v5409, %v5412
        %vm5414 = vweird.f32 %v5394
        %vm5415 = vweird.f32 %v5409
        %vm5416 = vmor %vm5414, %vm5415
        %v5417 = vsel %vm5416, %v5409, %v5413
        %v5418 = vand.u32 2147483647, %v5394
        %vm5419 = vcmp.eq.f32.partialorder %v5418, 8.507059e+37
        %v5420 = vand.u32 %v5394, 2147483648
        %v5421 = vor.u32 1.1754944e-38, %v5420
        %v5422 = vsel %vm5419, %v5421, %v5417
        %v5423 = vmul.f32 %v5386, %v5408
        %v5424 = vmul.f32 %v5388, %v5422
        %5425 = vrot.lane.b32.xlu0 %v4961, 40
        %v5426 = vpop.permute.xlu0 %5425
        %5427 = vrot.lane.b32.xlu0 %v4964, 40
        %v5428 = vpop.permute.xlu0 %5427
        %v5432 = vsel %vm1132, %v5423, 0
        %v5435 = vsel %vm1132, %v5424, 0
        %5437 = vmatpush.msra.mxu0 0.0
        %5438 = vmatpush.msra.mxu0 0.0
        %5439 = vmatpush.msra.mxu0 0.0
        %5440 = vmatpush.msra.mxu0 0.0
        %5441 = vmatpush.msra.mxu0 0.0
        %5442 = vmatpush.msra.mxu0 0.0
        %5443 = vmatpush.msra.mxu0 0.0
        %5444 = vmatpush.msra.mxu0 0.0
        %5445 = vmatpush.msra.mxu0 0.0
        %5446 = vmatpush.msra.mxu0 0.0
        %5447 = vmatpush.msra.mxu0 0.0
        %5448 = vmatpush.msra.mxu0 0.0
        %5449 = vmatpush.msra.mxu0 0.0
        %5450 = vmatpush.msra.mxu0 0.0
        %5451 = vmatpush.msra.mxu0 %v5428
        %5452 = vmatpush.msra.mxu0 %v5426
        %5453 = vmatmul.f32.gmra.mxu0 %v5432
        %v5454 = vpop.f32.mrf.mxu0
        %v5455 = vadd.f32 0.0, %v5454
        %5456 = vmatmul.f32.gmra.mxu0 %v5435
        %v5457 = vpop.f32.mrf.mxu0
        %v5458 = vadd.f32 0.0, %v5457
        %5459 = vdwg.mxu0
        %5462 = vrot.lane.b32.xlu0 %v5207, 8
        %v5463 = vpop.permute.xlu0 %5462
        %5464 = vrot.lane.b32.xlu0 %v5210, 8
        %v5465 = vpop.permute.xlu0 %5464
        %5470 = vrot.lane.b32.xlu0 %v5331, 16
        %v5471 = vpop.permute.xlu0 %5470
        %5472 = vrot.lane.b32.xlu0 %v5334, 16
        %v5473 = vpop.permute.xlu0 %5472
        %5478 = vrot.lane.b32.xlu0 %v5455, 24
        %v5479 = vpop.permute.xlu0 %5478
        %5480 = vrot.lane.b32.xlu0 %v5458, 24
        %v5481 = vpop.permute.xlu0 %5480
        %v5484 = vsel %vm952, %v5083, %v5463
        %v5485 = vsel %vm952, %v5086, %v5465
        %v5486 = vsel %vm1132, %v5484, %v5471
        %v5487 = vsel %vm1132, %v5485, %v5473
        %v5488 = vsel %vm1616, %v5486, %v5479
        %v5489 = vsel %vm1616, %v5487, %v5481
        %v5490 = vperm.slane %v4876, 1
        %v5492 = vsel %vm982, %v5488, 0
        %v5495 = vsel %vm982, %v5489, 0
        %5497 = vmatpush.msra.mxu0 0.0
        %5498 = vmatpush.msra.mxu0 0.0
        %5499 = vmatpush.msra.mxu0 0.0
        %5500 = vmatpush.msra.mxu0 0.0
        %5501 = vmatpush.msra.mxu0 0.0
        %5502 = vmatpush.msra.mxu0 0.0
        %5503 = vmatpush.msra.mxu0 0.0
        %5504 = vmatpush.msra.mxu0 0.0
        %5505 = vmatpush.msra.mxu0 0.0
        %5506 = vmatpush.msra.mxu0 0.0
        %5507 = vmatpush.msra.mxu0 0.0
        %5508 = vmatpush.msra.mxu0 0.0
        %5509 = vmatpush.msra.mxu0 %v4935
        %5510 = vmatpush.msra.mxu0 %v4934
        %5511 = vmatpush.msra.mxu0 %v4933
        %5512 = vmatpush.msra.mxu0 %v4932
        %5513 = vmatmul.f32.gmra.mxu0 %v5492
        %v5514 = vpop.f32.mrf.mxu0
        %v5515 = vadd.f32 %v5490, %v5514
        %5516 = vmatmul.f32.gmra.mxu0 %v5495
        %v5517 = vpop.f32.mrf.mxu0
        %v5518 = vadd.f32 %v5490, %v5517
        %5519 = vdwg.mxu0
        %v5520 = vadd.f32 %v4874, %v5515
        %v5521 = vadd.f32 %v4875, %v5518
        %v5522 = vsel %vm982, %v5520, 0.0
        %5523 = vadd.xlane.f32.xlu0 %v5522
        %v5524 = vpop.xlane.xlu0 %5523
        %v5525 = vsel %vm982, %v5521, 0.0
        %5526 = vadd.xlane.f32.xlu0 %v5525
        %v5527 = vpop.xlane.xlu0 %5526
        %v5528 = vmul.f32 %v5524, %v1018
        %v5529 = vmul.f32 %v5527, %v1018
        %v5530 = vsub.f32 %v5520, %v5528
        %v5531 = vsub.f32 %v5521, %v5529
        %v5532 = vmul.f32 %v5530, %v5530
        %v5533 = vmul.f32 %v5531, %v5531
        %v5534 = vsel %vm982, %v5532, 0.0
        %5535 = vadd.xlane.f32.xlu0 %v5534
        %v5536 = vpop.xlane.xlu0 %5535
        %v5537 = vsel %vm982, %v5533, 0.0
        %5538 = vadd.xlane.f32.xlu0 %v5537
        %v5539 = vpop.xlane.xlu0 %5538
        %v5540 = vmul.f32 %v5536, %v1018
        %v5541 = vmul.f32 %v5539, %v1018
        %v5542 = vadd.f32 %v5540, 1e-05
        %v5543 = vadd.f32 %v5541, 1e-05
        %v5544 = vrsqrt.pop %v5542
        %v5545 = vmul.f32 %v5544, %v5542
        %v5546 = vmul.f32 %v5545, %v5544
        %v5547 = vmul.f32 0.5, %v5546
        %v5548 = vsub.f32 1.5, %v5547
        %v5549 = vmul.f32 %v5544, %v5548
        %vm5550 = vweird.f32 %v5542
        %vm5551 = vweird.f32 %v5544
        %vm5552 = vmor %vm5550, %vm5551
        %v5553 = vsel %vm5552, %v5544, %v5549
        %v5554 = vrsqrt.pop %v5543
        %v5555 = vmul.f32 %v5554, %v5543
        %v5556 = vmul.f32 %v5555, %v5554
        %v5557 = vmul.f32 0.5, %v5556
        %v5558 = vsub.f32 1.5, %v5557
        %v5559 = vmul.f32 %v5554, %v5558
        %vm5560 = vweird.f32 %v5543
        %vm5561 = vweird.f32 %v5554
        %vm5562 = vmor %vm5560, %vm5561
        %v5563 = vsel %vm5562, %v5554, %v5559
        %v5564 = vmul.f32 %v5530, %v5553
        %v5565 = vmul.f32 %v5531, %v5563
        %v5566 = vperm.slane %v4877, 0
        %v5567 = vmul.f32 %v5564, %v5566
        %v5568 = vmul.f32 %v5565, %v5566
        %v5569 = vperm.slane %v4877, 1
        %v5570 = vadd.f32 %v5567, %v5569
        %v5571 = vadd.f32 %v5568, %v5569
        %v5572 = vld [vmem:[%s20] sm:$0xff]
        %v5573 = vld [vmem:[%s20 + $0x8] sm:$0xff]
        %v5574 = vld [vmem:[%s20 + $0x10] sm:$0xff]
        %v5575 = vld [vmem:[%s20 + $0x18] sm:$0xff]
        %v5576 = vld [vmem:[%s21] sm:$0xff]
        %v5577 = vld [vmem:[%s21 + $0x8] sm:$0xff]
        %v5578 = vld [vmem:[%s21 + $0x10] sm:$0xff]
        %v5579 = vld [vmem:[%s21 + $0x18] sm:$0xff]
        %v5580 = vperm.slane %v4876, 2
        %v5582 = vsel %vm982, %v5570, 0
        %v5585 = vsel %vm982, %v5571, 0
        %5587 = vmatpush.msra.mxu0 0.0
        %5588 = vmatpush.msra.mxu0 0.0
        %5589 = vmatpush.msra.mxu0 0.0
        %5590 = vmatpush.msra.mxu0 0.0
        %5591 = vmatpush.msra.mxu0 0.0
        %5592 = vmatpush.msra.mxu0 0.0
        %5593 = vmatpush.msra.mxu0 0.0
        %5594 = vmatpush.msra.mxu0 0.0
        %5595 = vmatpush.msra.mxu0 0.0
        %5596 = vmatpush.msra.mxu0 0.0
        %5597 = vmatpush.msra.mxu0 0.0
        %5598 = vmatpush.msra.mxu0 0.0
        %5599 = vmatpush.msra.mxu0 %v5575
        %5600 = vmatpush.msra.mxu0 %v5574
        %5601 = vmatpush.msra.mxu0 %v5573
        %5602 = vmatpush.msra.mxu0 %v5572
        %5603 = vmatmul.f32.gmra.mxu0 %v5582
        %v5604 = vpop.f32.mrf.mxu0
        %v5605 = vadd.f32 %v5580, %v5604
        %5606 = vmatmul.f32.gmra.mxu0 %v5585
        %v5607 = vpop.f32.mrf.mxu0
        %v5608 = vadd.f32 %v5580, %v5607
        %5609 = vdwg.mxu0
        %5614 = vrot.lane.b32.xlu0 %v5572, 96
        %v5615 = vpop.permute.xlu0 %5614
        %5616 = vrot.lane.b32.xlu0 %v5573, 96
        %v5617 = vpop.permute.xlu0 %5616
        %5618 = vrot.lane.b32.xlu0 %v5574, 96
        %v5619 = vpop.permute.xlu0 %5618
        %5620 = vrot.lane.b32.xlu0 %v5575, 96
        %v5621 = vpop.permute.xlu0 %5620
        %5627 = vrot.lane.b32.xlu0 %v5580, 96
        %v5628 = vpop.permute.xlu0 %5627
        %v5631 = vsel %vm982, %v4868, 0
        %v5634 = vsel %vm982, %v4869, 0
        %v5637 = vsel %vm982, %v4870, 0
        %5639 = vmatpush.msra.mxu0 0.0
        %5640 = vmatpush.msra.mxu0 0.0
        %5641 = vmatpush.msra.mxu0 0.0
        %5642 = vmatpush.msra.mxu0 0.0
        %5643 = vmatpush.msra.mxu0 0.0
        %5644 = vmatpush.msra.mxu0 0.0
        %5645 = vmatpush.msra.mxu0 0.0
        %5646 = vmatpush.msra.mxu0 0.0
        %5647 = vmatpush.msra.mxu0 0.0
        %5648 = vmatpush.msra.mxu0 0.0
        %5649 = vmatpush.msra.mxu0 0.0
        %5650 = vmatpush.msra.mxu0 0.0
        %5651 = vmatpush.msra.mxu0 %v5621
        %5652 = vmatpush.msra.mxu0 %v5619
        %5653 = vmatpush.msra.mxu0 %v5617
        %5654 = vmatpush.msra.mxu0 %v5615
        %5655 = vmatmul.f32.gmra.mxu0 %v5631
        %v5656 = vpop.f32.mrf.mxu0
        %v5657 = vadd.f32 %v5628, %v5656
        %5658 = vmatmul.f32.gmra.mxu0 %v5634
        %v5659 = vpop.f32.mrf.mxu0
        %v5660 = vadd.f32 %v5628, %v5659
        %5661 = vmatmul.f32.gmra.mxu0 %v5637
        %v5662 = vpop.f32.mrf.mxu0
        %v5663 = vadd.f32 %v5628, %v5662
        %5664 = vdwg.mxu0
        %v5666 = vsel %vm952, %v5605, 0
        %v5669 = vsel %vm952, %v5608, 0
        %v5672 = vsel %vm952, %v5657, 0
        %v5675 = vsel %vm952, %v5660, 0
        %v5678 = vsel %vm952, %v5663, 0
        %5680 = vmatpush.xpose.msra.mxu0 0.0
        %5681 = vmatpush.xpose.msra.mxu0 0.0
        %5682 = vmatpush.xpose.msra.mxu0 0.0
        %5683 = vmatpush.xpose.msra.mxu0 0.0
        %5684 = vmatpush.xpose.msra.mxu0 0.0
        %5685 = vmatpush.xpose.msra.mxu0 0.0
        %5686 = vmatpush.xpose.msra.mxu0 0.0
        %5687 = vmatpush.xpose.msra.mxu0 0.0
        %5688 = vmatpush.xpose.msra.mxu0 0.0
        %5689 = vmatpush.xpose.msra.mxu0 0.0
        %5690 = vmatpush.xpose.msra.mxu0 0.0
        %5691 = vmatpush.xpose.msra.mxu0 0.0
        %5692 = vmatpush.xpose.msra.mxu0 0.0
        %5693 = vmatpush.xpose.msra.mxu0 %v5678
        %5694 = vmatpush.xpose.msra.mxu0 %v5675
        %5695 = vmatpush.xpose.msra.mxu0 %v5672
        %5696 = vmatmul.f32.gmra.mxu0 %v5666
        %v5697 = vpop.f32.mrf.mxu0
        %v5698 = vadd.f32 0.0, %v5697
        %5699 = vmatmul.f32.gmra.mxu0 %v5669
        %v5700 = vpop.f32.mrf.mxu0
        %v5701 = vadd.f32 0.0, %v5700
        %5702 = vdwg.mxu0
        %v5703 = vmul.f32 %v5698, 0.35355338
        %v5704 = vmul.f32 %v5701, 0.35355338
        %v5705 = vadd.f32 %v5703, %v2813
        %v5706 = vadd.f32 %v5704, %v2813
        %v5707 = vsel %vm1616, %v5705, -inf
        %5708 = vmax.xlane.f32.xlu0 %v5707
        %v5709 = vpop.xlane.xlu0 %5708
        %v5710 = vsel %vm1616, %v5706, -inf
        %5711 = vmax.xlane.f32.xlu0 %v5710
        %v5712 = vpop.xlane.xlu0 %5711
        %v5713 = vsub.f32 %v5705, %v5709
        %v5714 = vsub.f32 %v5706, %v5712
        %v5715 = vmul.f32 %v5713, 1.442695
        %v5716 = vpow.pop %v5715
        %v5717 = vmul.f32 %v5714, 1.442695
        %v5718 = vpow.pop %v5717
        %v5719 = vsel %vm1616, %v5716, 0.0
        %5720 = vadd.xlane.f32.xlu0 %v5719
        %v5721 = vpop.xlane.xlu0 %5720
        %v5722 = vsel %vm1616, %v5718, 0.0
        %5723 = vadd.xlane.f32.xlu0 %v5722
        %v5724 = vpop.xlane.xlu0 %5723
        %v5725 = vrcp.pop %v5721
        %v5726 = vmul.f32 %v5721, %v5725
        %v5727 = vsub.f32 1.0, %v5726
        %v5728 = vmul.f32 %v5725, %v5727
        %v5729 = vadd.f32 %v5725, %v5728
        %vm5730 = vweird.f32 %v5721
        %vm5731 = vweird.f32 %v5725
        %vm5732 = vmor %vm5730, %vm5731
        %v5733 = vsel %vm5732, %v5725, %v5729
        %v5734 = vand.u32 2147483647, %v5721
        %vm5735 = vcmp.eq.f32.partialorder %v5734, 8.507059e+37
        %v5736 = vand.u32 %v5721, 2147483648
        %v5737 = vor.u32 1.1754944e-38, %v5736
        %v5738 = vsel %vm5735, %v5737, %v5733
        %v5739 = vrcp.pop %v5724
        %v5740 = vmul.f32 %v5724, %v5739
        %v5741 = vsub.f32 1.0, %v5740
        %v5742 = vmul.f32 %v5739, %v5741
        %v5743 = vadd.f32 %v5739, %v5742
        %vm5744 = vweird.f32 %v5724
        %vm5745 = vweird.f32 %v5739
        %vm5746 = vmor %vm5744, %vm5745
        %v5747 = vsel %vm5746, %v5739, %v5743
        %v5748 = vand.u32 2147483647, %v5724
        %vm5749 = vcmp.eq.f32.partialorder %v5748, 8.507059e+37
        %v5750 = vand.u32 %v5724, 2147483648
        %v5751 = vor.u32 1.1754944e-38, %v5750
        %v5752 = vsel %vm5749, %v5751, %v5747
        %v5753 = vmul.f32 %v5716, %v5738
        %v5754 = vmul.f32 %v5718, %v5752
        %5755 = vrot.lane.b32.xlu0 %v5657, 96
        %v5756 = vpop.permute.xlu0 %5755
        %5757 = vrot.lane.b32.xlu0 %v5660, 96
        %v5758 = vpop.permute.xlu0 %5757
        %5759 = vrot.lane.b32.xlu0 %v5663, 96
        %v5760 = vpop.permute.xlu0 %5759
        %v5765 = vsel %vm1616, %v5753, 0
        %v5768 = vsel %vm1616, %v5754, 0
        %5770 = vmatpush.msra.mxu0 0.0
        %5771 = vmatpush.msra.mxu0 0.0
        %5772 = vmatpush.msra.mxu0 0.0
        %5773 = vmatpush.msra.mxu0 0.0
        %5774 = vmatpush.msra.mxu0 0.0
        %5775 = vmatpush.msra.mxu0 0.0
        %5776 = vmatpush.msra.mxu0 0.0
        %5777 = vmatpush.msra.mxu0 0.0
        %5778 = vmatpush.msra.mxu0 0.0
        %5779 = vmatpush.msra.mxu0 0.0
        %5780 = vmatpush.msra.mxu0 0.0
        %5781 = vmatpush.msra.mxu0 0.0
        %5782 = vmatpush.msra.mxu0 0.0
        %5783 = vmatpush.msra.mxu0 %v5760
        %5784 = vmatpush.msra.mxu0 %v5758
        %5785 = vmatpush.msra.mxu0 %v5756
        %5786 = vmatmul.f32.gmra.mxu0 %v5765
        %v5787 = vpop.f32.mrf.mxu0
        %v5788 = vadd.f32 0.0, %v5787
        %5789 = vmatmul.f32.gmra.mxu0 %v5768
        %v5790 = vpop.f32.mrf.mxu0
        %v5791 = vadd.f32 0.0, %v5790
        %5792 = vdwg.mxu0
        %5793 = vrot.lane.b32.xlu0 %v5605, 120
        %v5794 = vpop.permute.xlu0 %5793
        %5795 = vrot.lane.b32.xlu0 %v5608, 120
        %v5796 = vpop.permute.xlu0 %5795
        %5797 = vrot.lane.b32.xlu0 %v5657, 120
        %v5798 = vpop.permute.xlu0 %5797
        %5799 = vrot.lane.b32.xlu0 %v5660, 120
        %v5800 = vpop.permute.xlu0 %5799
        %5801 = vrot.lane.b32.xlu0 %v5663, 120
        %v5802 = vpop.permute.xlu0 %5801
        %v5803 = vsel %vm952, %v5794, 0
        %v5805 = vsel %vm952, %v5796, 0
        %v5807 = vsel %vm952, %v5798, 0
        %v5809 = vsel %vm952, %v5800, 0
        %v5811 = vsel %vm952, %v5802, 0
        %5813 = vmatpush.xpose.msra.mxu0 0.0
        %5814 = vmatpush.xpose.msra.mxu0 0.0
        %5815 = vmatpush.xpose.msra.mxu0 0.0
        %5816 = vmatpush.xpose.msra.mxu0 0.0
        %5817 = vmatpush.xpose.msra.mxu0 0.0
        %5818 = vmatpush.xpose.msra.mxu0 0.0
        %5819 = vmatpush.xpose.msra.mxu0 0.0
        %5820 = vmatpush.xpose.msra.mxu0 0.0
        %5821 = vmatpush.xpose.msra.mxu0 0.0
        %5822 = vmatpush.xpose.msra.mxu0 0.0
        %5823 = vmatpush.xpose.msra.mxu0 0.0
        %5824 = vmatpush.xpose.msra.mxu0 0.0
        %5825 = vmatpush.xpose.msra.mxu0 0.0
        %5826 = vmatpush.xpose.msra.mxu0 %v5811
        %5827 = vmatpush.xpose.msra.mxu0 %v5809
        %5828 = vmatpush.xpose.msra.mxu0 %v5807
        %5829 = vmatmul.f32.gmra.mxu0 %v5803
        %v5830 = vpop.f32.mrf.mxu0
        %v5831 = vadd.f32 0.0, %v5830
        %5832 = vmatmul.f32.gmra.mxu0 %v5805
        %v5833 = vpop.f32.mrf.mxu0
        %v5834 = vadd.f32 0.0, %v5833
        %5835 = vdwg.mxu0
        %v5836 = vmul.f32 %v5831, 0.35355338
        %v5837 = vmul.f32 %v5834, 0.35355338
        %v5838 = vadd.f32 %v5836, %v2813
        %v5839 = vadd.f32 %v5837, %v2813
        %v5840 = vsel %vm1616, %v5838, -inf
        %5841 = vmax.xlane.f32.xlu0 %v5840
        %v5842 = vpop.xlane.xlu0 %5841
        %v5843 = vsel %vm1616, %v5839, -inf
        %5844 = vmax.xlane.f32.xlu0 %v5843
        %v5845 = vpop.xlane.xlu0 %5844
        %v5846 = vsub.f32 %v5838, %v5842
        %v5847 = vsub.f32 %v5839, %v5845
        %v5848 = vmul.f32 %v5846, 1.442695
        %v5849 = vpow.pop %v5848
        %v5850 = vmul.f32 %v5847, 1.442695
        %v5851 = vpow.pop %v5850
        %v5852 = vsel %vm1616, %v5849, 0.0
        %5853 = vadd.xlane.f32.xlu0 %v5852
        %v5854 = vpop.xlane.xlu0 %5853
        %v5855 = vsel %vm1616, %v5851, 0.0
        %5856 = vadd.xlane.f32.xlu0 %v5855
        %v5857 = vpop.xlane.xlu0 %5856
        %v5858 = vrcp.pop %v5854
        %v5859 = vmul.f32 %v5854, %v5858
        %v5860 = vsub.f32 1.0, %v5859
        %v5861 = vmul.f32 %v5858, %v5860
        %v5862 = vadd.f32 %v5858, %v5861
        %vm5863 = vweird.f32 %v5854
        %vm5864 = vweird.f32 %v5858
        %vm5865 = vmor %vm5863, %vm5864
        %v5866 = vsel %vm5865, %v5858, %v5862
        %v5867 = vand.u32 2147483647, %v5854
        %vm5868 = vcmp.eq.f32.partialorder %v5867, 8.507059e+37
        %v5869 = vand.u32 %v5854, 2147483648
        %v5870 = vor.u32 1.1754944e-38, %v5869
        %v5871 = vsel %vm5868, %v5870, %v5866
        %v5872 = vrcp.pop %v5857
        %v5873 = vmul.f32 %v5857, %v5872
        %v5874 = vsub.f32 1.0, %v5873
        %v5875 = vmul.f32 %v5872, %v5874
        %v5876 = vadd.f32 %v5872, %v5875
        %vm5877 = vweird.f32 %v5857
        %vm5878 = vweird.f32 %v5872
        %vm5879 = vmor %vm5877, %vm5878
        %v5880 = vsel %vm5879, %v5872, %v5876
        %v5881 = vand.u32 2147483647, %v5857
        %vm5882 = vcmp.eq.f32.partialorder %v5881, 8.507059e+37
        %v5883 = vand.u32 %v5857, 2147483648
        %v5884 = vor.u32 1.1754944e-38, %v5883
        %v5885 = vsel %vm5882, %v5884, %v5880
        %v5886 = vmul.f32 %v5849, %v5871
        %v5887 = vmul.f32 %v5851, %v5885
        %5888 = vrot.lane.b32.xlu0 %v5657, 88
        %v5889 = vpop.permute.xlu0 %5888
        %5890 = vrot.lane.b32.xlu0 %v5660, 88
        %v5891 = vpop.permute.xlu0 %5890
        %5892 = vrot.lane.b32.xlu0 %v5663, 88
        %v5893 = vpop.permute.xlu0 %5892
        %v5898 = vsel %vm1616, %v5886, 0
        %v5901 = vsel %vm1616, %v5887, 0
        %5903 = vmatpush.msra.mxu0 0.0
        %5904 = vmatpush.msra.mxu0 0.0
        %5905 = vmatpush.msra.mxu0 0.0
        %5906 = vmatpush.msra.mxu0 0.0
        %5907 = vmatpush.msra.mxu0 0.0
        %5908 = vmatpush.msra.mxu0 0.0
        %5909 = vmatpush.msra.mxu0 0.0
        %5910 = vmatpush.msra.mxu0 0.0
        %5911 = vmatpush.msra.mxu0 0.0
        %5912 = vmatpush.msra.mxu0 0.0
        %5913 = vmatpush.msra.mxu0 0.0
        %5914 = vmatpush.msra.mxu0 0.0
        %5915 = vmatpush.msra.mxu0 0.0
        %5916 = vmatpush.msra.mxu0 %v5893
        %5917 = vmatpush.msra.mxu0 %v5891
        %5918 = vmatpush.msra.mxu0 %v5889
        %5919 = vmatmul.f32.gmra.mxu0 %v5898
        %v5920 = vpop.f32.mrf.mxu0
        %v5921 = vadd.f32 0.0, %v5920
        %5922 = vmatmul.f32.gmra.mxu0 %v5901
        %v5923 = vpop.f32.mrf.mxu0
        %v5924 = vadd.f32 0.0, %v5923
        %5925 = vdwg.mxu0
        %5926 = vrot.lane.b32.xlu0 %v5605, 112
        %v5927 = vpop.permute.xlu0 %5926
        %5928 = vrot.lane.b32.xlu0 %v5608, 112
        %v5929 = vpop.permute.xlu0 %5928
        %5930 = vrot.lane.b32.xlu0 %v5657, 112
        %v5931 = vpop.permute.xlu0 %5930
        %5932 = vrot.lane.b32.xlu0 %v5660, 112
        %v5933 = vpop.permute.xlu0 %5932
        %5934 = vrot.lane.b32.xlu0 %v5663, 112
        %v5935 = vpop.permute.xlu0 %5934
        %v5936 = vsel %vm952, %v5927, 0
        %v5938 = vsel %vm952, %v5929, 0
        %v5940 = vsel %vm952, %v5931, 0
        %v5942 = vsel %vm952, %v5933, 0
        %v5944 = vsel %vm952, %v5935, 0
        %5946 = vmatpush.xpose.msra.mxu0 0.0
        %5947 = vmatpush.xpose.msra.mxu0 0.0
        %5948 = vmatpush.xpose.msra.mxu0 0.0
        %5949 = vmatpush.xpose.msra.mxu0 0.0
        %5950 = vmatpush.xpose.msra.mxu0 0.0
        %5951 = vmatpush.xpose.msra.mxu0 0.0
        %5952 = vmatpush.xpose.msra.mxu0 0.0
        %5953 = vmatpush.xpose.msra.mxu0 0.0
        %5954 = vmatpush.xpose.msra.mxu0 0.0
        %5955 = vmatpush.xpose.msra.mxu0 0.0
        %5956 = vmatpush.xpose.msra.mxu0 0.0
        %5957 = vmatpush.xpose.msra.mxu0 0.0
        %5958 = vmatpush.xpose.msra.mxu0 0.0
        %5959 = vmatpush.xpose.msra.mxu0 %v5944
        %5960 = vmatpush.xpose.msra.mxu0 %v5942
        %5961 = vmatpush.xpose.msra.mxu0 %v5940
        %5962 = vmatmul.f32.gmra.mxu0 %v5936
        %v5963 = vpop.f32.mrf.mxu0
        %v5964 = vadd.f32 0.0, %v5963
        %5965 = vmatmul.f32.gmra.mxu0 %v5938
        %v5966 = vpop.f32.mrf.mxu0
        %v5967 = vadd.f32 0.0, %v5966
        %5968 = vdwg.mxu0
        %v5969 = vmul.f32 %v5964, 0.35355338
        %v5970 = vmul.f32 %v5967, 0.35355338
        %v5971 = vadd.f32 %v5969, %v2813
        %v5972 = vadd.f32 %v5970, %v2813
        %v5973 = vsel %vm1616, %v5971, -inf
        %5974 = vmax.xlane.f32.xlu0 %v5973
        %v5975 = vpop.xlane.xlu0 %5974
        %v5976 = vsel %vm1616, %v5972, -inf
        %5977 = vmax.xlane.f32.xlu0 %v5976
        %v5978 = vpop.xlane.xlu0 %5977
        %v5979 = vsub.f32 %v5971, %v5975
        %v5980 = vsub.f32 %v5972, %v5978
        %v5981 = vmul.f32 %v5979, 1.442695
        %v5982 = vpow.pop %v5981
        %v5983 = vmul.f32 %v5980, 1.442695
        %v5984 = vpow.pop %v5983
        %v5985 = vsel %vm1616, %v5982, 0.0
        %5986 = vadd.xlane.f32.xlu0 %v5985
        %v5987 = vpop.xlane.xlu0 %5986
        %v5988 = vsel %vm1616, %v5984, 0.0
        %5989 = vadd.xlane.f32.xlu0 %v5988
        %v5990 = vpop.xlane.xlu0 %5989
        %v5991 = vrcp.pop %v5987
        %v5992 = vmul.f32 %v5987, %v5991
        %v5993 = vsub.f32 1.0, %v5992
        %v5994 = vmul.f32 %v5991, %v5993
        %v5995 = vadd.f32 %v5991, %v5994
        %vm5996 = vweird.f32 %v5987
        %vm5997 = vweird.f32 %v5991
        %vm5998 = vmor %vm5996, %vm5997
        %v5999 = vsel %vm5998, %v5991, %v5995
        %v6000 = vand.u32 2147483647, %v5987
        %vm6001 = vcmp.eq.f32.partialorder %v6000, 8.507059e+37
        %v6002 = vand.u32 %v5987, 2147483648
        %v6003 = vor.u32 1.1754944e-38, %v6002
        %v6004 = vsel %vm6001, %v6003, %v5999
        %v6005 = vrcp.pop %v5990
        %v6006 = vmul.f32 %v5990, %v6005
        %v6007 = vsub.f32 1.0, %v6006
        %v6008 = vmul.f32 %v6005, %v6007
        %v6009 = vadd.f32 %v6005, %v6008
        %vm6010 = vweird.f32 %v5990
        %vm6011 = vweird.f32 %v6005
        %vm6012 = vmor %vm6010, %vm6011
        %v6013 = vsel %vm6012, %v6005, %v6009
        %v6014 = vand.u32 2147483647, %v5990
        %vm6015 = vcmp.eq.f32.partialorder %v6014, 8.507059e+37
        %v6016 = vand.u32 %v5990, 2147483648
        %v6017 = vor.u32 1.1754944e-38, %v6016
        %v6018 = vsel %vm6015, %v6017, %v6013
        %v6019 = vmul.f32 %v5982, %v6004
        %v6020 = vmul.f32 %v5984, %v6018
        %6021 = vrot.lane.b32.xlu0 %v5657, 80
        %v6022 = vpop.permute.xlu0 %6021
        %6023 = vrot.lane.b32.xlu0 %v5660, 80
        %v6024 = vpop.permute.xlu0 %6023
        %6025 = vrot.lane.b32.xlu0 %v5663, 80
        %v6026 = vpop.permute.xlu0 %6025
        %v6031 = vsel %vm1616, %v6019, 0
        %v6034 = vsel %vm1616, %v6020, 0
        %6036 = vmatpush.msra.mxu0 0.0
        %6037 = vmatpush.msra.mxu0 0.0
        %6038 = vmatpush.msra.mxu0 0.0
        %6039 = vmatpush.msra.mxu0 0.0
        %6040 = vmatpush.msra.mxu0 0.0
        %6041 = vmatpush.msra.mxu0 0.0
        %6042 = vmatpush.msra.mxu0 0.0
        %6043 = vmatpush.msra.mxu0 0.0
        %6044 = vmatpush.msra.mxu0 0.0
        %6045 = vmatpush.msra.mxu0 0.0
        %6046 = vmatpush.msra.mxu0 0.0
        %6047 = vmatpush.msra.mxu0 0.0
        %6048 = vmatpush.msra.mxu0 0.0
        %6049 = vmatpush.msra.mxu0 %v6026
        %6050 = vmatpush.msra.mxu0 %v6024
        %6051 = vmatpush.msra.mxu0 %v6022
        %6052 = vmatmul.f32.gmra.mxu0 %v6031
        %v6053 = vpop.f32.mrf.mxu0
        %v6054 = vadd.f32 0.0, %v6053
        %6055 = vmatmul.f32.gmra.mxu0 %v6034
        %v6056 = vpop.f32.mrf.mxu0
        %v6057 = vadd.f32 0.0, %v6056
        %6058 = vdwg.mxu0
        %6059 = vrot.lane.b32.xlu0 %v5605, 104
        %v6060 = vpop.permute.xlu0 %6059
        %6061 = vrot.lane.b32.xlu0 %v5608, 104
        %v6062 = vpop.permute.xlu0 %6061
        %6063 = vrot.lane.b32.xlu0 %v5657, 104
        %v6064 = vpop.permute.xlu0 %6063
        %6065 = vrot.lane.b32.xlu0 %v5660, 104
        %v6066 = vpop.permute.xlu0 %6065
        %6067 = vrot.lane.b32.xlu0 %v5663, 104
        %v6068 = vpop.permute.xlu0 %6067
        %v6069 = vsel %vm952, %v6060, 0
        %v6071 = vsel %vm952, %v6062, 0
        %v6073 = vsel %vm952, %v6064, 0
        %v6075 = vsel %vm952, %v6066, 0
        %v6077 = vsel %vm952, %v6068, 0
        %6079 = vmatpush.xpose.msra.mxu0 0.0
        %6080 = vmatpush.xpose.msra.mxu0 0.0
        %6081 = vmatpush.xpose.msra.mxu0 0.0
        %6082 = vmatpush.xpose.msra.mxu0 0.0
        %6083 = vmatpush.xpose.msra.mxu0 0.0
        %6084 = vmatpush.xpose.msra.mxu0 0.0
        %6085 = vmatpush.xpose.msra.mxu0 0.0
        %6086 = vmatpush.xpose.msra.mxu0 0.0
        %6087 = vmatpush.xpose.msra.mxu0 0.0
        %6088 = vmatpush.xpose.msra.mxu0 0.0
        %6089 = vmatpush.xpose.msra.mxu0 0.0
        %6090 = vmatpush.xpose.msra.mxu0 0.0
        %6091 = vmatpush.xpose.msra.mxu0 0.0
        %6092 = vmatpush.xpose.msra.mxu0 %v6077
        %6093 = vmatpush.xpose.msra.mxu0 %v6075
        %6094 = vmatpush.xpose.msra.mxu0 %v6073
        %6095 = vmatmul.f32.gmra.mxu0 %v6069
        %v6096 = vpop.f32.mrf.mxu0
        %v6097 = vadd.f32 0.0, %v6096
        %6098 = vmatmul.f32.gmra.mxu0 %v6071
        %v6099 = vpop.f32.mrf.mxu0
        %v6100 = vadd.f32 0.0, %v6099
        %6101 = vdwg.mxu0
        %v6102 = vmul.f32 %v6097, 0.35355338
        %v6103 = vmul.f32 %v6100, 0.35355338
        %v6104 = vadd.f32 %v6102, %v2813
        %v6105 = vadd.f32 %v6103, %v2813
        %v6106 = vsel %vm1616, %v6104, -inf
        %6107 = vmax.xlane.f32.xlu0 %v6106
        %v6108 = vpop.xlane.xlu0 %6107
        %v6109 = vsel %vm1616, %v6105, -inf
        %6110 = vmax.xlane.f32.xlu0 %v6109
        %v6111 = vpop.xlane.xlu0 %6110
        %v6112 = vsub.f32 %v6104, %v6108
        %v6113 = vsub.f32 %v6105, %v6111
        %v6114 = vmul.f32 %v6112, 1.442695
        %v6115 = vpow.pop %v6114
        %v6116 = vmul.f32 %v6113, 1.442695
        %v6117 = vpow.pop %v6116
        %v6118 = vsel %vm1616, %v6115, 0.0
        %6119 = vadd.xlane.f32.xlu0 %v6118
        %v6120 = vpop.xlane.xlu0 %6119
        %v6121 = vsel %vm1616, %v6117, 0.0
        %6122 = vadd.xlane.f32.xlu0 %v6121
        %v6123 = vpop.xlane.xlu0 %6122
        %v6124 = vrcp.pop %v6120
        %v6125 = vmul.f32 %v6120, %v6124
        %v6126 = vsub.f32 1.0, %v6125
        %v6127 = vmul.f32 %v6124, %v6126
        %v6128 = vadd.f32 %v6124, %v6127
        %vm6129 = vweird.f32 %v6120
        %vm6130 = vweird.f32 %v6124
        %vm6131 = vmor %vm6129, %vm6130
        %v6132 = vsel %vm6131, %v6124, %v6128
        %v6133 = vand.u32 2147483647, %v6120
        %vm6134 = vcmp.eq.f32.partialorder %v6133, 8.507059e+37
        %v6135 = vand.u32 %v6120, 2147483648
        %v6136 = vor.u32 1.1754944e-38, %v6135
        %v6137 = vsel %vm6134, %v6136, %v6132
        %v6138 = vrcp.pop %v6123
        %v6139 = vmul.f32 %v6123, %v6138
        %v6140 = vsub.f32 1.0, %v6139
        %v6141 = vmul.f32 %v6138, %v6140
        %v6142 = vadd.f32 %v6138, %v6141
        %vm6143 = vweird.f32 %v6123
        %vm6144 = vweird.f32 %v6138
        %vm6145 = vmor %vm6143, %vm6144
        %v6146 = vsel %vm6145, %v6138, %v6142
        %v6147 = vand.u32 2147483647, %v6123
        %vm6148 = vcmp.eq.f32.partialorder %v6147, 8.507059e+37
        %v6149 = vand.u32 %v6123, 2147483648
        %v6150 = vor.u32 1.1754944e-38, %v6149
        %v6151 = vsel %vm6148, %v6150, %v6146
        %v6152 = vmul.f32 %v6115, %v6137
        %v6153 = vmul.f32 %v6117, %v6151
        %6154 = vrot.lane.b32.xlu0 %v5657, 72
        %v6155 = vpop.permute.xlu0 %6154
        %6156 = vrot.lane.b32.xlu0 %v5660, 72
        %v6157 = vpop.permute.xlu0 %6156
        %6158 = vrot.lane.b32.xlu0 %v5663, 72
        %v6159 = vpop.permute.xlu0 %6158
        %v6164 = vsel %vm1616, %v6152, 0
        %v6167 = vsel %vm1616, %v6153, 0
        %6169 = vmatpush.msra.mxu0 0.0
        %6170 = vmatpush.msra.mxu0 0.0
        %6171 = vmatpush.msra.mxu0 0.0
        %6172 = vmatpush.msra.mxu0 0.0
        %6173 = vmatpush.msra.mxu0 0.0
        %6174 = vmatpush.msra.mxu0 0.0
        %6175 = vmatpush.msra.mxu0 0.0
        %6176 = vmatpush.msra.mxu0 0.0
        %6177 = vmatpush.msra.mxu0 0.0
        %6178 = vmatpush.msra.mxu0 0.0
        %6179 = vmatpush.msra.mxu0 0.0
        %6180 = vmatpush.msra.mxu0 0.0
        %6181 = vmatpush.msra.mxu0 0.0
        %6182 = vmatpush.msra.mxu0 %v6159
        %6183 = vmatpush.msra.mxu0 %v6157
        %6184 = vmatpush.msra.mxu0 %v6155
        %6185 = vmatmul.f32.gmra.mxu0 %v6164
        %v6186 = vpop.f32.mrf.mxu0
        %v6187 = vadd.f32 0.0, %v6186
        %6188 = vmatmul.f32.gmra.mxu0 %v6167
        %v6189 = vpop.f32.mrf.mxu0
        %v6190 = vadd.f32 0.0, %v6189
        %6191 = vdwg.mxu0
        %6194 = vrot.lane.b32.xlu0 %v5921, 8
        %v6195 = vpop.permute.xlu0 %6194
        %6196 = vrot.lane.b32.xlu0 %v5924, 8
        %v6197 = vpop.permute.xlu0 %6196
        %6202 = vrot.lane.b32.xlu0 %v6054, 16
        %v6203 = vpop.permute.xlu0 %6202
        %6204 = vrot.lane.b32.xlu0 %v6057, 16
        %v6205 = vpop.permute.xlu0 %6204
        %6210 = vrot.lane.b32.xlu0 %v6187, 24
        %v6211 = vpop.permute.xlu0 %6210
        %6212 = vrot.lane.b32.xlu0 %v6190, 24
        %v6213 = vpop.permute.xlu0 %6212
        %v6216 = vsel %vm952, %v5788, %v6195
        %v6217 = vsel %vm952, %v5791, %v6197
        %v6218 = vsel %vm1132, %v6216, %v6203
        %v6219 = vsel %vm1132, %v6217, %v6205
        %v6220 = vsel %vm1616, %v6218, %v6211
        %v6221 = vsel %vm1616, %v6219, %v6213
        %v6222 = vperm.slane %v4876, 3
        %v6224 = vsel %vm982, %v6220, 0
        %v6227 = vsel %vm982, %v6221, 0
        %6229 = vmatpush.msra.mxu0 0.0
        %6230 = vmatpush.msra.mxu0 0.0
        %6231 = vmatpush.msra.mxu0 0.0
        %6232 = vmatpush.msra.mxu0 0.0
        %6233 = vmatpush.msra.mxu0 0.0
        %6234 = vmatpush.msra.mxu0 0.0
        %6235 = vmatpush.msra.mxu0 0.0
        %6236 = vmatpush.msra.mxu0 0.0
        %6237 = vmatpush.msra.mxu0 0.0
        %6238 = vmatpush.msra.mxu0 0.0
        %6239 = vmatpush.msra.mxu0 0.0
        %6240 = vmatpush.msra.mxu0 0.0
        %6241 = vmatpush.msra.mxu0 %v5579
        %6242 = vmatpush.msra.mxu0 %v5578
        %6243 = vmatpush.msra.mxu0 %v5577
        %6244 = vmatpush.msra.mxu0 %v5576
        %6245 = vmatmul.f32.gmra.mxu0 %v6224
        %v6246 = vpop.f32.mrf.mxu0
        %v6247 = vadd.f32 %v6222, %v6246
        %6248 = vmatmul.f32.gmra.mxu0 %v6227
        %v6249 = vpop.f32.mrf.mxu0
        %v6250 = vadd.f32 %v6222, %v6249
        %6251 = vdwg.mxu0
        %v6252 = vadd.f32 %v5520, %v6247
        %v6253 = vadd.f32 %v5521, %v6250
        %v6254 = vsel %vm982, %v6252, 0.0
        %6255 = vadd.xlane.f32.xlu0 %v6254
        %v6256 = vpop.xlane.xlu0 %6255
        %v6257 = vsel %vm982, %v6253, 0.0
        %6258 = vadd.xlane.f32.xlu0 %v6257
        %v6259 = vpop.xlane.xlu0 %6258
        %v6260 = vmul.f32 %v6256, %v1018
        %v6261 = vmul.f32 %v6259, %v1018
        %v6262 = vsub.f32 %v6252, %v6260
        %v6263 = vsub.f32 %v6253, %v6261
        %v6264 = vmul.f32 %v6262, %v6262
        %v6265 = vmul.f32 %v6263, %v6263
        %v6266 = vsel %vm982, %v6264, 0.0
        %6267 = vadd.xlane.f32.xlu0 %v6266
        %v6268 = vpop.xlane.xlu0 %6267
        %v6269 = vsel %vm982, %v6265, 0.0
        %6270 = vadd.xlane.f32.xlu0 %v6269
        %v6271 = vpop.xlane.xlu0 %6270
        %v6272 = vmul.f32 %v6268, %v1018
        %v6273 = vmul.f32 %v6271, %v1018
        %v6274 = vadd.f32 %v6272, 1e-05
        %v6275 = vadd.f32 %v6273, 1e-05
        %v6276 = vrsqrt.pop %v6274
        %v6277 = vmul.f32 %v6276, %v6274
        %v6278 = vmul.f32 %v6277, %v6276
        %v6279 = vmul.f32 0.5, %v6278
        %v6280 = vsub.f32 1.5, %v6279
        %v6281 = vmul.f32 %v6276, %v6280
        %vm6282 = vweird.f32 %v6274
        %vm6283 = vweird.f32 %v6276
        %vm6284 = vmor %vm6282, %vm6283
        %v6285 = vsel %vm6284, %v6276, %v6281
        %v6286 = vrsqrt.pop %v6275
        %v6287 = vmul.f32 %v6286, %v6275
        %v6288 = vmul.f32 %v6287, %v6286
        %v6289 = vmul.f32 0.5, %v6288
        %v6290 = vsub.f32 1.5, %v6289
        %v6291 = vmul.f32 %v6286, %v6290
        %vm6292 = vweird.f32 %v6275
        %vm6293 = vweird.f32 %v6286
        %vm6294 = vmor %vm6292, %vm6293
        %v6295 = vsel %vm6294, %v6286, %v6291
        %v6296 = vmul.f32 %v6262, %v6285
        %v6297 = vmul.f32 %v6263, %v6295
        %v6298 = vperm.slane %v4877, 2
        %v6299 = vmul.f32 %v6296, %v6298
        %v6300 = vmul.f32 %v6297, %v6298
        %v6301 = vperm.slane %v4877, 3
        %v6302 = vadd.f32 %v6299, %v6301
        %v6303 = vadd.f32 %v6300, %v6301
        %v6304 = vld [vmem:[%s22] sm:$0xff]
        %v6305 = vld [vmem:[%s22 + $0x8] sm:$0xff]
        %v6306 = vld [vmem:[%s22 + $0x10] sm:$0xff]
        %v6307 = vld [vmem:[%s22 + $0x18] sm:$0xff]
        %v6308 = vperm.slane %v4876, 4
        %v6310 = vsel %vm982, %v6302, 0
        %v6313 = vsel %vm982, %v6303, 0
        %6315 = vmatpush.msra.mxu0 0.0
        %6316 = vmatpush.msra.mxu0 0.0
        %6317 = vmatpush.msra.mxu0 0.0
        %6318 = vmatpush.msra.mxu0 0.0
        %6319 = vmatpush.msra.mxu0 0.0
        %6320 = vmatpush.msra.mxu0 0.0
        %6321 = vmatpush.msra.mxu0 0.0
        %6322 = vmatpush.msra.mxu0 0.0
        %6323 = vmatpush.msra.mxu0 0.0
        %6324 = vmatpush.msra.mxu0 0.0
        %6325 = vmatpush.msra.mxu0 0.0
        %6326 = vmatpush.msra.mxu0 0.0
        %6327 = vmatpush.msra.mxu0 %v6307
        %6328 = vmatpush.msra.mxu0 %v6306
        %6329 = vmatpush.msra.mxu0 %v6305
        %6330 = vmatpush.msra.mxu0 %v6304
        %6331 = vmatmul.f32.gmra.mxu0 %v6310
        %v6332 = vpop.f32.mrf.mxu0
        %v6333 = vadd.f32 %v6308, %v6332
        %6334 = vmatmul.f32.gmra.mxu0 %v6313
        %v6335 = vpop.f32.mrf.mxu0
        %v6336 = vadd.f32 %v6308, %v6335
        %6337 = vdwg.mxu0
        %v6338 = vmul.f32 %v6333, %v6333
        %v6339 = vmul.f32 %v6336, %v6336
        %v6340 = vmul.f32 %v6333, %v6338
        %v6341 = vmul.f32 %v6336, %v6339
        %v6342 = vmul.f32 %v6340, 0.044715
        %v6343 = vmul.f32 %v6341, 0.044715
        %v6344 = vadd.f32 %v6333, %v6342
        %v6345 = vadd.f32 %v6336, %v6343
        %v6346 = vmul.f32 %v6344, 0.7978846
        %v6347 = vmul.f32 %v6345, 0.7978846
        %v6348 = vtanh.pop %v6346
        %v6349 = vtanh.pop %v6347
        %v6350 = vadd.f32 %v6348, 1.0
        %v6351 = vadd.f32 %v6349, 1.0
        %v6352 = vmul.f32 %v6350, 0.5
        %v6353 = vmul.f32 %v6351, 0.5
        %v6354 = vmul.f32 %v6333, %v6352
        %v6355 = vmul.f32 %v6336, %v6353
        %v6356 = vld [vmem:[%s23] sm:$0xff]
        %v6357 = vld [vmem:[%s23 + $0x8] sm:$0xff]
        %v6358 = vld [vmem:[%s23 + $0x10] sm:$0xff]
        %v6359 = vld [vmem:[%s23 + $0x18] sm:$0xff]
        %v6360 = vld [vmem:[%s23 + $0x20] sm:$0xff]
        %v6361 = vld [vmem:[%s23 + $0x28] sm:$0xff]
        %v6362 = vld [vmem:[%s23 + $0x30] sm:$0xff]
        %v6363 = vld [vmem:[%s23 + $0x38] sm:$0xff]
        %v6365 = vsel %vm1749, %v6354, 0
        %v6368 = vsel %vm1749, %v6355, 0
        %6370 = vmatpush.msra.mxu0 0.0
        %6371 = vmatpush.msra.mxu0 0.0
        %6372 = vmatpush.msra.mxu0 0.0
        %6373 = vmatpush.msra.mxu0 0.0
        %6374 = vmatpush.msra.mxu0 0.0
        %6375 = vmatpush.msra.mxu0 0.0
        %6376 = vmatpush.msra.mxu0 0.0
        %6377 = vmatpush.msra.mxu0 0.0
        %6378 = vmatpush.msra.mxu0 %v6363
        %6379 = vmatpush.msra.mxu0 %v6362
        %6380 = vmatpush.msra.mxu0 %v6361
        %6381 = vmatpush.msra.mxu0 %v6360
        %6382 = vmatpush.msra.mxu0 %v6359
        %6383 = vmatpush.msra.mxu0 %v6358
        %6384 = vmatpush.msra.mxu0 %v6357
        %6385 = vmatpush.msra.mxu0 %v6356
        %6386 = vmatmul.f32.gmra.mxu0 %v6365
        %v6387 = vpop.f32.mrf.mxu0
        %v6388 = vadd.f32 0.0, %v6387
        %6389 = vmatmul.f32.gmra.mxu0 %v6368
        %v6390 = vpop.f32.mrf.mxu0
        %v6391 = vadd.f32 0.0, %v6390
        %6392 = vdwg.mxu0
        %v6393 = vadd.f32 %v6252, %v6388
        %v6394 = vadd.f32 %v6253, %v6391
        %v6395 = vperm.slane %v4876, 5
        %v6396 = vadd.f32 %v6393, %v6395
        %v6397 = vadd.f32 %v6394, %v6395
        %s6398 = scalar_lea.vmem %s24, 16
        %v6399 = vld [vmem:[%s6398] sm:$0xff]
        %v6400 = vld [vmem:[%s6398 + $0x8] sm:$0xff]
        %v6401 = vsel %vm982, %v6396, 0.0
        %6402 = vadd.xlane.f32.xlu0 %v6401
        %v6403 = vpop.xlane.xlu0 %6402
        %v6404 = vsel %vm982, %v6397, 0.0
        %6405 = vadd.xlane.f32.xlu0 %v6404
        %v6406 = vpop.xlane.xlu0 %6405
        %v6407 = vmul.f32 %v6403, %v1018
        %v6408 = vmul.f32 %v6406, %v1018
        %v6409 = vsub.f32 %v6396, %v6407
        %v6410 = vsub.f32 %v6397, %v6408
        %v6411 = vmul.f32 %v6409, %v6409
        %v6412 = vmul.f32 %v6410, %v6410
        %v6413 = vsel %vm982, %v6411, 0.0
        %6414 = vadd.xlane.f32.xlu0 %v6413
        %v6415 = vpop.xlane.xlu0 %6414
        %v6416 = vsel %vm982, %v6412, 0.0
        %6417 = vadd.xlane.f32.xlu0 %v6416
        %v6418 = vpop.xlane.xlu0 %6417
        %v6419 = vmul.f32 %v6415, %v1018
        %v6420 = vmul.f32 %v6418, %v1018
        %v6421 = vadd.f32 %v6419, 1e-05
        %v6422 = vadd.f32 %v6420, 1e-05
        %v6423 = vrsqrt.pop %v6421
        %v6424 = vmul.f32 %v6423, %v6421
        %v6425 = vmul.f32 %v6424, %v6423
        %v6426 = vmul.f32 0.5, %v6425
        %v6427 = vsub.f32 1.5, %v6426
        %v6428 = vmul.f32 %v6423, %v6427
        %vm6429 = vweird.f32 %v6421
        %vm6430 = vweird.f32 %v6423
        %vm6431 = vmor %vm6429, %vm6430
        %v6432 = vsel %vm6431, %v6423, %v6428
        %v6433 = vrsqrt.pop %v6422
        %v6434 = vmul.f32 %v6433, %v6422
        %v6435 = vmul.f32 %v6434, %v6433
        %v6436 = vmul.f32 0.5, %v6435
        %v6437 = vsub.f32 1.5, %v6436
        %v6438 = vmul.f32 %v6433, %v6437
        %vm6439 = vweird.f32 %v6422
        %vm6440 = vweird.f32 %v6433
        %vm6441 = vmor %vm6439, %vm6440
        %v6442 = vsel %vm6441, %v6433, %v6438
        %v6443 = vmul.f32 %v6409, %v6432
        %v6444 = vmul.f32 %v6410, %v6442
        %v6445 = vperm.slane %v6399, 6
        %v6446 = vmul.f32 %v6443, %v6445
        %v6447 = vmul.f32 %v6444, %v6445
        %v6448 = vperm.slane %v6399, 7
        %v6449 = vadd.f32 %v6446, %v6448
        %v6450 = vadd.f32 %v6447, %v6448
        %s6451 = scalar_lea.vmem %s18, 32
        %v6452 = vld [vmem:[%s6451] sm:$0xff]
        %v6453 = vld [vmem:[%s6451 + $0x8] sm:$0xff]
        %v6454 = vld [vmem:[%s6451 + $0x10] sm:$0xff]
        %v6455 = vld [vmem:[%s6451 + $0x18] sm:$0xff]
        %s6456 = scalar_lea.vmem %s19, 32
        %v6457 = vld [vmem:[%s6456] sm:$0xff]
        %v6458 = vld [vmem:[%s6456 + $0x8] sm:$0xff]
        %v6459 = vld [vmem:[%s6456 + $0x10] sm:$0xff]
        %v6460 = vld [vmem:[%s6456 + $0x18] sm:$0xff]
        %v6461 = vperm.slane %v6399, 0
        %v6463 = vsel %vm982, %v6449, 0
        %v6466 = vsel %vm982, %v6450, 0
        %6468 = vmatpush.msra.mxu0 0.0
        %6469 = vmatpush.msra.mxu0 0.0
        %6470 = vmatpush.msra.mxu0 0.0
        %6471 = vmatpush.msra.mxu0 0.0
        %6472 = vmatpush.msra.mxu0 0.0
        %6473 = vmatpush.msra.mxu0 0.0
        %6474 = vmatpush.msra.mxu0 0.0
        %6475 = vmatpush.msra.mxu0 0.0
        %6476 = vmatpush.msra.mxu0 0.0
        %6477 = vmatpush.msra.mxu0 0.0
        %6478 = vmatpush.msra.mxu0 0.0
        %6479 = vmatpush.msra.mxu0 0.0
        %6480 = vmatpush.msra.mxu0 %v6455
        %6481 = vmatpush.msra.mxu0 %v6454
        %6482 = vmatpush.msra.mxu0 %v6453
        %6483 = vmatpush.msra.mxu0 %v6452
        %6484 = vmatmul.f32.gmra.mxu0 %v6463
        %v6485 = vpop.f32.mrf.mxu0
        %v6486 = vadd.f32 %v6461, %v6485
        %6487 = vmatmul.f32.gmra.mxu0 %v6466
        %v6488 = vpop.f32.mrf.mxu0
        %v6489 = vadd.f32 %v6461, %v6488
        %6490 = vdwg.mxu0
        %6493 = vrot.lane.b32.xlu0 %v6486, 96
        %v6494 = vpop.permute.xlu0 %6493
        %6495 = vrot.lane.b32.xlu0 %v6489, 96
        %v6496 = vpop.permute.xlu0 %6495
        %v6497 = vsel %vm952, %v6486, 0
        %v6499 = vsel %vm952, %v6489, 0
        %v6501 = vsel %vm952, %v6494, 0
        %v6503 = vsel %vm952, %v6496, 0
        %6505 = vmatpush.xpose.msra.mxu0 0.0
        %6506 = vmatpush.xpose.msra.mxu0 0.0
        %6507 = vmatpush.xpose.msra.mxu0 0.0
        %6508 = vmatpush.xpose.msra.mxu0 0.0
        %6509 = vmatpush.xpose.msra.mxu0 0.0
        %6510 = vmatpush.xpose.msra.mxu0 0.0
        %6511 = vmatpush.xpose.msra.mxu0 0.0
        %6512 = vmatpush.xpose.msra.mxu0 0.0
        %6513 = vmatpush.xpose.msra.mxu0 0.0
        %6514 = vmatpush.xpose.msra.mxu0 0.0
        %6515 = vmatpush.xpose.msra.mxu0 0.0
        %6516 = vmatpush.xpose.msra.mxu0 0.0
        %6517 = vmatpush.xpose.msra.mxu0 0.0
        %6518 = vmatpush.xpose.msra.mxu0 0.0
        %6519 = vmatpush.xpose.msra.mxu0 %v6503
        %6520 = vmatpush.xpose.msra.mxu0 %v6501
        %6521 = vmatmul.f32.gmra.mxu0 %v6497
        %v6522 = vpop.f32.mrf.mxu0
        %v6523 = vadd.f32 0.0, %v6522
        %6524 = vmatmul.f32.gmra.mxu0 %v6499
        %v6525 = vpop.f32.mrf.mxu0
        %v6526 = vadd.f32 0.0, %v6525
        %6527 = vdwg.mxu0
        %v6528 = vmul.f32 %v6523, 0.35355338
        %v6529 = vmul.f32 %v6526, 0.35355338
        %v6530 = vsel %vm1132, %v6528, -inf
        %6531 = vmax.xlane.f32.xlu0 %v6530
        %v6532 = vpop.xlane.xlu0 %6531
        %v6533 = vsel %vm1132, %v6529, -inf
        %6534 = vmax.xlane.f32.xlu0 %v6533
        %v6535 = vpop.xlane.xlu0 %6534
        %v6536 = vsub.f32 %v6528, %v6532
        %v6537 = vsub.f32 %v6529, %v6535
        %v6538 = vmul.f32 %v6536, 1.442695
        %v6539 = vpow.pop %v6538
        %v6540 = vmul.f32 %v6537, 1.442695
        %v6541 = vpow.pop %v6540
        %v6542 = vsel %vm1132, %v6539, 0.0
        %6543 = vadd.xlane.f32.xlu0 %v6542
        %v6544 = vpop.xlane.xlu0 %6543
        %v6545 = vsel %vm1132, %v6541, 0.0
        %6546 = vadd.xlane.f32.xlu0 %v6545
        %v6547 = vpop.xlane.xlu0 %6546
        %v6548 = vrcp.pop %v6544
        %v6549 = vmul.f32 %v6544, %v6548
        %v6550 = vsub.f32 1.0, %v6549
        %v6551 = vmul.f32 %v6548, %v6550
        %v6552 = vadd.f32 %v6548, %v6551
        %vm6553 = vweird.f32 %v6544
        %vm6554 = vweird.f32 %v6548
        %vm6555 = vmor %vm6553, %vm6554
        %v6556 = vsel %vm6555, %v6548, %v6552
        %v6557 = vand.u32 2147483647, %v6544
        %vm6558 = vcmp.eq.f32.partialorder %v6557, 8.507059e+37
        %v6559 = vand.u32 %v6544, 2147483648
        %v6560 = vor.u32 1.1754944e-38, %v6559
        %v6561 = vsel %vm6558, %v6560, %v6556
        %v6562 = vrcp.pop %v6547
        %v6563 = vmul.f32 %v6547, %v6562
        %v6564 = vsub.f32 1.0, %v6563
        %v6565 = vmul.f32 %v6562, %v6564
        %v6566 = vadd.f32 %v6562, %v6565
        %vm6567 = vweird.f32 %v6547
        %vm6568 = vweird.f32 %v6562
        %vm6569 = vmor %vm6567, %vm6568
        %v6570 = vsel %vm6569, %v6562, %v6566
        %v6571 = vand.u32 2147483647, %v6547
        %vm6572 = vcmp.eq.f32.partialorder %v6571, 8.507059e+37
        %v6573 = vand.u32 %v6547, 2147483648
        %v6574 = vor.u32 1.1754944e-38, %v6573
        %v6575 = vsel %vm6572, %v6574, %v6570
        %v6576 = vmul.f32 %v6539, %v6561
        %v6577 = vmul.f32 %v6541, %v6575
        %6578 = vrot.lane.b32.xlu0 %v6486, 64
        %v6579 = vpop.permute.xlu0 %6578
        %6580 = vrot.lane.b32.xlu0 %v6489, 64
        %v6581 = vpop.permute.xlu0 %6580
        %v6585 = vsel %vm1132, %v6576, 0
        %v6588 = vsel %vm1132, %v6577, 0
        %6590 = vmatpush.msra.mxu0 0.0
        %6591 = vmatpush.msra.mxu0 0.0
        %6592 = vmatpush.msra.mxu0 0.0
        %6593 = vmatpush.msra.mxu0 0.0
        %6594 = vmatpush.msra.mxu0 0.0
        %6595 = vmatpush.msra.mxu0 0.0
        %6596 = vmatpush.msra.mxu0 0.0
        %6597 = vmatpush.msra.mxu0 0.0
        %6598 = vmatpush.msra.mxu0 0.0
        %6599 = vmatpush.msra.mxu0 0.0
        %6600 = vmatpush.msra.mxu0 0.0
        %6601 = vmatpush.msra.mxu0 0.0
        %6602 = vmatpush.msra.mxu0 0.0
        %6603 = vmatpush.msra.mxu0 0.0
        %6604 = vmatpush.msra.mxu0 %v6581
        %6605 = vmatpush.msra.mxu0 %v6579
        %6606 = vmatmul.f32.gmra.mxu0 %v6585
        %v6607 = vpop.f32.mrf.mxu0
        %v6608 = vadd.f32 0.0, %v6607
        %6609 = vmatmul.f32.gmra.mxu0 %v6588
        %v6610 = vpop.f32.mrf.mxu0
        %v6611 = vadd.f32 0.0, %v6610
        %6612 = vdwg.mxu0
        %6613 = vrot.lane.b32.xlu0 %v6486, 120
        %v6614 = vpop.permute.xlu0 %6613
        %6615 = vrot.lane.b32.xlu0 %v6489, 120
        %v6616 = vpop.permute.xlu0 %6615
        %6617 = vrot.lane.b32.xlu0 %v6486, 88
        %v6618 = vpop.permute.xlu0 %6617
        %6619 = vrot.lane.b32.xlu0 %v6489, 88
        %v6620 = vpop.permute.xlu0 %6619
        %v6621 = vsel %vm952, %v6614, 0
        %v6623 = vsel %vm952, %v6616, 0
        %v6625 = vsel %vm952, %v6618, 0
        %v6627 = vsel %vm952, %v6620, 0
        %6629 = vmatpush.xpose.msra.mxu0 0.0
        %6630 = vmatpush.xpose.msra.mxu0 0.0
        %6631 = vmatpush.xpose.msra.mxu0 0.0
        %6632 = vmatpush.xpose.msra.mxu0 0.0
        %6633 = vmatpush.xpose.msra.mxu0 0.0
        %6634 = vmatpush.xpose.msra.mxu0 0.0
        %6635 = vmatpush.xpose.msra.mxu0 0.0
        %6636 = vmatpush.xpose.msra.mxu0 0.0
        %6637 = vmatpush.xpose.msra.mxu0 0.0
        %6638 = vmatpush.xpose.msra.mxu0 0.0
        %6639 = vmatpush.xpose.msra.mxu0 0.0
        %6640 = vmatpush.xpose.msra.mxu0 0.0
        %6641 = vmatpush.xpose.msra.mxu0 0.0
        %6642 = vmatpush.xpose.msra.mxu0 0.0
        %6643 = vmatpush.xpose.msra.mxu0 %v6627
        %6644 = vmatpush.xpose.msra.mxu0 %v6625
        %6645 = vmatmul.f32.gmra.mxu0 %v6621
        %v6646 = vpop.f32.mrf.mxu0
        %v6647 = vadd.f32 0.0, %v6646
        %6648 = vmatmul.f32.gmra.mxu0 %v6623
        %v6649 = vpop.f32.mrf.mxu0
        %v6650 = vadd.f32 0.0, %v6649
        %6651 = vdwg.mxu0
        %v6652 = vmul.f32 %v6647, 0.35355338
        %v6653 = vmul.f32 %v6650, 0.35355338
        %v6654 = vsel %vm1132, %v6652, -inf
        %6655 = vmax.xlane.f32.xlu0 %v6654
        %v6656 = vpop.xlane.xlu0 %6655
        %v6657 = vsel %vm1132, %v6653, -inf
        %6658 = vmax.xlane.f32.xlu0 %v6657
        %v6659 = vpop.xlane.xlu0 %6658
        %v6660 = vsub.f32 %v6652, %v6656
        %v6661 = vsub.f32 %v6653, %v6659
        %v6662 = vmul.f32 %v6660, 1.442695
        %v6663 = vpow.pop %v6662
        %v6664 = vmul.f32 %v6661, 1.442695
        %v6665 = vpow.pop %v6664
        %v6666 = vsel %vm1132, %v6663, 0.0
        %6667 = vadd.xlane.f32.xlu0 %v6666
        %v6668 = vpop.xlane.xlu0 %6667
        %v6669 = vsel %vm1132, %v6665, 0.0
        %6670 = vadd.xlane.f32.xlu0 %v6669
        %v6671 = vpop.xlane.xlu0 %6670
        %v6672 = vrcp.pop %v6668
        %v6673 = vmul.f32 %v6668, %v6672
        %v6674 = vsub.f32 1.0, %v6673
        %v6675 = vmul.f32 %v6672, %v6674
        %v6676 = vadd.f32 %v6672, %v6675
        %vm6677 = vweird.f32 %v6668
        %vm6678 = vweird.f32 %v6672
        %vm6679 = vmor %vm6677, %vm6678
        %v6680 = vsel %vm6679, %v6672, %v6676
        %v6681 = vand.u32 2147483647, %v6668
        %vm6682 = vcmp.eq.f32.partialorder %v6681, 8.507059e+37
        %v6683 = vand.u32 %v6668, 2147483648
        %v6684 = vor.u32 1.1754944e-38, %v6683
        %v6685 = vsel %vm6682, %v6684, %v6680
        %v6686 = vrcp.pop %v6671
        %v6687 = vmul.f32 %v6671, %v6686
        %v6688 = vsub.f32 1.0, %v6687
        %v6689 = vmul.f32 %v6686, %v6688
        %v6690 = vadd.f32 %v6686, %v6689
        %vm6691 = vweird.f32 %v6671
        %vm6692 = vweird.f32 %v6686
        %vm6693 = vmor %vm6691, %vm6692
        %v6694 = vsel %vm6693, %v6686, %v6690
        %v6695 = vand.u32 2147483647, %v6671
        %vm6696 = vcmp.eq.f32.partialorder %v6695, 8.507059e+37
        %v6697 = vand.u32 %v6671, 2147483648
        %v6698 = vor.u32 1.1754944e-38, %v6697
        %v6699 = vsel %vm6696, %v6698, %v6694
        %v6700 = vmul.f32 %v6663, %v6685
        %v6701 = vmul.f32 %v6665, %v6699
        %6702 = vrot.lane.b32.xlu0 %v6486, 56
        %v6703 = vpop.permute.xlu0 %6702
        %6704 = vrot.lane.b32.xlu0 %v6489, 56
        %v6705 = vpop.permute.xlu0 %6704
        %v6709 = vsel %vm1132, %v6700, 0
        %v6712 = vsel %vm1132, %v6701, 0
        %6714 = vmatpush.msra.mxu0 0.0
        %6715 = vmatpush.msra.mxu0 0.0
        %6716 = vmatpush.msra.mxu0 0.0
        %6717 = vmatpush.msra.mxu0 0.0
        %6718 = vmatpush.msra.mxu0 0.0
        %6719 = vmatpush.msra.mxu0 0.0
        %6720 = vmatpush.msra.mxu0 0.0
        %6721 = vmatpush.msra.mxu0 0.0
        %6722 = vmatpush.msra.mxu0 0.0
        %6723 = vmatpush.msra.mxu0 0.0
        %6724 = vmatpush.msra.mxu0 0.0
        %6725 = vmatpush.msra.mxu0 0.0
        %6726 = vmatpush.msra.mxu0 0.0
        %6727 = vmatpush.msra.mxu0 0.0
        %6728 = vmatpush.msra.mxu0 %v6705
        %6729 = vmatpush.msra.mxu0 %v6703
        %6730 = vmatmul.f32.gmra.mxu0 %v6709
        %v6731 = vpop.f32.mrf.mxu0
        %v6732 = vadd.f32 0.0, %v6731
        %6733 = vmatmul.f32.gmra.mxu0 %v6712
        %v6734 = vpop.f32.mrf.mxu0
        %v6735 = vadd.f32 0.0, %v6734
        %6736 = vdwg.mxu0
        %6737 = vrot.lane.b32.xlu0 %v6486, 112
        %v6738 = vpop.permute.xlu0 %6737
        %6739 = vrot.lane.b32.xlu0 %v6489, 112
        %v6740 = vpop.permute.xlu0 %6739
        %6741 = vrot.lane.b32.xlu0 %v6486, 80
        %v6742 = vpop.permute.xlu0 %6741
        %6743 = vrot.lane.b32.xlu0 %v6489, 80
        %v6744 = vpop.permute.xlu0 %6743
        %v6745 = vsel %vm952, %v6738, 0
        %v6747 = vsel %vm952, %v6740, 0
        %v6749 = vsel %vm952, %v6742, 0
        %v6751 = vsel %vm952, %v6744, 0
        %6753 = vmatpush.xpose.msra.mxu0 0.0
        %6754 = vmatpush.xpose.msra.mxu0 0.0
        %6755 = vmatpush.xpose.msra.mxu0 0.0
        %6756 = vmatpush.xpose.msra.mxu0 0.0
        %6757 = vmatpush.xpose.msra.mxu0 0.0
        %6758 = vmatpush.xpose.msra.mxu0 0.0
        %6759 = vmatpush.xpose.msra.mxu0 0.0
        %6760 = vmatpush.xpose.msra.mxu0 0.0
        %6761 = vmatpush.xpose.msra.mxu0 0.0
        %6762 = vmatpush.xpose.msra.mxu0 0.0
        %6763 = vmatpush.xpose.msra.mxu0 0.0
        %6764 = vmatpush.xpose.msra.mxu0 0.0
        %6765 = vmatpush.xpose.msra.mxu0 0.0
        %6766 = vmatpush.xpose.msra.mxu0 0.0
        %6767 = vmatpush.xpose.msra.mxu0 %v6751
        %6768 = vmatpush.xpose.msra.mxu0 %v6749
        %6769 = vmatmul.f32.gmra.mxu0 %v6745
        %v6770 = vpop.f32.mrf.mxu0
        %v6771 = vadd.f32 0.0, %v6770
        %6772 = vmatmul.f32.gmra.mxu0 %v6747
        %v6773 = vpop.f32.mrf.mxu0
        %v6774 = vadd.f32 0.0, %v6773
        %6775 = vdwg.mxu0
        %v6776 = vmul.f32 %v6771, 0.35355338
        %v6777 = vmul.f32 %v6774, 0.35355338
        %v6778 = vsel %vm1132, %v6776, -inf
        %6779 = vmax.xlane.f32.xlu0 %v6778
        %v6780 = vpop.xlane.xlu0 %6779
        %v6781 = vsel %vm1132, %v6777, -inf
        %6782 = vmax.xlane.f32.xlu0 %v6781
        %v6783 = vpop.xlane.xlu0 %6782
        %v6784 = vsub.f32 %v6776, %v6780
        %v6785 = vsub.f32 %v6777, %v6783
        %v6786 = vmul.f32 %v6784, 1.442695
        %v6787 = vpow.pop %v6786
        %v6788 = vmul.f32 %v6785, 1.442695
        %v6789 = vpow.pop %v6788
        %v6790 = vsel %vm1132, %v6787, 0.0
        %6791 = vadd.xlane.f32.xlu0 %v6790
        %v6792 = vpop.xlane.xlu0 %6791
        %v6793 = vsel %vm1132, %v6789, 0.0
        %6794 = vadd.xlane.f32.xlu0 %v6793
        %v6795 = vpop.xlane.xlu0 %6794
        %v6796 = vrcp.pop %v6792
        %v6797 = vmul.f32 %v6792, %v6796
        %v6798 = vsub.f32 1.0, %v6797
        %v6799 = vmul.f32 %v6796, %v6798
        %v6800 = vadd.f32 %v6796, %v6799
        %vm6801 = vweird.f32 %v6792
        %vm6802 = vweird.f32 %v6796
        %vm6803 = vmor %vm6801, %vm6802
        %v6804 = vsel %vm6803, %v6796, %v6800
        %v6805 = vand.u32 2147483647, %v6792
        %vm6806 = vcmp.eq.f32.partialorder %v6805, 8.507059e+37
        %v6807 = vand.u32 %v6792, 2147483648
        %v6808 = vor.u32 1.1754944e-38, %v6807
        %v6809 = vsel %vm6806, %v6808, %v6804
        %v6810 = vrcp.pop %v6795
        %v6811 = vmul.f32 %v6795, %v6810
        %v6812 = vsub.f32 1.0, %v6811
        %v6813 = vmul.f32 %v6810, %v6812
        %v6814 = vadd.f32 %v6810, %v6813
        %vm6815 = vweird.f32 %v6795
        %vm6816 = vweird.f32 %v6810
        %vm6817 = vmor %vm6815, %vm6816
        %v6818 = vsel %vm6817, %v6810, %v6814
        %v6819 = vand.u32 2147483647, %v6795
        %vm6820 = vcmp.eq.f32.partialorder %v6819, 8.507059e+37
        %v6821 = vand.u32 %v6795, 2147483648
        %v6822 = vor.u32 1.1754944e-38, %v6821
        %v6823 = vsel %vm6820, %v6822, %v6818
        %v6824 = vmul.f32 %v6787, %v6809
        %v6825 = vmul.f32 %v6789, %v6823
        %6826 = vrot.lane.b32.xlu0 %v6486, 48
        %v6827 = vpop.permute.xlu0 %6826
        %6828 = vrot.lane.b32.xlu0 %v6489, 48
        %v6829 = vpop.permute.xlu0 %6828
        %v6833 = vsel %vm1132, %v6824, 0
        %v6836 = vsel %vm1132, %v6825, 0
        %6838 = vmatpush.msra.mxu0 0.0
        %6839 = vmatpush.msra.mxu0 0.0
        %6840 = vmatpush.msra.mxu0 0.0
        %6841 = vmatpush.msra.mxu0 0.0
        %6842 = vmatpush.msra.mxu0 0.0
        %6843 = vmatpush.msra.mxu0 0.0
        %6844 = vmatpush.msra.mxu0 0.0
        %6845 = vmatpush.msra.mxu0 0.0
        %6846 = vmatpush.msra.mxu0 0.0
        %6847 = vmatpush.msra.mxu0 0.0
        %6848 = vmatpush.msra.mxu0 0.0
        %6849 = vmatpush.msra.mxu0 0.0
        %6850 = vmatpush.msra.mxu0 0.0
        %6851 = vmatpush.msra.mxu0 0.0
        %6852 = vmatpush.msra.mxu0 %v6829
        %6853 = vmatpush.msra.mxu0 %v6827
        %6854 = vmatmul.f32.gmra.mxu0 %v6833
        %v6855 = vpop.f32.mrf.mxu0
        %v6856 = vadd.f32 0.0, %v6855
        %6857 = vmatmul.f32.gmra.mxu0 %v6836
        %v6858 = vpop.f32.mrf.mxu0
        %v6859 = vadd.f32 0.0, %v6858
        %6860 = vdwg.mxu0
        %6861 = vrot.lane.b32.xlu0 %v6486, 104
        %v6862 = vpop.permute.xlu0 %6861
        %6863 = vrot.lane.b32.xlu0 %v6489, 104
        %v6864 = vpop.permute.xlu0 %6863
        %6865 = vrot.lane.b32.xlu0 %v6486, 72
        %v6866 = vpop.permute.xlu0 %6865
        %6867 = vrot.lane.b32.xlu0 %v6489, 72
        %v6868 = vpop.permute.xlu0 %6867
        %v6869 = vsel %vm952, %v6862, 0
        %v6871 = vsel %vm952, %v6864, 0
        %v6873 = vsel %vm952, %v6866, 0
        %v6875 = vsel %vm952, %v6868, 0
        %6877 = vmatpush.xpose.msra.mxu0 0.0
        %6878 = vmatpush.xpose.msra.mxu0 0.0
        %6879 = vmatpush.xpose.msra.mxu0 0.0
        %6880 = vmatpush.xpose.msra.mxu0 0.0
        %6881 = vmatpush.xpose.msra.mxu0 0.0
        %6882 = vmatpush.xpose.msra.mxu0 0.0
        %6883 = vmatpush.xpose.msra.mxu0 0.0
        %6884 = vmatpush.xpose.msra.mxu0 0.0
        %6885 = vmatpush.xpose.msra.mxu0 0.0
        %6886 = vmatpush.xpose.msra.mxu0 0.0
        %6887 = vmatpush.xpose.msra.mxu0 0.0
        %6888 = vmatpush.xpose.msra.mxu0 0.0
        %6889 = vmatpush.xpose.msra.mxu0 0.0
        %6890 = vmatpush.xpose.msra.mxu0 0.0
        %6891 = vmatpush.xpose.msra.mxu0 %v6875
        %6892 = vmatpush.xpose.msra.mxu0 %v6873
        %6893 = vmatmul.f32.gmra.mxu0 %v6869
        %v6894 = vpop.f32.mrf.mxu0
        %v6895 = vadd.f32 0.0, %v6894
        %6896 = vmatmul.f32.gmra.mxu0 %v6871
        %v6897 = vpop.f32.mrf.mxu0
        %v6898 = vadd.f32 0.0, %v6897
        %6899 = vdwg.mxu0
        %v6900 = vmul.f32 %v6895, 0.35355338
        %v6901 = vmul.f32 %v6898, 0.35355338
        %v6902 = vsel %vm1132, %v6900, -inf
        %6903 = vmax.xlane.f32.xlu0 %v6902
        %v6904 = vpop.xlane.xlu0 %6903
        %v6905 = vsel %vm1132, %v6901, -inf
        %6906 = vmax.xlane.f32.xlu0 %v6905
        %v6907 = vpop.xlane.xlu0 %6906
        %v6908 = vsub.f32 %v6900, %v6904
        %v6909 = vsub.f32 %v6901, %v6907
        %v6910 = vmul.f32 %v6908, 1.442695
        %v6911 = vpow.pop %v6910
        %v6912 = vmul.f32 %v6909, 1.442695
        %v6913 = vpow.pop %v6912
        %v6914 = vsel %vm1132, %v6911, 0.0
        %6915 = vadd.xlane.f32.xlu0 %v6914
        %v6916 = vpop.xlane.xlu0 %6915
        %v6917 = vsel %vm1132, %v6913, 0.0
        %6918 = vadd.xlane.f32.xlu0 %v6917
        %v6919 = vpop.xlane.xlu0 %6918
        %v6920 = vrcp.pop %v6916
        %v6921 = vmul.f32 %v6916, %v6920
        %v6922 = vsub.f32 1.0, %v6921
        %v6923 = vmul.f32 %v6920, %v6922
        %v6924 = vadd.f32 %v6920, %v6923
        %vm6925 = vweird.f32 %v6916
        %vm6926 = vweird.f32 %v6920
        %vm6927 = vmor %vm6925, %vm6926
        %v6928 = vsel %vm6927, %v6920, %v6924
        %v6929 = vand.u32 2147483647, %v6916
        %vm6930 = vcmp.eq.f32.partialorder %v6929, 8.507059e+37
        %v6931 = vand.u32 %v6916, 2147483648
        %v6932 = vor.u32 1.1754944e-38, %v6931
        %v6933 = vsel %vm6930, %v6932, %v6928
        %v6934 = vrcp.pop %v6919
        %v6935 = vmul.f32 %v6919, %v6934
        %v6936 = vsub.f32 1.0, %v6935
        %v6937 = vmul.f32 %v6934, %v6936
        %v6938 = vadd.f32 %v6934, %v6937
        %vm6939 = vweird.f32 %v6919
        %vm6940 = vweird.f32 %v6934
        %vm6941 = vmor %vm6939, %vm6940
        %v6942 = vsel %vm6941, %v6934, %v6938
        %v6943 = vand.u32 2147483647, %v6919
        %vm6944 = vcmp.eq.f32.partialorder %v6943, 8.507059e+37
        %v6945 = vand.u32 %v6919, 2147483648
        %v6946 = vor.u32 1.1754944e-38, %v6945
        %v6947 = vsel %vm6944, %v6946, %v6942
        %v6948 = vmul.f32 %v6911, %v6933
        %v6949 = vmul.f32 %v6913, %v6947
        %6950 = vrot.lane.b32.xlu0 %v6486, 40
        %v6951 = vpop.permute.xlu0 %6950
        %6952 = vrot.lane.b32.xlu0 %v6489, 40
        %v6953 = vpop.permute.xlu0 %6952
        %v6957 = vsel %vm1132, %v6948, 0
        %v6960 = vsel %vm1132, %v6949, 0
        %6962 = vmatpush.msra.mxu0 0.0
        %6963 = vmatpush.msra.mxu0 0.0
        %6964 = vmatpush.msra.mxu0 0.0
        %6965 = vmatpush.msra.mxu0 0.0
        %6966 = vmatpush.msra.mxu0 0.0
        %6967 = vmatpush.msra.mxu0 0.0
        %6968 = vmatpush.msra.mxu0 0.0
        %6969 = vmatpush.msra.mxu0 0.0
        %6970 = vmatpush.msra.mxu0 0.0
        %6971 = vmatpush.msra.mxu0 0.0
        %6972 = vmatpush.msra.mxu0 0.0
        %6973 = vmatpush.msra.mxu0 0.0
        %6974 = vmatpush.msra.mxu0 0.0
        %6975 = vmatpush.msra.mxu0 0.0
        %6976 = vmatpush.msra.mxu0 %v6953
        %6977 = vmatpush.msra.mxu0 %v6951
        %6978 = vmatmul.f32.gmra.mxu0 %v6957
        %v6979 = vpop.f32.mrf.mxu0
        %v6980 = vadd.f32 0.0, %v6979
        %6981 = vmatmul.f32.gmra.mxu0 %v6960
        %v6982 = vpop.f32.mrf.mxu0
        %v6983 = vadd.f32 0.0, %v6982
        %6984 = vdwg.mxu0
        %6987 = vrot.lane.b32.xlu0 %v6732, 8
        %v6988 = vpop.permute.xlu0 %6987
        %6989 = vrot.lane.b32.xlu0 %v6735, 8
        %v6990 = vpop.permute.xlu0 %6989
        %6995 = vrot.lane.b32.xlu0 %v6856, 16
        %v6996 = vpop.permute.xlu0 %6995
        %6997 = vrot.lane.b32.xlu0 %v6859, 16
        %v6998 = vpop.permute.xlu0 %6997
        %7003 = vrot.lane.b32.xlu0 %v6980, 24
        %v7004 = vpop.permute.xlu0 %7003
        %7005 = vrot.lane.b32.xlu0 %v6983, 24
        %v7006 = vpop.permute.xlu0 %7005
        %v7009 = vsel %vm952, %v6608, %v6988
        %v7010 = vsel %vm952, %v6611, %v6990
        %v7011 = vsel %vm1132, %v7009, %v6996
        %v7012 = vsel %vm1132, %v7010, %v6998
        %v7013 = vsel %vm1616, %v7011, %v7004
        %v7014 = vsel %vm1616, %v7012, %v7006
        %v7015 = vperm.slane %v6399, 1
        %v7017 = vsel %vm982, %v7013, 0
        %v7020 = vsel %vm982, %v7014, 0
        %7022 = vmatpush.msra.mxu0 0.0
        %7023 = vmatpush.msra.mxu0 0.0
        %7024 = vmatpush.msra.mxu0 0.0
        %7025 = vmatpush.msra.mxu0 0.0
        %7026 = vmatpush.msra.mxu0 0.0
        %7027 = vmatpush.msra.mxu0 0.0
        %7028 = vmatpush.msra.mxu0 0.0
        %7029 = vmatpush.msra.mxu0 0.0
        %7030 = vmatpush.msra.mxu0 0.0
        %7031 = vmatpush.msra.mxu0 0.0
        %7032 = vmatpush.msra.mxu0 0.0
        %7033 = vmatpush.msra.mxu0 0.0
        %7034 = vmatpush.msra.mxu0 %v6460
        %7035 = vmatpush.msra.mxu0 %v6459
        %7036 = vmatpush.msra.mxu0 %v6458
        %7037 = vmatpush.msra.mxu0 %v6457
        %7038 = vmatmul.f32.gmra.mxu0 %v7017
        %v7039 = vpop.f32.mrf.mxu0
        %v7040 = vadd.f32 %v7015, %v7039
        %7041 = vmatmul.f32.gmra.mxu0 %v7020
        %v7042 = vpop.f32.mrf.mxu0
        %v7043 = vadd.f32 %v7015, %v7042
        %7044 = vdwg.mxu0
        %v7045 = vadd.f32 %v6396, %v7040
        %v7046 = vadd.f32 %v6397, %v7043
        %v7047 = vsel %vm982, %v7045, 0.0
        %7048 = vadd.xlane.f32.xlu0 %v7047
        %v7049 = vpop.xlane.xlu0 %7048
        %v7050 = vsel %vm982, %v7046, 0.0
        %7051 = vadd.xlane.f32.xlu0 %v7050
        %v7052 = vpop.xlane.xlu0 %7051
        %v7053 = vmul.f32 %v7049, %v1018
        %v7054 = vmul.f32 %v7052, %v1018
        %v7055 = vsub.f32 %v7045, %v7053
        %v7056 = vsub.f32 %v7046, %v7054
        %v7057 = vmul.f32 %v7055, %v7055
        %v7058 = vmul.f32 %v7056, %v7056
        %v7059 = vsel %vm982, %v7057, 0.0
        %7060 = vadd.xlane.f32.xlu0 %v7059
        %v7061 = vpop.xlane.xlu0 %7060
        %v7062 = vsel %vm982, %v7058, 0.0
        %7063 = vadd.xlane.f32.xlu0 %v7062
        %v7064 = vpop.xlane.xlu0 %7063
        %v7065 = vmul.f32 %v7061, %v1018
        %v7066 = vmul.f32 %v7064, %v1018
        %v7067 = vadd.f32 %v7065, 1e-05
        %v7068 = vadd.f32 %v7066, 1e-05
        %v7069 = vrsqrt.pop %v7067
        %v7070 = vmul.f32 %v7069, %v7067
        %v7071 = vmul.f32 %v7070, %v7069
        %v7072 = vmul.f32 0.5, %v7071
        %v7073 = vsub.f32 1.5, %v7072
        %v7074 = vmul.f32 %v7069, %v7073
        %vm7075 = vweird.f32 %v7067
        %vm7076 = vweird.f32 %v7069
        %vm7077 = vmor %vm7075, %vm7076
        %v7078 = vsel %vm7077, %v7069, %v7074
        %v7079 = vrsqrt.pop %v7068
        %v7080 = vmul.f32 %v7079, %v7068
        %v7081 = vmul.f32 %v7080, %v7079
        %v7082 = vmul.f32 0.5, %v7081
        %v7083 = vsub.f32 1.5, %v7082
        %v7084 = vmul.f32 %v7079, %v7083
        %vm7085 = vweird.f32 %v7068
        %vm7086 = vweird.f32 %v7079
        %vm7087 = vmor %vm7085, %vm7086
        %v7088 = vsel %vm7087, %v7079, %v7084
        %v7089 = vmul.f32 %v7055, %v7078
        %v7090 = vmul.f32 %v7056, %v7088
        %v7091 = vperm.slane %v6400, 0
        %v7092 = vmul.f32 %v7089, %v7091
        %v7093 = vmul.f32 %v7090, %v7091
        %v7094 = vperm.slane %v6400, 1
        %v7095 = vadd.f32 %v7092, %v7094
        %v7096 = vadd.f32 %v7093, %v7094
        %s7097 = scalar_lea.vmem %s20, 32
        %v7098 = vld [vmem:[%s7097] sm:$0xff]
        %v7099 = vld [vmem:[%s7097 + $0x8] sm:$0xff]
        %v7100 = vld [vmem:[%s7097 + $0x10] sm:$0xff]
        %v7101 = vld [vmem:[%s7097 + $0x18] sm:$0xff]
        %s7102 = scalar_lea.vmem %s21, 32
        %v7103 = vld [vmem:[%s7102] sm:$0xff]
        %v7104 = vld [vmem:[%s7102 + $0x8] sm:$0xff]
        %v7105 = vld [vmem:[%s7102 + $0x10] sm:$0xff]
        %v7106 = vld [vmem:[%s7102 + $0x18] sm:$0xff]
        %v7107 = vperm.slane %v6399, 2
        %v7109 = vsel %vm982, %v7095, 0
        %v7112 = vsel %vm982, %v7096, 0
        %7114 = vmatpush.msra.mxu0 0.0
        %7115 = vmatpush.msra.mxu0 0.0
        %7116 = vmatpush.msra.mxu0 0.0
        %7117 = vmatpush.msra.mxu0 0.0
        %7118 = vmatpush.msra.mxu0 0.0
        %7119 = vmatpush.msra.mxu0 0.0
        %7120 = vmatpush.msra.mxu0 0.0
        %7121 = vmatpush.msra.mxu0 0.0
        %7122 = vmatpush.msra.mxu0 0.0
        %7123 = vmatpush.msra.mxu0 0.0
        %7124 = vmatpush.msra.mxu0 0.0
        %7125 = vmatpush.msra.mxu0 0.0
        %7126 = vmatpush.msra.mxu0 %v7101
        %7127 = vmatpush.msra.mxu0 %v7100
        %7128 = vmatpush.msra.mxu0 %v7099
        %7129 = vmatpush.msra.mxu0 %v7098
        %7130 = vmatmul.f32.gmra.mxu0 %v7109
        %v7131 = vpop.f32.mrf.mxu0
        %v7132 = vadd.f32 %v7107, %v7131
        %7133 = vmatmul.f32.gmra.mxu0 %v7112
        %v7134 = vpop.f32.mrf.mxu0
        %v7135 = vadd.f32 %v7107, %v7134
        %7136 = vdwg.mxu0
        %7141 = vrot.lane.b32.xlu0 %v7098, 96
        %v7142 = vpop.permute.xlu0 %7141
        %7143 = vrot.lane.b32.xlu0 %v7099, 96
        %v7144 = vpop.permute.xlu0 %7143
        %7145 = vrot.lane.b32.xlu0 %v7100, 96
        %v7146 = vpop.permute.xlu0 %7145
        %7147 = vrot.lane.b32.xlu0 %v7101, 96
        %v7148 = vpop.permute.xlu0 %7147
        %7154 = vrot.lane.b32.xlu0 %v7107, 96
        %v7155 = vpop.permute.xlu0 %7154
        %7157 = vmatpush.msra.mxu0 0.0
        %7158 = vmatpush.msra.mxu0 0.0
        %7159 = vmatpush.msra.mxu0 0.0
        %7160 = vmatpush.msra.mxu0 0.0
        %7161 = vmatpush.msra.mxu0 0.0
        %7162 = vmatpush.msra.mxu0 0.0
        %7163 = vmatpush.msra.mxu0 0.0
        %7164 = vmatpush.msra.mxu0 0.0
        %7165 = vmatpush.msra.mxu0 0.0
        %7166 = vmatpush.msra.mxu0 0.0
        %7167 = vmatpush.msra.mxu0 0.0
        %7168 = vmatpush.msra.mxu0 0.0
        %7169 = vmatpush.msra.mxu0 %v7148
        %7170 = vmatpush.msra.mxu0 %v7146
        %7171 = vmatpush.msra.mxu0 %v7144
        %7172 = vmatpush.msra.mxu0 %v7142
        %7173 = vmatmul.f32.gmra.mxu0 %v5631
        %v7174 = vpop.f32.mrf.mxu0
        %v7175 = vadd.f32 %v7155, %v7174
        %7176 = vmatmul.f32.gmra.mxu0 %v5634
        %v7177 = vpop.f32.mrf.mxu0
        %v7178 = vadd.f32 %v7155, %v7177
        %7179 = vmatmul.f32.gmra.mxu0 %v5637
        %v7180 = vpop.f32.mrf.mxu0
        %v7181 = vadd.f32 %v7155, %v7180
        %7182 = vdwg.mxu0
        %v7184 = vsel %vm952, %v7132, 0
        %v7187 = vsel %vm952, %v7135, 0
        %v7190 = vsel %vm952, %v7175, 0
        %v7193 = vsel %vm952, %v7178, 0
        %v7196 = vsel %vm952, %v7181, 0
        %7198 = vmatpush.xpose.msra.mxu0 0.0
        %7199 = vmatpush.xpose.msra.mxu0 0.0
        %7200 = vmatpush.xpose.msra.mxu0 0.0
        %7201 = vmatpush.xpose.msra.mxu0 0.0
        %7202 = vmatpush.xpose.msra.mxu0 0.0
        %7203 = vmatpush.xpose.msra.mxu0 0.0
        %7204 = vmatpush.xpose.msra.mxu0 0.0
        %7205 = vmatpush.xpose.msra.mxu0 0.0
        %7206 = vmatpush.xpose.msra.mxu0 0.0
        %7207 = vmatpush.xpose.msra.mxu0 0.0
        %7208 = vmatpush.xpose.msra.mxu0 0.0
        %7209 = vmatpush.xpose.msra.mxu0 0.0
        %7210 = vmatpush.xpose.msra.mxu0 0.0
        %7211 = vmatpush.xpose.msra.mxu0 %v7196
        %7212 = vmatpush.xpose.msra.mxu0 %v7193
        %7213 = vmatpush.xpose.msra.mxu0 %v7190
        %7214 = vmatmul.f32.gmra.mxu0 %v7184
        %v7215 = vpop.f32.mrf.mxu0
        %v7216 = vadd.f32 0.0, %v7215
        %7217 = vmatmul.f32.gmra.mxu0 %v7187
        %v7218 = vpop.f32.mrf.mxu0
        %v7219 = vadd.f32 0.0, %v7218
        %7220 = vdwg.mxu0
        %v7221 = vmul.f32 %v7216, 0.35355338
        %v7222 = vmul.f32 %v7219, 0.35355338
        %v7223 = vadd.f32 %v7221, %v2813
        %v7224 = vadd.f32 %v7222, %v2813
        %v7225 = vsel %vm1616, %v7223, -inf
        %7226 = vmax.xlane.f32.xlu0 %v7225
        %v7227 = vpop.xlane.xlu0 %7226
        %v7228 = vsel %vm1616, %v7224, -inf
        %7229 = vmax.xlane.f32.xlu0 %v7228
        %v7230 = vpop.xlane.xlu0 %7229
        %v7231 = vsub.f32 %v7223, %v7227
        %v7232 = vsub.f32 %v7224, %v7230
        %v7233 = vmul.f32 %v7231, 1.442695
        %v7234 = vpow.pop %v7233
        %v7235 = vmul.f32 %v7232, 1.442695
        %v7236 = vpow.pop %v7235
        %v7237 = vsel %vm1616, %v7234, 0.0
        %7238 = vadd.xlane.f32.xlu0 %v7237
        %v7239 = vpop.xlane.xlu0 %7238
        %v7240 = vsel %vm1616, %v7236, 0.0
        %7241 = vadd.xlane.f32.xlu0 %v7240
        %v7242 = vpop.xlane.xlu0 %7241
        %v7243 = vrcp.pop %v7239
        %v7244 = vmul.f32 %v7239, %v7243
        %v7245 = vsub.f32 1.0, %v7244
        %v7246 = vmul.f32 %v7243, %v7245
        %v7247 = vadd.f32 %v7243, %v7246
        %vm7248 = vweird.f32 %v7239
        %vm7249 = vweird.f32 %v7243
        %vm7250 = vmor %vm7248, %vm7249
        %v7251 = vsel %vm7250, %v7243, %v7247
        %v7252 = vand.u32 2147483647, %v7239
        %vm7253 = vcmp.eq.f32.partialorder %v7252, 8.507059e+37
        %v7254 = vand.u32 %v7239, 2147483648
        %v7255 = vor.u32 1.1754944e-38, %v7254
        %v7256 = vsel %vm7253, %v7255, %v7251
        %v7257 = vrcp.pop %v7242
        %v7258 = vmul.f32 %v7242, %v7257
        %v7259 = vsub.f32 1.0, %v7258
        %v7260 = vmul.f32 %v7257, %v7259
        %v7261 = vadd.f32 %v7257, %v7260
        %vm7262 = vweird.f32 %v7242
        %vm7263 = vweird.f32 %v7257
        %vm7264 = vmor %vm7262, %vm7263
        %v7265 = vsel %vm7264, %v7257, %v7261
        %v7266 = vand.u32 2147483647, %v7242
        %vm7267 = vcmp.eq.f32.partialorder %v7266, 8.507059e+37
        %v7268 = vand.u32 %v7242, 2147483648
        %v7269 = vor.u32 1.1754944e-38, %v7268
        %v7270 = vsel %vm7267, %v7269, %v7265
        %v7271 = vmul.f32 %v7234, %v7256
        %v7272 = vmul.f32 %v7236, %v7270
        %7273 = vrot.lane.b32.xlu0 %v7175, 96
        %v7274 = vpop.permute.xlu0 %7273
        %7275 = vrot.lane.b32.xlu0 %v7178, 96
        %v7276 = vpop.permute.xlu0 %7275
        %7277 = vrot.lane.b32.xlu0 %v7181, 96
        %v7278 = vpop.permute.xlu0 %7277
        %v7283 = vsel %vm1616, %v7271, 0
        %v7286 = vsel %vm1616, %v7272, 0
        %7288 = vmatpush.msra.mxu0 0.0
        %7289 = vmatpush.msra.mxu0 0.0
        %7290 = vmatpush.msra.mxu0 0.0
        %7291 = vmatpush.msra.mxu0 0.0
        %7292 = vmatpush.msra.mxu0 0.0
        %7293 = vmatpush.msra.mxu0 0.0
        %7294 = vmatpush.msra.mxu0 0.0
        %7295 = vmatpush.msra.mxu0 0.0
        %7296 = vmatpush.msra.mxu0 0.0
        %7297 = vmatpush.msra.mxu0 0.0
        %7298 = vmatpush.msra.mxu0 0.0
        %7299 = vmatpush.msra.mxu0 0.0
        %7300 = vmatpush.msra.mxu0 0.0
        %7301 = vmatpush.msra.mxu0 %v7278
        %7302 = vmatpush.msra.mxu0 %v7276
        %7303 = vmatpush.msra.mxu0 %v7274
        %7304 = vmatmul.f32.gmra.mxu0 %v7283
        %v7305 = vpop.f32.mrf.mxu0
        %v7306 = vadd.f32 0.0, %v7305
        %7307 = vmatmul.f32.gmra.mxu0 %v7286
        %v7308 = vpop.f32.mrf.mxu0
        %v7309 = vadd.f32 0.0, %v7308
        %7310 = vdwg.mxu0
        %7311 = vrot.lane.b32.xlu0 %v7132, 120
        %v7312 = vpop.permute.xlu0 %7311
        %7313 = vrot.lane.b32.xlu0 %v7135, 120
        %v7314 = vpop.permute.xlu0 %7313
        %7315 = vrot.lane.b32.xlu0 %v7175, 120
        %v7316 = vpop.permute.xlu0 %7315
        %7317 = vrot.lane.b32.xlu0 %v7178, 120
        %v7318 = vpop.permute.xlu0 %7317
        %7319 = vrot.lane.b32.xlu0 %v7181, 120
        %v7320 = vpop.permute.xlu0 %7319
        %v7321 = vsel %vm952, %v7312, 0
        %v7323 = vsel %vm952, %v7314, 0
        %v7325 = vsel %vm952, %v7316, 0
        %v7327 = vsel %vm952, %v7318, 0
        %v7329 = vsel %vm952, %v7320, 0
        %7331 = vmatpush.xpose.msra.mxu0 0.0
        %7332 = vmatpush.xpose.msra.mxu0 0.0
        %7333 = vmatpush.xpose.msra.mxu0 0.0
        %7334 = vmatpush.xpose.msra.mxu0 0.0
        %7335 = vmatpush.xpose.msra.mxu0 0.0
        %7336 = vmatpush.xpose.msra.mxu0 0.0
        %7337 = vmatpush.xpose.msra.mxu0 0.0
        %7338 = vmatpush.xpose.msra.mxu0 0.0
        %7339 = vmatpush.xpose.msra.mxu0 0.0
        %7340 = vmatpush.xpose.msra.mxu0 0.0
        %7341 = vmatpush.xpose.msra.mxu0 0.0
        %7342 = vmatpush.xpose.msra.mxu0 0.0
        %7343 = vmatpush.xpose.msra.mxu0 0.0
        %7344 = vmatpush.xpose.msra.mxu0 %v7329
        %7345 = vmatpush.xpose.msra.mxu0 %v7327
        %7346 = vmatpush.xpose.msra.mxu0 %v7325
        %7347 = vmatmul.f32.gmra.mxu0 %v7321
        %v7348 = vpop.f32.mrf.mxu0
        %v7349 = vadd.f32 0.0, %v7348
        %7350 = vmatmul.f32.gmra.mxu0 %v7323
        %v7351 = vpop.f32.mrf.mxu0
        %v7352 = vadd.f32 0.0, %v7351
        %7353 = vdwg.mxu0
        %v7354 = vmul.f32 %v7349, 0.35355338
        %v7355 = vmul.f32 %v7352, 0.35355338
        %v7356 = vadd.f32 %v7354, %v2813
        %v7357 = vadd.f32 %v7355, %v2813
        %v7358 = vsel %vm1616, %v7356, -inf
        %7359 = vmax.xlane.f32.xlu0 %v7358
        %v7360 = vpop.xlane.xlu0 %7359
        %v7361 = vsel %vm1616, %v7357, -inf
        %7362 = vmax.xlane.f32.xlu0 %v7361
        %v7363 = vpop.xlane.xlu0 %7362
        %v7364 = vsub.f32 %v7356, %v7360
        %v7365 = vsub.f32 %v7357, %v7363
        %v7366 = vmul.f32 %v7364, 1.442695
        %v7367 = vpow.pop %v7366
        %v7368 = vmul.f32 %v7365, 1.442695
        %v7369 = vpow.pop %v7368
        %v7370 = vsel %vm1616, %v7367, 0.0
        %7371 = vadd.xlane.f32.xlu0 %v7370
        %v7372 = vpop.xlane.xlu0 %7371
        %v7373 = vsel %vm1616, %v7369, 0.0
        %7374 = vadd.xlane.f32.xlu0 %v7373
        %v7375 = vpop.xlane.xlu0 %7374
        %v7376 = vrcp.pop %v7372
        %v7377 = vmul.f32 %v7372, %v7376
        %v7378 = vsub.f32 1.0, %v7377
        %v7379 = vmul.f32 %v7376, %v7378
        %v7380 = vadd.f32 %v7376, %v7379
        %vm7381 = vweird.f32 %v7372
        %vm7382 = vweird.f32 %v7376
        %vm7383 = vmor %vm7381, %vm7382
        %v7384 = vsel %vm7383, %v7376, %v7380
        %v7385 = vand.u32 2147483647, %v7372
        %vm7386 = vcmp.eq.f32.partialorder %v7385, 8.507059e+37
        %v7387 = vand.u32 %v7372, 2147483648
        %v7388 = vor.u32 1.1754944e-38, %v7387
        %v7389 = vsel %vm7386, %v7388, %v7384
        %v7390 = vrcp.pop %v7375
        %v7391 = vmul.f32 %v7375, %v7390
        %v7392 = vsub.f32 1.0, %v7391
        %v7393 = vmul.f32 %v7390, %v7392
        %v7394 = vadd.f32 %v7390, %v7393
        %vm7395 = vweird.f32 %v7375
        %vm7396 = vweird.f32 %v7390
        %vm7397 = vmor %vm7395, %vm7396
        %v7398 = vsel %vm7397, %v7390, %v7394
        %v7399 = vand.u32 2147483647, %v7375
        %vm7400 = vcmp.eq.f32.partialorder %v7399, 8.507059e+37
        %v7401 = vand.u32 %v7375, 2147483648
        %v7402 = vor.u32 1.1754944e-38, %v7401
        %v7403 = vsel %vm7400, %v7402, %v7398
        %v7404 = vmul.f32 %v7367, %v7389
        %v7405 = vmul.f32 %v7369, %v7403
        %7406 = vrot.lane.b32.xlu0 %v7175, 88
        %v7407 = vpop.permute.xlu0 %7406
        %7408 = vrot.lane.b32.xlu0 %v7178, 88
        %v7409 = vpop.permute.xlu0 %7408
        %7410 = vrot.lane.b32.xlu0 %v7181, 88
        %v7411 = vpop.permute.xlu0 %7410
        %v7416 = vsel %vm1616, %v7404, 0
        %v7419 = vsel %vm1616, %v7405, 0
        %7421 = vmatpush.msra.mxu0 0.0
        %7422 = vmatpush.msra.mxu0 0.0
        %7423 = vmatpush.msra.mxu0 0.0
        %7424 = vmatpush.msra.mxu0 0.0
        %7425 = vmatpush.msra.mxu0 0.0
        %7426 = vmatpush.msra.mxu0 0.0
        %7427 = vmatpush.msra.mxu0 0.0
        %7428 = vmatpush.msra.mxu0 0.0
        %7429 = vmatpush.msra.mxu0 0.0
        %7430 = vmatpush.msra.mxu0 0.0
        %7431 = vmatpush.msra.mxu0 0.0
        %7432 = vmatpush.msra.mxu0 0.0
        %7433 = vmatpush.msra.mxu0 0.0
        %7434 = vmatpush.msra.mxu0 %v7411
        %7435 = vmatpush.msra.mxu0 %v7409
        %7436 = vmatpush.msra.mxu0 %v7407
        %7437 = vmatmul.f32.gmra.mxu0 %v7416
        %v7438 = vpop.f32.mrf.mxu0
        %v7439 = vadd.f32 0.0, %v7438
        %7440 = vmatmul.f32.gmra.mxu0 %v7419
        %v7441 = vpop.f32.mrf.mxu0
        %v7442 = vadd.f32 0.0, %v7441
        %7443 = vdwg.mxu0
        %7444 = vrot.lane.b32.xlu0 %v7132, 112
        %v7445 = vpop.permute.xlu0 %7444
        %7446 = vrot.lane.b32.xlu0 %v7135, 112
        %v7447 = vpop.permute.xlu0 %7446
        %7448 = vrot.lane.b32.xlu0 %v7175, 112
        %v7449 = vpop.permute.xlu0 %7448
        %7450 = vrot.lane.b32.xlu0 %v7178, 112
        %v7451 = vpop.permute.xlu0 %7450
        %7452 = vrot.lane.b32.xlu0 %v7181, 112
        %v7453 = vpop.permute.xlu0 %7452
        %v7454 = vsel %vm952, %v7445, 0
        %v7456 = vsel %vm952, %v7447, 0
        %v7458 = vsel %vm952, %v7449, 0
        %v7460 = vsel %vm952, %v7451, 0
        %v7462 = vsel %vm952, %v7453, 0
        %7464 = vmatpush.xpose.msra.mxu0 0.0
        %7465 = vmatpush.xpose.msra.mxu0 0.0
        %7466 = vmatpush.xpose.msra.mxu0 0.0
        %7467 = vmatpush.xpose.msra.mxu0 0.0
        %7468 = vmatpush.xpose.msra.mxu0 0.0
        %7469 = vmatpush.xpose.msra.mxu0 0.0
        %7470 = vmatpush.xpose.msra.mxu0 0.0
        %7471 = vmatpush.xpose.msra.mxu0 0.0
        %7472 = vmatpush.xpose.msra.mxu0 0.0
        %7473 = vmatpush.xpose.msra.mxu0 0.0
        %7474 = vmatpush.xpose.msra.mxu0 0.0
        %7475 = vmatpush.xpose.msra.mxu0 0.0
        %7476 = vmatpush.xpose.msra.mxu0 0.0
        %7477 = vmatpush.xpose.msra.mxu0 %v7462
        %7478 = vmatpush.xpose.msra.mxu0 %v7460
        %7479 = vmatpush.xpose.msra.mxu0 %v7458
        %7480 = vmatmul.f32.gmra.mxu0 %v7454
        %v7481 = vpop.f32.mrf.mxu0
        %v7482 = vadd.f32 0.0, %v7481
        %7483 = vmatmul.f32.gmra.mxu0 %v7456
        %v7484 = vpop.f32.mrf.mxu0
        %v7485 = vadd.f32 0.0, %v7484
        %7486 = vdwg.mxu0
        %v7487 = vmul.f32 %v7482, 0.35355338
        %v7488 = vmul.f32 %v7485, 0.35355338
        %v7489 = vadd.f32 %v7487, %v2813
        %v7490 = vadd.f32 %v7488, %v2813
        %v7491 = vsel %vm1616, %v7489, -inf
        %7492 = vmax.xlane.f32.xlu0 %v7491
        %v7493 = vpop.xlane.xlu0 %7492
        %v7494 = vsel %vm1616, %v7490, -inf
        %7495 = vmax.xlane.f32.xlu0 %v7494
        %v7496 = vpop.xlane.xlu0 %7495
        %v7497 = vsub.f32 %v7489, %v7493
        %v7498 = vsub.f32 %v7490, %v7496
        %v7499 = vmul.f32 %v7497, 1.442695
        %v7500 = vpow.pop %v7499
        %v7501 = vmul.f32 %v7498, 1.442695
        %v7502 = vpow.pop %v7501
        %v7503 = vsel %vm1616, %v7500, 0.0
        %7504 = vadd.xlane.f32.xlu0 %v7503
        %v7505 = vpop.xlane.xlu0 %7504
        %v7506 = vsel %vm1616, %v7502, 0.0
        %7507 = vadd.xlane.f32.xlu0 %v7506
        %v7508 = vpop.xlane.xlu0 %7507
        %v7509 = vrcp.pop %v7505
        %v7510 = vmul.f32 %v7505, %v7509
        %v7511 = vsub.f32 1.0, %v7510
        %v7512 = vmul.f32 %v7509, %v7511
        %v7513 = vadd.f32 %v7509, %v7512
        %vm7514 = vweird.f32 %v7505
        %vm7515 = vweird.f32 %v7509
        %vm7516 = vmor %vm7514, %vm7515
        %v7517 = vsel %vm7516, %v7509, %v7513
        %v7518 = vand.u32 2147483647, %v7505
        %vm7519 = vcmp.eq.f32.partialorder %v7518, 8.507059e+37
        %v7520 = vand.u32 %v7505, 2147483648
        %v7521 = vor.u32 1.1754944e-38, %v7520
        %v7522 = vsel %vm7519, %v7521, %v7517
        %v7523 = vrcp.pop %v7508
        %v7524 = vmul.f32 %v7508, %v7523
        %v7525 = vsub.f32 1.0, %v7524
        %v7526 = vmul.f32 %v7523, %v7525
        %v7527 = vadd.f32 %v7523, %v7526
        %vm7528 = vweird.f32 %v7508
        %vm7529 = vweird.f32 %v7523
        %vm7530 = vmor %vm7528, %vm7529
        %v7531 = vsel %vm7530, %v7523, %v7527
        %v7532 = vand.u32 2147483647, %v7508
        %vm7533 = vcmp.eq.f32.partialorder %v7532, 8.507059e+37
        %v7534 = vand.u32 %v7508, 2147483648
        %v7535 = vor.u32 1.1754944e-38, %v7534
        %v7536 = vsel %vm7533, %v7535, %v7531
        %v7537 = vmul.f32 %v7500, %v7522
        %v7538 = vmul.f32 %v7502, %v7536
        %7539 = vrot.lane.b32.xlu0 %v7175, 80
        %v7540 = vpop.permute.xlu0 %7539
        %7541 = vrot.lane.b32.xlu0 %v7178, 80
        %v7542 = vpop.permute.xlu0 %7541
        %7543 = vrot.lane.b32.xlu0 %v7181, 80
        %v7544 = vpop.permute.xlu0 %7543
        %v7549 = vsel %vm1616, %v7537, 0
        %v7552 = vsel %vm1616, %v7538, 0
        %7554 = vmatpush.msra.mxu0 0.0
        %7555 = vmatpush.msra.mxu0 0.0
        %7556 = vmatpush.msra.mxu0 0.0
        %7557 = vmatpush.msra.mxu0 0.0
        %7558 = vmatpush.msra.mxu0 0.0
        %7559 = vmatpush.msra.mxu0 0.0
        %7560 = vmatpush.msra.mxu0 0.0
        %7561 = vmatpush.msra.mxu0 0.0
        %7562 = vmatpush.msra.mxu0 0.0
        %7563 = vmatpush.msra.mxu0 0.0
        %7564 = vmatpush.msra.mxu0 0.0
        %7565 = vmatpush.msra.mxu0 0.0
        %7566 = vmatpush.msra.mxu0 0.0
        %7567 = vmatpush.msra.mxu0 %v7544
        %7568 = vmatpush.msra.mxu0 %v7542
        %7569 = vmatpush.msra.mxu0 %v7540
        %7570 = vmatmul.f32.gmra.mxu0 %v7549
        %v7571 = vpop.f32.mrf.mxu0
        %v7572 = vadd.f32 0.0, %v7571
        %7573 = vmatmul.f32.gmra.mxu0 %v7552
        %v7574 = vpop.f32.mrf.mxu0
        %v7575 = vadd.f32 0.0, %v7574
        %7576 = vdwg.mxu0
        %7577 = vrot.lane.b32.xlu0 %v7132, 104
        %v7578 = vpop.permute.xlu0 %7577
        %7579 = vrot.lane.b32.xlu0 %v7135, 104
        %v7580 = vpop.permute.xlu0 %7579
        %7581 = vrot.lane.b32.xlu0 %v7175, 104
        %v7582 = vpop.permute.xlu0 %7581
        %7583 = vrot.lane.b32.xlu0 %v7178, 104
        %v7584 = vpop.permute.xlu0 %7583
        %7585 = vrot.lane.b32.xlu0 %v7181, 104
        %v7586 = vpop.permute.xlu0 %7585
        %v7587 = vsel %vm952, %v7578, 0
        %v7589 = vsel %vm952, %v7580, 0
        %v7591 = vsel %vm952, %v7582, 0
        %v7593 = vsel %vm952, %v7584, 0
        %v7595 = vsel %vm952, %v7586, 0
        %7597 = vmatpush.xpose.msra.mxu0 0.0
        %7598 = vmatpush.xpose.msra.mxu0 0.0
        %7599 = vmatpush.xpose.msra.mxu0 0.0
        %7600 = vmatpush.xpose.msra.mxu0 0.0
        %7601 = vmatpush.xpose.msra.mxu0 0.0
        %7602 = vmatpush.xpose.msra.mxu0 0.0
        %7603 = vmatpush.xpose.msra.mxu0 0.0
        %7604 = vmatpush.xpose.msra.mxu0 0.0
        %7605 = vmatpush.xpose.msra.mxu0 0.0
        %7606 = vmatpush.xpose.msra.mxu0 0.0
        %7607 = vmatpush.xpose.msra.mxu0 0.0
        %7608 = vmatpush.xpose.msra.mxu0 0.0
        %7609 = vmatpush.xpose.msra.mxu0 0.0
        %7610 = vmatpush.xpose.msra.mxu0 %v7595
        %7611 = vmatpush.xpose.msra.mxu0 %v7593
        %7612 = vmatpush.xpose.msra.mxu0 %v7591
        %7613 = vmatmul.f32.gmra.mxu0 %v7587
        %v7614 = vpop.f32.mrf.mxu0
        %v7615 = vadd.f32 0.0, %v7614
        %7616 = vmatmul.f32.gmra.mxu0 %v7589
        %v7617 = vpop.f32.mrf.mxu0
        %v7618 = vadd.f32 0.0, %v7617
        %7619 = vdwg.mxu0
        %v7620 = vmul.f32 %v7615, 0.35355338
        %v7621 = vmul.f32 %v7618, 0.35355338
        %v7622 = vadd.f32 %v7620, %v2813
        %v7623 = vadd.f32 %v7621, %v2813
        %v7624 = vsel %vm1616, %v7622, -inf
        %7625 = vmax.xlane.f32.xlu0 %v7624
        %v7626 = vpop.xlane.xlu0 %7625
        %v7627 = vsel %vm1616, %v7623, -inf
        %7628 = vmax.xlane.f32.xlu0 %v7627
        %v7629 = vpop.xlane.xlu0 %7628
        %v7630 = vsub.f32 %v7622, %v7626
        %v7631 = vsub.f32 %v7623, %v7629
        %v7632 = vmul.f32 %v7630, 1.442695
        %v7633 = vpow.pop %v7632
        %v7634 = vmul.f32 %v7631, 1.442695
        %v7635 = vpow.pop %v7634
        %v7636 = vsel %vm1616, %v7633, 0.0
        %7637 = vadd.xlane.f32.xlu0 %v7636
        %v7638 = vpop.xlane.xlu0 %7637
        %v7639 = vsel %vm1616, %v7635, 0.0
        %7640 = vadd.xlane.f32.xlu0 %v7639
        %v7641 = vpop.xlane.xlu0 %7640
        %v7642 = vrcp.pop %v7638
        %v7643 = vmul.f32 %v7638, %v7642
        %v7644 = vsub.f32 1.0, %v7643
        %v7645 = vmul.f32 %v7642, %v7644
        %v7646 = vadd.f32 %v7642, %v7645
        %vm7647 = vweird.f32 %v7638
        %vm7648 = vweird.f32 %v7642
        %vm7649 = vmor %vm7647, %vm7648
        %v7650 = vsel %vm7649, %v7642, %v7646
        %v7651 = vand.u32 2147483647, %v7638
        %vm7652 = vcmp.eq.f32.partialorder %v7651, 8.507059e+37
        %v7653 = vand.u32 %v7638, 2147483648
        %v7654 = vor.u32 1.1754944e-38, %v7653
        %v7655 = vsel %vm7652, %v7654, %v7650
        %v7656 = vrcp.pop %v7641
        %v7657 = vmul.f32 %v7641, %v7656
        %v7658 = vsub.f32 1.0, %v7657
        %v7659 = vmul.f32 %v7656, %v7658
        %v7660 = vadd.f32 %v7656, %v7659
        %vm7661 = vweird.f32 %v7641
        %vm7662 = vweird.f32 %v7656
        %vm7663 = vmor %vm7661, %vm7662
        %v7664 = vsel %vm7663, %v7656, %v7660
        %v7665 = vand.u32 2147483647, %v7641
        %vm7666 = vcmp.eq.f32.partialorder %v7665, 8.507059e+37
        %v7667 = vand.u32 %v7641, 2147483648
        %v7668 = vor.u32 1.1754944e-38, %v7667
        %v7669 = vsel %vm7666, %v7668, %v7664
        %v7670 = vmul.f32 %v7633, %v7655
        %v7671 = vmul.f32 %v7635, %v7669
        %7672 = vrot.lane.b32.xlu0 %v7175, 72
        %v7673 = vpop.permute.xlu0 %7672
        %7674 = vrot.lane.b32.xlu0 %v7178, 72
        %v7675 = vpop.permute.xlu0 %7674
        %7676 = vrot.lane.b32.xlu0 %v7181, 72
        %v7677 = vpop.permute.xlu0 %7676
        %v7682 = vsel %vm1616, %v7670, 0
        %v7685 = vsel %vm1616, %v7671, 0
        %7687 = vmatpush.msra.mxu0 0.0
        %7688 = vmatpush.msra.mxu0 0.0
        %7689 = vmatpush.msra.mxu0 0.0
        %7690 = vmatpush.msra.mxu0 0.0
        %7691 = vmatpush.msra.mxu0 0.0
        %7692 = vmatpush.msra.mxu0 0.0
        %7693 = vmatpush.msra.mxu0 0.0
        %7694 = vmatpush.msra.mxu0 0.0
        %7695 = vmatpush.msra.mxu0 0.0
        %7696 = vmatpush.msra.mxu0 0.0
        %7697 = vmatpush.msra.mxu0 0.0
        %7698 = vmatpush.msra.mxu0 0.0
        %7699 = vmatpush.msra.mxu0 0.0
        %7700 = vmatpush.msra.mxu0 %v7677
        %7701 = vmatpush.msra.mxu0 %v7675
        %7702 = vmatpush.msra.mxu0 %v7673
        %7703 = vmatmul.f32.gmra.mxu0 %v7682
        %v7704 = vpop.f32.mrf.mxu0
        %v7705 = vadd.f32 0.0, %v7704
        %7706 = vmatmul.f32.gmra.mxu0 %v7685
        %v7707 = vpop.f32.mrf.mxu0
        %v7708 = vadd.f32 0.0, %v7707
        %7709 = vdwg.mxu0
        %7712 = vrot.lane.b32.xlu0 %v7439, 8
        %v7713 = vpop.permute.xlu0 %7712
        %7714 = vrot.lane.b32.xlu0 %v7442, 8
        %v7715 = vpop.permute.xlu0 %7714
        %7720 = vrot.lane.b32.xlu0 %v7572, 16
        %v7721 = vpop.permute.xlu0 %7720
        %7722 = vrot.lane.b32.xlu0 %v7575, 16
        %v7723 = vpop.permute.xlu0 %7722
        %7728 = vrot.lane.b32.xlu0 %v7705, 24
        %v7729 = vpop.permute.xlu0 %7728
        %7730 = vrot.lane.b32.xlu0 %v7708, 24
        %v7731 = vpop.permute.xlu0 %7730
        %v7734 = vsel %vm952, %v7306, %v7713
        %v7735 = vsel %vm952, %v7309, %v7715
        %v7736 = vsel %vm1132, %v7734, %v7721
        %v7737 = vsel %vm1132, %v7735, %v7723
        %v7738 = vsel %vm1616, %v7736, %v7729
        %v7739 = vsel %vm1616, %v7737, %v7731
        %v7740 = vperm.slane %v6399, 3
        %v7742 = vsel %vm982, %v7738, 0
        %v7745 = vsel %vm982, %v7739, 0
        %7747 = vmatpush.msra.mxu0 0.0
        %7748 = vmatpush.msra.mxu0 0.0
        %7749 = vmatpush.msra.mxu0 0.0
        %7750 = vmatpush.msra.mxu0 0.0
        %7751 = vmatpush.msra.mxu0 0.0
        %7752 = vmatpush.msra.mxu0 0.0
        %7753 = vmatpush.msra.mxu0 0.0
        %7754 = vmatpush.msra.mxu0 0.0
        %7755 = vmatpush.msra.mxu0 0.0
        %7756 = vmatpush.msra.mxu0 0.0
        %7757 = vmatpush.msra.mxu0 0.0
        %7758 = vmatpush.msra.mxu0 0.0
        %7759 = vmatpush.msra.mxu0 %v7106
        %7760 = vmatpush.msra.mxu0 %v7105
        %7761 = vmatpush.msra.mxu0 %v7104
        %7762 = vmatpush.msra.mxu0 %v7103
        %7763 = vmatmul.f32.gmra.mxu0 %v7742
        %v7764 = vpop.f32.mrf.mxu0
        %v7765 = vadd.f32 %v7740, %v7764
        %7766 = vmatmul.f32.gmra.mxu0 %v7745
        %v7767 = vpop.f32.mrf.mxu0
        %v7768 = vadd.f32 %v7740, %v7767
        %7769 = vdwg.mxu0
        %v7770 = vadd.f32 %v7045, %v7765
        %v7771 = vadd.f32 %v7046, %v7768
        %v7772 = vsel %vm982, %v7770, 0.0
        %7773 = vadd.xlane.f32.xlu0 %v7772
        %v7774 = vpop.xlane.xlu0 %7773
        %v7775 = vsel %vm982, %v7771, 0.0
        %7776 = vadd.xlane.f32.xlu0 %v7775
        %v7777 = vpop.xlane.xlu0 %7776
        %v7778 = vmul.f32 %v7774, %v1018
        %v7779 = vmul.f32 %v7777, %v1018
        %v7780 = vsub.f32 %v7770, %v7778
        %v7781 = vsub.f32 %v7771, %v7779
        %v7782 = vmul.f32 %v7780, %v7780
        %v7783 = vmul.f32 %v7781, %v7781
        %v7784 = vsel %vm982, %v7782, 0.0
        %7785 = vadd.xlane.f32.xlu0 %v7784
        %v7786 = vpop.xlane.xlu0 %7785
        %v7787 = vsel %vm982, %v7783, 0.0
        %7788 = vadd.xlane.f32.xlu0 %v7787
        %v7789 = vpop.xlane.xlu0 %7788
        %v7790 = vmul.f32 %v7786, %v1018
        %v7791 = vmul.f32 %v7789, %v1018
        %v7792 = vadd.f32 %v7790, 1e-05
        %v7793 = vadd.f32 %v7791, 1e-05
        %v7794 = vrsqrt.pop %v7792
        %v7795 = vmul.f32 %v7794, %v7792
        %v7796 = vmul.f32 %v7795, %v7794
        %v7797 = vmul.f32 0.5, %v7796
        %v7798 = vsub.f32 1.5, %v7797
        %v7799 = vmul.f32 %v7794, %v7798
        %vm7800 = vweird.f32 %v7792
        %vm7801 = vweird.f32 %v7794
        %vm7802 = vmor %vm7800, %vm7801
        %v7803 = vsel %vm7802, %v7794, %v7799
        %v7804 = vrsqrt.pop %v7793
        %v7805 = vmul.f32 %v7804, %v7793
        %v7806 = vmul.f32 %v7805, %v7804
        %v7807 = vmul.f32 0.5, %v7806
        %v7808 = vsub.f32 1.5, %v7807
        %v7809 = vmul.f32 %v7804, %v7808
        %vm7810 = vweird.f32 %v7793
        %vm7811 = vweird.f32 %v7804
        %vm7812 = vmor %vm7810, %vm7811
        %v7813 = vsel %vm7812, %v7804, %v7809
        %v7814 = vmul.f32 %v7780, %v7803
        %v7815 = vmul.f32 %v7781, %v7813
        %v7816 = vperm.slane %v6400, 2
        %v7817 = vmul.f32 %v7814, %v7816
        %v7818 = vmul.f32 %v7815, %v7816
        %v7819 = vperm.slane %v6400, 3
        %v7820 = vadd.f32 %v7817, %v7819
        %v7821 = vadd.f32 %v7818, %v7819
        %s7822 = scalar_lea.vmem %s22, 32
        %v7823 = vld [vmem:[%s7822] sm:$0xff]
        %v7824 = vld [vmem:[%s7822 + $0x8] sm:$0xff]
        %v7825 = vld [vmem:[%s7822 + $0x10] sm:$0xff]
        %v7826 = vld [vmem:[%s7822 + $0x18] sm:$0xff]
        %v7827 = vperm.slane %v6399, 4
        %v7829 = vsel %vm982, %v7820, 0
        %v7832 = vsel %vm982, %v7821, 0
        %7834 = vmatpush.msra.mxu0 0.0
        %7835 = vmatpush.msra.mxu0 0.0
        %7836 = vmatpush.msra.mxu0 0.0
        %7837 = vmatpush.msra.mxu0 0.0
        %7838 = vmatpush.msra.mxu0 0.0
        %7839 = vmatpush.msra.mxu0 0.0
        %7840 = vmatpush.msra.mxu0 0.0
        %7841 = vmatpush.msra.mxu0 0.0
        %7842 = vmatpush.msra.mxu0 0.0
        %7843 = vmatpush.msra.mxu0 0.0
        %7844 = vmatpush.msra.mxu0 0.0
        %7845 = vmatpush.msra.mxu0 0.0
        %7846 = vmatpush.msra.mxu0 %v7826
        %7847 = vmatpush.msra.mxu0 %v7825
        %7848 = vmatpush.msra.mxu0 %v7824
        %7849 = vmatpush.msra.mxu0 %v7823
        %7850 = vmatmul.f32.gmra.mxu0 %v7829
        %v7851 = vpop.f32.mrf.mxu0
        %v7852 = vadd.f32 %v7827, %v7851
        %7853 = vmatmul.f32.gmra.mxu0 %v7832
        %v7854 = vpop.f32.mrf.mxu0
        %v7855 = vadd.f32 %v7827, %v7854
        %7856 = vdwg.mxu0
        %v7857 = vmul.f32 %v7852, %v7852
        %v7858 = vmul.f32 %v7855, %v7855
        %v7859 = vmul.f32 %v7852, %v7857
        %v7860 = vmul.f32 %v7855, %v7858
        %v7861 = vmul.f32 %v7859, 0.044715
        %v7862 = vmul.f32 %v7860, 0.044715
        %v7863 = vadd.f32 %v7852, %v7861
        %v7864 = vadd.f32 %v7855, %v7862
        %v7865 = vmul.f32 %v7863, 0.7978846
        %v7866 = vmul.f32 %v7864, 0.7978846
        %v7867 = vtanh.pop %v7865
        %v7868 = vtanh.pop %v7866
        %v7869 = vadd.f32 %v7867, 1.0
        %v7870 = vadd.f32 %v7868, 1.0
        %v7871 = vmul.f32 %v7869, 0.5
        %v7872 = vmul.f32 %v7870, 0.5
        %v7873 = vmul.f32 %v7852, %v7871
        %v7874 = vmul.f32 %v7855, %v7872
        %s7875 = scalar_lea.vmem %s23, 64
        %v7876 = vld [vmem:[%s7875] sm:$0xff]
        %v7877 = vld [vmem:[%s7875 + $0x8] sm:$0xff]
        %v7878 = vld [vmem:[%s7875 + $0x10] sm:$0xff]
        %v7879 = vld [vmem:[%s7875 + $0x18] sm:$0xff]
        %v7880 = vld [vmem:[%s7875 + $0x20] sm:$0xff]
        %v7881 = vld [vmem:[%s7875 + $0x28] sm:$0xff]
        %v7882 = vld [vmem:[%s7875 + $0x30] sm:$0xff]
        %v7883 = vld [vmem:[%s7875 + $0x38] sm:$0xff]
        %v7885 = vsel %vm1749, %v7873, 0
        %v7888 = vsel %vm1749, %v7874, 0
        %7890 = vmatpush.msra.mxu0 0.0
        %7891 = vmatpush.msra.mxu0 0.0
        %7892 = vmatpush.msra.mxu0 0.0
        %7893 = vmatpush.msra.mxu0 0.0
        %7894 = vmatpush.msra.mxu0 0.0
        %7895 = vmatpush.msra.mxu0 0.0
        %7896 = vmatpush.msra.mxu0 0.0
        %7897 = vmatpush.msra.mxu0 0.0
        %7898 = vmatpush.msra.mxu0 %v7883
        %7899 = vmatpush.msra.mxu0 %v7882
        %7900 = vmatpush.msra.mxu0 %v7881
        %7901 = vmatpush.msra.mxu0 %v7880
        %7902 = vmatpush.msra.mxu0 %v7879
        %7903 = vmatpush.msra.mxu0 %v7878
        %7904 = vmatpush.msra.mxu0 %v7877
        %7905 = vmatpush.msra.mxu0 %v7876
        %7906 = vmatmul.f32.gmra.mxu0 %v7885
        %v7907 = vpop.f32.mrf.mxu0
        %v7908 = vadd.f32 0.0, %v7907
        %7909 = vmatmul.f32.gmra.mxu0 %v7888
        %v7910 = vpop.f32.mrf.mxu0
        %v7911 = vadd.f32 0.0, %v7910
        %7912 = vdwg.mxu0
        %v7913 = vadd.f32 %v7770, %v7908
        %v7914 = vadd.f32 %v7771, %v7911
        %v7915 = vperm.slane %v6399, 5
        %v7916 = vadd.f32 %v7913, %v7915
        %v7917 = vadd.f32 %v7914, %v7915
        %v7918 = vsel %vm982, %v7916, 0.0
        %7919 = vadd.xlane.f32.xlu0 %v7918
        %v7920 = vpop.xlane.xlu0 %7919
        %v7921 = vsel %vm982, %v7917, 0.0
        %7922 = vadd.xlane.f32.xlu0 %v7921
        %v7923 = vpop.xlane.xlu0 %7922
        %v7924 = vmul.f32 %v7920, %v1018
        %v7925 = vmul.f32 %v7923, %v1018
        %v7926 = vsub.f32 %v7916, %v7924
        %v7927 = vsub.f32 %v7917, %v7925
        %v7928 = vmul.f32 %v7926, %v7926
        %v7929 = vmul.f32 %v7927, %v7927
        %v7930 = vsel %vm982, %v7928, 0.0
        %7931 = vadd.xlane.f32.xlu0 %v7930
        %v7932 = vpop.xlane.xlu0 %7931
        %v7933 = vsel %vm982, %v7929, 0.0
        %7934 = vadd.xlane.f32.xlu0 %v7933
        %v7935 = vpop.xlane.xlu0 %7934
        %v7936 = vmul.f32 %v7932, %v1018
        %v7937 = vmul.f32 %v7935, %v1018
        %v7938 = vadd.f32 %v7936, 1e-05
        %v7939 = vadd.f32 %v7937, 1e-05
        %v7940 = vrsqrt.pop %v7938
        %v7941 = vmul.f32 %v7940, %v7938
        %v7942 = vmul.f32 %v7941, %v7940
        %v7943 = vmul.f32 0.5, %v7942
        %v7944 = vsub.f32 1.5, %v7943
        %v7945 = vmul.f32 %v7940, %v7944
        %vm7946 = vweird.f32 %v7938
        %vm7947 = vweird.f32 %v7940
        %vm7948 = vmor %vm7946, %vm7947
        %v7949 = vsel %vm7948, %v7940, %v7945
        %v7950 = vrsqrt.pop %v7939
        %v7951 = vmul.f32 %v7950, %v7939
        %v7952 = vmul.f32 %v7951, %v7950
        %v7953 = vmul.f32 0.5, %v7952
        %v7954 = vsub.f32 1.5, %v7953
        %v7955 = vmul.f32 %v7950, %v7954
        %vm7956 = vweird.f32 %v7939
        %vm7957 = vweird.f32 %v7950
        %vm7958 = vmor %vm7956, %vm7957
        %v7959 = vsel %vm7958, %v7950, %v7955
        %v7960 = vmul.f32 %v7926, %v7949
        %v7961 = vmul.f32 %v7927, %v7959
        %v7962 = vperm.slane %v945, 4
        %v7963 = vmul.f32 %v7960, %v7962
        %v7964 = vmul.f32 %v7961, %v7962
        %v7965 = vperm.slane %v945, 5
        %v7966 = vadd.f32 %v7963, %v7965
        %v7967 = vadd.f32 %v7964, %v7965
        %v7968 = vld [vmem:[%s6] sm:$0xff]
        %v7969 = vld [vmem:[%s6 + $0x8] sm:$0xff]
        %v7970 = vld [vmem:[%s6 + $0x10] sm:$0xff]
        %v7971 = vld [vmem:[%s6 + $0x18] sm:$0xff]
        %v7972 = vperm.slane %v945, 6
        %v7974 = vsel %vm982, %v7966, 0
        %v7977 = vsel %vm982, %v7967, 0
        %7979 = vmatpush.msra.mxu0 0.0
        %7980 = vmatpush.msra.mxu0 0.0
        %7981 = vmatpush.msra.mxu0 0.0
        %7982 = vmatpush.msra.mxu0 0.0
        %7983 = vmatpush.msra.mxu0 0.0
        %7984 = vmatpush.msra.mxu0 0.0
        %7985 = vmatpush.msra.mxu0 0.0
        %7986 = vmatpush.msra.mxu0 0.0
        %7987 = vmatpush.msra.mxu0 0.0
        %7988 = vmatpush.msra.mxu0 0.0
        %7989 = vmatpush.msra.mxu0 0.0
        %7990 = vmatpush.msra.mxu0 0.0
        %7991 = vmatpush.msra.mxu0 %v7971
        %7992 = vmatpush.msra.mxu0 %v7970
        %7993 = vmatpush.msra.mxu0 %v7969
        %7994 = vmatpush.msra.mxu0 %v7968
        %7995 = vmatmul.f32.gmra.mxu0 %v7974
        %v7996 = vpop.f32.mrf.mxu0
        %v7997 = vadd.f32 %v7972, %v7996
        %7998 = vmatmul.f32.gmra.mxu0 %v7977
        %v7999 = vpop.f32.mrf.mxu0
        %v8000 = vadd.f32 %v7972, %v7999
        %8001 = vdwg.mxu0
        %8002 = vst [vmem:[%s944] sm:$0xff] %v7997
        %8003 = vst [vmem:[%s944 + $0x8] sm:$0xff] %v8000
        %s8004 = sand.u32 %s604, 1
        %s8005 = scalar_lea.sflag [#allocation3], %s8004
        %s8006 = sand.u32 %s604, 1
        %s8007 = smul.addr %s8006, 16
        %s8008 = scalar_lea.vmem [#allocation2], %s8007
        %s8009 = sand.u32 %s46, 1
        %s8010 = scalar_lea.sflag [#allocation5], %s8009
        %s8011 = sand.u32 %s630, 1
        %s8012 = smul.addr %s8011, 16
        %s8013 = scalar_lea.vmem [#allocation4], %s8012
        %s8014 = sand.u32 %s46, 1
        %s8015 = scalar_lea.sflag [#allocation5], %s8014
        %s8016 = sand.u32 %s656, 1
        %s8017 = smul.addr %s8016, 24
        %s8018 = scalar_lea.vmem [#allocation6], %s8017
        %p8019 = scmp.lt.s32.totalorder %s46, 1
        %s8020 = scalar_select %p8019, %s46, 1
        %s8021 = smul.addr %s8020, 2
        %s8022 = smul.addr %s8021, 8
        %s8023 = scalar_lea.vmem %s28, %s8022
        // Predicated region
        $region121: #{prose_fwd.1} parent=119 // pred_check
          %p8024 = pneg %p614
        $region122: #{prose_fwd.1} parent=119 // pred_check_branch
          %8026 = sbr.rel (%p8024) target = $region124
        $region123: #{prose_fwd.1} parent=119 // pred_region
          %8028 = vsyncadd %s8005, 0
          %s8029 = smul.addr %s46, 2
          %s8030 = smul.addr %s8029, 8
          %s8031 = scalar_lea.hbm %s25, %s8030
          %s8032 = sshll.u32 %s8008, 4
          %s8033 = int_to_ptr.vmem [resolvable:$true] %s8032
          %s8034 = sshll.u32 %s8031, 4
          %s8035 = int_to_ptr.hbm [resolvable:$true] %s8034
          %8040 = dma.vmem_to_hbm [thread:$0]  %s8033, 256, %s8035, %s8005, 128, 128, 8
        $region124: #{prose_fwd.1} parent=119 // pred_fallthru
          _
        // Predicated region
        $region125: #{prose_fwd.1} parent=119 // pred_check
          %p8041 = pneg %p640
        $region126: #{prose_fwd.1} parent=119 // pred_check_branch
          %8043 = sbr.rel (%p8041) target = $region128
        $region127: #{prose_fwd.1} parent=119 // pred_region
          %8045 = vsyncadd %s8010, 0
          %s8046 = smul.addr %s46, 2
          %s8047 = smul.addr %s8046, 8
          %s8048 = scalar_lea.hbm %s26, %s8047
          %s8049 = sshll.u32 %s8013, 4
          %s8050 = int_to_ptr.vmem [resolvable:$true] %s8049
          %s8051 = sshll.u32 %s8048, 4
          %s8052 = int_to_ptr.hbm [resolvable:$true] %s8051
          %8057 = dma.vmem_to_hbm [thread:$0]  %s8050, 256, %s8052, %s8010, 128, 128, 8
        $region128: #{prose_fwd.1} parent=119 // pred_fallthru
          _
        // Predicated region
        $region129: #{prose_fwd.1} parent=119 // pred_check
          %p8058 = pneg %p666
        $region130: #{prose_fwd.1} parent=119 // pred_check_branch
          %8060 = sbr.rel (%p8058) target = $region132
        $region131: #{prose_fwd.1} parent=119 // pred_region
          %8062 = vsyncadd %s8015, 0
          %s8063 = smul.addr %s46, 3
          %s8064 = smul.addr %s8063, 8
          %s8065 = scalar_lea.hbm %s27, %s8064
          %s8066 = sshll.u32 %s8018, 4
          %s8067 = int_to_ptr.vmem [resolvable:$true] %s8066
          %s8068 = sshll.u32 %s8065, 4
          %s8069 = int_to_ptr.hbm [resolvable:$true] %s8068
          %8074 = dma.vmem_to_hbm [thread:$0]  %s8067, 384, %s8069, %s8015, 128, 128, 8
        $region132: #{prose_fwd.1} parent=119 // pred_fallthru
          _
        // Predicated region
        $region133: #{prose_fwd.1} parent=119 // pred_check
          %p8075 = pneg %p692
        $region134: #{prose_fwd.1} parent=119 // pred_check_branch
          %8077 = sbr.rel (%p8075) target = $region136
        $region135: #{prose_fwd.1} parent=119 // pred_region
          _
        $region136: #{prose_fwd.1} parent=119 // pred_fallthru
          _
      $region120: #{prose_fwd.1} parent=5 // pred_fallthru
        _
      %p8078 = scmp.le.s32.totalorder 2, %s41
      // Predicated region
      $region137: #{prose_fwd.1} parent=5 // pred_check
        %p8079 = pneg %p8078
      $region138: #{prose_fwd.1} parent=5 // pred_check_branch
        %8081 = sbr.rel (%p8079) target = $region140
      $region139: #{prose_fwd.1} parent=5 // pred_region
        %s8082 = ssub.s32 %s41, 2
        // Predicated region
        $region141: #{prose_fwd.1} parent=139 // pred_check
          %p8083 = pneg %p620
        $region142: #{prose_fwd.1} parent=139 // pred_check_branch
          %8085 = sbr.rel (%p8083) target = $region144
        $region143: #{prose_fwd.1} parent=139 // pred_region
          %s8086 = sand.u32 %s605, 1
          %s8087 = scalar_lea.sflag [#allocation3], %s8086
          %s8088 = sand.u32 %s605, 1
          %s8089 = smul.addr %s8088, 16
          %s8090 = scalar_lea.vmem [#allocation2], %s8089
          %8092 = dma.done %s8087, 256
        $region144: #{prose_fwd.1} parent=139 // pred_fallthru
          _
        // Predicated region
        $region145: #{prose_fwd.1} parent=139 // pred_check
          %p8093 = pneg %p646
        $region146: #{prose_fwd.1} parent=139 // pred_check_branch
          %8095 = sbr.rel (%p8093) target = $region148
        $region147: #{prose_fwd.1} parent=139 // pred_region
          %s8096 = sand.u32 %s47, 1
          %s8097 = scalar_lea.sflag [#allocation5], %s8096
          %s8098 = sand.u32 %s631, 1
          %s8099 = smul.addr %s8098, 16
          %s8100 = scalar_lea.vmem [#allocation4], %s8099
          %8102 = dma.done %s8097, 256
        $region148: #{prose_fwd.1} parent=139 // pred_fallthru
          _
        // Predicated region
        $region149: #{prose_fwd.1} parent=139 // pred_check
          %p8103 = pneg %p672
        $region150: #{prose_fwd.1} parent=139 // pred_check_branch
          %8105 = sbr.rel (%p8103) target = $region152
        $region151: #{prose_fwd.1} parent=139 // pred_region
          %s8106 = sand.u32 %s47, 1
          %s8107 = scalar_lea.sflag [#allocation5], %s8106
          %s8108 = sand.u32 %s657, 1
          %s8109 = smul.addr %s8108, 24
          %s8110 = scalar_lea.vmem [#allocation6], %s8109
          %8112 = dma.done %s8107, 384
        $region152: #{prose_fwd.1} parent=139 // pred_fallthru
          _
        // Predicated region
        $region153: #{prose_fwd.1} parent=139 // pred_check
          %p8113 = pneg %p698
        $region154: #{prose_fwd.1} parent=139 // pred_check_branch
          %8115 = sbr.rel (%p8113) target = $region156
        $region155: #{prose_fwd.1} parent=139 // pred_region
          %p8116 = scmp.lt.s32.totalorder %s47, 1
          %s8117 = scalar_select %p8116, %s47, 1
          %s8118 = smul.addr %s8117, 2
          %s8119 = smul.addr %s8118, 8
          %s8120 = scalar_lea.vmem %s28, %s8119
        $region156: #{prose_fwd.1} parent=139 // pred_fallthru
          _
      $region140: #{prose_fwd.1} parent=5 // pred_fallthru
        _
    $region6: #{prose_fwd.1} parent=1 // loop_footer
      %s45 = sadd.s32 1, %s41
    $region7: #{prose_fwd.1} parent=1 // loop_footer_branch
      %40 = sbr.rel target = $region3
    $region8: #{prose_fwd.1} parent=1 // loop_exit
      _
    %8121 = vsyncpa [#allocation3], 1
    %s8122 = scalar_lea.sflag [#allocation3], 1
    %8123 = vsyncpa %s8122, 1
    %8124 = vsyncpa [#allocation5], 1
    %s8125 = scalar_lea.sflag [#allocation5], 1
    %8126 = vsyncpa %s8125, 1

</llo_original>
